<compile_context>
chip_gen: v6e
topology: v6e:2x2x1
jax: 0.10.0
libtpu: 0.0.40
codegen_flags: <defaults>
</compile_context>

<pallas_src>
import math

import numpy as np
import jax
import jax.numpy as jnp
from jax.experimental import pallas as pl
from jax.experimental.pallas import tpu as pltpu

VMEM_LIMIT = 48 * 1024 * 1024


def _snake(v, alpha):
    """Snake1d activation in f32: x + (1/(a+eps)) * sin(a*x)^2."""
    return v + (1.0 / (alpha + 1e-9)) * jnp.sin(alpha * v) ** 2


# ----------------------------------------------------------------------------
# Standalone conv kernels (conv_in, downsample, conv_out)
# ----------------------------------------------------------------------------
def make_conv_s1_kernel(K, dilation, T_out, Cin, Cout, snake):
    """stride-1 conv: (optional snake) -> im2col -> single bf16 MXU matmul."""

    def kernel(*refs):
        refs = list(refs)
        alpha_ref = refs.pop(0) if snake else None
        x_ref = refs.pop(0)            # (T_pad, Cin)
        w_ref = refs.pop(0)            # (K*Cin, Cout)
        b_ref = refs.pop(0)            # (1, Cout)
        o_ref = refs.pop(0)            # (T_out, Cout)

        x = x_ref[...].astype(jnp.float32)
        if snake:
            x = _snake(x, alpha_ref[...].astype(jnp.float32))
        bias = b_ref[...].astype(jnp.float32)

        if Cin == 1:
            # Contraction depth 1: keep it off the MXU, use VPU broadcast MACs.
            w = w_ref[...].astype(jnp.float32)                      # (K, Cout)
            acc = jnp.broadcast_to(bias, (T_out, Cout))
            for k in range(K):
                xk = jax.lax.slice(x, (k * dilation, 0),
                                   (k * dilation + T_out, 1))       # (T_out, 1)
                acc = acc + xk * w[k:k + 1, :]
            o_ref[...] = acc.astype(o_ref.dtype)
        else:
            taps = [jax.lax.slice(x, (k * dilation, 0),
                                  (k * dilation + T_out, Cin))
                    for k in range(K)]
            im2col = jnp.concatenate(taps, axis=1) if K > 1 else taps[0]
            acc = jnp.dot(im2col.astype(jnp.bfloat16),
                          w_ref[...].astype(jnp.bfloat16),
                          preferred_element_type=jnp.float32) + bias
            o_ref[...] = acc.astype(o_ref.dtype)

    return kernel


def make_conv_down_kernel(stride, T_out, Cin, Cout, snake):
    """stride>1 conv with K == 2*stride on a pre-grouped (T_groups, stride*Cin)
    input: two unit-stride slices, two deep bf16 matmuls."""
    SC = stride * Cin

    def kernel(*refs):
        refs = list(refs)
        alpha_ref = refs.pop(0) if snake else None   # (1, stride*Cin), pre-tiled
        x_ref = refs.pop(0)                          # (T_groups, stride*Cin)
        w_ref = refs.pop(0)                          # (2*stride*Cin, Cout)
        b_ref = refs.pop(0)                          # (1, Cout)
        o_ref = refs.pop(0)                          # (T_out, Cout)

        x = x_ref[...].astype(jnp.float32)
        if snake:
            x = _snake(x, alpha_ref[...].astype(jnp.float32))
        lo = jax.lax.slice(x, (0, 0), (T_out, SC)).astype(jnp.bfloat16)
        hi = jax.lax.slice(x, (1, 0), (1 + T_out, SC)).astype(jnp.bfloat16)
        w = w_ref[...].astype(jnp.bfloat16)
        acc = (jnp.dot(lo, w[:SC], preferred_element_type=jnp.float32)
               + jnp.dot(hi, w[SC:], preferred_element_type=jnp.float32)
               + b_ref[...].astype(jnp.float32))
        o_ref[...] = acc.astype(o_ref.dtype)

    return kernel


def pallas_conv1d(x, w, b, *, stride=1, dilation=1, padding=0, alpha=None,
                  out_dtype=jnp.bfloat16):
    """x: (B, T, Cin) channels-last; w: (K, Cin, Cout); b: (1, Cout)."""
    B, T, Cin = x.shape
    K, _, Cout = w.shape
    snake = alpha is not None

    in_specs, args = [], []

    if stride == 1:
        if padding > 0:
            x = jnp.pad(x, ((0, 0), (padding, padding), (0, 0)))
        T_pad = T + 2 * padding
        T_out = T_pad - (K - 1) * dilation
        kernel = make_conv_s1_kernel(K, dilation, T_out, Cin, Cout, snake)
        if snake:
            in_specs.append(pl.BlockSpec((1, Cin), lambda bb: (0, 0)))
            args.append(alpha)
        in_specs += [pl.BlockSpec((None, T_pad, Cin), lambda bb: (bb, 0, 0)),
                     pl.BlockSpec((K * Cin, Cout), lambda bb: (0, 0)),
                     pl.BlockSpec((1, Cout), lambda bb: (0, 0))]
        args += [x, w.reshape(K * Cin, Cout), b]
    else:
        s = stride
        assert K == 2 * s, "downsample conv assumes kernel_size == 2 * stride"
        x = jnp.pad(x, ((0, 0), (padding, padding), (0, 0)))
        T_pad = T + 2 * padding
        T_out = (T_pad - K) // s + 1
        T_grp = -(-T_pad // s)                         # ceil(T_pad / s)
        extra = T_grp * s - T_pad
        if extra:
            x = jnp.pad(x, ((0, 0), (0, extra), (0, 0)))
        xg = x.reshape(B, T_grp, s * Cin)              # unit-stride tap groups
        kernel = make_conv_down_kernel(s, T_out, Cin, Cout, snake)
        if snake:
            in_specs.append(pl.BlockSpec((1, s * Cin), lambda bb: (0, 0)))
            args.append(jnp.tile(alpha, (1, s)))
        in_specs += [pl.BlockSpec((None, T_grp, s * Cin), lambda bb: (bb, 0, 0)),
                     pl.BlockSpec((K * Cin, Cout), lambda bb: (0, 0)),
                     pl.BlockSpec((1, Cout), lambda bb: (0, 0))]
        args += [xg, w.reshape(K * Cin, Cout), b]

    return pl.pallas_call(
        kernel,
        out_shape=jax.ShapeDtypeStruct((B, T_out, Cout), out_dtype),
        grid=(B,),
        in_specs=in_specs,
        out_specs=pl.BlockSpec((None, T_out, Cout), lambda bb: (bb, 0, 0)),
        compiler_params=pltpu.CompilerParams(
            dimension_semantics=("parallel",),
            vmem_limit_bytes=VMEM_LIMIT),
    )(*args)


# ----------------------------------------------------------------------------
# Fused ResidualUnit: snake -> conv7(dilated) -> snake -> conv1 -> + x
# ----------------------------------------------------------------------------
def make_resunit_kernel(dilation, T, C):
    pad = 3 * dilation   # (7-1)*dilation // 2  -> length preserving

    def kernel(x_ref, a1_ref, w7_ref, b7_ref, a2_ref, w1_ref, b1_ref, o_ref):
        xp = x_ref[...].astype(jnp.float32)                   # (T+2*pad, C)
        h = _snake(xp, a1_ref[...].astype(jnp.float32))
        taps = [jax.lax.slice(h, (k * dilation, 0), (k * dilation + T, C))
                for k in range(7)]
        im2col = jnp.concatenate(taps, axis=1)                # (T, 7*C)
        acc = (jnp.dot(im2col.astype(jnp.bfloat16),
                       w7_ref[...].astype(jnp.bfloat16),
                       preferred_element_type=jnp.float32)
               + b7_ref[...].astype(jnp.float32))
        h2 = _snake(acc, a2_ref[...].astype(jnp.float32))
        out = (jnp.dot(h2.astype(jnp.bfloat16),
                       w1_ref[...].astype(jnp.bfloat16),
                       preferred_element_type=jnp.float32)
               + b1_ref[...].astype(jnp.float32)
               + jax.lax.slice(xp, (pad, 0), (pad + T, C)))   # residual skip
        o_ref[...] = out.astype(o_ref.dtype)

    return kernel


def pallas_residual_unit(x, p, dilation, out_dtype=jnp.bfloat16):
    B, T, C = x.shape
    pad = 3 * dilation
    xp = jnp.pad(x, ((0, 0), (pad, pad), (0, 0)))
    T_pad = T + 2 * pad
    kernel = make_resunit_kernel(dilation, T, C)
    w7 = p["conv7"]["w"].reshape(7 * C, C)
    w1 = p["conv1"]["w"].reshape(C, C)
    return pl.pallas_call(
        kernel,
        out_shape=jax.ShapeDtypeStruct((B, T, C), out_dtype),
        grid=(B,),
        in_specs=[
            pl.BlockSpec((None, T_pad, C), lambda bb: (bb, 0, 0)),
            pl.BlockSpec((1, C), lambda bb: (0, 0)),
            pl.BlockSpec((7 * C, C), lambda bb: (0, 0)),
            pl.BlockSpec((1, C), lambda bb: (0, 0)),
            pl.BlockSpec((1, C), lambda bb: (0, 0)),
            pl.BlockSpec((C, C), lambda bb: (0, 0)),
            pl.BlockSpec((1, C), lambda bb: (0, 0)),
        ],
        out_specs=pl.BlockSpec((None, T, C), lambda bb: (bb, 0, 0)),
        compiler_params=pltpu.CompilerParams(
            dimension_semantics=("parallel",),
            vmem_limit_bytes=VMEM_LIMIT),
    )(xp, p["alpha1"], w7, p["conv7"]["b"], p["alpha2"], w1, p["conv1"]["b"])


# ----------------------------------------------------------------------------
# SLSTM kernel (Encodec-style: y = LSTM_L(x) + x), batched recurrence
# ----------------------------------------------------------------------------
def make_lstm_kernel(T, Bp, D, L):
    def kernel(x_ref, wih_ref, whh_ref, b_ref, o_ref, g_ref):
        # x_ref/o_ref: (T*Bp, D) with row index t*Bp + b
        # wih_ref/whh_ref: (L, D, 4D); b_ref: (L, 1, 4D); g_ref: VMEM (T*Bp, 4D)
        for l in range(L):
            src_ref = x_ref if l == 0 else o_ref
            wih = wih_ref[l].astype(jnp.bfloat16)
            whh = whh_ref[l].astype(jnp.bfloat16)
            bias = b_ref[l].astype(jnp.float32)

            # Hoisted input projection for the whole sequence: one big matmul.
            g_ref[...] = (jnp.dot(src_ref[...].astype(jnp.bfloat16), wih,
                                  preferred_element_type=jnp.float32) + bias)

            def step(t, carry, whh=whh):
                h, c = carry                                   # (Bp, D) f32
                row = pl.multiple_of(t * Bp, Bp)
                g = (g_ref[pl.ds(row, Bp), :]
                     + jnp.dot(h.astype(jnp.bfloat16), whh,
                               preferred_element_type=jnp.float32))
                # PyTorch gate order: i, f, g, o
                i_g = jax.nn.sigmoid(g[:, 0:D])
                f_g = jax.nn.sigmoid(g[:, D:2 * D])
                g_g = jnp.tanh(g[:, 2 * D:3 * D])
                o_g = jax.nn.sigmoid(g[:, 3 * D:4 * D])
                c = f_g * c + i_g * g_g
                h = o_g * jnp.tanh(c)
                o_ref[pl.ds(row, Bp), :] = h.astype(o_ref.dtype)
                return (h, c)

            h0 = jnp.zeros((Bp, D), jnp.float32)
            c0 = jnp.zeros((Bp, D), jnp.float32)
            jax.lax.fori_loop(0, T, step, (h0, c0))

        # skip connection: y = LSTM(x) + x
        o_ref[...] = o_ref[...] + x_ref[...]

    return kernel


def pallas_slstm(x, p, out_dtype=jnp.bfloat16):
    """x: (B, T, D) channels-last."""
    B, T, D = x.shape
    L = p["wihT"].shape[0]
    Bp = max(8, ((B + 7) // 8) * 8)        # pad batch to full sublanes
    xt = jnp.transpose(x, (1, 0, 2))       # (T, B, D): time-major for the loop
    if Bp != B:
        xt = jnp.pad(xt, ((0, 0), (0, Bp - B), (0, 0)))
    xf = xt.reshape(T * Bp, D)

    kernel = make_lstm_kernel(T, Bp, D, L)
    out = pl.pallas_call(
        kernel,
        out_shape=jax.ShapeDtypeStruct((T * Bp, D), out_dtype),
        grid=(1,),
        in_specs=[
            pl.BlockSpec((T * Bp, D), lambda i: (0, 0)),
            pl.BlockSpec((L, D, 4 * D), lambda i: (0, 0, 0)),
            pl.BlockSpec((L, D, 4 * D), lambda i: (0, 0, 0)),
            pl.BlockSpec((L, 1, 4 * D), lambda i: (0, 0, 0)),
        ],
        out_specs=pl.BlockSpec((T * Bp, D), lambda i: (0, 0)),
        scratch_shapes=[pltpu.VMEM((T * Bp, 4 * D), jnp.float32)],
        compiler_params=pltpu.CompilerParams(
            dimension_semantics=("arbitrary",),
            vmem_limit_bytes=VMEM_LIMIT),
    )(xf, p["wihT"], p["whhT"], p["bias"])

    out = out.reshape(T, Bp, D)[:, :B]
    return jnp.transpose(out, (1, 0, 2))


# ----------------------------------------------------------------------------
# Deterministic parameter initialization (synthetic; weight_norm folded into
# the effective conv weight — numerically equivalent for the forward pass).
# ----------------------------------------------------------------------------
class KeyGen:
    def __init__(self, seed=0):
        self.key = jax.random.PRNGKey(seed)

    def __call__(self):
        self.key, sub = jax.random.split(self.key)
        return sub


def init_conv_params(kg, cin, cout, k):
    scale = 1.0 / math.sqrt(cin * k)
    w = (jax.random.normal(kg(), (k, cin, cout), jnp.float32) * scale
         ).astype(jnp.bfloat16)
    b = jax.random.normal(kg(), (1, cout), jnp.float32) * scale
    return {"w": w, "b": b}


def init_residual_unit(kg, dim):
    return {
        "alpha1": jnp.ones((1, dim), jnp.float32),   # Snake1d alpha init = 1
        "conv7": init_conv_params(kg, dim, dim, 7),
        "alpha2": jnp.ones((1, dim), jnp.float32),
        "conv1": init_conv_params(kg, dim, dim, 1),
    }


def init_encoder_block(kg, dim, stride):
    return {
        "res": [init_residual_unit(kg, dim // 2) for _ in range(3)],
        "alpha": jnp.ones((1, dim // 2), jnp.float32),
        "down": init_conv_params(kg, dim // 2, dim, 2 * stride),
        "stride": stride,
    }


def init_lstm(kg, dim, layers):
    scale = 1.0 / math.sqrt(dim)
    return {
        "wihT": (jax.random.normal(kg(), (layers, dim, 4 * dim), jnp.float32)
                 * scale).astype(jnp.bfloat16),
        "whhT": (jax.random.normal(kg(), (layers, dim, 4 * dim), jnp.float32)
                 * scale).astype(jnp.bfloat16),
        # combined bias (b_ih + b_hh)
        "bias": jax.random.normal(kg(), (layers, 1, 4 * dim), jnp.float32) * scale,
    }


def init_encoder(kg, d_model, strides, d_latent, lstm):
    params = {"conv_in": init_conv_params(kg, 1, d_model, 7), "blocks": []}
    d = d_model
    for s in strides:
        d *= 2
        params["blocks"].append(init_encoder_block(kg, d, s))
    params["lstm"] = init_lstm(kg, d, lstm) if lstm else None
    params["alpha_out"] = jnp.ones((1, d), jnp.float32)
    params["conv_out"] = init_conv_params(kg, d, d_latent, 3)
    return params


# ----------------------------------------------------------------------------
# Forward pass (mirrors the PyTorch Sequential exactly)
# ----------------------------------------------------------------------------
def encoder_block_forward(x, p):
    for dil, rp in zip((1, 3, 9), p["res"]):
        # With pad = 3*dilation the conv preserves length, so PyTorch's
        # trimming branch (`if pad > 0: x = x[..., pad:-pad]`) is a no-op.
        x = pallas_residual_unit(x, rp, dil)
    s = p["stride"]
    return pallas_conv1d(x, p["down"]["w"], p["down"]["b"],
                         stride=s, padding=math.ceil(s / 2), alpha=p["alpha"])


def encoder_forward(params, x_nct):
    # Accept PyTorch NCT (B, 1, T); compute in (B, T, C); return NCT.
    x = jnp.transpose(x_nct, (0, 2, 1)).astype(jnp.float32)
    x = pallas_conv1d(x, params["conv_in"]["w"], params["conv_in"]["b"],
                      padding=3)
    for bp in params["blocks"]:
        x = encoder_block_forward(x, bp)
    if params["lstm"] is not None:
        x = pallas_slstm(x, params["lstm"])
    x = pallas_conv1d(x, params["conv_out"]["w"], params["conv_out"]["b"],
                      padding=1, alpha=params["alpha_out"],
                      out_dtype=jnp.float32)
    return jnp.transpose(x, (0, 2, 1))   # (B, d_latent, T_out)


# ----------------------------------------------------------------------------
if __name__ == "__main__":
    # Small-but-structurally-faithful config: default strides [2,4,8,8],
    # reduced width (d_model=8 -> channels 8,16,32,64,128), d_latent=8, lstm=2.
    D_MODEL, STRIDES, D_LATENT, LSTM = 8, (2, 4, 8, 8), 8, 2
    B, T = 2, 2048                                   # total downsample = 512

    kg = KeyGen(0)
    params = init_encoder(kg, D_MODEL, STRIDES, D_LATENT, LSTM)

    x = jax.random.normal(jax.random.PRNGKey(0), (B, 1, T), jnp.float32)

    y = encoder_forward(params, x)
    y = jax.block_until_ready(y)

    expected_t = T // int(np.prod(STRIDES))
    assert y.shape == (B, D_LATENT, expected_t), y.shape
    assert bool(jnp.all(jnp.isfinite(y)))
    print("KERNEL_OK")
</pallas_src>

<mosaic_0001>
module attributes {stable_mosaic.version = 11 : i64} {
  func.func @kernel(%arg0: i32, %arg1: memref<1x2054x1xf32, #tpu.memory_space<vmem>>, %arg2: memref<7x8xbf16, #tpu.memory_space<vmem>>, %arg3: memref<1x8xf32, #tpu.memory_space<vmem>>, %arg4: memref<1x2048x8xbf16, #tpu.memory_space<vmem>>) attributes {dimension_semantics = [#tpu.dimension_semantics<parallel>], iteration_bounds = array<i64: 2>, scalar_prefetch = 0 : i64, scratch_operands = 0 : i64, tpu.core_type = #tpu.core_type<tc>, window_params = [{transform_indices = @transform_0, window_bounds = array<i64: 1, 2054, 1>}, {pipeline_mode = #tpu.pipeline_mode<synchronous>, transform_indices = @transform_1, window_bounds = array<i64: 7, 8>}, {pipeline_mode = #tpu.pipeline_mode<synchronous>, transform_indices = @transform_2, window_bounds = array<i64: 1, 8>}, {transform_indices = @transform_3, window_bounds = array<i64: 1, 2048, 8>}]} {
    %c0 = arith.constant 0 : index
    %c0_0 = arith.constant 0 : index
    %c0_1 = arith.constant 0 : index
    %0 = vector.load %arg1[%c0, %c0_0, %c0_1] : memref<1x2054x1xf32, #tpu.memory_space<vmem>>, vector<1x2054x1xf32>
    %1 = vector.shape_cast %0 : vector<1x2054x1xf32> to vector<2054x1xf32>
    %c0_2 = arith.constant 0 : index
    %c0_3 = arith.constant 0 : index
    %2 = vector.load %arg3[%c0_2, %c0_3] : memref<1x8xf32, #tpu.memory_space<vmem>>, vector<1x8xf32>
    %c0_4 = arith.constant 0 : index
    %c0_5 = arith.constant 0 : index
    %3 = vector.load %arg2[%c0_4, %c0_5] : memref<7x8xbf16, #tpu.memory_space<vmem>>, vector<7x8xbf16>
    %4 = arith.extf %3 : vector<7x8xbf16> to vector<7x8xf32>
    %5 = vector.shape_cast %2 : vector<1x8xf32> to vector<1x8xf32>
    %6 = vector.broadcast %5 : vector<1x8xf32> to vector<2048x8xf32>
    %7 = vector.extract_strided_slice %1 {offsets = [0, 0], sizes = [2048, 1], strides = [1, 1]} : vector<2054x1xf32> to vector<2048x1xf32>
    %8 = vector.extract_strided_slice %4 {offsets = [0, 0], sizes = [1, 8], strides = [1, 1]} : vector<7x8xf32> to vector<1x8xf32>
    %9 = vector.broadcast %7 : vector<2048x1xf32> to vector<2048x8xf32>
    %10 = vector.broadcast %8 : vector<1x8xf32> to vector<2048x8xf32>
    %11 = arith.mulf %9, %10 : vector<2048x8xf32>
    %12 = arith.addf %6, %11 : vector<2048x8xf32>
    %13 = vector.extract_strided_slice %1 {offsets = [1, 0], sizes = [2048, 1], strides = [1, 1]} : vector<2054x1xf32> to vector<2048x1xf32>
    %14 = vector.extract_strided_slice %4 {offsets = [1, 0], sizes = [1, 8], strides = [1, 1]} : vector<7x8xf32> to vector<1x8xf32>
    %15 = vector.broadcast %13 : vector<2048x1xf32> to vector<2048x8xf32>
    %16 = vector.broadcast %14 : vector<1x8xf32> to vector<2048x8xf32>
    %17 = arith.mulf %15, %16 : vector<2048x8xf32>
    %18 = arith.addf %12, %17 : vector<2048x8xf32>
    %19 = vector.extract_strided_slice %1 {offsets = [2, 0], sizes = [2048, 1], strides = [1, 1]} : vector<2054x1xf32> to vector<2048x1xf32>
    %20 = vector.extract_strided_slice %4 {offsets = [2, 0], sizes = [1, 8], strides = [1, 1]} : vector<7x8xf32> to vector<1x8xf32>
    %21 = vector.broadcast %19 : vector<2048x1xf32> to vector<2048x8xf32>
    %22 = vector.broadcast %20 : vector<1x8xf32> to vector<2048x8xf32>
    %23 = arith.mulf %21, %22 : vector<2048x8xf32>
    %24 = arith.addf %18, %23 : vector<2048x8xf32>
    %25 = vector.extract_strided_slice %1 {offsets = [3, 0], sizes = [2048, 1], strides = [1, 1]} : vector<2054x1xf32> to vector<2048x1xf32>
    %26 = vector.extract_strided_slice %4 {offsets = [3, 0], sizes = [1, 8], strides = [1, 1]} : vector<7x8xf32> to vector<1x8xf32>
    %27 = vector.broadcast %25 : vector<2048x1xf32> to vector<2048x8xf32>
    %28 = vector.broadcast %26 : vector<1x8xf32> to vector<2048x8xf32>
    %29 = arith.mulf %27, %28 : vector<2048x8xf32>
    %30 = arith.addf %24, %29 : vector<2048x8xf32>
    %31 = vector.extract_strided_slice %1 {offsets = [4, 0], sizes = [2048, 1], strides = [1, 1]} : vector<2054x1xf32> to vector<2048x1xf32>
    %32 = vector.extract_strided_slice %4 {offsets = [4, 0], sizes = [1, 8], strides = [1, 1]} : vector<7x8xf32> to vector<1x8xf32>
    %33 = vector.broadcast %31 : vector<2048x1xf32> to vector<2048x8xf32>
    %34 = vector.broadcast %32 : vector<1x8xf32> to vector<2048x8xf32>
    %35 = arith.mulf %33, %34 : vector<2048x8xf32>
    %36 = arith.addf %30, %35 : vector<2048x8xf32>
    %37 = vector.extract_strided_slice %1 {offsets = [5, 0], sizes = [2048, 1], strides = [1, 1]} : vector<2054x1xf32> to vector<2048x1xf32>
    %38 = vector.extract_strided_slice %4 {offsets = [5, 0], sizes = [1, 8], strides = [1, 1]} : vector<7x8xf32> to vector<1x8xf32>
    %39 = vector.broadcast %37 : vector<2048x1xf32> to vector<2048x8xf32>
    %40 = vector.broadcast %38 : vector<1x8xf32> to vector<2048x8xf32>
    %41 = arith.mulf %39, %40 : vector<2048x8xf32>
    %42 = arith.addf %36, %41 : vector<2048x8xf32>
    %43 = vector.extract_strided_slice %1 {offsets = [6, 0], sizes = [2048, 1], strides = [1, 1]} : vector<2054x1xf32> to vector<2048x1xf32>
    %44 = vector.extract_strided_slice %4 {offsets = [6, 0], sizes = [1, 8], strides = [1, 1]} : vector<7x8xf32> to vector<1x8xf32>
    %45 = vector.broadcast %43 : vector<2048x1xf32> to vector<2048x8xf32>
    %46 = vector.broadcast %44 : vector<1x8xf32> to vector<2048x8xf32>
    %47 = arith.mulf %45, %46 : vector<2048x8xf32>
    %48 = arith.addf %42, %47 : vector<2048x8xf32>
    %49 = arith.truncf %48 : vector<2048x8xf32> to vector<2048x8xbf16>
    %c0_6 = arith.constant 0 : index
    %c0_7 = arith.constant 0 : index
    %c0_8 = arith.constant 0 : index
    %50 = vector.load %arg4[%c0_6, %c0_7, %c0_8] : memref<1x2048x8xbf16, #tpu.memory_space<vmem>>, vector<1x2048x8xbf16>
    %51 = vector.shape_cast %50 : vector<1x2048x8xbf16> to vector<2048x8xbf16>
    %52 = vector.shape_cast %49 : vector<2048x8xbf16> to vector<1x2048x8xbf16>
    tpu.vector_store %arg4[%c0_6, %c0_7, %c0_8], %52 {strides = array<i32>} : memref<1x2048x8xbf16, #tpu.memory_space<vmem>>, vector<1x2048x8xbf16>,
    return
  }
  func.func @transform_0(%arg0: i32) -> (i32, i32, i32) {
    %c0_i32 = arith.constant 0 : i32
    %c0_i32_0 = arith.constant 0 : i32
    %c0_i32_1 = arith.constant 0 : i32
    return %arg0, %c0_i32, %c0_i32_0 : i32, i32, i32
  }
  func.func @transform_1(%arg0: i32) -> (i32, i32) {
    %c0_i32 = arith.constant 0 : i32
    %c0_i32_0 = arith.constant 0 : i32
    %c0_i32_1 = arith.constant 0 : i32
    return %c0_i32, %c0_i32_0 : i32, i32
  }
  func.func @transform_2(%arg0: i32) -> (i32, i32) {
    %c0_i32 = arith.constant 0 : i32
    %c0_i32_0 = arith.constant 0 : i32
    %c0_i32_1 = arith.constant 0 : i32
    return %c0_i32, %c0_i32_0 : i32, i32
  }
  func.func @transform_3(%arg0: i32) -> (i32, i32, i32) {
    %c0_i32 = arith.constant 0 : i32
    %c0_i32_0 = arith.constant 0 : i32
    %c0_i32_1 = arith.constant 0 : i32
    return %arg0, %c0_i32, %c0_i32_0 : i32, i32, i32
  }
}

</mosaic_0001>

<llo_original>
// kernel: tpu_custom_call.1
$region0: #{tpu_custom_call.1}
  #allocation0 [shape = 'u32[]', space=smem, size = 0x4, offset = 0x4, fixed_abs, tag = 'smem constant byte address 0x4 - core index']
  #allocation1 [shape = 'u32[144,128]{1,0:T(1,128)}', space=vmem, size = 0x12000, scoped, tag = 'internal scratch']
  %s0 = inlined_call_operand.vmem [shape: f32[2,2054,1], index: 0, kind: input, shape index: {}]
  %s1 = inlined_call_operand.vmem [shape: bf16[7,8], index: 1, kind: input, shape index: {}]
  %s2 = inlined_call_operand.vmem [shape: f32[1,8], index: 2, kind: input, shape index: {}]
  %s3 = inlined_call_operand.vmem [shape: bf16[2,2048,8], index: 3, kind: output, shape index: {}]
  %s4 = sld [smem:[#allocation0]]
  $region45: #{tpu_custom_call.1} parent=0
    _
  %s6 = ssub.s32 1, %s4
  %s7 = scalar_select 0, %s6, %s4
  loop: start=0, step=1, limit=4
  $region2: #{tpu_custom_call.1} parent=0 // loop_pre_header
    _
  $region3: #{tpu_custom_call.1} parent=0 // loop_header
    %s9 = sphi 0, %s13
    %p10 = scmp.ge.s32.totalorder %s9, 4
    %s19 = sphi 0, %s21
    %s22 = sphi 0, %s19
    %s23 = sphi 0, %s22
    %s39 = sphi 0, %s23
    %s43 = sphi 0, %s43
    %s45 = sphi 0, %s43
    %s46 = sphi 0, %s45
    %s60 = sphi 0, %s46
    %s64 = sphi 0, %s64
    %s66 = sphi 0, %s64
    %s67 = sphi 0, %s66
    %s81 = sphi 0, %s67
    %s87 = sphi 0, %s89
    %s90 = sphi 0, %s87
    %s91 = sphi 0, %s90
    %s107 = sphi 0, %s91
  $region4: #{tpu_custom_call.1} parent=0 // loop_header_branch
    %12 = sbr.rel (%p10) target = $region8
  $region5: #{tpu_custom_call.1} parent=0 // loop_body
    %s14 = ssub.s32 %s9, 1
    %s15 = ssub.s32 %s9, 2
    %s16 = sadd.s32 %s9, 1
    %s17 = ssub.s32 %s9, %s16
    %p18 = scmp.eq.s32.totalorder %s17, 0
    %s20 = sadd.s32 %s19, 1
    %s21 = scalar_select %p18, %s19, %s20
    %p24 = pneg %p18
    %p25 = scmp.eq.s32.totalorder %s9, 1
    %p26 = por %p24, %p25
    %p27 = scmp.ne.s32.totalorder %s19, %s22
    %p28 = scmp.eq.s32.totalorder %s9, 0
    %p29 = por %p27, %p28
    %p30 = scmp.ne.s32.totalorder %s19, %s22
    %p31 = scmp.eq.s32.totalorder %s14, 1
    %p32 = por %p30, %p31
    %p33 = scmp.ne.s32.totalorder %s22, %s23
    %p34 = scmp.eq.s32.totalorder %s14, 0
    %p35 = por %p33, %p34
    %p36 = scmp.ne.s32.totalorder %s22, %s23
    %p37 = scmp.eq.s32.totalorder %s15, 1
    %p38 = por %p36, %p37
    %p40 = scmp.ne.s32.totalorder %s23, %s39
    %p41 = scmp.eq.s32.totalorder %s15, 0
    %p42 = por %p40, %p41
    %s44 = sadd.s32 %s43, 1
    %p47 = scmp.eq.s32.totalorder %s9, 1
    %p48 = scmp.ne.s32.totalorder %s43, %s45
    %p49 = scmp.eq.s32.totalorder %s9, 0
    %p50 = por %p48, %p49
    %p51 = scmp.ne.s32.totalorder %s43, %s45
    %p52 = scmp.eq.s32.totalorder %s14, 1
    %p53 = por %p51, %p52
    %p54 = scmp.ne.s32.totalorder %s45, %s46
    %p55 = scmp.eq.s32.totalorder %s14, 0
    %p56 = por %p54, %p55
    %p57 = scmp.ne.s32.totalorder %s45, %s46
    %p58 = scmp.eq.s32.totalorder %s15, 1
    %p59 = por %p57, %p58
    %p61 = scmp.ne.s32.totalorder %s46, %s60
    %p62 = scmp.eq.s32.totalorder %s15, 0
    %p63 = por %p61, %p62
    %s65 = sadd.s32 %s64, 1
    %p68 = scmp.eq.s32.totalorder %s9, 1
    %p69 = scmp.ne.s32.totalorder %s64, %s66
    %p70 = scmp.eq.s32.totalorder %s9, 0
    %p71 = por %p69, %p70
    %p72 = scmp.ne.s32.totalorder %s64, %s66
    %p73 = scmp.eq.s32.totalorder %s14, 1
    %p74 = por %p72, %p73
    %p75 = scmp.ne.s32.totalorder %s66, %s67
    %p76 = scmp.eq.s32.totalorder %s14, 0
    %p77 = por %p75, %p76
    %p78 = scmp.ne.s32.totalorder %s66, %s67
    %p79 = scmp.eq.s32.totalorder %s15, 1
    %p80 = por %p78, %p79
    %p82 = scmp.ne.s32.totalorder %s67, %s81
    %p83 = scmp.eq.s32.totalorder %s15, 0
    %p84 = por %p82, %p83
    %s85 = ssub.s32 %s9, %s16
    %p86 = scmp.eq.s32.totalorder %s85, 0
    %s88 = sadd.s32 %s87, 1
    %s89 = scalar_select %p86, %s87, %s88
    %p92 = pneg %p86
    %p93 = scmp.eq.s32.totalorder %s9, 1
    %p94 = por %p92, %p93
    %p95 = scmp.ne.s32.totalorder %s87, %s90
    %p96 = scmp.eq.s32.totalorder %s9, 0
    %p97 = por %p95, %p96
    %p98 = scmp.ne.s32.totalorder %s87, %s90
    %p99 = scmp.eq.s32.totalorder %s14, 1
    %p100 = por %p98, %p99
    %p101 = scmp.ne.s32.totalorder %s90, %s91
    %p102 = scmp.eq.s32.totalorder %s14, 0
    %p103 = por %p101, %p102
    %p104 = scmp.ne.s32.totalorder %s90, %s91
    %p105 = scmp.eq.s32.totalorder %s15, 1
    %p106 = por %p104, %p105
    %p108 = scmp.ne.s32.totalorder %s91, %s107
    %p109 = scmp.eq.s32.totalorder %s15, 0
    %p110 = por %p108, %p109
    %p111 = scmp.le.s32.totalorder 1, %s9
    %p112 = scmp.lt.s32.totalorder %s9, 3
    %p113 = pnand %p111, %p112
    %p114 = pneg %p113
    // Predicated region
    $region9: #{tpu_custom_call.1} parent=5 // pred_check
      _
    $region10: #{tpu_custom_call.1} parent=5 // pred_check_branch
      %116 = sbr.rel (%p113) target = $region12
    $region11: #{tpu_custom_call.1} parent=5 // pred_region
      %s117 = ssub.s32 %s9, 1
      // Predicated region
      $region13: #{tpu_custom_call.1} parent=11 // pred_check
        %p118 = pneg %p56
      $region14: #{tpu_custom_call.1} parent=11 // pred_check_branch
        %120 = sbr.rel (%p118) target = $region16
      $region15: #{tpu_custom_call.1} parent=11 // pred_region
        _
      $region16: #{tpu_custom_call.1} parent=11 // pred_fallthru
        _
      // Predicated region
      $region17: #{tpu_custom_call.1} parent=11 // pred_check
        %p121 = pneg %p77
      $region18: #{tpu_custom_call.1} parent=11 // pred_check_branch
        %123 = sbr.rel (%p121) target = $region20
      $region19: #{tpu_custom_call.1} parent=11 // pred_region
        _
      $region20: #{tpu_custom_call.1} parent=11 // pred_fallthru
        _
    $region12: #{tpu_custom_call.1} parent=5 // pred_fallthru
      _
    %p124 = scmp.lt.s32.totalorder %s9, 2
    // Predicated region
    $region21: #{tpu_custom_call.1} parent=5 // pred_check
      %p125 = pneg %p124
    $region22: #{tpu_custom_call.1} parent=5 // pred_check_branch
      %127 = sbr.rel (%p125) target = $region24
    $region23: #{tpu_custom_call.1} parent=5 // pred_region
      // Predicated region
      $region25: #{tpu_custom_call.1} parent=23 // pred_check
        %p128 = pneg %p29
      $region26: #{tpu_custom_call.1} parent=23 // pred_check_branch
        %130 = sbr.rel (%p128) target = $region28
      $region27: #{tpu_custom_call.1} parent=23 // pred_region
        %p131 = scmp.lt.s32.totalorder %s9, 1
        %s132 = scalar_select %p131, %s9, 1
        %s133 = smul.addr %s132, 257
        %s134 = smul.addr %s133, 8
        %s135 = scalar_lea.vmem %s0, %s134
      $region28: #{tpu_custom_call.1} parent=23 // pred_fallthru
        _
    $region24: #{tpu_custom_call.1} parent=5 // pred_fallthru
      _
    %p136 = scmp.le.s32.totalorder 1, %s9
    %p137 = scmp.lt.s32.totalorder %s9, 3
    %p138 = pnand %p136, %p137
    %p139 = pneg %p138
    // Predicated region
    $region29: #{tpu_custom_call.1} parent=5 // pred_check
      _
    $region30: #{tpu_custom_call.1} parent=5 // pred_check_branch
      %141 = sbr.rel (%p138) target = $region32
    $region31: #{tpu_custom_call.1} parent=5 // pred_region
      %s142 = ssub.s32 %s9, 1
      %p143 = scmp.lt.s32.totalorder %s14, 1
      %s144 = scalar_select %p143, %s14, 1
      %s145 = smul.addr %s144, 257
      %s146 = smul.addr %s145, 8
      %s147 = scalar_lea.vmem %s0, %s146
      %p148 = pneg %p35
      %p149 = pneg %p32
      %p150 = pneg %p56
      %p151 = pneg %p53
      %p152 = pneg %p77
      %p153 = pneg %p74
      %p154 = pneg %p103
      %p155 = pneg %p100
      %p156 = scmp.lt.s32.totalorder %s14, 1
      %s157 = scalar_select %p156, %s14, 1
      %s158 = smul.addr %s157, 256
      %s159 = smul.addr %s158, 4
      %s160 = scalar_lea.vmem %s3, %s159
      %p161 = scmp.lt.s32.totalorder %s14, 1
      %s162 = scalar_select %p161, %s14, 1
      %s163 = smul.addr %s162, 257
      %s164 = smul.addr %s163, 8
      %s165 = scalar_lea.vmem %s0, %s164
      %p166 = scmp.lt.s32.totalorder %s14, 1
      %s167 = scalar_select %p166, %s14, 1
      %s168 = smul.addr %s167, 256
      %s169 = smul.addr %s168, 4
      %s170 = scalar_lea.vmem %s3, %s169
      %v171 = vld [vmem:[%s165] sm:$0xff]
      %v172 = vld [vmem:[%s165 + $0x8] sm:$0xff]
      %v173 = vld [vmem:[%s165 + $0x10] sm:$0xff]
      %v174 = vld [vmem:[%s165 + $0x18] sm:$0xff]
      %v175 = vld [vmem:[%s165 + $0x20] sm:$0xff]
      %v176 = vld [vmem:[%s165 + $0x28] sm:$0xff]
      %v177 = vld [vmem:[%s165 + $0x30] sm:$0xff]
      %v178 = vld [vmem:[%s165 + $0x38] sm:$0xff]
      %v179 = vld [vmem:[%s165 + $0x40] sm:$0xff]
      %v180 = vld [vmem:[%s165 + $0x48] sm:$0xff]
      %v181 = vld [vmem:[%s165 + $0x50] sm:$0xff]
      %v182 = vld [vmem:[%s165 + $0x58] sm:$0xff]
      %v183 = vld [vmem:[%s165 + $0x60] sm:$0xff]
      %v184 = vld [vmem:[%s165 + $0x68] sm:$0xff]
      %v185 = vld [vmem:[%s165 + $0x70] sm:$0xff]
      %v186 = vld [vmem:[%s165 + $0x78] sm:$0xff]
      %v187 = vld [vmem:[%s165 + $0x80] sm:$0xff]
      %v188 = vld [vmem:[%s165 + $0x88] sm:$0xff]
      %v189 = vld [vmem:[%s165 + $0x90] sm:$0xff]
      %v190 = vld [vmem:[%s165 + $0x98] sm:$0xff]
      %v191 = vld [vmem:[%s165 + $0xa0] sm:$0xff]
      %v192 = vld [vmem:[%s165 + $0xa8] sm:$0xff]
      %v193 = vld [vmem:[%s165 + $0xb0] sm:$0xff]
      %v194 = vld [vmem:[%s165 + $0xb8] sm:$0xff]
      %v195 = vld [vmem:[%s165 + $0xc0] sm:$0xff]
      %v196 = vld [vmem:[%s165 + $0xc8] sm:$0xff]
      %v197 = vld [vmem:[%s165 + $0xd0] sm:$0xff]
      %v198 = vld [vmem:[%s165 + $0xd8] sm:$0xff]
      %v199 = vld [vmem:[%s165 + $0xe0] sm:$0xff]
      %v200 = vld [vmem:[%s165 + $0xe8] sm:$0xff]
      %v201 = vld [vmem:[%s165 + $0xf0] sm:$0xff]
      %v202 = vld [vmem:[%s165 + $0xf8] sm:$0xff]
      %v203 = vld [vmem:[%s165 + $0x100] sm:$0xff]
      %v204 = vld [vmem:[%s165 + $0x108] sm:$0xff]
      %v205 = vld [vmem:[%s165 + $0x110] sm:$0xff]
      %v206 = vld [vmem:[%s165 + $0x118] sm:$0xff]
      %v207 = vld [vmem:[%s165 + $0x120] sm:$0xff]
      %v208 = vld [vmem:[%s165 + $0x128] sm:$0xff]
      %v209 = vld [vmem:[%s165 + $0x130] sm:$0xff]
      %v210 = vld [vmem:[%s165 + $0x138] sm:$0xff]
      %v211 = vld [vmem:[%s165 + $0x140] sm:$0xff]
      %v212 = vld [vmem:[%s165 + $0x148] sm:$0xff]
      %v213 = vld [vmem:[%s165 + $0x150] sm:$0xff]
      %v214 = vld [vmem:[%s165 + $0x158] sm:$0xff]
      %v215 = vld [vmem:[%s165 + $0x160] sm:$0xff]
      %v216 = vld [vmem:[%s165 + $0x168] sm:$0xff]
      %v217 = vld [vmem:[%s165 + $0x170] sm:$0xff]
      %v218 = vld [vmem:[%s165 + $0x178] sm:$0xff]
      %v219 = vld [vmem:[%s165 + $0x180] sm:$0xff]
      %v220 = vld [vmem:[%s165 + $0x188] sm:$0xff]
      %v221 = vld [vmem:[%s165 + $0x190] sm:$0xff]
      %v222 = vld [vmem:[%s165 + $0x198] sm:$0xff]
      %v223 = vld [vmem:[%s165 + $0x1a0] sm:$0xff]
      %v224 = vld [vmem:[%s165 + $0x1a8] sm:$0xff]
      %v225 = vld [vmem:[%s165 + $0x1b0] sm:$0xff]
      %v226 = vld [vmem:[%s165 + $0x1b8] sm:$0xff]
      %v227 = vld [vmem:[%s165 + $0x1c0] sm:$0xff]
      %v228 = vld [vmem:[%s165 + $0x1c8] sm:$0xff]
      %v229 = vld [vmem:[%s165 + $0x1d0] sm:$0xff]
      %v230 = vld [vmem:[%s165 + $0x1d8] sm:$0xff]
      %v231 = vld [vmem:[%s165 + $0x1e0] sm:$0xff]
      %v232 = vld [vmem:[%s165 + $0x1e8] sm:$0xff]
      %v233 = vld [vmem:[%s165 + $0x1f0] sm:$0xff]
      %v234 = vld [vmem:[%s165 + $0x1f8] sm:$0xff]
      %v235 = vld [vmem:[%s165 + $0x200] sm:$0xff]
      %v236 = vld [vmem:[%s165 + $0x208] sm:$0xff]
      %v237 = vld [vmem:[%s165 + $0x210] sm:$0xff]
      %v238 = vld [vmem:[%s165 + $0x218] sm:$0xff]
      %v239 = vld [vmem:[%s165 + $0x220] sm:$0xff]
      %v240 = vld [vmem:[%s165 + $0x228] sm:$0xff]
      %v241 = vld [vmem:[%s165 + $0x230] sm:$0xff]
      %v242 = vld [vmem:[%s165 + $0x238] sm:$0xff]
      %v243 = vld [vmem:[%s165 + $0x240] sm:$0xff]
      %v244 = vld [vmem:[%s165 + $0x248] sm:$0xff]
      %v245 = vld [vmem:[%s165 + $0x250] sm:$0xff]
      %v246 = vld [vmem:[%s165 + $0x258] sm:$0xff]
      %v247 = vld [vmem:[%s165 + $0x260] sm:$0xff]
      %v248 = vld [vmem:[%s165 + $0x268] sm:$0xff]
      %v249 = vld [vmem:[%s165 + $0x270] sm:$0xff]
      %v250 = vld [vmem:[%s165 + $0x278] sm:$0xff]
      %v251 = vld [vmem:[%s165 + $0x280] sm:$0xff]
      %v252 = vld [vmem:[%s165 + $0x288] sm:$0xff]
      %v253 = vld [vmem:[%s165 + $0x290] sm:$0xff]
      %v254 = vld [vmem:[%s165 + $0x298] sm:$0xff]
      %v255 = vld [vmem:[%s165 + $0x2a0] sm:$0xff]
      %v256 = vld [vmem:[%s165 + $0x2a8] sm:$0xff]
      %v257 = vld [vmem:[%s165 + $0x2b0] sm:$0xff]
      %v258 = vld [vmem:[%s165 + $0x2b8] sm:$0xff]
      %v259 = vld [vmem:[%s165 + $0x2c0] sm:$0xff]
      %v260 = vld [vmem:[%s165 + $0x2c8] sm:$0xff]
      %v261 = vld [vmem:[%s165 + $0x2d0] sm:$0xff]
      %v262 = vld [vmem:[%s165 + $0x2d8] sm:$0xff]
      %v263 = vld [vmem:[%s165 + $0x2e0] sm:$0xff]
      %v264 = vld [vmem:[%s165 + $0x2e8] sm:$0xff]
      %v265 = vld [vmem:[%s165 + $0x2f0] sm:$0xff]
      %v266 = vld [vmem:[%s165 + $0x2f8] sm:$0xff]
      %v267 = vld [vmem:[%s165 + $0x300] sm:$0xff]
      %v268 = vld [vmem:[%s165 + $0x308] sm:$0xff]
      %v269 = vld [vmem:[%s165 + $0x310] sm:$0xff]
      %v270 = vld [vmem:[%s165 + $0x318] sm:$0xff]
      %v271 = vld [vmem:[%s165 + $0x320] sm:$0xff]
      %v272 = vld [vmem:[%s165 + $0x328] sm:$0xff]
      %v273 = vld [vmem:[%s165 + $0x330] sm:$0xff]
      %v274 = vld [vmem:[%s165 + $0x338] sm:$0xff]
      %v275 = vld [vmem:[%s165 + $0x340] sm:$0xff]
      %v276 = vld [vmem:[%s165 + $0x348] sm:$0xff]
      %v277 = vld [vmem:[%s165 + $0x350] sm:$0xff]
      %v278 = vld [vmem:[%s165 + $0x358] sm:$0xff]
      %v279 = vld [vmem:[%s165 + $0x360] sm:$0xff]
      %v280 = vld [vmem:[%s165 + $0x368] sm:$0xff]
      %v281 = vld [vmem:[%s165 + $0x370] sm:$0xff]
      %v282 = vld [vmem:[%s165 + $0x378] sm:$0xff]
      %v283 = vld [vmem:[%s165 + $0x380] sm:$0xff]
      %v284 = vld [vmem:[%s165 + $0x388] sm:$0xff]
      %v285 = vld [vmem:[%s165 + $0x390] sm:$0xff]
      %v286 = vld [vmem:[%s165 + $0x398] sm:$0xff]
      %v287 = vld [vmem:[%s165 + $0x3a0] sm:$0xff]
      %v288 = vld [vmem:[%s165 + $0x3a8] sm:$0xff]
      %v289 = vld [vmem:[%s165 + $0x3b0] sm:$0xff]
      %v290 = vld [vmem:[%s165 + $0x3b8] sm:$0xff]
      %v291 = vld [vmem:[%s165 + $0x3c0] sm:$0xff]
      %v292 = vld [vmem:[%s165 + $0x3c8] sm:$0xff]
      %v293 = vld [vmem:[%s165 + $0x3d0] sm:$0xff]
      %v294 = vld [vmem:[%s165 + $0x3d8] sm:$0xff]
      %v295 = vld [vmem:[%s165 + $0x3e0] sm:$0xff]
      %v296 = vld [vmem:[%s165 + $0x3e8] sm:$0xff]
      %v297 = vld [vmem:[%s165 + $0x3f0] sm:$0xff]
      %v298 = vld [vmem:[%s165 + $0x3f8] sm:$0xff]
      %v299 = vld [vmem:[%s165 + $0x400] sm:$0xff]
      %v300 = vld [vmem:[%s165 + $0x408] sm:$0xff]
      %v301 = vld [vmem:[%s165 + $0x410] sm:$0xff]
      %v302 = vld [vmem:[%s165 + $0x418] sm:$0xff]
      %v303 = vld [vmem:[%s165 + $0x420] sm:$0xff]
      %v304 = vld [vmem:[%s165 + $0x428] sm:$0xff]
      %v305 = vld [vmem:[%s165 + $0x430] sm:$0xff]
      %v306 = vld [vmem:[%s165 + $0x438] sm:$0xff]
      %v307 = vld [vmem:[%s165 + $0x440] sm:$0xff]
      %v308 = vld [vmem:[%s165 + $0x448] sm:$0xff]
      %v309 = vld [vmem:[%s165 + $0x450] sm:$0xff]
      %v310 = vld [vmem:[%s165 + $0x458] sm:$0xff]
      %v311 = vld [vmem:[%s165 + $0x460] sm:$0xff]
      %v312 = vld [vmem:[%s165 + $0x468] sm:$0xff]
      %v313 = vld [vmem:[%s165 + $0x470] sm:$0xff]
      %v314 = vld [vmem:[%s165 + $0x478] sm:$0xff]
      %v315 = vld [vmem:[%s165 + $0x480] sm:$0xff]
      %v316 = vld [vmem:[%s165 + $0x488] sm:$0xff]
      %v317 = vld [vmem:[%s165 + $0x490] sm:$0xff]
      %v318 = vld [vmem:[%s165 + $0x498] sm:$0xff]
      %v319 = vld [vmem:[%s165 + $0x4a0] sm:$0xff]
      %v320 = vld [vmem:[%s165 + $0x4a8] sm:$0xff]
      %v321 = vld [vmem:[%s165 + $0x4b0] sm:$0xff]
      %v322 = vld [vmem:[%s165 + $0x4b8] sm:$0xff]
      %v323 = vld [vmem:[%s165 + $0x4c0] sm:$0xff]
      %v324 = vld [vmem:[%s165 + $0x4c8] sm:$0xff]
      %v325 = vld [vmem:[%s165 + $0x4d0] sm:$0xff]
      %v326 = vld [vmem:[%s165 + $0x4d8] sm:$0xff]
      %v327 = vld [vmem:[%s165 + $0x4e0] sm:$0xff]
      %v328 = vld [vmem:[%s165 + $0x4e8] sm:$0xff]
      %v329 = vld [vmem:[%s165 + $0x4f0] sm:$0xff]
      %v330 = vld [vmem:[%s165 + $0x4f8] sm:$0xff]
      %v331 = vld [vmem:[%s165 + $0x500] sm:$0xff]
      %v332 = vld [vmem:[%s165 + $0x508] sm:$0xff]
      %v333 = vld [vmem:[%s165 + $0x510] sm:$0xff]
      %v334 = vld [vmem:[%s165 + $0x518] sm:$0xff]
      %v335 = vld [vmem:[%s165 + $0x520] sm:$0xff]
      %v336 = vld [vmem:[%s165 + $0x528] sm:$0xff]
      %v337 = vld [vmem:[%s165 + $0x530] sm:$0xff]
      %v338 = vld [vmem:[%s165 + $0x538] sm:$0xff]
      %v339 = vld [vmem:[%s165 + $0x540] sm:$0xff]
      %v340 = vld [vmem:[%s165 + $0x548] sm:$0xff]
      %v341 = vld [vmem:[%s165 + $0x550] sm:$0xff]
      %v342 = vld [vmem:[%s165 + $0x558] sm:$0xff]
      %v343 = vld [vmem:[%s165 + $0x560] sm:$0xff]
      %v344 = vld [vmem:[%s165 + $0x568] sm:$0xff]
      %v345 = vld [vmem:[%s165 + $0x570] sm:$0xff]
      %v346 = vld [vmem:[%s165 + $0x578] sm:$0xff]
      %v347 = vld [vmem:[%s165 + $0x580] sm:$0xff]
      %v348 = vld [vmem:[%s165 + $0x588] sm:$0xff]
      %v349 = vld [vmem:[%s165 + $0x590] sm:$0xff]
      %v350 = vld [vmem:[%s165 + $0x598] sm:$0xff]
      %v351 = vld [vmem:[%s165 + $0x5a0] sm:$0xff]
      %v352 = vld [vmem:[%s165 + $0x5a8] sm:$0xff]
      %v353 = vld [vmem:[%s165 + $0x5b0] sm:$0xff]
      %v354 = vld [vmem:[%s165 + $0x5b8] sm:$0xff]
      %v355 = vld [vmem:[%s165 + $0x5c0] sm:$0xff]
      %v356 = vld [vmem:[%s165 + $0x5c8] sm:$0xff]
      %v357 = vld [vmem:[%s165 + $0x5d0] sm:$0xff]
      %v358 = vld [vmem:[%s165 + $0x5d8] sm:$0xff]
      %v359 = vld [vmem:[%s165 + $0x5e0] sm:$0xff]
      %v360 = vld [vmem:[%s165 + $0x5e8] sm:$0xff]
      %v361 = vld [vmem:[%s165 + $0x5f0] sm:$0xff]
      %v362 = vld [vmem:[%s165 + $0x5f8] sm:$0xff]
      %v363 = vld [vmem:[%s165 + $0x600] sm:$0xff]
      %v364 = vld [vmem:[%s165 + $0x608] sm:$0xff]
      %v365 = vld [vmem:[%s165 + $0x610] sm:$0xff]
      %v366 = vld [vmem:[%s165 + $0x618] sm:$0xff]
      %v367 = vld [vmem:[%s165 + $0x620] sm:$0xff]
      %v368 = vld [vmem:[%s165 + $0x628] sm:$0xff]
      %v369 = vld [vmem:[%s165 + $0x630] sm:$0xff]
      %v370 = vld [vmem:[%s165 + $0x638] sm:$0xff]
      %v371 = vld [vmem:[%s165 + $0x640] sm:$0xff]
      %v372 = vld [vmem:[%s165 + $0x648] sm:$0xff]
      %v373 = vld [vmem:[%s165 + $0x650] sm:$0xff]
      %v374 = vld [vmem:[%s165 + $0x658] sm:$0xff]
      %v375 = vld [vmem:[%s165 + $0x660] sm:$0xff]
      %v376 = vld [vmem:[%s165 + $0x668] sm:$0xff]
      %v377 = vld [vmem:[%s165 + $0x670] sm:$0xff]
      %v378 = vld [vmem:[%s165 + $0x678] sm:$0xff]
      %v379 = vld [vmem:[%s165 + $0x680] sm:$0xff]
      %v380 = vld [vmem:[%s165 + $0x688] sm:$0xff]
      %v381 = vld [vmem:[%s165 + $0x690] sm:$0xff]
      %v382 = vld [vmem:[%s165 + $0x698] sm:$0xff]
      %v383 = vld [vmem:[%s165 + $0x6a0] sm:$0xff]
      %v384 = vld [vmem:[%s165 + $0x6a8] sm:$0xff]
      %v385 = vld [vmem:[%s165 + $0x6b0] sm:$0xff]
      %v386 = vld [vmem:[%s165 + $0x6b8] sm:$0xff]
      %v387 = vld [vmem:[%s165 + $0x6c0] sm:$0xff]
      %v388 = vld [vmem:[%s165 + $0x6c8] sm:$0xff]
      %v389 = vld [vmem:[%s165 + $0x6d0] sm:$0xff]
      %v390 = vld [vmem:[%s165 + $0x6d8] sm:$0xff]
      %v391 = vld [vmem:[%s165 + $0x6e0] sm:$0xff]
      %v392 = vld [vmem:[%s165 + $0x6e8] sm:$0xff]
      %v393 = vld [vmem:[%s165 + $0x6f0] sm:$0xff]
      %v394 = vld [vmem:[%s165 + $0x6f8] sm:$0xff]
      %v395 = vld [vmem:[%s165 + $0x700] sm:$0xff]
      %v396 = vld [vmem:[%s165 + $0x708] sm:$0xff]
      %v397 = vld [vmem:[%s165 + $0x710] sm:$0xff]
      %v398 = vld [vmem:[%s165 + $0x718] sm:$0xff]
      %v399 = vld [vmem:[%s165 + $0x720] sm:$0xff]
      %v400 = vld [vmem:[%s165 + $0x728] sm:$0xff]
      %v401 = vld [vmem:[%s165 + $0x730] sm:$0xff]
      %v402 = vld [vmem:[%s165 + $0x738] sm:$0xff]
      %v403 = vld [vmem:[%s165 + $0x740] sm:$0xff]
      %v404 = vld [vmem:[%s165 + $0x748] sm:$0xff]
      %v405 = vld [vmem:[%s165 + $0x750] sm:$0xff]
      %v406 = vld [vmem:[%s165 + $0x758] sm:$0xff]
      %v407 = vld [vmem:[%s165 + $0x760] sm:$0xff]
      %v408 = vld [vmem:[%s165 + $0x768] sm:$0xff]
      %v409 = vld [vmem:[%s165 + $0x770] sm:$0xff]
      %v410 = vld [vmem:[%s165 + $0x778] sm:$0xff]
      %v411 = vld [vmem:[%s165 + $0x780] sm:$0xff]
      %v412 = vld [vmem:[%s165 + $0x788] sm:$0xff]
      %v413 = vld [vmem:[%s165 + $0x790] sm:$0xff]
      %v414 = vld [vmem:[%s165 + $0x798] sm:$0xff]
      %v415 = vld [vmem:[%s165 + $0x7a0] sm:$0xff]
      %v416 = vld [vmem:[%s165 + $0x7a8] sm:$0xff]
      %v417 = vld [vmem:[%s165 + $0x7b0] sm:$0xff]
      %v418 = vld [vmem:[%s165 + $0x7b8] sm:$0xff]
      %v419 = vld [vmem:[%s165 + $0x7c0] sm:$0xff]
      %v420 = vld [vmem:[%s165 + $0x7c8] sm:$0xff]
      %v421 = vld [vmem:[%s165 + $0x7d0] sm:$0xff]
      %v422 = vld [vmem:[%s165 + $0x7d8] sm:$0xff]
      %v423 = vld [vmem:[%s165 + $0x7e0] sm:$0xff]
      %v424 = vld [vmem:[%s165 + $0x7e8] sm:$0xff]
      %v425 = vld [vmem:[%s165 + $0x7f0] sm:$0xff]
      %v426 = vld [vmem:[%s165 + $0x7f8] sm:$0xff]
      %v427 = vld [vmem:[%s165 + $0x800] sm:$0x3f]
      %v428 = vld [vmem:[%s2] sm:$0x1]
      %v429 = vld [vmem:[%s1] sm:$0xf]
      %v430 = vunpack.c.l.bf16 %v429
      %v432 = vlaneseq
      %v433 = vshrl.u32 %v432, 7
      %v434 = vsub.s32 0, %v433
      %v435 = vrot.slane %v428, %v434
      %438 = vset.pattern.permute.xlu0 0
      %439 = vperm.xlu0 %438, %v171
      %v440 = vpop.permute.xlu0 %439
      %443 = vset.pattern.permute.xlu0 0
      %444 = vperm.xlu0 %443, %v172
      %v445 = vpop.permute.xlu0 %444
      %448 = vset.pattern.permute.xlu0 0
      %449 = vperm.xlu0 %448, %v173
      %v450 = vpop.permute.xlu0 %449
      %453 = vset.pattern.permute.xlu0 0
      %454 = vperm.xlu0 %453, %v174
      %v455 = vpop.permute.xlu0 %454
      %458 = vset.pattern.permute.xlu0 0
      %459 = vperm.xlu0 %458, %v175
      %v460 = vpop.permute.xlu0 %459
      %463 = vset.pattern.permute.xlu0 0
      %464 = vperm.xlu0 %463, %v176
      %v465 = vpop.permute.xlu0 %464
      %468 = vset.pattern.permute.xlu0 0
      %469 = vperm.xlu0 %468, %v177
      %v470 = vpop.permute.xlu0 %469
      %473 = vset.pattern.permute.xlu0 0
      %474 = vperm.xlu0 %473, %v178
      %v475 = vpop.permute.xlu0 %474
      %478 = vset.pattern.permute.xlu0 0
      %479 = vperm.xlu0 %478, %v179
      %v480 = vpop.permute.xlu0 %479
      %483 = vset.pattern.permute.xlu0 0
      %484 = vperm.xlu0 %483, %v180
      %v485 = vpop.permute.xlu0 %484
      %488 = vset.pattern.permute.xlu0 0
      %489 = vperm.xlu0 %488, %v181
      %v490 = vpop.permute.xlu0 %489
      %493 = vset.pattern.permute.xlu0 0
      %494 = vperm.xlu0 %493, %v182
      %v495 = vpop.permute.xlu0 %494
      %498 = vset.pattern.permute.xlu0 0
      %499 = vperm.xlu0 %498, %v183
      %v500 = vpop.permute.xlu0 %499
      %503 = vset.pattern.permute.xlu0 0
      %504 = vperm.xlu0 %503, %v184
      %v505 = vpop.permute.xlu0 %504
      %508 = vset.pattern.permute.xlu0 0
      %509 = vperm.xlu0 %508, %v185
      %v510 = vpop.permute.xlu0 %509
      %513 = vset.pattern.permute.xlu0 0
      %514 = vperm.xlu0 %513, %v186
      %v515 = vpop.permute.xlu0 %514
      %518 = vset.pattern.permute.xlu0 0
      %519 = vperm.xlu0 %518, %v187
      %v520 = vpop.permute.xlu0 %519
      %523 = vset.pattern.permute.xlu0 0
      %524 = vperm.xlu0 %523, %v188
      %v525 = vpop.permute.xlu0 %524
      %528 = vset.pattern.permute.xlu0 0
      %529 = vperm.xlu0 %528, %v189
      %v530 = vpop.permute.xlu0 %529
      %533 = vset.pattern.permute.xlu0 0
      %534 = vperm.xlu0 %533, %v190
      %v535 = vpop.permute.xlu0 %534
      %538 = vset.pattern.permute.xlu0 0
      %539 = vperm.xlu0 %538, %v191
      %v540 = vpop.permute.xlu0 %539
      %543 = vset.pattern.permute.xlu0 0
      %544 = vperm.xlu0 %543, %v192
      %v545 = vpop.permute.xlu0 %544
      %548 = vset.pattern.permute.xlu0 0
      %549 = vperm.xlu0 %548, %v193
      %v550 = vpop.permute.xlu0 %549
      %553 = vset.pattern.permute.xlu0 0
      %554 = vperm.xlu0 %553, %v194
      %v555 = vpop.permute.xlu0 %554
      %558 = vset.pattern.permute.xlu0 0
      %559 = vperm.xlu0 %558, %v195
      %v560 = vpop.permute.xlu0 %559
      %563 = vset.pattern.permute.xlu0 0
      %564 = vperm.xlu0 %563, %v196
      %v565 = vpop.permute.xlu0 %564
      %568 = vset.pattern.permute.xlu0 0
      %569 = vperm.xlu0 %568, %v197
      %v570 = vpop.permute.xlu0 %569
      %573 = vset.pattern.permute.xlu0 0
      %574 = vperm.xlu0 %573, %v198
      %v575 = vpop.permute.xlu0 %574
      %578 = vset.pattern.permute.xlu0 0
      %579 = vperm.xlu0 %578, %v199
      %v580 = vpop.permute.xlu0 %579
      %583 = vset.pattern.permute.xlu0 0
      %584 = vperm.xlu0 %583, %v200
      %v585 = vpop.permute.xlu0 %584
      %588 = vset.pattern.permute.xlu0 0
      %589 = vperm.xlu0 %588, %v201
      %v590 = vpop.permute.xlu0 %589
      %593 = vset.pattern.permute.xlu0 0
      %594 = vperm.xlu0 %593, %v202
      %v595 = vpop.permute.xlu0 %594
      %598 = vset.pattern.permute.xlu0 0
      %599 = vperm.xlu0 %598, %v203
      %v600 = vpop.permute.xlu0 %599
      %603 = vset.pattern.permute.xlu0 0
      %604 = vperm.xlu0 %603, %v204
      %v605 = vpop.permute.xlu0 %604
      %608 = vset.pattern.permute.xlu0 0
      %609 = vperm.xlu0 %608, %v205
      %v610 = vpop.permute.xlu0 %609
      %613 = vset.pattern.permute.xlu0 0
      %614 = vperm.xlu0 %613, %v206
      %v615 = vpop.permute.xlu0 %614
      %618 = vset.pattern.permute.xlu0 0
      %619 = vperm.xlu0 %618, %v207
      %v620 = vpop.permute.xlu0 %619
      %623 = vset.pattern.permute.xlu0 0
      %624 = vperm.xlu0 %623, %v208
      %v625 = vpop.permute.xlu0 %624
      %628 = vset.pattern.permute.xlu0 0
      %629 = vperm.xlu0 %628, %v209
      %v630 = vpop.permute.xlu0 %629
      %633 = vset.pattern.permute.xlu0 0
      %634 = vperm.xlu0 %633, %v210
      %v635 = vpop.permute.xlu0 %634
      %638 = vset.pattern.permute.xlu0 0
      %639 = vperm.xlu0 %638, %v211
      %v640 = vpop.permute.xlu0 %639
      %643 = vset.pattern.permute.xlu0 0
      %644 = vperm.xlu0 %643, %v212
      %v645 = vpop.permute.xlu0 %644
      %648 = vset.pattern.permute.xlu0 0
      %649 = vperm.xlu0 %648, %v213
      %v650 = vpop.permute.xlu0 %649
      %653 = vset.pattern.permute.xlu0 0
      %654 = vperm.xlu0 %653, %v214
      %v655 = vpop.permute.xlu0 %654
      %658 = vset.pattern.permute.xlu0 0
      %659 = vperm.xlu0 %658, %v215
      %v660 = vpop.permute.xlu0 %659
      %663 = vset.pattern.permute.xlu0 0
      %664 = vperm.xlu0 %663, %v216
      %v665 = vpop.permute.xlu0 %664
      %668 = vset.pattern.permute.xlu0 0
      %669 = vperm.xlu0 %668, %v217
      %v670 = vpop.permute.xlu0 %669
      %673 = vset.pattern.permute.xlu0 0
      %674 = vperm.xlu0 %673, %v218
      %v675 = vpop.permute.xlu0 %674
      %678 = vset.pattern.permute.xlu0 0
      %679 = vperm.xlu0 %678, %v219
      %v680 = vpop.permute.xlu0 %679
      %683 = vset.pattern.permute.xlu0 0
      %684 = vperm.xlu0 %683, %v220
      %v685 = vpop.permute.xlu0 %684
      %688 = vset.pattern.permute.xlu0 0
      %689 = vperm.xlu0 %688, %v221
      %v690 = vpop.permute.xlu0 %689
      %693 = vset.pattern.permute.xlu0 0
      %694 = vperm.xlu0 %693, %v222
      %v695 = vpop.permute.xlu0 %694
      %698 = vset.pattern.permute.xlu0 0
      %699 = vperm.xlu0 %698, %v223
      %v700 = vpop.permute.xlu0 %699
      %703 = vset.pattern.permute.xlu0 0
      %704 = vperm.xlu0 %703, %v224
      %v705 = vpop.permute.xlu0 %704
      %708 = vset.pattern.permute.xlu0 0
      %709 = vperm.xlu0 %708, %v225
      %v710 = vpop.permute.xlu0 %709
      %713 = vset.pattern.permute.xlu0 0
      %714 = vperm.xlu0 %713, %v226
      %v715 = vpop.permute.xlu0 %714
      %718 = vset.pattern.permute.xlu0 0
      %719 = vperm.xlu0 %718, %v227
      %v720 = vpop.permute.xlu0 %719
      %723 = vset.pattern.permute.xlu0 0
      %724 = vperm.xlu0 %723, %v228
      %v725 = vpop.permute.xlu0 %724
      %728 = vset.pattern.permute.xlu0 0
      %729 = vperm.xlu0 %728, %v229
      %v730 = vpop.permute.xlu0 %729
      %733 = vset.pattern.permute.xlu0 0
      %734 = vperm.xlu0 %733, %v230
      %v735 = vpop.permute.xlu0 %734
      %738 = vset.pattern.permute.xlu0 0
      %739 = vperm.xlu0 %738, %v231
      %v740 = vpop.permute.xlu0 %739
      %743 = vset.pattern.permute.xlu0 0
      %744 = vperm.xlu0 %743, %v232
      %v745 = vpop.permute.xlu0 %744
      %748 = vset.pattern.permute.xlu0 0
      %749 = vperm.xlu0 %748, %v233
      %v750 = vpop.permute.xlu0 %749
      %753 = vset.pattern.permute.xlu0 0
      %754 = vperm.xlu0 %753, %v234
      %v755 = vpop.permute.xlu0 %754
      %758 = vset.pattern.permute.xlu0 0
      %759 = vperm.xlu0 %758, %v235
      %v760 = vpop.permute.xlu0 %759
      %763 = vset.pattern.permute.xlu0 0
      %764 = vperm.xlu0 %763, %v236
      %v765 = vpop.permute.xlu0 %764
      %768 = vset.pattern.permute.xlu0 0
      %769 = vperm.xlu0 %768, %v237
      %v770 = vpop.permute.xlu0 %769
      %773 = vset.pattern.permute.xlu0 0
      %774 = vperm.xlu0 %773, %v238
      %v775 = vpop.permute.xlu0 %774
      %778 = vset.pattern.permute.xlu0 0
      %779 = vperm.xlu0 %778, %v239
      %v780 = vpop.permute.xlu0 %779
      %783 = vset.pattern.permute.xlu0 0
      %784 = vperm.xlu0 %783, %v240
      %v785 = vpop.permute.xlu0 %784
      %788 = vset.pattern.permute.xlu0 0
      %789 = vperm.xlu0 %788, %v241
      %v790 = vpop.permute.xlu0 %789
      %793 = vset.pattern.permute.xlu0 0
      %794 = vperm.xlu0 %793, %v242
      %v795 = vpop.permute.xlu0 %794
      %798 = vset.pattern.permute.xlu0 0
      %799 = vperm.xlu0 %798, %v243
      %v800 = vpop.permute.xlu0 %799
      %803 = vset.pattern.permute.xlu0 0
      %804 = vperm.xlu0 %803, %v244
      %v805 = vpop.permute.xlu0 %804
      %808 = vset.pattern.permute.xlu0 0
      %809 = vperm.xlu0 %808, %v245
      %v810 = vpop.permute.xlu0 %809
      %813 = vset.pattern.permute.xlu0 0
      %814 = vperm.xlu0 %813, %v246
      %v815 = vpop.permute.xlu0 %814
      %818 = vset.pattern.permute.xlu0 0
      %819 = vperm.xlu0 %818, %v247
      %v820 = vpop.permute.xlu0 %819
      %823 = vset.pattern.permute.xlu0 0
      %824 = vperm.xlu0 %823, %v248
      %v825 = vpop.permute.xlu0 %824
      %828 = vset.pattern.permute.xlu0 0
      %829 = vperm.xlu0 %828, %v249
      %v830 = vpop.permute.xlu0 %829
      %833 = vset.pattern.permute.xlu0 0
      %834 = vperm.xlu0 %833, %v250
      %v835 = vpop.permute.xlu0 %834
      %838 = vset.pattern.permute.xlu0 0
      %839 = vperm.xlu0 %838, %v251
      %v840 = vpop.permute.xlu0 %839
      %843 = vset.pattern.permute.xlu0 0
      %844 = vperm.xlu0 %843, %v252
      %v845 = vpop.permute.xlu0 %844
      %848 = vset.pattern.permute.xlu0 0
      %849 = vperm.xlu0 %848, %v253
      %v850 = vpop.permute.xlu0 %849
      %853 = vset.pattern.permute.xlu0 0
      %854 = vperm.xlu0 %853, %v254
      %v855 = vpop.permute.xlu0 %854
      %858 = vset.pattern.permute.xlu0 0
      %859 = vperm.xlu0 %858, %v255
      %v860 = vpop.permute.xlu0 %859
      %863 = vset.pattern.permute.xlu0 0
      %864 = vperm.xlu0 %863, %v256
      %v865 = vpop.permute.xlu0 %864
      %868 = vset.pattern.permute.xlu0 0
      %869 = vperm.xlu0 %868, %v257
      %v870 = vpop.permute.xlu0 %869
      %873 = vset.pattern.permute.xlu0 0
      %874 = vperm.xlu0 %873, %v258
      %v875 = vpop.permute.xlu0 %874
      %878 = vset.pattern.permute.xlu0 0
      %879 = vperm.xlu0 %878, %v259
      %v880 = vpop.permute.xlu0 %879
      %883 = vset.pattern.permute.xlu0 0
      %884 = vperm.xlu0 %883, %v260
      %v885 = vpop.permute.xlu0 %884
      %888 = vset.pattern.permute.xlu0 0
      %889 = vperm.xlu0 %888, %v261
      %v890 = vpop.permute.xlu0 %889
      %893 = vset.pattern.permute.xlu0 0
      %894 = vperm.xlu0 %893, %v262
      %v895 = vpop.permute.xlu0 %894
      %898 = vset.pattern.permute.xlu0 0
      %899 = vperm.xlu0 %898, %v263
      %v900 = vpop.permute.xlu0 %899
      %903 = vset.pattern.permute.xlu0 0
      %904 = vperm.xlu0 %903, %v264
      %v905 = vpop.permute.xlu0 %904
      %908 = vset.pattern.permute.xlu0 0
      %909 = vperm.xlu0 %908, %v265
      %v910 = vpop.permute.xlu0 %909
      %913 = vset.pattern.permute.xlu0 0
      %914 = vperm.xlu0 %913, %v266
      %v915 = vpop.permute.xlu0 %914
      %918 = vset.pattern.permute.xlu0 0
      %919 = vperm.xlu0 %918, %v267
      %v920 = vpop.permute.xlu0 %919
      %923 = vset.pattern.permute.xlu0 0
      %924 = vperm.xlu0 %923, %v268
      %v925 = vpop.permute.xlu0 %924
      %928 = vset.pattern.permute.xlu0 0
      %929 = vperm.xlu0 %928, %v269
      %v930 = vpop.permute.xlu0 %929
      %933 = vset.pattern.permute.xlu0 0
      %934 = vperm.xlu0 %933, %v270
      %v935 = vpop.permute.xlu0 %934
      %938 = vset.pattern.permute.xlu0 0
      %939 = vperm.xlu0 %938, %v271
      %v940 = vpop.permute.xlu0 %939
      %943 = vset.pattern.permute.xlu0 0
      %944 = vperm.xlu0 %943, %v272
      %v945 = vpop.permute.xlu0 %944
      %948 = vset.pattern.permute.xlu0 0
      %949 = vperm.xlu0 %948, %v273
      %v950 = vpop.permute.xlu0 %949
      %953 = vset.pattern.permute.xlu0 0
      %954 = vperm.xlu0 %953, %v274
      %v955 = vpop.permute.xlu0 %954
      %958 = vset.pattern.permute.xlu0 0
      %959 = vperm.xlu0 %958, %v275
      %v960 = vpop.permute.xlu0 %959
      %963 = vset.pattern.permute.xlu0 0
      %964 = vperm.xlu0 %963, %v276
      %v965 = vpop.permute.xlu0 %964
      %968 = vset.pattern.permute.xlu0 0
      %969 = vperm.xlu0 %968, %v277
      %v970 = vpop.permute.xlu0 %969
      %973 = vset.pattern.permute.xlu0 0
      %974 = vperm.xlu0 %973, %v278
      %v975 = vpop.permute.xlu0 %974
      %978 = vset.pattern.permute.xlu0 0
      %979 = vperm.xlu0 %978, %v279
      %v980 = vpop.permute.xlu0 %979
      %983 = vset.pattern.permute.xlu0 0
      %984 = vperm.xlu0 %983, %v280
      %v985 = vpop.permute.xlu0 %984
      %988 = vset.pattern.permute.xlu0 0
      %989 = vperm.xlu0 %988, %v281
      %v990 = vpop.permute.xlu0 %989
      %993 = vset.pattern.permute.xlu0 0
      %994 = vperm.xlu0 %993, %v282
      %v995 = vpop.permute.xlu0 %994
      %998 = vset.pattern.permute.xlu0 0
      %999 = vperm.xlu0 %998, %v283
      %v1000 = vpop.permute.xlu0 %999
      %1003 = vset.pattern.permute.xlu0 0
      %1004 = vperm.xlu0 %1003, %v284
      %v1005 = vpop.permute.xlu0 %1004
      %1008 = vset.pattern.permute.xlu0 0
      %1009 = vperm.xlu0 %1008, %v285
      %v1010 = vpop.permute.xlu0 %1009
      %1013 = vset.pattern.permute.xlu0 0
      %1014 = vperm.xlu0 %1013, %v286
      %v1015 = vpop.permute.xlu0 %1014
      %1018 = vset.pattern.permute.xlu0 0
      %1019 = vperm.xlu0 %1018, %v287
      %v1020 = vpop.permute.xlu0 %1019
      %1023 = vset.pattern.permute.xlu0 0
      %1024 = vperm.xlu0 %1023, %v288
      %v1025 = vpop.permute.xlu0 %1024
      %1028 = vset.pattern.permute.xlu0 0
      %1029 = vperm.xlu0 %1028, %v289
      %v1030 = vpop.permute.xlu0 %1029
      %1033 = vset.pattern.permute.xlu0 0
      %1034 = vperm.xlu0 %1033, %v290
      %v1035 = vpop.permute.xlu0 %1034
      %1038 = vset.pattern.permute.xlu0 0
      %1039 = vperm.xlu0 %1038, %v291
      %v1040 = vpop.permute.xlu0 %1039
      %1043 = vset.pattern.permute.xlu0 0
      %1044 = vperm.xlu0 %1043, %v292
      %v1045 = vpop.permute.xlu0 %1044
      %1048 = vset.pattern.permute.xlu0 0
      %1049 = vperm.xlu0 %1048, %v293
      %v1050 = vpop.permute.xlu0 %1049
      %1053 = vset.pattern.permute.xlu0 0
      %1054 = vperm.xlu0 %1053, %v294
      %v1055 = vpop.permute.xlu0 %1054
      %1058 = vset.pattern.permute.xlu0 0
      %1059 = vperm.xlu0 %1058, %v295
      %v1060 = vpop.permute.xlu0 %1059
      %1063 = vset.pattern.permute.xlu0 0
      %1064 = vperm.xlu0 %1063, %v296
      %v1065 = vpop.permute.xlu0 %1064
      %1068 = vset.pattern.permute.xlu0 0
      %1069 = vperm.xlu0 %1068, %v297
      %v1070 = vpop.permute.xlu0 %1069
      %1073 = vset.pattern.permute.xlu0 0
      %1074 = vperm.xlu0 %1073, %v298
      %v1075 = vpop.permute.xlu0 %1074
      %1078 = vset.pattern.permute.xlu0 0
      %1079 = vperm.xlu0 %1078, %v299
      %v1080 = vpop.permute.xlu0 %1079
      %1083 = vset.pattern.permute.xlu0 0
      %1084 = vperm.xlu0 %1083, %v300
      %v1085 = vpop.permute.xlu0 %1084
      %1088 = vset.pattern.permute.xlu0 0
      %1089 = vperm.xlu0 %1088, %v301
      %v1090 = vpop.permute.xlu0 %1089
      %1093 = vset.pattern.permute.xlu0 0
      %1094 = vperm.xlu0 %1093, %v302
      %v1095 = vpop.permute.xlu0 %1094
      %1098 = vset.pattern.permute.xlu0 0
      %1099 = vperm.xlu0 %1098, %v303
      %v1100 = vpop.permute.xlu0 %1099
      %1103 = vset.pattern.permute.xlu0 0
      %1104 = vperm.xlu0 %1103, %v304
      %v1105 = vpop.permute.xlu0 %1104
      %1108 = vset.pattern.permute.xlu0 0
      %1109 = vperm.xlu0 %1108, %v305
      %v1110 = vpop.permute.xlu0 %1109
      %1113 = vset.pattern.permute.xlu0 0
      %1114 = vperm.xlu0 %1113, %v306
      %v1115 = vpop.permute.xlu0 %1114
      %1118 = vset.pattern.permute.xlu0 0
      %1119 = vperm.xlu0 %1118, %v307
      %v1120 = vpop.permute.xlu0 %1119
      %1123 = vset.pattern.permute.xlu0 0
      %1124 = vperm.xlu0 %1123, %v308
      %v1125 = vpop.permute.xlu0 %1124
      %1128 = vset.pattern.permute.xlu0 0
      %1129 = vperm.xlu0 %1128, %v309
      %v1130 = vpop.permute.xlu0 %1129
      %1133 = vset.pattern.permute.xlu0 0
      %1134 = vperm.xlu0 %1133, %v310
      %v1135 = vpop.permute.xlu0 %1134
      %1138 = vset.pattern.permute.xlu0 0
      %1139 = vperm.xlu0 %1138, %v311
      %v1140 = vpop.permute.xlu0 %1139
      %1143 = vset.pattern.permute.xlu0 0
      %1144 = vperm.xlu0 %1143, %v312
      %v1145 = vpop.permute.xlu0 %1144
      %1148 = vset.pattern.permute.xlu0 0
      %1149 = vperm.xlu0 %1148, %v313
      %v1150 = vpop.permute.xlu0 %1149
      %1153 = vset.pattern.permute.xlu0 0
      %1154 = vperm.xlu0 %1153, %v314
      %v1155 = vpop.permute.xlu0 %1154
      %1158 = vset.pattern.permute.xlu0 0
      %1159 = vperm.xlu0 %1158, %v315
      %v1160 = vpop.permute.xlu0 %1159
      %1163 = vset.pattern.permute.xlu0 0
      %1164 = vperm.xlu0 %1163, %v316
      %v1165 = vpop.permute.xlu0 %1164
      %1168 = vset.pattern.permute.xlu0 0
      %1169 = vperm.xlu0 %1168, %v317
      %v1170 = vpop.permute.xlu0 %1169
      %1173 = vset.pattern.permute.xlu0 0
      %1174 = vperm.xlu0 %1173, %v318
      %v1175 = vpop.permute.xlu0 %1174
      %1178 = vset.pattern.permute.xlu0 0
      %1179 = vperm.xlu0 %1178, %v319
      %v1180 = vpop.permute.xlu0 %1179
      %1183 = vset.pattern.permute.xlu0 0
      %1184 = vperm.xlu0 %1183, %v320
      %v1185 = vpop.permute.xlu0 %1184
      %1188 = vset.pattern.permute.xlu0 0
      %1189 = vperm.xlu0 %1188, %v321
      %v1190 = vpop.permute.xlu0 %1189
      %1193 = vset.pattern.permute.xlu0 0
      %1194 = vperm.xlu0 %1193, %v322
      %v1195 = vpop.permute.xlu0 %1194
      %1198 = vset.pattern.permute.xlu0 0
      %1199 = vperm.xlu0 %1198, %v323
      %v1200 = vpop.permute.xlu0 %1199
      %1203 = vset.pattern.permute.xlu0 0
      %1204 = vperm.xlu0 %1203, %v324
      %v1205 = vpop.permute.xlu0 %1204
      %1208 = vset.pattern.permute.xlu0 0
      %1209 = vperm.xlu0 %1208, %v325
      %v1210 = vpop.permute.xlu0 %1209
      %1213 = vset.pattern.permute.xlu0 0
      %1214 = vperm.xlu0 %1213, %v326
      %v1215 = vpop.permute.xlu0 %1214
      %1218 = vset.pattern.permute.xlu0 0
      %1219 = vperm.xlu0 %1218, %v327
      %v1220 = vpop.permute.xlu0 %1219
      %1223 = vset.pattern.permute.xlu0 0
      %1224 = vperm.xlu0 %1223, %v328
      %v1225 = vpop.permute.xlu0 %1224
      %1228 = vset.pattern.permute.xlu0 0
      %1229 = vperm.xlu0 %1228, %v329
      %v1230 = vpop.permute.xlu0 %1229
      %1233 = vset.pattern.permute.xlu0 0
      %1234 = vperm.xlu0 %1233, %v330
      %v1235 = vpop.permute.xlu0 %1234
      %1238 = vset.pattern.permute.xlu0 0
      %1239 = vperm.xlu0 %1238, %v331
      %v1240 = vpop.permute.xlu0 %1239
      %1243 = vset.pattern.permute.xlu0 0
      %1244 = vperm.xlu0 %1243, %v332
      %v1245 = vpop.permute.xlu0 %1244
      %1248 = vset.pattern.permute.xlu0 0
      %1249 = vperm.xlu0 %1248, %v333
      %v1250 = vpop.permute.xlu0 %1249
      %1253 = vset.pattern.permute.xlu0 0
      %1254 = vperm.xlu0 %1253, %v334
      %v1255 = vpop.permute.xlu0 %1254
      %1258 = vset.pattern.permute.xlu0 0
      %1259 = vperm.xlu0 %1258, %v335
      %v1260 = vpop.permute.xlu0 %1259
      %1263 = vset.pattern.permute.xlu0 0
      %1264 = vperm.xlu0 %1263, %v336
      %v1265 = vpop.permute.xlu0 %1264
      %1268 = vset.pattern.permute.xlu0 0
      %1269 = vperm.xlu0 %1268, %v337
      %v1270 = vpop.permute.xlu0 %1269
      %1273 = vset.pattern.permute.xlu0 0
      %1274 = vperm.xlu0 %1273, %v338
      %v1275 = vpop.permute.xlu0 %1274
      %1278 = vset.pattern.permute.xlu0 0
      %1279 = vperm.xlu0 %1278, %v339
      %v1280 = vpop.permute.xlu0 %1279
      %1283 = vset.pattern.permute.xlu0 0
      %1284 = vperm.xlu0 %1283, %v340
      %v1285 = vpop.permute.xlu0 %1284
      %1288 = vset.pattern.permute.xlu0 0
      %1289 = vperm.xlu0 %1288, %v341
      %v1290 = vpop.permute.xlu0 %1289
      %1293 = vset.pattern.permute.xlu0 0
      %1294 = vperm.xlu0 %1293, %v342
      %v1295 = vpop.permute.xlu0 %1294
      %1298 = vset.pattern.permute.xlu0 0
      %1299 = vperm.xlu0 %1298, %v343
      %v1300 = vpop.permute.xlu0 %1299
      %1303 = vset.pattern.permute.xlu0 0
      %1304 = vperm.xlu0 %1303, %v344
      %v1305 = vpop.permute.xlu0 %1304
      %1308 = vset.pattern.permute.xlu0 0
      %1309 = vperm.xlu0 %1308, %v345
      %v1310 = vpop.permute.xlu0 %1309
      %1313 = vset.pattern.permute.xlu0 0
      %1314 = vperm.xlu0 %1313, %v346
      %v1315 = vpop.permute.xlu0 %1314
      %1318 = vset.pattern.permute.xlu0 0
      %1319 = vperm.xlu0 %1318, %v347
      %v1320 = vpop.permute.xlu0 %1319
      %1323 = vset.pattern.permute.xlu0 0
      %1324 = vperm.xlu0 %1323, %v348
      %v1325 = vpop.permute.xlu0 %1324
      %1328 = vset.pattern.permute.xlu0 0
      %1329 = vperm.xlu0 %1328, %v349
      %v1330 = vpop.permute.xlu0 %1329
      %1333 = vset.pattern.permute.xlu0 0
      %1334 = vperm.xlu0 %1333, %v350
      %v1335 = vpop.permute.xlu0 %1334
      %1338 = vset.pattern.permute.xlu0 0
      %1339 = vperm.xlu0 %1338, %v351
      %v1340 = vpop.permute.xlu0 %1339
      %1343 = vset.pattern.permute.xlu0 0
      %1344 = vperm.xlu0 %1343, %v352
      %v1345 = vpop.permute.xlu0 %1344
      %1348 = vset.pattern.permute.xlu0 0
      %1349 = vperm.xlu0 %1348, %v353
      %v1350 = vpop.permute.xlu0 %1349
      %1353 = vset.pattern.permute.xlu0 0
      %1354 = vperm.xlu0 %1353, %v354
      %v1355 = vpop.permute.xlu0 %1354
      %1358 = vset.pattern.permute.xlu0 0
      %1359 = vperm.xlu0 %1358, %v355
      %v1360 = vpop.permute.xlu0 %1359
      %1363 = vset.pattern.permute.xlu0 0
      %1364 = vperm.xlu0 %1363, %v356
      %v1365 = vpop.permute.xlu0 %1364
      %1368 = vset.pattern.permute.xlu0 0
      %1369 = vperm.xlu0 %1368, %v357
      %v1370 = vpop.permute.xlu0 %1369
      %1373 = vset.pattern.permute.xlu0 0
      %1374 = vperm.xlu0 %1373, %v358
      %v1375 = vpop.permute.xlu0 %1374
      %1378 = vset.pattern.permute.xlu0 0
      %1379 = vperm.xlu0 %1378, %v359
      %v1380 = vpop.permute.xlu0 %1379
      %1383 = vset.pattern.permute.xlu0 0
      %1384 = vperm.xlu0 %1383, %v360
      %v1385 = vpop.permute.xlu0 %1384
      %1388 = vset.pattern.permute.xlu0 0
      %1389 = vperm.xlu0 %1388, %v361
      %v1390 = vpop.permute.xlu0 %1389
      %1393 = vset.pattern.permute.xlu0 0
      %1394 = vperm.xlu0 %1393, %v362
      %v1395 = vpop.permute.xlu0 %1394
      %1398 = vset.pattern.permute.xlu0 0
      %1399 = vperm.xlu0 %1398, %v363
      %v1400 = vpop.permute.xlu0 %1399
      %1403 = vset.pattern.permute.xlu0 0
      %1404 = vperm.xlu0 %1403, %v364
      %v1405 = vpop.permute.xlu0 %1404
      %1408 = vset.pattern.permute.xlu0 0
      %1409 = vperm.xlu0 %1408, %v365
      %v1410 = vpop.permute.xlu0 %1409
      %1413 = vset.pattern.permute.xlu0 0
      %1414 = vperm.xlu0 %1413, %v366
      %v1415 = vpop.permute.xlu0 %1414
      %1418 = vset.pattern.permute.xlu0 0
      %1419 = vperm.xlu0 %1418, %v367
      %v1420 = vpop.permute.xlu0 %1419
      %1423 = vset.pattern.permute.xlu0 0
      %1424 = vperm.xlu0 %1423, %v368
      %v1425 = vpop.permute.xlu0 %1424
      %1428 = vset.pattern.permute.xlu0 0
      %1429 = vperm.xlu0 %1428, %v369
      %v1430 = vpop.permute.xlu0 %1429
      %1433 = vset.pattern.permute.xlu0 0
      %1434 = vperm.xlu0 %1433, %v370
      %v1435 = vpop.permute.xlu0 %1434
      %1438 = vset.pattern.permute.xlu0 0
      %1439 = vperm.xlu0 %1438, %v371
      %v1440 = vpop.permute.xlu0 %1439
      %1443 = vset.pattern.permute.xlu0 0
      %1444 = vperm.xlu0 %1443, %v372
      %v1445 = vpop.permute.xlu0 %1444
      %1448 = vset.pattern.permute.xlu0 0
      %1449 = vperm.xlu0 %1448, %v373
      %v1450 = vpop.permute.xlu0 %1449
      %1453 = vset.pattern.permute.xlu0 0
      %1454 = vperm.xlu0 %1453, %v374
      %v1455 = vpop.permute.xlu0 %1454
      %1458 = vset.pattern.permute.xlu0 0
      %1459 = vperm.xlu0 %1458, %v375
      %v1460 = vpop.permute.xlu0 %1459
      %1463 = vset.pattern.permute.xlu0 0
      %1464 = vperm.xlu0 %1463, %v376
      %v1465 = vpop.permute.xlu0 %1464
      %1468 = vset.pattern.permute.xlu0 0
      %1469 = vperm.xlu0 %1468, %v377
      %v1470 = vpop.permute.xlu0 %1469
      %1473 = vset.pattern.permute.xlu0 0
      %1474 = vperm.xlu0 %1473, %v378
      %v1475 = vpop.permute.xlu0 %1474
      %1478 = vset.pattern.permute.xlu0 0
      %1479 = vperm.xlu0 %1478, %v379
      %v1480 = vpop.permute.xlu0 %1479
      %1483 = vset.pattern.permute.xlu0 0
      %1484 = vperm.xlu0 %1483, %v380
      %v1485 = vpop.permute.xlu0 %1484
      %1488 = vset.pattern.permute.xlu0 0
      %1489 = vperm.xlu0 %1488, %v381
      %v1490 = vpop.permute.xlu0 %1489
      %1493 = vset.pattern.permute.xlu0 0
      %1494 = vperm.xlu0 %1493, %v382
      %v1495 = vpop.permute.xlu0 %1494
      %1498 = vset.pattern.permute.xlu0 0
      %1499 = vperm.xlu0 %1498, %v383
      %v1500 = vpop.permute.xlu0 %1499
      %1503 = vset.pattern.permute.xlu0 0
      %1504 = vperm.xlu0 %1503, %v384
      %v1505 = vpop.permute.xlu0 %1504
      %1508 = vset.pattern.permute.xlu0 0
      %1509 = vperm.xlu0 %1508, %v385
      %v1510 = vpop.permute.xlu0 %1509
      %1513 = vset.pattern.permute.xlu0 0
      %1514 = vperm.xlu0 %1513, %v386
      %v1515 = vpop.permute.xlu0 %1514
      %1518 = vset.pattern.permute.xlu0 0
      %1519 = vperm.xlu0 %1518, %v387
      %v1520 = vpop.permute.xlu0 %1519
      %1523 = vset.pattern.permute.xlu0 0
      %1524 = vperm.xlu0 %1523, %v388
      %v1525 = vpop.permute.xlu0 %1524
      %1528 = vset.pattern.permute.xlu0 0
      %1529 = vperm.xlu0 %1528, %v389
      %v1530 = vpop.permute.xlu0 %1529
      %1533 = vset.pattern.permute.xlu0 0
      %1534 = vperm.xlu0 %1533, %v390
      %v1535 = vpop.permute.xlu0 %1534
      %1538 = vset.pattern.permute.xlu0 0
      %1539 = vperm.xlu0 %1538, %v391
      %v1540 = vpop.permute.xlu0 %1539
      %1543 = vset.pattern.permute.xlu0 0
      %1544 = vperm.xlu0 %1543, %v392
      %v1545 = vpop.permute.xlu0 %1544
      %1548 = vset.pattern.permute.xlu0 0
      %1549 = vperm.xlu0 %1548, %v393
      %v1550 = vpop.permute.xlu0 %1549
      %1553 = vset.pattern.permute.xlu0 0
      %1554 = vperm.xlu0 %1553, %v394
      %v1555 = vpop.permute.xlu0 %1554
      %1558 = vset.pattern.permute.xlu0 0
      %1559 = vperm.xlu0 %1558, %v395
      %v1560 = vpop.permute.xlu0 %1559
      %1563 = vset.pattern.permute.xlu0 0
      %1564 = vperm.xlu0 %1563, %v396
      %v1565 = vpop.permute.xlu0 %1564
      %1568 = vset.pattern.permute.xlu0 0
      %1569 = vperm.xlu0 %1568, %v397
      %v1570 = vpop.permute.xlu0 %1569
      %1573 = vset.pattern.permute.xlu0 0
      %1574 = vperm.xlu0 %1573, %v398
      %v1575 = vpop.permute.xlu0 %1574
      %1578 = vset.pattern.permute.xlu0 0
      %1579 = vperm.xlu0 %1578, %v399
      %v1580 = vpop.permute.xlu0 %1579
      %1583 = vset.pattern.permute.xlu0 0
      %1584 = vperm.xlu0 %1583, %v400
      %v1585 = vpop.permute.xlu0 %1584
      %1588 = vset.pattern.permute.xlu0 0
      %1589 = vperm.xlu0 %1588, %v401
      %v1590 = vpop.permute.xlu0 %1589
      %1593 = vset.pattern.permute.xlu0 0
      %1594 = vperm.xlu0 %1593, %v402
      %v1595 = vpop.permute.xlu0 %1594
      %1598 = vset.pattern.permute.xlu0 0
      %1599 = vperm.xlu0 %1598, %v403
      %v1600 = vpop.permute.xlu0 %1599
      %1603 = vset.pattern.permute.xlu0 0
      %1604 = vperm.xlu0 %1603, %v404
      %v1605 = vpop.permute.xlu0 %1604
      %1608 = vset.pattern.permute.xlu0 0
      %1609 = vperm.xlu0 %1608, %v405
      %v1610 = vpop.permute.xlu0 %1609
      %1613 = vset.pattern.permute.xlu0 0
      %1614 = vperm.xlu0 %1613, %v406
      %v1615 = vpop.permute.xlu0 %1614
      %1618 = vset.pattern.permute.xlu0 0
      %1619 = vperm.xlu0 %1618, %v407
      %v1620 = vpop.permute.xlu0 %1619
      %1623 = vset.pattern.permute.xlu0 0
      %1624 = vperm.xlu0 %1623, %v408
      %v1625 = vpop.permute.xlu0 %1624
      %1628 = vset.pattern.permute.xlu0 0
      %1629 = vperm.xlu0 %1628, %v409
      %v1630 = vpop.permute.xlu0 %1629
      %1633 = vset.pattern.permute.xlu0 0
      %1634 = vperm.xlu0 %1633, %v410
      %v1635 = vpop.permute.xlu0 %1634
      %1638 = vset.pattern.permute.xlu0 0
      %1639 = vperm.xlu0 %1638, %v411
      %v1640 = vpop.permute.xlu0 %1639
      %1643 = vset.pattern.permute.xlu0 0
      %1644 = vperm.xlu0 %1643, %v412
      %v1645 = vpop.permute.xlu0 %1644
      %1648 = vset.pattern.permute.xlu0 0
      %1649 = vperm.xlu0 %1648, %v413
      %v1650 = vpop.permute.xlu0 %1649
      %1653 = vset.pattern.permute.xlu0 0
      %1654 = vperm.xlu0 %1653, %v414
      %v1655 = vpop.permute.xlu0 %1654
      %1658 = vset.pattern.permute.xlu0 0
      %1659 = vperm.xlu0 %1658, %v415
      %v1660 = vpop.permute.xlu0 %1659
      %1663 = vset.pattern.permute.xlu0 0
      %1664 = vperm.xlu0 %1663, %v416
      %v1665 = vpop.permute.xlu0 %1664
      %1668 = vset.pattern.permute.xlu0 0
      %1669 = vperm.xlu0 %1668, %v417
      %v1670 = vpop.permute.xlu0 %1669
      %1673 = vset.pattern.permute.xlu0 0
      %1674 = vperm.xlu0 %1673, %v418
      %v1675 = vpop.permute.xlu0 %1674
      %1678 = vset.pattern.permute.xlu0 0
      %1679 = vperm.xlu0 %1678, %v419
      %v1680 = vpop.permute.xlu0 %1679
      %1683 = vset.pattern.permute.xlu0 0
      %1684 = vperm.xlu0 %1683, %v420
      %v1685 = vpop.permute.xlu0 %1684
      %1688 = vset.pattern.permute.xlu0 0
      %1689 = vperm.xlu0 %1688, %v421
      %v1690 = vpop.permute.xlu0 %1689
      %1693 = vset.pattern.permute.xlu0 0
      %1694 = vperm.xlu0 %1693, %v422
      %v1695 = vpop.permute.xlu0 %1694
      %1698 = vset.pattern.permute.xlu0 0
      %1699 = vperm.xlu0 %1698, %v423
      %v1700 = vpop.permute.xlu0 %1699
      %1703 = vset.pattern.permute.xlu0 0
      %1704 = vperm.xlu0 %1703, %v424
      %v1705 = vpop.permute.xlu0 %1704
      %1708 = vset.pattern.permute.xlu0 0
      %1709 = vperm.xlu0 %1708, %v425
      %v1710 = vpop.permute.xlu0 %1709
      %1713 = vset.pattern.permute.xlu0 0
      %1714 = vperm.xlu0 %1713, %v426
      %v1715 = vpop.permute.xlu0 %1714
      %v1717 = vlaneseq
      %v1718 = vshrl.u32 %v1717, 7
      %v1719 = vsub.s32 0, %v1718
      %v1720 = vrot.slane %v430, %v1719
      %v1721 = vmul.f32 %v440, %v1720
      %v1722 = vmul.f32 %v445, %v1720
      %v1723 = vmul.f32 %v450, %v1720
      %v1724 = vmul.f32 %v455, %v1720
      %v1725 = vmul.f32 %v460, %v1720
      %v1726 = vmul.f32 %v465, %v1720
      %v1727 = vmul.f32 %v470, %v1720
      %v1728 = vmul.f32 %v475, %v1720
      %v1729 = vmul.f32 %v480, %v1720
      %v1730 = vmul.f32 %v485, %v1720
      %v1731 = vmul.f32 %v490, %v1720
      %v1732 = vmul.f32 %v495, %v1720
      %v1733 = vmul.f32 %v500, %v1720
      %v1734 = vmul.f32 %v505, %v1720
      %v1735 = vmul.f32 %v510, %v1720
      %v1736 = vmul.f32 %v515, %v1720
      %v1737 = vmul.f32 %v520, %v1720
      %v1738 = vmul.f32 %v525, %v1720
      %v1739 = vmul.f32 %v530, %v1720
      %v1740 = vmul.f32 %v535, %v1720
      %v1741 = vmul.f32 %v540, %v1720
      %v1742 = vmul.f32 %v545, %v1720
      %v1743 = vmul.f32 %v550, %v1720
      %v1744 = vmul.f32 %v555, %v1720
      %v1745 = vmul.f32 %v560, %v1720
      %v1746 = vmul.f32 %v565, %v1720
      %v1747 = vmul.f32 %v570, %v1720
      %v1748 = vmul.f32 %v575, %v1720
      %v1749 = vmul.f32 %v580, %v1720
      %v1750 = vmul.f32 %v585, %v1720
      %v1751 = vmul.f32 %v590, %v1720
      %v1752 = vmul.f32 %v595, %v1720
      %v1753 = vmul.f32 %v600, %v1720
      %v1754 = vmul.f32 %v605, %v1720
      %v1755 = vmul.f32 %v610, %v1720
      %v1756 = vmul.f32 %v615, %v1720
      %v1757 = vmul.f32 %v620, %v1720
      %v1758 = vmul.f32 %v625, %v1720
      %v1759 = vmul.f32 %v630, %v1720
      %v1760 = vmul.f32 %v635, %v1720
      %v1761 = vmul.f32 %v640, %v1720
      %v1762 = vmul.f32 %v645, %v1720
      %v1763 = vmul.f32 %v650, %v1720
      %v1764 = vmul.f32 %v655, %v1720
      %v1765 = vmul.f32 %v660, %v1720
      %v1766 = vmul.f32 %v665, %v1720
      %v1767 = vmul.f32 %v670, %v1720
      %v1768 = vmul.f32 %v675, %v1720
      %v1769 = vmul.f32 %v680, %v1720
      %v1770 = vmul.f32 %v685, %v1720
      %v1771 = vmul.f32 %v690, %v1720
      %v1772 = vmul.f32 %v695, %v1720
      %v1773 = vmul.f32 %v700, %v1720
      %v1774 = vmul.f32 %v705, %v1720
      %v1775 = vmul.f32 %v710, %v1720
      %v1776 = vmul.f32 %v715, %v1720
      %v1777 = vmul.f32 %v720, %v1720
      %v1778 = vmul.f32 %v725, %v1720
      %v1779 = vmul.f32 %v730, %v1720
      %v1780 = vmul.f32 %v735, %v1720
      %v1781 = vmul.f32 %v740, %v1720
      %v1782 = vmul.f32 %v745, %v1720
      %v1783 = vmul.f32 %v750, %v1720
      %v1784 = vmul.f32 %v755, %v1720
      %v1785 = vmul.f32 %v760, %v1720
      %v1786 = vmul.f32 %v765, %v1720
      %v1787 = vmul.f32 %v770, %v1720
      %v1788 = vmul.f32 %v775, %v1720
      %v1789 = vmul.f32 %v780, %v1720
      %v1790 = vmul.f32 %v785, %v1720
      %v1791 = vmul.f32 %v790, %v1720
      %v1792 = vmul.f32 %v795, %v1720
      %v1793 = vmul.f32 %v800, %v1720
      %v1794 = vmul.f32 %v805, %v1720
      %v1795 = vmul.f32 %v810, %v1720
      %v1796 = vmul.f32 %v815, %v1720
      %v1797 = vmul.f32 %v820, %v1720
      %v1798 = vmul.f32 %v825, %v1720
      %v1799 = vmul.f32 %v830, %v1720
      %v1800 = vmul.f32 %v835, %v1720
      %v1801 = vmul.f32 %v840, %v1720
      %v1802 = vmul.f32 %v845, %v1720
      %v1803 = vmul.f32 %v850, %v1720
      %v1804 = vmul.f32 %v855, %v1720
      %v1805 = vmul.f32 %v860, %v1720
      %v1806 = vmul.f32 %v865, %v1720
      %v1807 = vmul.f32 %v870, %v1720
      %v1808 = vmul.f32 %v875, %v1720
      %v1809 = vmul.f32 %v880, %v1720
      %v1810 = vmul.f32 %v885, %v1720
      %v1811 = vmul.f32 %v890, %v1720
      %v1812 = vmul.f32 %v895, %v1720
      %v1813 = vmul.f32 %v900, %v1720
      %v1814 = vmul.f32 %v905, %v1720
      %v1815 = vmul.f32 %v910, %v1720
      %v1816 = vmul.f32 %v915, %v1720
      %v1817 = vmul.f32 %v920, %v1720
      %v1818 = vmul.f32 %v925, %v1720
      %v1819 = vmul.f32 %v930, %v1720
      %v1820 = vmul.f32 %v935, %v1720
      %v1821 = vmul.f32 %v940, %v1720
      %v1822 = vmul.f32 %v945, %v1720
      %v1823 = vmul.f32 %v950, %v1720
      %v1824 = vmul.f32 %v955, %v1720
      %v1825 = vmul.f32 %v960, %v1720
      %v1826 = vmul.f32 %v965, %v1720
      %v1827 = vmul.f32 %v970, %v1720
      %v1828 = vmul.f32 %v975, %v1720
      %v1829 = vmul.f32 %v980, %v1720
      %v1830 = vmul.f32 %v985, %v1720
      %v1831 = vmul.f32 %v990, %v1720
      %v1832 = vmul.f32 %v995, %v1720
      %v1833 = vmul.f32 %v1000, %v1720
      %v1834 = vmul.f32 %v1005, %v1720
      %v1835 = vmul.f32 %v1010, %v1720
      %v1836 = vmul.f32 %v1015, %v1720
      %v1837 = vmul.f32 %v1020, %v1720
      %v1838 = vmul.f32 %v1025, %v1720
      %v1839 = vmul.f32 %v1030, %v1720
      %v1840 = vmul.f32 %v1035, %v1720
      %v1841 = vmul.f32 %v1040, %v1720
      %v1842 = vmul.f32 %v1045, %v1720
      %v1843 = vmul.f32 %v1050, %v1720
      %v1844 = vmul.f32 %v1055, %v1720
      %v1845 = vmul.f32 %v1060, %v1720
      %v1846 = vmul.f32 %v1065, %v1720
      %v1847 = vmul.f32 %v1070, %v1720
      %v1848 = vmul.f32 %v1075, %v1720
      %v1849 = vmul.f32 %v1080, %v1720
      %v1850 = vmul.f32 %v1085, %v1720
      %v1851 = vmul.f32 %v1090, %v1720
      %v1852 = vmul.f32 %v1095, %v1720
      %v1853 = vmul.f32 %v1100, %v1720
      %v1854 = vmul.f32 %v1105, %v1720
      %v1855 = vmul.f32 %v1110, %v1720
      %v1856 = vmul.f32 %v1115, %v1720
      %v1857 = vmul.f32 %v1120, %v1720
      %v1858 = vmul.f32 %v1125, %v1720
      %v1859 = vmul.f32 %v1130, %v1720
      %v1860 = vmul.f32 %v1135, %v1720
      %v1861 = vmul.f32 %v1140, %v1720
      %v1862 = vmul.f32 %v1145, %v1720
      %v1863 = vmul.f32 %v1150, %v1720
      %v1864 = vmul.f32 %v1155, %v1720
      %v1865 = vmul.f32 %v1160, %v1720
      %v1866 = vmul.f32 %v1165, %v1720
      %v1867 = vmul.f32 %v1170, %v1720
      %v1868 = vmul.f32 %v1175, %v1720
      %v1869 = vmul.f32 %v1180, %v1720
      %v1870 = vmul.f32 %v1185, %v1720
      %v1871 = vmul.f32 %v1190, %v1720
      %v1872 = vmul.f32 %v1195, %v1720
      %v1873 = vmul.f32 %v1200, %v1720
      %v1874 = vmul.f32 %v1205, %v1720
      %v1875 = vmul.f32 %v1210, %v1720
      %v1876 = vmul.f32 %v1215, %v1720
      %v1877 = vmul.f32 %v1220, %v1720
      %v1878 = vmul.f32 %v1225, %v1720
      %v1879 = vmul.f32 %v1230, %v1720
      %v1880 = vmul.f32 %v1235, %v1720
      %v1881 = vmul.f32 %v1240, %v1720
      %v1882 = vmul.f32 %v1245, %v1720
      %v1883 = vmul.f32 %v1250, %v1720
      %v1884 = vmul.f32 %v1255, %v1720
      %v1885 = vmul.f32 %v1260, %v1720
      %v1886 = vmul.f32 %v1265, %v1720
      %v1887 = vmul.f32 %v1270, %v1720
      %v1888 = vmul.f32 %v1275, %v1720
      %v1889 = vmul.f32 %v1280, %v1720
      %v1890 = vmul.f32 %v1285, %v1720
      %v1891 = vmul.f32 %v1290, %v1720
      %v1892 = vmul.f32 %v1295, %v1720
      %v1893 = vmul.f32 %v1300, %v1720
      %v1894 = vmul.f32 %v1305, %v1720
      %v1895 = vmul.f32 %v1310, %v1720
      %v1896 = vmul.f32 %v1315, %v1720
      %v1897 = vmul.f32 %v1320, %v1720
      %v1898 = vmul.f32 %v1325, %v1720
      %v1899 = vmul.f32 %v1330, %v1720
      %v1900 = vmul.f32 %v1335, %v1720
      %v1901 = vmul.f32 %v1340, %v1720
      %v1902 = vmul.f32 %v1345, %v1720
      %v1903 = vmul.f32 %v1350, %v1720
      %v1904 = vmul.f32 %v1355, %v1720
      %v1905 = vmul.f32 %v1360, %v1720
      %v1906 = vmul.f32 %v1365, %v1720
      %v1907 = vmul.f32 %v1370, %v1720
      %v1908 = vmul.f32 %v1375, %v1720
      %v1909 = vmul.f32 %v1380, %v1720
      %v1910 = vmul.f32 %v1385, %v1720
      %v1911 = vmul.f32 %v1390, %v1720
      %v1912 = vmul.f32 %v1395, %v1720
      %v1913 = vmul.f32 %v1400, %v1720
      %v1914 = vmul.f32 %v1405, %v1720
      %v1915 = vmul.f32 %v1410, %v1720
      %v1916 = vmul.f32 %v1415, %v1720
      %v1917 = vmul.f32 %v1420, %v1720
      %v1918 = vmul.f32 %v1425, %v1720
      %v1919 = vmul.f32 %v1430, %v1720
      %v1920 = vmul.f32 %v1435, %v1720
      %v1921 = vmul.f32 %v1440, %v1720
      %v1922 = vmul.f32 %v1445, %v1720
      %v1923 = vmul.f32 %v1450, %v1720
      %v1924 = vmul.f32 %v1455, %v1720
      %v1925 = vmul.f32 %v1460, %v1720
      %v1926 = vmul.f32 %v1465, %v1720
      %v1927 = vmul.f32 %v1470, %v1720
      %v1928 = vmul.f32 %v1475, %v1720
      %v1929 = vmul.f32 %v1480, %v1720
      %v1930 = vmul.f32 %v1485, %v1720
      %v1931 = vmul.f32 %v1490, %v1720
      %v1932 = vmul.f32 %v1495, %v1720
      %v1933 = vmul.f32 %v1500, %v1720
      %v1934 = vmul.f32 %v1505, %v1720
      %v1935 = vmul.f32 %v1510, %v1720
      %v1936 = vmul.f32 %v1515, %v1720
      %v1937 = vmul.f32 %v1520, %v1720
      %v1938 = vmul.f32 %v1525, %v1720
      %v1939 = vmul.f32 %v1530, %v1720
      %v1940 = vmul.f32 %v1535, %v1720
      %v1941 = vmul.f32 %v1540, %v1720
      %v1942 = vmul.f32 %v1545, %v1720
      %v1943 = vmul.f32 %v1550, %v1720
      %v1944 = vmul.f32 %v1555, %v1720
      %v1945 = vmul.f32 %v1560, %v1720
      %v1946 = vmul.f32 %v1565, %v1720
      %v1947 = vmul.f32 %v1570, %v1720
      %v1948 = vmul.f32 %v1575, %v1720
      %v1949 = vmul.f32 %v1580, %v1720
      %v1950 = vmul.f32 %v1585, %v1720
      %v1951 = vmul.f32 %v1590, %v1720
      %v1952 = vmul.f32 %v1595, %v1720
      %v1953 = vmul.f32 %v1600, %v1720
      %v1954 = vmul.f32 %v1605, %v1720
      %v1955 = vmul.f32 %v1610, %v1720
      %v1956 = vmul.f32 %v1615, %v1720
      %v1957 = vmul.f32 %v1620, %v1720
      %v1958 = vmul.f32 %v1625, %v1720
      %v1959 = vmul.f32 %v1630, %v1720
      %v1960 = vmul.f32 %v1635, %v1720
      %v1961 = vmul.f32 %v1640, %v1720
      %v1962 = vmul.f32 %v1645, %v1720
      %v1963 = vmul.f32 %v1650, %v1720
      %v1964 = vmul.f32 %v1655, %v1720
      %v1965 = vmul.f32 %v1660, %v1720
      %v1966 = vmul.f32 %v1665, %v1720
      %v1967 = vmul.f32 %v1670, %v1720
      %v1968 = vmul.f32 %v1675, %v1720
      %v1969 = vmul.f32 %v1680, %v1720
      %v1970 = vmul.f32 %v1685, %v1720
      %v1971 = vmul.f32 %v1690, %v1720
      %v1972 = vmul.f32 %v1695, %v1720
      %v1973 = vmul.f32 %v1700, %v1720
      %v1974 = vmul.f32 %v1705, %v1720
      %v1975 = vmul.f32 %v1710, %v1720
      %v1976 = vmul.f32 %v1715, %v1720
      %v1977 = vadd.f32 %v435, %v1721
      %v1978 = vadd.f32 %v435, %v1722
      %v1979 = vadd.f32 %v435, %v1723
      %v1980 = vadd.f32 %v435, %v1724
      %v1981 = vadd.f32 %v435, %v1725
      %v1982 = vadd.f32 %v435, %v1726
      %v1983 = vadd.f32 %v435, %v1727
      %v1984 = vadd.f32 %v435, %v1728
      %v1985 = vadd.f32 %v435, %v1729
      %v1986 = vadd.f32 %v435, %v1730
      %v1987 = vadd.f32 %v435, %v1731
      %v1988 = vadd.f32 %v435, %v1732
      %v1989 = vadd.f32 %v435, %v1733
      %v1990 = vadd.f32 %v435, %v1734
      %v1991 = vadd.f32 %v435, %v1735
      %v1992 = vadd.f32 %v435, %v1736
      %v1993 = vadd.f32 %v435, %v1737
      %v1994 = vadd.f32 %v435, %v1738
      %v1995 = vadd.f32 %v435, %v1739
      %v1996 = vadd.f32 %v435, %v1740
      %v1997 = vadd.f32 %v435, %v1741
      %v1998 = vadd.f32 %v435, %v1742
      %v1999 = vadd.f32 %v435, %v1743
      %v2000 = vadd.f32 %v435, %v1744
      %v2001 = vadd.f32 %v435, %v1745
      %v2002 = vadd.f32 %v435, %v1746
      %v2003 = vadd.f32 %v435, %v1747
      %v2004 = vadd.f32 %v435, %v1748
      %v2005 = vadd.f32 %v435, %v1749
      %v2006 = vadd.f32 %v435, %v1750
      %v2007 = vadd.f32 %v435, %v1751
      %v2008 = vadd.f32 %v435, %v1752
      %v2009 = vadd.f32 %v435, %v1753
      %v2010 = vadd.f32 %v435, %v1754
      %v2011 = vadd.f32 %v435, %v1755
      %v2012 = vadd.f32 %v435, %v1756
      %v2013 = vadd.f32 %v435, %v1757
      %v2014 = vadd.f32 %v435, %v1758
      %v2015 = vadd.f32 %v435, %v1759
      %v2016 = vadd.f32 %v435, %v1760
      %v2017 = vadd.f32 %v435, %v1761
      %v2018 = vadd.f32 %v435, %v1762
      %v2019 = vadd.f32 %v435, %v1763
      %v2020 = vadd.f32 %v435, %v1764
      %v2021 = vadd.f32 %v435, %v1765
      %v2022 = vadd.f32 %v435, %v1766
      %v2023 = vadd.f32 %v435, %v1767
      %v2024 = vadd.f32 %v435, %v1768
      %v2025 = vadd.f32 %v435, %v1769
      %v2026 = vadd.f32 %v435, %v1770
      %v2027 = vadd.f32 %v435, %v1771
      %v2028 = vadd.f32 %v435, %v1772
      %v2029 = vadd.f32 %v435, %v1773
      %v2030 = vadd.f32 %v435, %v1774
      %v2031 = vadd.f32 %v435, %v1775
      %v2032 = vadd.f32 %v435, %v1776
      %v2033 = vadd.f32 %v435, %v1777
      %v2034 = vadd.f32 %v435, %v1778
      %v2035 = vadd.f32 %v435, %v1779
      %v2036 = vadd.f32 %v435, %v1780
      %v2037 = vadd.f32 %v435, %v1781
      %v2038 = vadd.f32 %v435, %v1782
      %v2039 = vadd.f32 %v435, %v1783
      %v2040 = vadd.f32 %v435, %v1784
      %v2041 = vadd.f32 %v435, %v1785
      %v2042 = vadd.f32 %v435, %v1786
      %v2043 = vadd.f32 %v435, %v1787
      %v2044 = vadd.f32 %v435, %v1788
      %v2045 = vadd.f32 %v435, %v1789
      %v2046 = vadd.f32 %v435, %v1790
      %v2047 = vadd.f32 %v435, %v1791
      %v2048 = vadd.f32 %v435, %v1792
      %v2049 = vadd.f32 %v435, %v1793
      %v2050 = vadd.f32 %v435, %v1794
      %v2051 = vadd.f32 %v435, %v1795
      %v2052 = vadd.f32 %v435, %v1796
      %v2053 = vadd.f32 %v435, %v1797
      %v2054 = vadd.f32 %v435, %v1798
      %v2055 = vadd.f32 %v435, %v1799
      %v2056 = vadd.f32 %v435, %v1800
      %v2057 = vadd.f32 %v435, %v1801
      %v2058 = vadd.f32 %v435, %v1802
      %v2059 = vadd.f32 %v435, %v1803
      %v2060 = vadd.f32 %v435, %v1804
      %v2061 = vadd.f32 %v435, %v1805
      %v2062 = vadd.f32 %v435, %v1806
      %v2063 = vadd.f32 %v435, %v1807
      %v2064 = vadd.f32 %v435, %v1808
      %v2065 = vadd.f32 %v435, %v1809
      %v2066 = vadd.f32 %v435, %v1810
      %v2067 = vadd.f32 %v435, %v1811
      %v2068 = vadd.f32 %v435, %v1812
      %v2069 = vadd.f32 %v435, %v1813
      %v2070 = vadd.f32 %v435, %v1814
      %v2071 = vadd.f32 %v435, %v1815
      %v2072 = vadd.f32 %v435, %v1816
      %v2073 = vadd.f32 %v435, %v1817
      %v2074 = vadd.f32 %v435, %v1818
      %v2075 = vadd.f32 %v435, %v1819
      %v2076 = vadd.f32 %v435, %v1820
      %v2077 = vadd.f32 %v435, %v1821
      %v2078 = vadd.f32 %v435, %v1822
      %v2079 = vadd.f32 %v435, %v1823
      %v2080 = vadd.f32 %v435, %v1824
      %v2081 = vadd.f32 %v435, %v1825
      %v2082 = vadd.f32 %v435, %v1826
      %v2083 = vadd.f32 %v435, %v1827
      %v2084 = vadd.f32 %v435, %v1828
      %v2085 = vadd.f32 %v435, %v1829
      %v2086 = vadd.f32 %v435, %v1830
      %v2087 = vadd.f32 %v435, %v1831
      %v2088 = vadd.f32 %v435, %v1832
      %v2089 = vadd.f32 %v435, %v1833
      %v2090 = vadd.f32 %v435, %v1834
      %v2091 = vadd.f32 %v435, %v1835
      %v2092 = vadd.f32 %v435, %v1836
      %v2093 = vadd.f32 %v435, %v1837
      %v2094 = vadd.f32 %v435, %v1838
      %v2095 = vadd.f32 %v435, %v1839
      %v2096 = vadd.f32 %v435, %v1840
      %v2097 = vadd.f32 %v435, %v1841
      %v2098 = vadd.f32 %v435, %v1842
      %v2099 = vadd.f32 %v435, %v1843
      %v2100 = vadd.f32 %v435, %v1844
      %v2101 = vadd.f32 %v435, %v1845
      %v2102 = vadd.f32 %v435, %v1846
      %v2103 = vadd.f32 %v435, %v1847
      %v2104 = vadd.f32 %v435, %v1848
      %v2105 = vadd.f32 %v435, %v1849
      %v2106 = vadd.f32 %v435, %v1850
      %v2107 = vadd.f32 %v435, %v1851
      %v2108 = vadd.f32 %v435, %v1852
      %v2109 = vadd.f32 %v435, %v1853
      %v2110 = vadd.f32 %v435, %v1854
      %v2111 = vadd.f32 %v435, %v1855
      %v2112 = vadd.f32 %v435, %v1856
      %v2113 = vadd.f32 %v435, %v1857
      %v2114 = vadd.f32 %v435, %v1858
      %v2115 = vadd.f32 %v435, %v1859
      %v2116 = vadd.f32 %v435, %v1860
      %v2117 = vadd.f32 %v435, %v1861
      %v2118 = vadd.f32 %v435, %v1862
      %v2119 = vadd.f32 %v435, %v1863
      %v2120 = vadd.f32 %v435, %v1864
      %v2121 = vadd.f32 %v435, %v1865
      %v2122 = vadd.f32 %v435, %v1866
      %v2123 = vadd.f32 %v435, %v1867
      %v2124 = vadd.f32 %v435, %v1868
      %v2125 = vadd.f32 %v435, %v1869
      %v2126 = vadd.f32 %v435, %v1870
      %v2127 = vadd.f32 %v435, %v1871
      %v2128 = vadd.f32 %v435, %v1872
      %v2129 = vadd.f32 %v435, %v1873
      %v2130 = vadd.f32 %v435, %v1874
      %v2131 = vadd.f32 %v435, %v1875
      %v2132 = vadd.f32 %v435, %v1876
      %v2133 = vadd.f32 %v435, %v1877
      %v2134 = vadd.f32 %v435, %v1878
      %v2135 = vadd.f32 %v435, %v1879
      %v2136 = vadd.f32 %v435, %v1880
      %v2137 = vadd.f32 %v435, %v1881
      %v2138 = vadd.f32 %v435, %v1882
      %v2139 = vadd.f32 %v435, %v1883
      %v2140 = vadd.f32 %v435, %v1884
      %v2141 = vadd.f32 %v435, %v1885
      %v2142 = vadd.f32 %v435, %v1886
      %v2143 = vadd.f32 %v435, %v1887
      %v2144 = vadd.f32 %v435, %v1888
      %v2145 = vadd.f32 %v435, %v1889
      %v2146 = vadd.f32 %v435, %v1890
      %v2147 = vadd.f32 %v435, %v1891
      %v2148 = vadd.f32 %v435, %v1892
      %v2149 = vadd.f32 %v435, %v1893
      %v2150 = vadd.f32 %v435, %v1894
      %v2151 = vadd.f32 %v435, %v1895
      %v2152 = vadd.f32 %v435, %v1896
      %v2153 = vadd.f32 %v435, %v1897
      %v2154 = vadd.f32 %v435, %v1898
      %v2155 = vadd.f32 %v435, %v1899
      %v2156 = vadd.f32 %v435, %v1900
      %v2157 = vadd.f32 %v435, %v1901
      %v2158 = vadd.f32 %v435, %v1902
      %v2159 = vadd.f32 %v435, %v1903
      %v2160 = vadd.f32 %v435, %v1904
      %v2161 = vadd.f32 %v435, %v1905
      %v2162 = vadd.f32 %v435, %v1906
      %v2163 = vadd.f32 %v435, %v1907
      %v2164 = vadd.f32 %v435, %v1908
      %v2165 = vadd.f32 %v435, %v1909
      %v2166 = vadd.f32 %v435, %v1910
      %v2167 = vadd.f32 %v435, %v1911
      %v2168 = vadd.f32 %v435, %v1912
      %v2169 = vadd.f32 %v435, %v1913
      %v2170 = vadd.f32 %v435, %v1914
      %v2171 = vadd.f32 %v435, %v1915
      %v2172 = vadd.f32 %v435, %v1916
      %v2173 = vadd.f32 %v435, %v1917
      %v2174 = vadd.f32 %v435, %v1918
      %v2175 = vadd.f32 %v435, %v1919
      %v2176 = vadd.f32 %v435, %v1920
      %v2177 = vadd.f32 %v435, %v1921
      %v2178 = vadd.f32 %v435, %v1922
      %v2179 = vadd.f32 %v435, %v1923
      %v2180 = vadd.f32 %v435, %v1924
      %v2181 = vadd.f32 %v435, %v1925
      %v2182 = vadd.f32 %v435, %v1926
      %v2183 = vadd.f32 %v435, %v1927
      %v2184 = vadd.f32 %v435, %v1928
      %v2185 = vadd.f32 %v435, %v1929
      %v2186 = vadd.f32 %v435, %v1930
      %v2187 = vadd.f32 %v435, %v1931
      %v2188 = vadd.f32 %v435, %v1932
      %v2189 = vadd.f32 %v435, %v1933
      %v2190 = vadd.f32 %v435, %v1934
      %v2191 = vadd.f32 %v435, %v1935
      %v2192 = vadd.f32 %v435, %v1936
      %v2193 = vadd.f32 %v435, %v1937
      %v2194 = vadd.f32 %v435, %v1938
      %v2195 = vadd.f32 %v435, %v1939
      %v2196 = vadd.f32 %v435, %v1940
      %v2197 = vadd.f32 %v435, %v1941
      %v2198 = vadd.f32 %v435, %v1942
      %v2199 = vadd.f32 %v435, %v1943
      %v2200 = vadd.f32 %v435, %v1944
      %v2201 = vadd.f32 %v435, %v1945
      %v2202 = vadd.f32 %v435, %v1946
      %v2203 = vadd.f32 %v435, %v1947
      %v2204 = vadd.f32 %v435, %v1948
      %v2205 = vadd.f32 %v435, %v1949
      %v2206 = vadd.f32 %v435, %v1950
      %v2207 = vadd.f32 %v435, %v1951
      %v2208 = vadd.f32 %v435, %v1952
      %v2209 = vadd.f32 %v435, %v1953
      %v2210 = vadd.f32 %v435, %v1954
      %v2211 = vadd.f32 %v435, %v1955
      %v2212 = vadd.f32 %v435, %v1956
      %v2213 = vadd.f32 %v435, %v1957
      %v2214 = vadd.f32 %v435, %v1958
      %v2215 = vadd.f32 %v435, %v1959
      %v2216 = vadd.f32 %v435, %v1960
      %v2217 = vadd.f32 %v435, %v1961
      %v2218 = vadd.f32 %v435, %v1962
      %v2219 = vadd.f32 %v435, %v1963
      %v2220 = vadd.f32 %v435, %v1964
      %v2221 = vadd.f32 %v435, %v1965
      %v2222 = vadd.f32 %v435, %v1966
      %v2223 = vadd.f32 %v435, %v1967
      %v2224 = vadd.f32 %v435, %v1968
      %v2225 = vadd.f32 %v435, %v1969
      %v2226 = vadd.f32 %v435, %v1970
      %v2227 = vadd.f32 %v435, %v1971
      %v2228 = vadd.f32 %v435, %v1972
      %v2229 = vadd.f32 %v435, %v1973
      %v2230 = vadd.f32 %v435, %v1974
      %v2231 = vadd.f32 %v435, %v1975
      %v2232 = vadd.f32 %v435, %v1976
      %2234 = vset.pattern.permute.xlu0 0
      %2235 = vperm.xlu0 %2234, %v427
      %v2236 = vpop.permute.xlu0 %2235
      %v2238 = vlaneseq
      %v2239 = vshrl.u32 %v2238, 7
      %v2240 = vsub.s32 1, %v2239
      %v2241 = vrot.slane %v430, %v2240
      %v2242 = vmul.f32 %v440, %v2241
      %v2243 = vmul.f32 %v445, %v2241
      %v2244 = vmul.f32 %v450, %v2241
      %v2245 = vmul.f32 %v455, %v2241
      %v2246 = vmul.f32 %v460, %v2241
      %v2247 = vmul.f32 %v465, %v2241
      %v2248 = vmul.f32 %v470, %v2241
      %v2249 = vmul.f32 %v475, %v2241
      %v2250 = vmul.f32 %v480, %v2241
      %v2251 = vmul.f32 %v485, %v2241
      %v2252 = vmul.f32 %v490, %v2241
      %v2253 = vmul.f32 %v495, %v2241
      %v2254 = vmul.f32 %v500, %v2241
      %v2255 = vmul.f32 %v505, %v2241
      %v2256 = vmul.f32 %v510, %v2241
      %v2257 = vmul.f32 %v515, %v2241
      %v2258 = vmul.f32 %v520, %v2241
      %v2259 = vmul.f32 %v525, %v2241
      %v2260 = vmul.f32 %v530, %v2241
      %v2261 = vmul.f32 %v535, %v2241
      %v2262 = vmul.f32 %v540, %v2241
      %v2263 = vmul.f32 %v545, %v2241
      %v2264 = vmul.f32 %v550, %v2241
      %v2265 = vmul.f32 %v555, %v2241
      %v2266 = vmul.f32 %v560, %v2241
      %v2267 = vmul.f32 %v565, %v2241
      %v2268 = vmul.f32 %v570, %v2241
      %v2269 = vmul.f32 %v575, %v2241
      %v2270 = vmul.f32 %v580, %v2241
      %v2271 = vmul.f32 %v585, %v2241
      %v2272 = vmul.f32 %v590, %v2241
      %v2273 = vmul.f32 %v595, %v2241
      %v2274 = vmul.f32 %v600, %v2241
      %v2275 = vmul.f32 %v605, %v2241
      %v2276 = vmul.f32 %v610, %v2241
      %v2277 = vmul.f32 %v615, %v2241
      %v2278 = vmul.f32 %v620, %v2241
      %v2279 = vmul.f32 %v625, %v2241
      %v2280 = vmul.f32 %v630, %v2241
      %v2281 = vmul.f32 %v635, %v2241
      %v2282 = vmul.f32 %v640, %v2241
      %v2283 = vmul.f32 %v645, %v2241
      %v2284 = vmul.f32 %v650, %v2241
      %v2285 = vmul.f32 %v655, %v2241
      %v2286 = vmul.f32 %v660, %v2241
      %v2287 = vmul.f32 %v665, %v2241
      %v2288 = vmul.f32 %v670, %v2241
      %v2289 = vmul.f32 %v675, %v2241
      %v2290 = vmul.f32 %v680, %v2241
      %v2291 = vmul.f32 %v685, %v2241
      %v2292 = vmul.f32 %v690, %v2241
      %v2293 = vmul.f32 %v695, %v2241
      %v2294 = vmul.f32 %v700, %v2241
      %v2295 = vmul.f32 %v705, %v2241
      %v2296 = vmul.f32 %v710, %v2241
      %v2297 = vmul.f32 %v715, %v2241
      %v2298 = vmul.f32 %v720, %v2241
      %v2299 = vmul.f32 %v725, %v2241
      %v2300 = vmul.f32 %v730, %v2241
      %v2301 = vmul.f32 %v735, %v2241
      %v2302 = vmul.f32 %v740, %v2241
      %v2303 = vmul.f32 %v745, %v2241
      %v2304 = vmul.f32 %v750, %v2241
      %v2305 = vmul.f32 %v755, %v2241
      %v2306 = vmul.f32 %v760, %v2241
      %v2307 = vmul.f32 %v765, %v2241
      %v2308 = vmul.f32 %v770, %v2241
      %v2309 = vmul.f32 %v775, %v2241
      %v2310 = vmul.f32 %v780, %v2241
      %v2311 = vmul.f32 %v785, %v2241
      %v2312 = vmul.f32 %v790, %v2241
      %v2313 = vmul.f32 %v795, %v2241
      %v2314 = vmul.f32 %v800, %v2241
      %v2315 = vmul.f32 %v805, %v2241
      %v2316 = vmul.f32 %v810, %v2241
      %v2317 = vmul.f32 %v815, %v2241
      %v2318 = vmul.f32 %v820, %v2241
      %v2319 = vmul.f32 %v825, %v2241
      %v2320 = vmul.f32 %v830, %v2241
      %v2321 = vmul.f32 %v835, %v2241
      %v2322 = vmul.f32 %v840, %v2241
      %v2323 = vmul.f32 %v845, %v2241
      %v2324 = vmul.f32 %v850, %v2241
      %v2325 = vmul.f32 %v855, %v2241
      %v2326 = vmul.f32 %v860, %v2241
      %v2327 = vmul.f32 %v865, %v2241
      %v2328 = vmul.f32 %v870, %v2241
      %v2329 = vmul.f32 %v875, %v2241
      %v2330 = vmul.f32 %v880, %v2241
      %v2331 = vmul.f32 %v885, %v2241
      %v2332 = vmul.f32 %v890, %v2241
      %v2333 = vmul.f32 %v895, %v2241
      %v2334 = vmul.f32 %v900, %v2241
      %v2335 = vmul.f32 %v905, %v2241
      %v2336 = vmul.f32 %v910, %v2241
      %v2337 = vmul.f32 %v915, %v2241
      %v2338 = vmul.f32 %v920, %v2241
      %v2339 = vmul.f32 %v925, %v2241
      %v2340 = vmul.f32 %v930, %v2241
      %v2341 = vmul.f32 %v935, %v2241
      %v2342 = vmul.f32 %v940, %v2241
      %v2343 = vmul.f32 %v945, %v2241
      %v2344 = vmul.f32 %v950, %v2241
      %v2345 = vmul.f32 %v955, %v2241
      %v2346 = vmul.f32 %v960, %v2241
      %v2347 = vmul.f32 %v965, %v2241
      %v2348 = vmul.f32 %v970, %v2241
      %v2349 = vmul.f32 %v975, %v2241
      %v2350 = vmul.f32 %v980, %v2241
      %v2351 = vmul.f32 %v985, %v2241
      %v2352 = vmul.f32 %v990, %v2241
      %v2353 = vmul.f32 %v995, %v2241
      %v2354 = vmul.f32 %v1000, %v2241
      %v2355 = vmul.f32 %v1005, %v2241
      %v2356 = vmul.f32 %v1010, %v2241
      %v2357 = vmul.f32 %v1015, %v2241
      %v2358 = vmul.f32 %v1020, %v2241
      %v2359 = vmul.f32 %v1025, %v2241
      %v2360 = vmul.f32 %v1030, %v2241
      %v2361 = vmul.f32 %v1035, %v2241
      %v2362 = vmul.f32 %v1040, %v2241
      %v2363 = vmul.f32 %v1045, %v2241
      %v2364 = vmul.f32 %v1050, %v2241
      %v2365 = vmul.f32 %v1055, %v2241
      %v2366 = vmul.f32 %v1060, %v2241
      %v2367 = vmul.f32 %v1065, %v2241
      %v2368 = vmul.f32 %v1070, %v2241
      %v2369 = vmul.f32 %v1075, %v2241
      %v2370 = vmul.f32 %v1080, %v2241
      %v2371 = vmul.f32 %v1085, %v2241
      %v2372 = vmul.f32 %v1090, %v2241
      %v2373 = vmul.f32 %v1095, %v2241
      %v2374 = vmul.f32 %v1100, %v2241
      %v2375 = vmul.f32 %v1105, %v2241
      %v2376 = vmul.f32 %v1110, %v2241
      %v2377 = vmul.f32 %v1115, %v2241
      %v2378 = vmul.f32 %v1120, %v2241
      %v2379 = vmul.f32 %v1125, %v2241
      %v2380 = vmul.f32 %v1130, %v2241
      %v2381 = vmul.f32 %v1135, %v2241
      %v2382 = vmul.f32 %v1140, %v2241
      %v2383 = vmul.f32 %v1145, %v2241
      %v2384 = vmul.f32 %v1150, %v2241
      %v2385 = vmul.f32 %v1155, %v2241
      %v2386 = vmul.f32 %v1160, %v2241
      %v2387 = vmul.f32 %v1165, %v2241
      %v2388 = vmul.f32 %v1170, %v2241
      %v2389 = vmul.f32 %v1175, %v2241
      %v2390 = vmul.f32 %v1180, %v2241
      %v2391 = vmul.f32 %v1185, %v2241
      %v2392 = vmul.f32 %v1190, %v2241
      %v2393 = vmul.f32 %v1195, %v2241
      %v2394 = vmul.f32 %v1200, %v2241
      %v2395 = vmul.f32 %v1205, %v2241
      %v2396 = vmul.f32 %v1210, %v2241
      %v2397 = vmul.f32 %v1215, %v2241
      %v2398 = vmul.f32 %v1220, %v2241
      %v2399 = vmul.f32 %v1225, %v2241
      %v2400 = vmul.f32 %v1230, %v2241
      %v2401 = vmul.f32 %v1235, %v2241
      %v2402 = vmul.f32 %v1240, %v2241
      %v2403 = vmul.f32 %v1245, %v2241
      %v2404 = vmul.f32 %v1250, %v2241
      %v2405 = vmul.f32 %v1255, %v2241
      %v2406 = vmul.f32 %v1260, %v2241
      %v2407 = vmul.f32 %v1265, %v2241
      %v2408 = vmul.f32 %v1270, %v2241
      %v2409 = vmul.f32 %v1275, %v2241
      %v2410 = vmul.f32 %v1280, %v2241
      %v2411 = vmul.f32 %v1285, %v2241
      %v2412 = vmul.f32 %v1290, %v2241
      %v2413 = vmul.f32 %v1295, %v2241
      %v2414 = vmul.f32 %v1300, %v2241
      %v2415 = vmul.f32 %v1305, %v2241
      %v2416 = vmul.f32 %v1310, %v2241
      %v2417 = vmul.f32 %v1315, %v2241
      %v2418 = vmul.f32 %v1320, %v2241
      %v2419 = vmul.f32 %v1325, %v2241
      %v2420 = vmul.f32 %v1330, %v2241
      %v2421 = vmul.f32 %v1335, %v2241
      %v2422 = vmul.f32 %v1340, %v2241
      %v2423 = vmul.f32 %v1345, %v2241
      %v2424 = vmul.f32 %v1350, %v2241
      %v2425 = vmul.f32 %v1355, %v2241
      %v2426 = vmul.f32 %v1360, %v2241
      %v2427 = vmul.f32 %v1365, %v2241
      %v2428 = vmul.f32 %v1370, %v2241
      %v2429 = vmul.f32 %v1375, %v2241
      %v2430 = vmul.f32 %v1380, %v2241
      %v2431 = vmul.f32 %v1385, %v2241
      %v2432 = vmul.f32 %v1390, %v2241
      %v2433 = vmul.f32 %v1395, %v2241
      %v2434 = vmul.f32 %v1400, %v2241
      %v2435 = vmul.f32 %v1405, %v2241
      %v2436 = vmul.f32 %v1410, %v2241
      %v2437 = vmul.f32 %v1415, %v2241
      %v2438 = vmul.f32 %v1420, %v2241
      %v2439 = vmul.f32 %v1425, %v2241
      %v2440 = vmul.f32 %v1430, %v2241
      %v2441 = vmul.f32 %v1435, %v2241
      %v2442 = vmul.f32 %v1440, %v2241
      %v2443 = vmul.f32 %v1445, %v2241
      %v2444 = vmul.f32 %v1450, %v2241
      %v2445 = vmul.f32 %v1455, %v2241
      %v2446 = vmul.f32 %v1460, %v2241
      %v2447 = vmul.f32 %v1465, %v2241
      %v2448 = vmul.f32 %v1470, %v2241
      %v2449 = vmul.f32 %v1475, %v2241
      %v2450 = vmul.f32 %v1480, %v2241
      %v2451 = vmul.f32 %v1485, %v2241
      %v2452 = vmul.f32 %v1490, %v2241
      %v2453 = vmul.f32 %v1495, %v2241
      %v2454 = vmul.f32 %v1500, %v2241
      %v2455 = vmul.f32 %v1505, %v2241
      %v2456 = vmul.f32 %v1510, %v2241
      %v2457 = vmul.f32 %v1515, %v2241
      %v2458 = vmul.f32 %v1520, %v2241
      %v2459 = vmul.f32 %v1525, %v2241
      %v2460 = vmul.f32 %v1530, %v2241
      %v2461 = vmul.f32 %v1535, %v2241
      %v2462 = vmul.f32 %v1540, %v2241
      %v2463 = vmul.f32 %v1545, %v2241
      %v2464 = vmul.f32 %v1550, %v2241
      %v2465 = vmul.f32 %v1555, %v2241
      %v2466 = vmul.f32 %v1560, %v2241
      %v2467 = vmul.f32 %v1565, %v2241
      %v2468 = vmul.f32 %v1570, %v2241
      %v2469 = vmul.f32 %v1575, %v2241
      %v2470 = vmul.f32 %v1580, %v2241
      %v2471 = vmul.f32 %v1585, %v2241
      %v2472 = vmul.f32 %v1590, %v2241
      %v2473 = vmul.f32 %v1595, %v2241
      %v2474 = vmul.f32 %v1600, %v2241
      %v2475 = vmul.f32 %v1605, %v2241
      %v2476 = vmul.f32 %v1610, %v2241
      %v2477 = vmul.f32 %v1615, %v2241
      %v2478 = vmul.f32 %v1620, %v2241
      %v2479 = vmul.f32 %v1625, %v2241
      %v2480 = vmul.f32 %v1630, %v2241
      %v2481 = vmul.f32 %v1635, %v2241
      %v2482 = vmul.f32 %v1640, %v2241
      %v2483 = vmul.f32 %v1645, %v2241
      %v2484 = vmul.f32 %v1650, %v2241
      %v2485 = vmul.f32 %v1655, %v2241
      %v2486 = vmul.f32 %v1660, %v2241
      %v2487 = vmul.f32 %v1665, %v2241
      %v2488 = vmul.f32 %v1670, %v2241
      %v2489 = vmul.f32 %v1675, %v2241
      %v2490 = vmul.f32 %v1680, %v2241
      %v2491 = vmul.f32 %v1685, %v2241
      %v2492 = vmul.f32 %v1690, %v2241
      %v2493 = vmul.f32 %v1695, %v2241
      %v2494 = vmul.f32 %v1700, %v2241
      %v2495 = vmul.f32 %v1705, %v2241
      %v2496 = vmul.f32 %v1710, %v2241
      %v2497 = vmul.f32 %v1715, %v2241
      %v2498 = vmul.f32 %v2236, %v2241
      %vm2756 = vcmask 1046528
      %v2757 = vrot.slane %v2242, 1
      %v2758 = vrot.slane %v2243, 1
      %v2759 = vsel %vm2756, %v2757, %v2758
      %v2760 = vrot.slane %v2244, 1
      %v2761 = vsel %vm2756, %v2758, %v2760
      %v2762 = vrot.slane %v2245, 1
      %v2763 = vsel %vm2756, %v2760, %v2762
      %v2764 = vrot.slane %v2246, 1
      %v2765 = vsel %vm2756, %v2762, %v2764
      %v2766 = vrot.slane %v2247, 1
      %v2767 = vsel %vm2756, %v2764, %v2766
      %v2768 = vrot.slane %v2248, 1
      %v2769 = vsel %vm2756, %v2766, %v2768
      %v2770 = vrot.slane %v2249, 1
      %v2771 = vsel %vm2756, %v2768, %v2770
      %v2772 = vrot.slane %v2250, 1
      %v2773 = vsel %vm2756, %v2770, %v2772
      %v2774 = vrot.slane %v2251, 1
      %v2775 = vsel %vm2756, %v2772, %v2774
      %v2776 = vrot.slane %v2252, 1
      %v2777 = vsel %vm2756, %v2774, %v2776
      %v2778 = vrot.slane %v2253, 1
      %v2779 = vsel %vm2756, %v2776, %v2778
      %v2780 = vrot.slane %v2254, 1
      %v2781 = vsel %vm2756, %v2778, %v2780
      %v2782 = vrot.slane %v2255, 1
      %v2783 = vsel %vm2756, %v2780, %v2782
      %v2784 = vrot.slane %v2256, 1
      %v2785 = vsel %vm2756, %v2782, %v2784
      %v2786 = vrot.slane %v2257, 1
      %v2787 = vsel %vm2756, %v2784, %v2786
      %v2788 = vrot.slane %v2258, 1
      %v2789 = vsel %vm2756, %v2786, %v2788
      %v2790 = vrot.slane %v2259, 1
      %v2791 = vsel %vm2756, %v2788, %v2790
      %v2792 = vrot.slane %v2260, 1
      %v2793 = vsel %vm2756, %v2790, %v2792
      %v2794 = vrot.slane %v2261, 1
      %v2795 = vsel %vm2756, %v2792, %v2794
      %v2796 = vrot.slane %v2262, 1
      %v2797 = vsel %vm2756, %v2794, %v2796
      %v2798 = vrot.slane %v2263, 1
      %v2799 = vsel %vm2756, %v2796, %v2798
      %v2800 = vrot.slane %v2264, 1
      %v2801 = vsel %vm2756, %v2798, %v2800
      %v2802 = vrot.slane %v2265, 1
      %v2803 = vsel %vm2756, %v2800, %v2802
      %v2804 = vrot.slane %v2266, 1
      %v2805 = vsel %vm2756, %v2802, %v2804
      %v2806 = vrot.slane %v2267, 1
      %v2807 = vsel %vm2756, %v2804, %v2806
      %v2808 = vrot.slane %v2268, 1
      %v2809 = vsel %vm2756, %v2806, %v2808
      %v2810 = vrot.slane %v2269, 1
      %v2811 = vsel %vm2756, %v2808, %v2810
      %v2812 = vrot.slane %v2270, 1
      %v2813 = vsel %vm2756, %v2810, %v2812
      %v2814 = vrot.slane %v2271, 1
      %v2815 = vsel %vm2756, %v2812, %v2814
      %v2816 = vrot.slane %v2272, 1
      %v2817 = vsel %vm2756, %v2814, %v2816
      %v2818 = vrot.slane %v2273, 1
      %v2819 = vsel %vm2756, %v2816, %v2818
      %v2820 = vrot.slane %v2274, 1
      %v2821 = vsel %vm2756, %v2818, %v2820
      %v2822 = vrot.slane %v2275, 1
      %v2823 = vsel %vm2756, %v2820, %v2822
      %v2824 = vrot.slane %v2276, 1
      %v2825 = vsel %vm2756, %v2822, %v2824
      %v2826 = vrot.slane %v2277, 1
      %v2827 = vsel %vm2756, %v2824, %v2826
      %v2828 = vrot.slane %v2278, 1
      %v2829 = vsel %vm2756, %v2826, %v2828
      %v2830 = vrot.slane %v2279, 1
      %v2831 = vsel %vm2756, %v2828, %v2830
      %v2832 = vrot.slane %v2280, 1
      %v2833 = vsel %vm2756, %v2830, %v2832
      %v2834 = vrot.slane %v2281, 1
      %v2835 = vsel %vm2756, %v2832, %v2834
      %v2836 = vrot.slane %v2282, 1
      %v2837 = vsel %vm2756, %v2834, %v2836
      %v2838 = vrot.slane %v2283, 1
      %v2839 = vsel %vm2756, %v2836, %v2838
      %v2840 = vrot.slane %v2284, 1
      %v2841 = vsel %vm2756, %v2838, %v2840
      %v2842 = vrot.slane %v2285, 1
      %v2843 = vsel %vm2756, %v2840, %v2842
      %v2844 = vrot.slane %v2286, 1
      %v2845 = vsel %vm2756, %v2842, %v2844
      %v2846 = vrot.slane %v2287, 1
      %v2847 = vsel %vm2756, %v2844, %v2846
      %v2848 = vrot.slane %v2288, 1
      %v2849 = vsel %vm2756, %v2846, %v2848
      %v2850 = vrot.slane %v2289, 1
      %v2851 = vsel %vm2756, %v2848, %v2850
      %v2852 = vrot.slane %v2290, 1
      %v2853 = vsel %vm2756, %v2850, %v2852
      %v2854 = vrot.slane %v2291, 1
      %v2855 = vsel %vm2756, %v2852, %v2854
      %v2856 = vrot.slane %v2292, 1
      %v2857 = vsel %vm2756, %v2854, %v2856
      %v2858 = vrot.slane %v2293, 1
      %v2859 = vsel %vm2756, %v2856, %v2858
      %v2860 = vrot.slane %v2294, 1
      %v2861 = vsel %vm2756, %v2858, %v2860
      %v2862 = vrot.slane %v2295, 1
      %v2863 = vsel %vm2756, %v2860, %v2862
      %v2864 = vrot.slane %v2296, 1
      %v2865 = vsel %vm2756, %v2862, %v2864
      %v2866 = vrot.slane %v2297, 1
      %v2867 = vsel %vm2756, %v2864, %v2866
      %v2868 = vrot.slane %v2298, 1
      %v2869 = vsel %vm2756, %v2866, %v2868
      %v2870 = vrot.slane %v2299, 1
      %v2871 = vsel %vm2756, %v2868, %v2870
      %v2872 = vrot.slane %v2300, 1
      %v2873 = vsel %vm2756, %v2870, %v2872
      %v2874 = vrot.slane %v2301, 1
      %v2875 = vsel %vm2756, %v2872, %v2874
      %v2876 = vrot.slane %v2302, 1
      %v2877 = vsel %vm2756, %v2874, %v2876
      %v2878 = vrot.slane %v2303, 1
      %v2879 = vsel %vm2756, %v2876, %v2878
      %v2880 = vrot.slane %v2304, 1
      %v2881 = vsel %vm2756, %v2878, %v2880
      %v2882 = vrot.slane %v2305, 1
      %v2883 = vsel %vm2756, %v2880, %v2882
      %v2884 = vrot.slane %v2306, 1
      %v2885 = vsel %vm2756, %v2882, %v2884
      %v2886 = vrot.slane %v2307, 1
      %v2887 = vsel %vm2756, %v2884, %v2886
      %v2888 = vrot.slane %v2308, 1
      %v2889 = vsel %vm2756, %v2886, %v2888
      %v2890 = vrot.slane %v2309, 1
      %v2891 = vsel %vm2756, %v2888, %v2890
      %v2892 = vrot.slane %v2310, 1
      %v2893 = vsel %vm2756, %v2890, %v2892
      %v2894 = vrot.slane %v2311, 1
      %v2895 = vsel %vm2756, %v2892, %v2894
      %v2896 = vrot.slane %v2312, 1
      %v2897 = vsel %vm2756, %v2894, %v2896
      %v2898 = vrot.slane %v2313, 1
      %v2899 = vsel %vm2756, %v2896, %v2898
      %v2900 = vrot.slane %v2314, 1
      %v2901 = vsel %vm2756, %v2898, %v2900
      %v2902 = vrot.slane %v2315, 1
      %v2903 = vsel %vm2756, %v2900, %v2902
      %v2904 = vrot.slane %v2316, 1
      %v2905 = vsel %vm2756, %v2902, %v2904
      %v2906 = vrot.slane %v2317, 1
      %v2907 = vsel %vm2756, %v2904, %v2906
      %v2908 = vrot.slane %v2318, 1
      %v2909 = vsel %vm2756, %v2906, %v2908
      %v2910 = vrot.slane %v2319, 1
      %v2911 = vsel %vm2756, %v2908, %v2910
      %v2912 = vrot.slane %v2320, 1
      %v2913 = vsel %vm2756, %v2910, %v2912
      %v2914 = vrot.slane %v2321, 1
      %v2915 = vsel %vm2756, %v2912, %v2914
      %v2916 = vrot.slane %v2322, 1
      %v2917 = vsel %vm2756, %v2914, %v2916
      %v2918 = vrot.slane %v2323, 1
      %v2919 = vsel %vm2756, %v2916, %v2918
      %v2920 = vrot.slane %v2324, 1
      %v2921 = vsel %vm2756, %v2918, %v2920
      %v2922 = vrot.slane %v2325, 1
      %v2923 = vsel %vm2756, %v2920, %v2922
      %v2924 = vrot.slane %v2326, 1
      %v2925 = vsel %vm2756, %v2922, %v2924
      %v2926 = vrot.slane %v2327, 1
      %v2927 = vsel %vm2756, %v2924, %v2926
      %v2928 = vrot.slane %v2328, 1
      %v2929 = vsel %vm2756, %v2926, %v2928
      %v2930 = vrot.slane %v2329, 1
      %v2931 = vsel %vm2756, %v2928, %v2930
      %v2932 = vrot.slane %v2330, 1
      %v2933 = vsel %vm2756, %v2930, %v2932
      %v2934 = vrot.slane %v2331, 1
      %v2935 = vsel %vm2756, %v2932, %v2934
      %v2936 = vrot.slane %v2332, 1
      %v2937 = vsel %vm2756, %v2934, %v2936
      %v2938 = vrot.slane %v2333, 1
      %v2939 = vsel %vm2756, %v2936, %v2938
      %v2940 = vrot.slane %v2334, 1
      %v2941 = vsel %vm2756, %v2938, %v2940
      %v2942 = vrot.slane %v2335, 1
      %v2943 = vsel %vm2756, %v2940, %v2942
      %v2944 = vrot.slane %v2336, 1
      %v2945 = vsel %vm2756, %v2942, %v2944
      %v2946 = vrot.slane %v2337, 1
      %v2947 = vsel %vm2756, %v2944, %v2946
      %v2948 = vrot.slane %v2338, 1
      %v2949 = vsel %vm2756, %v2946, %v2948
      %v2950 = vrot.slane %v2339, 1
      %v2951 = vsel %vm2756, %v2948, %v2950
      %v2952 = vrot.slane %v2340, 1
      %v2953 = vsel %vm2756, %v2950, %v2952
      %v2954 = vrot.slane %v2341, 1
      %v2955 = vsel %vm2756, %v2952, %v2954
      %v2956 = vrot.slane %v2342, 1
      %v2957 = vsel %vm2756, %v2954, %v2956
      %v2958 = vrot.slane %v2343, 1
      %v2959 = vsel %vm2756, %v2956, %v2958
      %v2960 = vrot.slane %v2344, 1
      %v2961 = vsel %vm2756, %v2958, %v2960
      %v2962 = vrot.slane %v2345, 1
      %v2963 = vsel %vm2756, %v2960, %v2962
      %v2964 = vrot.slane %v2346, 1
      %v2965 = vsel %vm2756, %v2962, %v2964
      %v2966 = vrot.slane %v2347, 1
      %v2967 = vsel %vm2756, %v2964, %v2966
      %v2968 = vrot.slane %v2348, 1
      %v2969 = vsel %vm2756, %v2966, %v2968
      %v2970 = vrot.slane %v2349, 1
      %v2971 = vsel %vm2756, %v2968, %v2970
      %v2972 = vrot.slane %v2350, 1
      %v2973 = vsel %vm2756, %v2970, %v2972
      %v2974 = vrot.slane %v2351, 1
      %v2975 = vsel %vm2756, %v2972, %v2974
      %v2976 = vrot.slane %v2352, 1
      %v2977 = vsel %vm2756, %v2974, %v2976
      %v2978 = vrot.slane %v2353, 1
      %v2979 = vsel %vm2756, %v2976, %v2978
      %v2980 = vrot.slane %v2354, 1
      %v2981 = vsel %vm2756, %v2978, %v2980
      %v2982 = vrot.slane %v2355, 1
      %v2983 = vsel %vm2756, %v2980, %v2982
      %v2984 = vrot.slane %v2356, 1
      %v2985 = vsel %vm2756, %v2982, %v2984
      %v2986 = vrot.slane %v2357, 1
      %v2987 = vsel %vm2756, %v2984, %v2986
      %v2988 = vrot.slane %v2358, 1
      %v2989 = vsel %vm2756, %v2986, %v2988
      %v2990 = vrot.slane %v2359, 1
      %v2991 = vsel %vm2756, %v2988, %v2990
      %v2992 = vrot.slane %v2360, 1
      %v2993 = vsel %vm2756, %v2990, %v2992
      %v2994 = vrot.slane %v2361, 1
      %v2995 = vsel %vm2756, %v2992, %v2994
      %v2996 = vrot.slane %v2362, 1
      %v2997 = vsel %vm2756, %v2994, %v2996
      %v2998 = vrot.slane %v2363, 1
      %v2999 = vsel %vm2756, %v2996, %v2998
      %v3000 = vrot.slane %v2364, 1
      %v3001 = vsel %vm2756, %v2998, %v3000
      %v3002 = vrot.slane %v2365, 1
      %v3003 = vsel %vm2756, %v3000, %v3002
      %v3004 = vrot.slane %v2366, 1
      %v3005 = vsel %vm2756, %v3002, %v3004
      %v3006 = vrot.slane %v2367, 1
      %v3007 = vsel %vm2756, %v3004, %v3006
      %v3008 = vrot.slane %v2368, 1
      %v3009 = vsel %vm2756, %v3006, %v3008
      %v3010 = vrot.slane %v2369, 1
      %v3011 = vsel %vm2756, %v3008, %v3010
      %v3012 = vrot.slane %v2370, 1
      %v3013 = vsel %vm2756, %v3010, %v3012
      %v3014 = vrot.slane %v2371, 1
      %v3015 = vsel %vm2756, %v3012, %v3014
      %v3016 = vrot.slane %v2372, 1
      %v3017 = vsel %vm2756, %v3014, %v3016
      %v3018 = vrot.slane %v2373, 1
      %v3019 = vsel %vm2756, %v3016, %v3018
      %v3020 = vrot.slane %v2374, 1
      %v3021 = vsel %vm2756, %v3018, %v3020
      %v3022 = vrot.slane %v2375, 1
      %v3023 = vsel %vm2756, %v3020, %v3022
      %v3024 = vrot.slane %v2376, 1
      %v3025 = vsel %vm2756, %v3022, %v3024
      %v3026 = vrot.slane %v2377, 1
      %v3027 = vsel %vm2756, %v3024, %v3026
      %v3028 = vrot.slane %v2378, 1
      %v3029 = vsel %vm2756, %v3026, %v3028
      %v3030 = vrot.slane %v2379, 1
      %v3031 = vsel %vm2756, %v3028, %v3030
      %v3032 = vrot.slane %v2380, 1
      %v3033 = vsel %vm2756, %v3030, %v3032
      %v3034 = vrot.slane %v2381, 1
      %v3035 = vsel %vm2756, %v3032, %v3034
      %v3036 = vrot.slane %v2382, 1
      %v3037 = vsel %vm2756, %v3034, %v3036
      %v3038 = vrot.slane %v2383, 1
      %v3039 = vsel %vm2756, %v3036, %v3038
      %v3040 = vrot.slane %v2384, 1
      %v3041 = vsel %vm2756, %v3038, %v3040
      %v3042 = vrot.slane %v2385, 1
      %v3043 = vsel %vm2756, %v3040, %v3042
      %v3044 = vrot.slane %v2386, 1
      %v3045 = vsel %vm2756, %v3042, %v3044
      %v3046 = vrot.slane %v2387, 1
      %v3047 = vsel %vm2756, %v3044, %v3046
      %v3048 = vrot.slane %v2388, 1
      %v3049 = vsel %vm2756, %v3046, %v3048
      %v3050 = vrot.slane %v2389, 1
      %v3051 = vsel %vm2756, %v3048, %v3050
      %v3052 = vrot.slane %v2390, 1
      %v3053 = vsel %vm2756, %v3050, %v3052
      %v3054 = vrot.slane %v2391, 1
      %v3055 = vsel %vm2756, %v3052, %v3054
      %v3056 = vrot.slane %v2392, 1
      %v3057 = vsel %vm2756, %v3054, %v3056
      %v3058 = vrot.slane %v2393, 1
      %v3059 = vsel %vm2756, %v3056, %v3058
      %v3060 = vrot.slane %v2394, 1
      %v3061 = vsel %vm2756, %v3058, %v3060
      %v3062 = vrot.slane %v2395, 1
      %v3063 = vsel %vm2756, %v3060, %v3062
      %v3064 = vrot.slane %v2396, 1
      %v3065 = vsel %vm2756, %v3062, %v3064
      %v3066 = vrot.slane %v2397, 1
      %v3067 = vsel %vm2756, %v3064, %v3066
      %v3068 = vrot.slane %v2398, 1
      %v3069 = vsel %vm2756, %v3066, %v3068
      %v3070 = vrot.slane %v2399, 1
      %v3071 = vsel %vm2756, %v3068, %v3070
      %v3072 = vrot.slane %v2400, 1
      %v3073 = vsel %vm2756, %v3070, %v3072
      %v3074 = vrot.slane %v2401, 1
      %v3075 = vsel %vm2756, %v3072, %v3074
      %v3076 = vrot.slane %v2402, 1
      %v3077 = vsel %vm2756, %v3074, %v3076
      %v3078 = vrot.slane %v2403, 1
      %v3079 = vsel %vm2756, %v3076, %v3078
      %v3080 = vrot.slane %v2404, 1
      %v3081 = vsel %vm2756, %v3078, %v3080
      %v3082 = vrot.slane %v2405, 1
      %v3083 = vsel %vm2756, %v3080, %v3082
      %v3084 = vrot.slane %v2406, 1
      %v3085 = vsel %vm2756, %v3082, %v3084
      %v3086 = vrot.slane %v2407, 1
      %v3087 = vsel %vm2756, %v3084, %v3086
      %v3088 = vrot.slane %v2408, 1
      %v3089 = vsel %vm2756, %v3086, %v3088
      %v3090 = vrot.slane %v2409, 1
      %v3091 = vsel %vm2756, %v3088, %v3090
      %v3092 = vrot.slane %v2410, 1
      %v3093 = vsel %vm2756, %v3090, %v3092
      %v3094 = vrot.slane %v2411, 1
      %v3095 = vsel %vm2756, %v3092, %v3094
      %v3096 = vrot.slane %v2412, 1
      %v3097 = vsel %vm2756, %v3094, %v3096
      %v3098 = vrot.slane %v2413, 1
      %v3099 = vsel %vm2756, %v3096, %v3098
      %v3100 = vrot.slane %v2414, 1
      %v3101 = vsel %vm2756, %v3098, %v3100
      %v3102 = vrot.slane %v2415, 1
      %v3103 = vsel %vm2756, %v3100, %v3102
      %v3104 = vrot.slane %v2416, 1
      %v3105 = vsel %vm2756, %v3102, %v3104
      %v3106 = vrot.slane %v2417, 1
      %v3107 = vsel %vm2756, %v3104, %v3106
      %v3108 = vrot.slane %v2418, 1
      %v3109 = vsel %vm2756, %v3106, %v3108
      %v3110 = vrot.slane %v2419, 1
      %v3111 = vsel %vm2756, %v3108, %v3110
      %v3112 = vrot.slane %v2420, 1
      %v3113 = vsel %vm2756, %v3110, %v3112
      %v3114 = vrot.slane %v2421, 1
      %v3115 = vsel %vm2756, %v3112, %v3114
      %v3116 = vrot.slane %v2422, 1
      %v3117 = vsel %vm2756, %v3114, %v3116
      %v3118 = vrot.slane %v2423, 1
      %v3119 = vsel %vm2756, %v3116, %v3118
      %v3120 = vrot.slane %v2424, 1
      %v3121 = vsel %vm2756, %v3118, %v3120
      %v3122 = vrot.slane %v2425, 1
      %v3123 = vsel %vm2756, %v3120, %v3122
      %v3124 = vrot.slane %v2426, 1
      %v3125 = vsel %vm2756, %v3122, %v3124
      %v3126 = vrot.slane %v2427, 1
      %v3127 = vsel %vm2756, %v3124, %v3126
      %v3128 = vrot.slane %v2428, 1
      %v3129 = vsel %vm2756, %v3126, %v3128
      %v3130 = vrot.slane %v2429, 1
      %v3131 = vsel %vm2756, %v3128, %v3130
      %v3132 = vrot.slane %v2430, 1
      %v3133 = vsel %vm2756, %v3130, %v3132
      %v3134 = vrot.slane %v2431, 1
      %v3135 = vsel %vm2756, %v3132, %v3134
      %v3136 = vrot.slane %v2432, 1
      %v3137 = vsel %vm2756, %v3134, %v3136
      %v3138 = vrot.slane %v2433, 1
      %v3139 = vsel %vm2756, %v3136, %v3138
      %v3140 = vrot.slane %v2434, 1
      %v3141 = vsel %vm2756, %v3138, %v3140
      %v3142 = vrot.slane %v2435, 1
      %v3143 = vsel %vm2756, %v3140, %v3142
      %v3144 = vrot.slane %v2436, 1
      %v3145 = vsel %vm2756, %v3142, %v3144
      %v3146 = vrot.slane %v2437, 1
      %v3147 = vsel %vm2756, %v3144, %v3146
      %v3148 = vrot.slane %v2438, 1
      %v3149 = vsel %vm2756, %v3146, %v3148
      %v3150 = vrot.slane %v2439, 1
      %v3151 = vsel %vm2756, %v3148, %v3150
      %v3152 = vrot.slane %v2440, 1
      %v3153 = vsel %vm2756, %v3150, %v3152
      %v3154 = vrot.slane %v2441, 1
      %v3155 = vsel %vm2756, %v3152, %v3154
      %v3156 = vrot.slane %v2442, 1
      %v3157 = vsel %vm2756, %v3154, %v3156
      %v3158 = vrot.slane %v2443, 1
      %v3159 = vsel %vm2756, %v3156, %v3158
      %v3160 = vrot.slane %v2444, 1
      %v3161 = vsel %vm2756, %v3158, %v3160
      %v3162 = vrot.slane %v2445, 1
      %v3163 = vsel %vm2756, %v3160, %v3162
      %v3164 = vrot.slane %v2446, 1
      %v3165 = vsel %vm2756, %v3162, %v3164
      %v3166 = vrot.slane %v2447, 1
      %v3167 = vsel %vm2756, %v3164, %v3166
      %v3168 = vrot.slane %v2448, 1
      %v3169 = vsel %vm2756, %v3166, %v3168
      %v3170 = vrot.slane %v2449, 1
      %v3171 = vsel %vm2756, %v3168, %v3170
      %v3172 = vrot.slane %v2450, 1
      %v3173 = vsel %vm2756, %v3170, %v3172
      %v3174 = vrot.slane %v2451, 1
      %v3175 = vsel %vm2756, %v3172, %v3174
      %v3176 = vrot.slane %v2452, 1
      %v3177 = vsel %vm2756, %v3174, %v3176
      %v3178 = vrot.slane %v2453, 1
      %v3179 = vsel %vm2756, %v3176, %v3178
      %v3180 = vrot.slane %v2454, 1
      %v3181 = vsel %vm2756, %v3178, %v3180
      %v3182 = vrot.slane %v2455, 1
      %v3183 = vsel %vm2756, %v3180, %v3182
      %v3184 = vrot.slane %v2456, 1
      %v3185 = vsel %vm2756, %v3182, %v3184
      %v3186 = vrot.slane %v2457, 1
      %v3187 = vsel %vm2756, %v3184, %v3186
      %v3188 = vrot.slane %v2458, 1
      %v3189 = vsel %vm2756, %v3186, %v3188
      %v3190 = vrot.slane %v2459, 1
      %v3191 = vsel %vm2756, %v3188, %v3190
      %v3192 = vrot.slane %v2460, 1
      %v3193 = vsel %vm2756, %v3190, %v3192
      %v3194 = vrot.slane %v2461, 1
      %v3195 = vsel %vm2756, %v3192, %v3194
      %v3196 = vrot.slane %v2462, 1
      %v3197 = vsel %vm2756, %v3194, %v3196
      %v3198 = vrot.slane %v2463, 1
      %v3199 = vsel %vm2756, %v3196, %v3198
      %v3200 = vrot.slane %v2464, 1
      %v3201 = vsel %vm2756, %v3198, %v3200
      %v3202 = vrot.slane %v2465, 1
      %v3203 = vsel %vm2756, %v3200, %v3202
      %v3204 = vrot.slane %v2466, 1
      %v3205 = vsel %vm2756, %v3202, %v3204
      %v3206 = vrot.slane %v2467, 1
      %v3207 = vsel %vm2756, %v3204, %v3206
      %v3208 = vrot.slane %v2468, 1
      %v3209 = vsel %vm2756, %v3206, %v3208
      %v3210 = vrot.slane %v2469, 1
      %v3211 = vsel %vm2756, %v3208, %v3210
      %v3212 = vrot.slane %v2470, 1
      %v3213 = vsel %vm2756, %v3210, %v3212
      %v3214 = vrot.slane %v2471, 1
      %v3215 = vsel %vm2756, %v3212, %v3214
      %v3216 = vrot.slane %v2472, 1
      %v3217 = vsel %vm2756, %v3214, %v3216
      %v3218 = vrot.slane %v2473, 1
      %v3219 = vsel %vm2756, %v3216, %v3218
      %v3220 = vrot.slane %v2474, 1
      %v3221 = vsel %vm2756, %v3218, %v3220
      %v3222 = vrot.slane %v2475, 1
      %v3223 = vsel %vm2756, %v3220, %v3222
      %v3224 = vrot.slane %v2476, 1
      %v3225 = vsel %vm2756, %v3222, %v3224
      %v3226 = vrot.slane %v2477, 1
      %v3227 = vsel %vm2756, %v3224, %v3226
      %v3228 = vrot.slane %v2478, 1
      %v3229 = vsel %vm2756, %v3226, %v3228
      %v3230 = vrot.slane %v2479, 1
      %v3231 = vsel %vm2756, %v3228, %v3230
      %v3232 = vrot.slane %v2480, 1
      %v3233 = vsel %vm2756, %v3230, %v3232
      %v3234 = vrot.slane %v2481, 1
      %v3235 = vsel %vm2756, %v3232, %v3234
      %v3236 = vrot.slane %v2482, 1
      %v3237 = vsel %vm2756, %v3234, %v3236
      %v3238 = vrot.slane %v2483, 1
      %v3239 = vsel %vm2756, %v3236, %v3238
      %v3240 = vrot.slane %v2484, 1
      %v3241 = vsel %vm2756, %v3238, %v3240
      %v3242 = vrot.slane %v2485, 1
      %v3243 = vsel %vm2756, %v3240, %v3242
      %v3244 = vrot.slane %v2486, 1
      %v3245 = vsel %vm2756, %v3242, %v3244
      %v3246 = vrot.slane %v2487, 1
      %v3247 = vsel %vm2756, %v3244, %v3246
      %v3248 = vrot.slane %v2488, 1
      %v3249 = vsel %vm2756, %v3246, %v3248
      %v3250 = vrot.slane %v2489, 1
      %v3251 = vsel %vm2756, %v3248, %v3250
      %v3252 = vrot.slane %v2490, 1
      %v3253 = vsel %vm2756, %v3250, %v3252
      %v3254 = vrot.slane %v2491, 1
      %v3255 = vsel %vm2756, %v3252, %v3254
      %v3256 = vrot.slane %v2492, 1
      %v3257 = vsel %vm2756, %v3254, %v3256
      %v3258 = vrot.slane %v2493, 1
      %v3259 = vsel %vm2756, %v3256, %v3258
      %v3260 = vrot.slane %v2494, 1
      %v3261 = vsel %vm2756, %v3258, %v3260
      %v3262 = vrot.slane %v2495, 1
      %v3263 = vsel %vm2756, %v3260, %v3262
      %v3264 = vrot.slane %v2496, 1
      %v3265 = vsel %vm2756, %v3262, %v3264
      %v3266 = vrot.slane %v2497, 1
      %v3267 = vsel %vm2756, %v3264, %v3266
      %v3268 = vrot.slane %v2498, 1
      %v3269 = vsel %vm2756, %v3266, %v3268
      %v3526 = vadd.f32 %v1977, %v2759
      %v3527 = vadd.f32 %v1978, %v2761
      %v3528 = vadd.f32 %v1979, %v2763
      %v3529 = vadd.f32 %v1980, %v2765
      %v3530 = vadd.f32 %v1981, %v2767
      %v3531 = vadd.f32 %v1982, %v2769
      %v3532 = vadd.f32 %v1983, %v2771
      %v3533 = vadd.f32 %v1984, %v2773
      %v3534 = vadd.f32 %v1985, %v2775
      %v3535 = vadd.f32 %v1986, %v2777
      %v3536 = vadd.f32 %v1987, %v2779
      %v3537 = vadd.f32 %v1988, %v2781
      %v3538 = vadd.f32 %v1989, %v2783
      %v3539 = vadd.f32 %v1990, %v2785
      %v3540 = vadd.f32 %v1991, %v2787
      %v3541 = vadd.f32 %v1992, %v2789
      %v3542 = vadd.f32 %v1993, %v2791
      %v3543 = vadd.f32 %v1994, %v2793
      %v3544 = vadd.f32 %v1995, %v2795
      %v3545 = vadd.f32 %v1996, %v2797
      %v3546 = vadd.f32 %v1997, %v2799
      %v3547 = vadd.f32 %v1998, %v2801
      %v3548 = vadd.f32 %v1999, %v2803
      %v3549 = vadd.f32 %v2000, %v2805
      %v3550 = vadd.f32 %v2001, %v2807
      %v3551 = vadd.f32 %v2002, %v2809
      %v3552 = vadd.f32 %v2003, %v2811
      %v3553 = vadd.f32 %v2004, %v2813
      %v3554 = vadd.f32 %v2005, %v2815
      %v3555 = vadd.f32 %v2006, %v2817
      %v3556 = vadd.f32 %v2007, %v2819
      %v3557 = vadd.f32 %v2008, %v2821
      %v3558 = vadd.f32 %v2009, %v2823
      %v3559 = vadd.f32 %v2010, %v2825
      %v3560 = vadd.f32 %v2011, %v2827
      %v3561 = vadd.f32 %v2012, %v2829
      %v3562 = vadd.f32 %v2013, %v2831
      %v3563 = vadd.f32 %v2014, %v2833
      %v3564 = vadd.f32 %v2015, %v2835
      %v3565 = vadd.f32 %v2016, %v2837
      %v3566 = vadd.f32 %v2017, %v2839
      %v3567 = vadd.f32 %v2018, %v2841
      %v3568 = vadd.f32 %v2019, %v2843
      %v3569 = vadd.f32 %v2020, %v2845
      %v3570 = vadd.f32 %v2021, %v2847
      %v3571 = vadd.f32 %v2022, %v2849
      %v3572 = vadd.f32 %v2023, %v2851
      %v3573 = vadd.f32 %v2024, %v2853
      %v3574 = vadd.f32 %v2025, %v2855
      %v3575 = vadd.f32 %v2026, %v2857
      %v3576 = vadd.f32 %v2027, %v2859
      %v3577 = vadd.f32 %v2028, %v2861
      %v3578 = vadd.f32 %v2029, %v2863
      %v3579 = vadd.f32 %v2030, %v2865
      %v3580 = vadd.f32 %v2031, %v2867
      %v3581 = vadd.f32 %v2032, %v2869
      %v3582 = vadd.f32 %v2033, %v2871
      %v3583 = vadd.f32 %v2034, %v2873
      %v3584 = vadd.f32 %v2035, %v2875
      %v3585 = vadd.f32 %v2036, %v2877
      %v3586 = vadd.f32 %v2037, %v2879
      %v3587 = vadd.f32 %v2038, %v2881
      %v3588 = vadd.f32 %v2039, %v2883
      %v3589 = vadd.f32 %v2040, %v2885
      %v3590 = vadd.f32 %v2041, %v2887
      %v3591 = vadd.f32 %v2042, %v2889
      %v3592 = vadd.f32 %v2043, %v2891
      %v3593 = vadd.f32 %v2044, %v2893
      %v3594 = vadd.f32 %v2045, %v2895
      %v3595 = vadd.f32 %v2046, %v2897
      %v3596 = vadd.f32 %v2047, %v2899
      %v3597 = vadd.f32 %v2048, %v2901
      %v3598 = vadd.f32 %v2049, %v2903
      %v3599 = vadd.f32 %v2050, %v2905
      %v3600 = vadd.f32 %v2051, %v2907
      %v3601 = vadd.f32 %v2052, %v2909
      %v3602 = vadd.f32 %v2053, %v2911
      %v3603 = vadd.f32 %v2054, %v2913
      %v3604 = vadd.f32 %v2055, %v2915
      %v3605 = vadd.f32 %v2056, %v2917
      %v3606 = vadd.f32 %v2057, %v2919
      %v3607 = vadd.f32 %v2058, %v2921
      %v3608 = vadd.f32 %v2059, %v2923
      %v3609 = vadd.f32 %v2060, %v2925
      %v3610 = vadd.f32 %v2061, %v2927
      %v3611 = vadd.f32 %v2062, %v2929
      %v3612 = vadd.f32 %v2063, %v2931
      %v3613 = vadd.f32 %v2064, %v2933
      %v3614 = vadd.f32 %v2065, %v2935
      %v3615 = vadd.f32 %v2066, %v2937
      %v3616 = vadd.f32 %v2067, %v2939
      %v3617 = vadd.f32 %v2068, %v2941
      %v3618 = vadd.f32 %v2069, %v2943
      %v3619 = vadd.f32 %v2070, %v2945
      %v3620 = vadd.f32 %v2071, %v2947
      %v3621 = vadd.f32 %v2072, %v2949
      %v3622 = vadd.f32 %v2073, %v2951
      %v3623 = vadd.f32 %v2074, %v2953
      %v3624 = vadd.f32 %v2075, %v2955
      %v3625 = vadd.f32 %v2076, %v2957
      %v3626 = vadd.f32 %v2077, %v2959
      %v3627 = vadd.f32 %v2078, %v2961
      %v3628 = vadd.f32 %v2079, %v2963
      %v3629 = vadd.f32 %v2080, %v2965
      %v3630 = vadd.f32 %v2081, %v2967
      %v3631 = vadd.f32 %v2082, %v2969
      %v3632 = vadd.f32 %v2083, %v2971
      %v3633 = vadd.f32 %v2084, %v2973
      %v3634 = vadd.f32 %v2085, %v2975
      %v3635 = vadd.f32 %v2086, %v2977
      %v3636 = vadd.f32 %v2087, %v2979
      %v3637 = vadd.f32 %v2088, %v2981
      %v3638 = vadd.f32 %v2089, %v2983
      %v3639 = vadd.f32 %v2090, %v2985
      %v3640 = vadd.f32 %v2091, %v2987
      %v3641 = vadd.f32 %v2092, %v2989
      %v3642 = vadd.f32 %v2093, %v2991
      %v3643 = vadd.f32 %v2094, %v2993
      %v3644 = vadd.f32 %v2095, %v2995
      %v3645 = vadd.f32 %v2096, %v2997
      %v3646 = vadd.f32 %v2097, %v2999
      %v3647 = vadd.f32 %v2098, %v3001
      %v3648 = vadd.f32 %v2099, %v3003
      %v3649 = vadd.f32 %v2100, %v3005
      %v3650 = vadd.f32 %v2101, %v3007
      %v3651 = vadd.f32 %v2102, %v3009
      %v3652 = vadd.f32 %v2103, %v3011
      %v3653 = vadd.f32 %v2104, %v3013
      %v3654 = vadd.f32 %v2105, %v3015
      %v3655 = vadd.f32 %v2106, %v3017
      %v3656 = vadd.f32 %v2107, %v3019
      %v3657 = vadd.f32 %v2108, %v3021
      %v3658 = vadd.f32 %v2109, %v3023
      %v3659 = vadd.f32 %v2110, %v3025
      %v3660 = vadd.f32 %v2111, %v3027
      %v3661 = vadd.f32 %v2112, %v3029
      %v3662 = vadd.f32 %v2113, %v3031
      %v3663 = vadd.f32 %v2114, %v3033
      %v3664 = vadd.f32 %v2115, %v3035
      %v3665 = vadd.f32 %v2116, %v3037
      %v3666 = vadd.f32 %v2117, %v3039
      %v3667 = vadd.f32 %v2118, %v3041
      %v3668 = vadd.f32 %v2119, %v3043
      %v3669 = vadd.f32 %v2120, %v3045
      %v3670 = vadd.f32 %v2121, %v3047
      %v3671 = vadd.f32 %v2122, %v3049
      %v3672 = vadd.f32 %v2123, %v3051
      %v3673 = vadd.f32 %v2124, %v3053
      %v3674 = vadd.f32 %v2125, %v3055
      %v3675 = vadd.f32 %v2126, %v3057
      %v3676 = vadd.f32 %v2127, %v3059
      %v3677 = vadd.f32 %v2128, %v3061
      %v3678 = vadd.f32 %v2129, %v3063
      %v3679 = vadd.f32 %v2130, %v3065
      %v3680 = vadd.f32 %v2131, %v3067
      %v3681 = vadd.f32 %v2132, %v3069
      %v3682 = vadd.f32 %v2133, %v3071
      %v3683 = vadd.f32 %v2134, %v3073
      %v3684 = vadd.f32 %v2135, %v3075
      %v3685 = vadd.f32 %v2136, %v3077
      %v3686 = vadd.f32 %v2137, %v3079
      %v3687 = vadd.f32 %v2138, %v3081
      %v3688 = vadd.f32 %v2139, %v3083
      %v3689 = vadd.f32 %v2140, %v3085
      %v3690 = vadd.f32 %v2141, %v3087
      %v3691 = vadd.f32 %v2142, %v3089
      %v3692 = vadd.f32 %v2143, %v3091
      %v3693 = vadd.f32 %v2144, %v3093
      %v3694 = vadd.f32 %v2145, %v3095
      %v3695 = vadd.f32 %v2146, %v3097
      %v3696 = vadd.f32 %v2147, %v3099
      %v3697 = vadd.f32 %v2148, %v3101
      %v3698 = vadd.f32 %v2149, %v3103
      %v3699 = vadd.f32 %v2150, %v3105
      %v3700 = vadd.f32 %v2151, %v3107
      %v3701 = vadd.f32 %v2152, %v3109
      %v3702 = vadd.f32 %v2153, %v3111
      %v3703 = vadd.f32 %v2154, %v3113
      %v3704 = vadd.f32 %v2155, %v3115
      %v3705 = vadd.f32 %v2156, %v3117
      %v3706 = vadd.f32 %v2157, %v3119
      %v3707 = vadd.f32 %v2158, %v3121
      %v3708 = vadd.f32 %v2159, %v3123
      %v3709 = vadd.f32 %v2160, %v3125
      %v3710 = vadd.f32 %v2161, %v3127
      %v3711 = vadd.f32 %v2162, %v3129
      %v3712 = vadd.f32 %v2163, %v3131
      %v3713 = vadd.f32 %v2164, %v3133
      %v3714 = vadd.f32 %v2165, %v3135
      %v3715 = vadd.f32 %v2166, %v3137
      %v3716 = vadd.f32 %v2167, %v3139
      %v3717 = vadd.f32 %v2168, %v3141
      %v3718 = vadd.f32 %v2169, %v3143
      %v3719 = vadd.f32 %v2170, %v3145
      %v3720 = vadd.f32 %v2171, %v3147
      %v3721 = vadd.f32 %v2172, %v3149
      %v3722 = vadd.f32 %v2173, %v3151
      %v3723 = vadd.f32 %v2174, %v3153
      %v3724 = vadd.f32 %v2175, %v3155
      %v3725 = vadd.f32 %v2176, %v3157
      %v3726 = vadd.f32 %v2177, %v3159
      %v3727 = vadd.f32 %v2178, %v3161
      %v3728 = vadd.f32 %v2179, %v3163
      %v3729 = vadd.f32 %v2180, %v3165
      %v3730 = vadd.f32 %v2181, %v3167
      %v3731 = vadd.f32 %v2182, %v3169
      %v3732 = vadd.f32 %v2183, %v3171
      %v3733 = vadd.f32 %v2184, %v3173
      %v3734 = vadd.f32 %v2185, %v3175
      %v3735 = vadd.f32 %v2186, %v3177
      %v3736 = vadd.f32 %v2187, %v3179
      %v3737 = vadd.f32 %v2188, %v3181
      %v3738 = vadd.f32 %v2189, %v3183
      %v3739 = vadd.f32 %v2190, %v3185
      %v3740 = vadd.f32 %v2191, %v3187
      %v3741 = vadd.f32 %v2192, %v3189
      %v3742 = vadd.f32 %v2193, %v3191
      %v3743 = vadd.f32 %v2194, %v3193
      %v3744 = vadd.f32 %v2195, %v3195
      %v3745 = vadd.f32 %v2196, %v3197
      %v3746 = vadd.f32 %v2197, %v3199
      %v3747 = vadd.f32 %v2198, %v3201
      %v3748 = vadd.f32 %v2199, %v3203
      %v3749 = vadd.f32 %v2200, %v3205
      %v3750 = vadd.f32 %v2201, %v3207
      %v3751 = vadd.f32 %v2202, %v3209
      %v3752 = vadd.f32 %v2203, %v3211
      %v3753 = vadd.f32 %v2204, %v3213
      %v3754 = vadd.f32 %v2205, %v3215
      %v3755 = vadd.f32 %v2206, %v3217
      %v3756 = vadd.f32 %v2207, %v3219
      %v3757 = vadd.f32 %v2208, %v3221
      %v3758 = vadd.f32 %v2209, %v3223
      %v3759 = vadd.f32 %v2210, %v3225
      %v3760 = vadd.f32 %v2211, %v3227
      %v3761 = vadd.f32 %v2212, %v3229
      %v3762 = vadd.f32 %v2213, %v3231
      %v3763 = vadd.f32 %v2214, %v3233
      %v3764 = vadd.f32 %v2215, %v3235
      %v3765 = vadd.f32 %v2216, %v3237
      %v3766 = vadd.f32 %v2217, %v3239
      %v3767 = vadd.f32 %v2218, %v3241
      %v3768 = vadd.f32 %v2219, %v3243
      %v3769 = vadd.f32 %v2220, %v3245
      %v3770 = vadd.f32 %v2221, %v3247
      %v3771 = vadd.f32 %v2222, %v3249
      %v3772 = vadd.f32 %v2223, %v3251
      %v3773 = vadd.f32 %v2224, %v3253
      %v3774 = vadd.f32 %v2225, %v3255
      %v3775 = vadd.f32 %v2226, %v3257
      %v3776 = vadd.f32 %v2227, %v3259
      %v3777 = vadd.f32 %v2228, %v3261
      %v3778 = vadd.f32 %v2229, %v3263
      %v3779 = vadd.f32 %v2230, %v3265
      %v3780 = vadd.f32 %v2231, %v3267
      %v3781 = vadd.f32 %v2232, %v3269
      %v3782 = vlaneseq
      %v3783 = vshrl.u32 %v3782, 7
      %v3784 = vsub.s32 2, %v3783
      %v3785 = vrot.slane %v430, %v3784
      %v3786 = vmul.f32 %v440, %v3785
      %v3787 = vmul.f32 %v445, %v3785
      %v3788 = vmul.f32 %v450, %v3785
      %v3789 = vmul.f32 %v455, %v3785
      %v3790 = vmul.f32 %v460, %v3785
      %v3791 = vmul.f32 %v465, %v3785
      %v3792 = vmul.f32 %v470, %v3785
      %v3793 = vmul.f32 %v475, %v3785
      %v3794 = vmul.f32 %v480, %v3785
      %v3795 = vmul.f32 %v485, %v3785
      %v3796 = vmul.f32 %v490, %v3785
      %v3797 = vmul.f32 %v495, %v3785
      %v3798 = vmul.f32 %v500, %v3785
      %v3799 = vmul.f32 %v505, %v3785
      %v3800 = vmul.f32 %v510, %v3785
      %v3801 = vmul.f32 %v515, %v3785
      %v3802 = vmul.f32 %v520, %v3785
      %v3803 = vmul.f32 %v525, %v3785
      %v3804 = vmul.f32 %v530, %v3785
      %v3805 = vmul.f32 %v535, %v3785
      %v3806 = vmul.f32 %v540, %v3785
      %v3807 = vmul.f32 %v545, %v3785
      %v3808 = vmul.f32 %v550, %v3785
      %v3809 = vmul.f32 %v555, %v3785
      %v3810 = vmul.f32 %v560, %v3785
      %v3811 = vmul.f32 %v565, %v3785
      %v3812 = vmul.f32 %v570, %v3785
      %v3813 = vmul.f32 %v575, %v3785
      %v3814 = vmul.f32 %v580, %v3785
      %v3815 = vmul.f32 %v585, %v3785
      %v3816 = vmul.f32 %v590, %v3785
      %v3817 = vmul.f32 %v595, %v3785
      %v3818 = vmul.f32 %v600, %v3785
      %v3819 = vmul.f32 %v605, %v3785
      %v3820 = vmul.f32 %v610, %v3785
      %v3821 = vmul.f32 %v615, %v3785
      %v3822 = vmul.f32 %v620, %v3785
      %v3823 = vmul.f32 %v625, %v3785
      %v3824 = vmul.f32 %v630, %v3785
      %v3825 = vmul.f32 %v635, %v3785
      %v3826 = vmul.f32 %v640, %v3785
      %v3827 = vmul.f32 %v645, %v3785
      %v3828 = vmul.f32 %v650, %v3785
      %v3829 = vmul.f32 %v655, %v3785
      %v3830 = vmul.f32 %v660, %v3785
      %v3831 = vmul.f32 %v665, %v3785
      %v3832 = vmul.f32 %v670, %v3785
      %v3833 = vmul.f32 %v675, %v3785
      %v3834 = vmul.f32 %v680, %v3785
      %v3835 = vmul.f32 %v685, %v3785
      %v3836 = vmul.f32 %v690, %v3785
      %v3837 = vmul.f32 %v695, %v3785
      %v3838 = vmul.f32 %v700, %v3785
      %v3839 = vmul.f32 %v705, %v3785
      %v3840 = vmul.f32 %v710, %v3785
      %v3841 = vmul.f32 %v715, %v3785
      %v3842 = vmul.f32 %v720, %v3785
      %v3843 = vmul.f32 %v725, %v3785
      %v3844 = vmul.f32 %v730, %v3785
      %v3845 = vmul.f32 %v735, %v3785
      %v3846 = vmul.f32 %v740, %v3785
      %v3847 = vmul.f32 %v745, %v3785
      %v3848 = vmul.f32 %v750, %v3785
      %v3849 = vmul.f32 %v755, %v3785
      %v3850 = vmul.f32 %v760, %v3785
      %v3851 = vmul.f32 %v765, %v3785
      %v3852 = vmul.f32 %v770, %v3785
      %v3853 = vmul.f32 %v775, %v3785
      %v3854 = vmul.f32 %v780, %v3785
      %v3855 = vmul.f32 %v785, %v3785
      %v3856 = vmul.f32 %v790, %v3785
      %v3857 = vmul.f32 %v795, %v3785
      %v3858 = vmul.f32 %v800, %v3785
      %v3859 = vmul.f32 %v805, %v3785
      %v3860 = vmul.f32 %v810, %v3785
      %v3861 = vmul.f32 %v815, %v3785
      %v3862 = vmul.f32 %v820, %v3785
      %v3863 = vmul.f32 %v825, %v3785
      %v3864 = vmul.f32 %v830, %v3785
      %v3865 = vmul.f32 %v835, %v3785
      %v3866 = vmul.f32 %v840, %v3785
      %v3867 = vmul.f32 %v845, %v3785
      %v3868 = vmul.f32 %v850, %v3785
      %v3869 = vmul.f32 %v855, %v3785
      %v3870 = vmul.f32 %v860, %v3785
      %v3871 = vmul.f32 %v865, %v3785
      %v3872 = vmul.f32 %v870, %v3785
      %v3873 = vmul.f32 %v875, %v3785
      %v3874 = vmul.f32 %v880, %v3785
      %v3875 = vmul.f32 %v885, %v3785
      %v3876 = vmul.f32 %v890, %v3785
      %v3877 = vmul.f32 %v895, %v3785
      %v3878 = vmul.f32 %v900, %v3785
      %v3879 = vmul.f32 %v905, %v3785
      %v3880 = vmul.f32 %v910, %v3785
      %v3881 = vmul.f32 %v915, %v3785
      %v3882 = vmul.f32 %v920, %v3785
      %v3883 = vmul.f32 %v925, %v3785
      %v3884 = vmul.f32 %v930, %v3785
      %v3885 = vmul.f32 %v935, %v3785
      %v3886 = vmul.f32 %v940, %v3785
      %v3887 = vmul.f32 %v945, %v3785
      %v3888 = vmul.f32 %v950, %v3785
      %v3889 = vmul.f32 %v955, %v3785
      %v3890 = vmul.f32 %v960, %v3785
      %v3891 = vmul.f32 %v965, %v3785
      %v3892 = vmul.f32 %v970, %v3785
      %v3893 = vmul.f32 %v975, %v3785
      %v3894 = vmul.f32 %v980, %v3785
      %v3895 = vmul.f32 %v985, %v3785
      %v3896 = vmul.f32 %v990, %v3785
      %v3897 = vmul.f32 %v995, %v3785
      %v3898 = vmul.f32 %v1000, %v3785
      %v3899 = vmul.f32 %v1005, %v3785
      %v3900 = vmul.f32 %v1010, %v3785
      %v3901 = vmul.f32 %v1015, %v3785
      %v3902 = vmul.f32 %v1020, %v3785
      %v3903 = vmul.f32 %v1025, %v3785
      %v3904 = vmul.f32 %v1030, %v3785
      %v3905 = vmul.f32 %v1035, %v3785
      %v3906 = vmul.f32 %v1040, %v3785
      %v3907 = vmul.f32 %v1045, %v3785
      %v3908 = vmul.f32 %v1050, %v3785
      %v3909 = vmul.f32 %v1055, %v3785
      %v3910 = vmul.f32 %v1060, %v3785
      %v3911 = vmul.f32 %v1065, %v3785
      %v3912 = vmul.f32 %v1070, %v3785
      %v3913 = vmul.f32 %v1075, %v3785
      %v3914 = vmul.f32 %v1080, %v3785
      %v3915 = vmul.f32 %v1085, %v3785
      %v3916 = vmul.f32 %v1090, %v3785
      %v3917 = vmul.f32 %v1095, %v3785
      %v3918 = vmul.f32 %v1100, %v3785
      %v3919 = vmul.f32 %v1105, %v3785
      %v3920 = vmul.f32 %v1110, %v3785
      %v3921 = vmul.f32 %v1115, %v3785
      %v3922 = vmul.f32 %v1120, %v3785
      %v3923 = vmul.f32 %v1125, %v3785
      %v3924 = vmul.f32 %v1130, %v3785
      %v3925 = vmul.f32 %v1135, %v3785
      %v3926 = vmul.f32 %v1140, %v3785
      %v3927 = vmul.f32 %v1145, %v3785
      %v3928 = vmul.f32 %v1150, %v3785
      %v3929 = vmul.f32 %v1155, %v3785
      %v3930 = vmul.f32 %v1160, %v3785
      %v3931 = vmul.f32 %v1165, %v3785
      %v3932 = vmul.f32 %v1170, %v3785
      %v3933 = vmul.f32 %v1175, %v3785
      %v3934 = vmul.f32 %v1180, %v3785
      %v3935 = vmul.f32 %v1185, %v3785
      %v3936 = vmul.f32 %v1190, %v3785
      %v3937 = vmul.f32 %v1195, %v3785
      %v3938 = vmul.f32 %v1200, %v3785
      %v3939 = vmul.f32 %v1205, %v3785
      %v3940 = vmul.f32 %v1210, %v3785
      %v3941 = vmul.f32 %v1215, %v3785
      %v3942 = vmul.f32 %v1220, %v3785
      %v3943 = vmul.f32 %v1225, %v3785
      %v3944 = vmul.f32 %v1230, %v3785
      %v3945 = vmul.f32 %v1235, %v3785
      %v3946 = vmul.f32 %v1240, %v3785
      %v3947 = vmul.f32 %v1245, %v3785
      %v3948 = vmul.f32 %v1250, %v3785
      %v3949 = vmul.f32 %v1255, %v3785
      %v3950 = vmul.f32 %v1260, %v3785
      %v3951 = vmul.f32 %v1265, %v3785
      %v3952 = vmul.f32 %v1270, %v3785
      %v3953 = vmul.f32 %v1275, %v3785
      %v3954 = vmul.f32 %v1280, %v3785
      %v3955 = vmul.f32 %v1285, %v3785
      %v3956 = vmul.f32 %v1290, %v3785
      %v3957 = vmul.f32 %v1295, %v3785
      %v3958 = vmul.f32 %v1300, %v3785
      %v3959 = vmul.f32 %v1305, %v3785
      %v3960 = vmul.f32 %v1310, %v3785
      %v3961 = vmul.f32 %v1315, %v3785
      %v3962 = vmul.f32 %v1320, %v3785
      %v3963 = vmul.f32 %v1325, %v3785
      %v3964 = vmul.f32 %v1330, %v3785
      %v3965 = vmul.f32 %v1335, %v3785
      %v3966 = vmul.f32 %v1340, %v3785
      %v3967 = vmul.f32 %v1345, %v3785
      %v3968 = vmul.f32 %v1350, %v3785
      %v3969 = vmul.f32 %v1355, %v3785
      %v3970 = vmul.f32 %v1360, %v3785
      %v3971 = vmul.f32 %v1365, %v3785
      %v3972 = vmul.f32 %v1370, %v3785
      %v3973 = vmul.f32 %v1375, %v3785
      %v3974 = vmul.f32 %v1380, %v3785
      %v3975 = vmul.f32 %v1385, %v3785
      %v3976 = vmul.f32 %v1390, %v3785
      %v3977 = vmul.f32 %v1395, %v3785
      %v3978 = vmul.f32 %v1400, %v3785
      %v3979 = vmul.f32 %v1405, %v3785
      %v3980 = vmul.f32 %v1410, %v3785
      %v3981 = vmul.f32 %v1415, %v3785
      %v3982 = vmul.f32 %v1420, %v3785
      %v3983 = vmul.f32 %v1425, %v3785
      %v3984 = vmul.f32 %v1430, %v3785
      %v3985 = vmul.f32 %v1435, %v3785
      %v3986 = vmul.f32 %v1440, %v3785
      %v3987 = vmul.f32 %v1445, %v3785
      %v3988 = vmul.f32 %v1450, %v3785
      %v3989 = vmul.f32 %v1455, %v3785
      %v3990 = vmul.f32 %v1460, %v3785
      %v3991 = vmul.f32 %v1465, %v3785
      %v3992 = vmul.f32 %v1470, %v3785
      %v3993 = vmul.f32 %v1475, %v3785
      %v3994 = vmul.f32 %v1480, %v3785
      %v3995 = vmul.f32 %v1485, %v3785
      %v3996 = vmul.f32 %v1490, %v3785
      %v3997 = vmul.f32 %v1495, %v3785
      %v3998 = vmul.f32 %v1500, %v3785
      %v3999 = vmul.f32 %v1505, %v3785
      %v4000 = vmul.f32 %v1510, %v3785
      %v4001 = vmul.f32 %v1515, %v3785
      %v4002 = vmul.f32 %v1520, %v3785
      %v4003 = vmul.f32 %v1525, %v3785
      %v4004 = vmul.f32 %v1530, %v3785
      %v4005 = vmul.f32 %v1535, %v3785
      %v4006 = vmul.f32 %v1540, %v3785
      %v4007 = vmul.f32 %v1545, %v3785
      %v4008 = vmul.f32 %v1550, %v3785
      %v4009 = vmul.f32 %v1555, %v3785
      %v4010 = vmul.f32 %v1560, %v3785
      %v4011 = vmul.f32 %v1565, %v3785
      %v4012 = vmul.f32 %v1570, %v3785
      %v4013 = vmul.f32 %v1575, %v3785
      %v4014 = vmul.f32 %v1580, %v3785
      %v4015 = vmul.f32 %v1585, %v3785
      %v4016 = vmul.f32 %v1590, %v3785
      %v4017 = vmul.f32 %v1595, %v3785
      %v4018 = vmul.f32 %v1600, %v3785
      %v4019 = vmul.f32 %v1605, %v3785
      %v4020 = vmul.f32 %v1610, %v3785
      %v4021 = vmul.f32 %v1615, %v3785
      %v4022 = vmul.f32 %v1620, %v3785
      %v4023 = vmul.f32 %v1625, %v3785
      %v4024 = vmul.f32 %v1630, %v3785
      %v4025 = vmul.f32 %v1635, %v3785
      %v4026 = vmul.f32 %v1640, %v3785
      %v4027 = vmul.f32 %v1645, %v3785
      %v4028 = vmul.f32 %v1650, %v3785
      %v4029 = vmul.f32 %v1655, %v3785
      %v4030 = vmul.f32 %v1660, %v3785
      %v4031 = vmul.f32 %v1665, %v3785
      %v4032 = vmul.f32 %v1670, %v3785
      %v4033 = vmul.f32 %v1675, %v3785
      %v4034 = vmul.f32 %v1680, %v3785
      %v4035 = vmul.f32 %v1685, %v3785
      %v4036 = vmul.f32 %v1690, %v3785
      %v4037 = vmul.f32 %v1695, %v3785
      %v4038 = vmul.f32 %v1700, %v3785
      %v4039 = vmul.f32 %v1705, %v3785
      %v4040 = vmul.f32 %v1710, %v3785
      %v4041 = vmul.f32 %v1715, %v3785
      %v4042 = vmul.f32 %v2236, %v3785
      %vm4300 = vcmask 1045504
      %v4301 = vrot.slane %v3786, 2
      %v4302 = vrot.slane %v3787, 2
      %v4303 = vsel %vm4300, %v4301, %v4302
      %v4304 = vrot.slane %v3788, 2
      %v4305 = vsel %vm4300, %v4302, %v4304
      %v4306 = vrot.slane %v3789, 2
      %v4307 = vsel %vm4300, %v4304, %v4306
      %v4308 = vrot.slane %v3790, 2
      %v4309 = vsel %vm4300, %v4306, %v4308
      %v4310 = vrot.slane %v3791, 2
      %v4311 = vsel %vm4300, %v4308, %v4310
      %v4312 = vrot.slane %v3792, 2
      %v4313 = vsel %vm4300, %v4310, %v4312
      %v4314 = vrot.slane %v3793, 2
      %v4315 = vsel %vm4300, %v4312, %v4314
      %v4316 = vrot.slane %v3794, 2
      %v4317 = vsel %vm4300, %v4314, %v4316
      %v4318 = vrot.slane %v3795, 2
      %v4319 = vsel %vm4300, %v4316, %v4318
      %v4320 = vrot.slane %v3796, 2
      %v4321 = vsel %vm4300, %v4318, %v4320
      %v4322 = vrot.slane %v3797, 2
      %v4323 = vsel %vm4300, %v4320, %v4322
      %v4324 = vrot.slane %v3798, 2
      %v4325 = vsel %vm4300, %v4322, %v4324
      %v4326 = vrot.slane %v3799, 2
      %v4327 = vsel %vm4300, %v4324, %v4326
      %v4328 = vrot.slane %v3800, 2
      %v4329 = vsel %vm4300, %v4326, %v4328
      %v4330 = vrot.slane %v3801, 2
      %v4331 = vsel %vm4300, %v4328, %v4330
      %v4332 = vrot.slane %v3802, 2
      %v4333 = vsel %vm4300, %v4330, %v4332
      %v4334 = vrot.slane %v3803, 2
      %v4335 = vsel %vm4300, %v4332, %v4334
      %v4336 = vrot.slane %v3804, 2
      %v4337 = vsel %vm4300, %v4334, %v4336
      %v4338 = vrot.slane %v3805, 2
      %v4339 = vsel %vm4300, %v4336, %v4338
      %v4340 = vrot.slane %v3806, 2
      %v4341 = vsel %vm4300, %v4338, %v4340
      %v4342 = vrot.slane %v3807, 2
      %v4343 = vsel %vm4300, %v4340, %v4342
      %v4344 = vrot.slane %v3808, 2
      %v4345 = vsel %vm4300, %v4342, %v4344
      %v4346 = vrot.slane %v3809, 2
      %v4347 = vsel %vm4300, %v4344, %v4346
      %v4348 = vrot.slane %v3810, 2
      %v4349 = vsel %vm4300, %v4346, %v4348
      %v4350 = vrot.slane %v3811, 2
      %v4351 = vsel %vm4300, %v4348, %v4350
      %v4352 = vrot.slane %v3812, 2
      %v4353 = vsel %vm4300, %v4350, %v4352
      %v4354 = vrot.slane %v3813, 2
      %v4355 = vsel %vm4300, %v4352, %v4354
      %v4356 = vrot.slane %v3814, 2
      %v4357 = vsel %vm4300, %v4354, %v4356
      %v4358 = vrot.slane %v3815, 2
      %v4359 = vsel %vm4300, %v4356, %v4358
      %v4360 = vrot.slane %v3816, 2
      %v4361 = vsel %vm4300, %v4358, %v4360
      %v4362 = vrot.slane %v3817, 2
      %v4363 = vsel %vm4300, %v4360, %v4362
      %v4364 = vrot.slane %v3818, 2
      %v4365 = vsel %vm4300, %v4362, %v4364
      %v4366 = vrot.slane %v3819, 2
      %v4367 = vsel %vm4300, %v4364, %v4366
      %v4368 = vrot.slane %v3820, 2
      %v4369 = vsel %vm4300, %v4366, %v4368
      %v4370 = vrot.slane %v3821, 2
      %v4371 = vsel %vm4300, %v4368, %v4370
      %v4372 = vrot.slane %v3822, 2
      %v4373 = vsel %vm4300, %v4370, %v4372
      %v4374 = vrot.slane %v3823, 2
      %v4375 = vsel %vm4300, %v4372, %v4374
      %v4376 = vrot.slane %v3824, 2
      %v4377 = vsel %vm4300, %v4374, %v4376
      %v4378 = vrot.slane %v3825, 2
      %v4379 = vsel %vm4300, %v4376, %v4378
      %v4380 = vrot.slane %v3826, 2
      %v4381 = vsel %vm4300, %v4378, %v4380
      %v4382 = vrot.slane %v3827, 2
      %v4383 = vsel %vm4300, %v4380, %v4382
      %v4384 = vrot.slane %v3828, 2
      %v4385 = vsel %vm4300, %v4382, %v4384
      %v4386 = vrot.slane %v3829, 2
      %v4387 = vsel %vm4300, %v4384, %v4386
      %v4388 = vrot.slane %v3830, 2
      %v4389 = vsel %vm4300, %v4386, %v4388
      %v4390 = vrot.slane %v3831, 2
      %v4391 = vsel %vm4300, %v4388, %v4390
      %v4392 = vrot.slane %v3832, 2
      %v4393 = vsel %vm4300, %v4390, %v4392
      %v4394 = vrot.slane %v3833, 2
      %v4395 = vsel %vm4300, %v4392, %v4394
      %v4396 = vrot.slane %v3834, 2
      %v4397 = vsel %vm4300, %v4394, %v4396
      %v4398 = vrot.slane %v3835, 2
      %v4399 = vsel %vm4300, %v4396, %v4398
      %v4400 = vrot.slane %v3836, 2
      %v4401 = vsel %vm4300, %v4398, %v4400
      %v4402 = vrot.slane %v3837, 2
      %v4403 = vsel %vm4300, %v4400, %v4402
      %v4404 = vrot.slane %v3838, 2
      %v4405 = vsel %vm4300, %v4402, %v4404
      %v4406 = vrot.slane %v3839, 2
      %v4407 = vsel %vm4300, %v4404, %v4406
      %v4408 = vrot.slane %v3840, 2
      %v4409 = vsel %vm4300, %v4406, %v4408
      %v4410 = vrot.slane %v3841, 2
      %v4411 = vsel %vm4300, %v4408, %v4410
      %v4412 = vrot.slane %v3842, 2
      %v4413 = vsel %vm4300, %v4410, %v4412
      %v4414 = vrot.slane %v3843, 2
      %v4415 = vsel %vm4300, %v4412, %v4414
      %v4416 = vrot.slane %v3844, 2
      %v4417 = vsel %vm4300, %v4414, %v4416
      %v4418 = vrot.slane %v3845, 2
      %v4419 = vsel %vm4300, %v4416, %v4418
      %v4420 = vrot.slane %v3846, 2
      %v4421 = vsel %vm4300, %v4418, %v4420
      %v4422 = vrot.slane %v3847, 2
      %v4423 = vsel %vm4300, %v4420, %v4422
      %v4424 = vrot.slane %v3848, 2
      %v4425 = vsel %vm4300, %v4422, %v4424
      %v4426 = vrot.slane %v3849, 2
      %v4427 = vsel %vm4300, %v4424, %v4426
      %v4428 = vrot.slane %v3850, 2
      %v4429 = vsel %vm4300, %v4426, %v4428
      %v4430 = vrot.slane %v3851, 2
      %v4431 = vsel %vm4300, %v4428, %v4430
      %v4432 = vrot.slane %v3852, 2
      %v4433 = vsel %vm4300, %v4430, %v4432
      %v4434 = vrot.slane %v3853, 2
      %v4435 = vsel %vm4300, %v4432, %v4434
      %v4436 = vrot.slane %v3854, 2
      %v4437 = vsel %vm4300, %v4434, %v4436
      %v4438 = vrot.slane %v3855, 2
      %v4439 = vsel %vm4300, %v4436, %v4438
      %v4440 = vrot.slane %v3856, 2
      %v4441 = vsel %vm4300, %v4438, %v4440
      %v4442 = vrot.slane %v3857, 2
      %v4443 = vsel %vm4300, %v4440, %v4442
      %v4444 = vrot.slane %v3858, 2
      %v4445 = vsel %vm4300, %v4442, %v4444
      %v4446 = vrot.slane %v3859, 2
      %v4447 = vsel %vm4300, %v4444, %v4446
      %v4448 = vrot.slane %v3860, 2
      %v4449 = vsel %vm4300, %v4446, %v4448
      %v4450 = vrot.slane %v3861, 2
      %v4451 = vsel %vm4300, %v4448, %v4450
      %v4452 = vrot.slane %v3862, 2
      %v4453 = vsel %vm4300, %v4450, %v4452
      %v4454 = vrot.slane %v3863, 2
      %v4455 = vsel %vm4300, %v4452, %v4454
      %v4456 = vrot.slane %v3864, 2
      %v4457 = vsel %vm4300, %v4454, %v4456
      %v4458 = vrot.slane %v3865, 2
      %v4459 = vsel %vm4300, %v4456, %v4458
      %v4460 = vrot.slane %v3866, 2
      %v4461 = vsel %vm4300, %v4458, %v4460
      %v4462 = vrot.slane %v3867, 2
      %v4463 = vsel %vm4300, %v4460, %v4462
      %v4464 = vrot.slane %v3868, 2
      %v4465 = vsel %vm4300, %v4462, %v4464
      %v4466 = vrot.slane %v3869, 2
      %v4467 = vsel %vm4300, %v4464, %v4466
      %v4468 = vrot.slane %v3870, 2
      %v4469 = vsel %vm4300, %v4466, %v4468
      %v4470 = vrot.slane %v3871, 2
      %v4471 = vsel %vm4300, %v4468, %v4470
      %v4472 = vrot.slane %v3872, 2
      %v4473 = vsel %vm4300, %v4470, %v4472
      %v4474 = vrot.slane %v3873, 2
      %v4475 = vsel %vm4300, %v4472, %v4474
      %v4476 = vrot.slane %v3874, 2
      %v4477 = vsel %vm4300, %v4474, %v4476
      %v4478 = vrot.slane %v3875, 2
      %v4479 = vsel %vm4300, %v4476, %v4478
      %v4480 = vrot.slane %v3876, 2
      %v4481 = vsel %vm4300, %v4478, %v4480
      %v4482 = vrot.slane %v3877, 2
      %v4483 = vsel %vm4300, %v4480, %v4482
      %v4484 = vrot.slane %v3878, 2
      %v4485 = vsel %vm4300, %v4482, %v4484
      %v4486 = vrot.slane %v3879, 2
      %v4487 = vsel %vm4300, %v4484, %v4486
      %v4488 = vrot.slane %v3880, 2
      %v4489 = vsel %vm4300, %v4486, %v4488
      %v4490 = vrot.slane %v3881, 2
      %v4491 = vsel %vm4300, %v4488, %v4490
      %v4492 = vrot.slane %v3882, 2
      %v4493 = vsel %vm4300, %v4490, %v4492
      %v4494 = vrot.slane %v3883, 2
      %v4495 = vsel %vm4300, %v4492, %v4494
      %v4496 = vrot.slane %v3884, 2
      %v4497 = vsel %vm4300, %v4494, %v4496
      %v4498 = vrot.slane %v3885, 2
      %v4499 = vsel %vm4300, %v4496, %v4498
      %v4500 = vrot.slane %v3886, 2
      %v4501 = vsel %vm4300, %v4498, %v4500
      %v4502 = vrot.slane %v3887, 2
      %v4503 = vsel %vm4300, %v4500, %v4502
      %v4504 = vrot.slane %v3888, 2
      %v4505 = vsel %vm4300, %v4502, %v4504
      %v4506 = vrot.slane %v3889, 2
      %v4507 = vsel %vm4300, %v4504, %v4506
      %v4508 = vrot.slane %v3890, 2
      %v4509 = vsel %vm4300, %v4506, %v4508
      %v4510 = vrot.slane %v3891, 2
      %v4511 = vsel %vm4300, %v4508, %v4510
      %v4512 = vrot.slane %v3892, 2
      %v4513 = vsel %vm4300, %v4510, %v4512
      %v4514 = vrot.slane %v3893, 2
      %v4515 = vsel %vm4300, %v4512, %v4514
      %v4516 = vrot.slane %v3894, 2
      %v4517 = vsel %vm4300, %v4514, %v4516
      %v4518 = vrot.slane %v3895, 2
      %v4519 = vsel %vm4300, %v4516, %v4518
      %v4520 = vrot.slane %v3896, 2
      %v4521 = vsel %vm4300, %v4518, %v4520
      %v4522 = vrot.slane %v3897, 2
      %v4523 = vsel %vm4300, %v4520, %v4522
      %v4524 = vrot.slane %v3898, 2
      %v4525 = vsel %vm4300, %v4522, %v4524
      %v4526 = vrot.slane %v3899, 2
      %v4527 = vsel %vm4300, %v4524, %v4526
      %v4528 = vrot.slane %v3900, 2
      %v4529 = vsel %vm4300, %v4526, %v4528
      %v4530 = vrot.slane %v3901, 2
      %v4531 = vsel %vm4300, %v4528, %v4530
      %v4532 = vrot.slane %v3902, 2
      %v4533 = vsel %vm4300, %v4530, %v4532
      %v4534 = vrot.slane %v3903, 2
      %v4535 = vsel %vm4300, %v4532, %v4534
      %v4536 = vrot.slane %v3904, 2
      %v4537 = vsel %vm4300, %v4534, %v4536
      %v4538 = vrot.slane %v3905, 2
      %v4539 = vsel %vm4300, %v4536, %v4538
      %v4540 = vrot.slane %v3906, 2
      %v4541 = vsel %vm4300, %v4538, %v4540
      %v4542 = vrot.slane %v3907, 2
      %v4543 = vsel %vm4300, %v4540, %v4542
      %v4544 = vrot.slane %v3908, 2
      %v4545 = vsel %vm4300, %v4542, %v4544
      %v4546 = vrot.slane %v3909, 2
      %v4547 = vsel %vm4300, %v4544, %v4546
      %v4548 = vrot.slane %v3910, 2
      %v4549 = vsel %vm4300, %v4546, %v4548
      %v4550 = vrot.slane %v3911, 2
      %v4551 = vsel %vm4300, %v4548, %v4550
      %v4552 = vrot.slane %v3912, 2
      %v4553 = vsel %vm4300, %v4550, %v4552
      %v4554 = vrot.slane %v3913, 2
      %v4555 = vsel %vm4300, %v4552, %v4554
      %v4556 = vrot.slane %v3914, 2
      %v4557 = vsel %vm4300, %v4554, %v4556
      %v4558 = vrot.slane %v3915, 2
      %v4559 = vsel %vm4300, %v4556, %v4558
      %v4560 = vrot.slane %v3916, 2
      %v4561 = vsel %vm4300, %v4558, %v4560
      %v4562 = vrot.slane %v3917, 2
      %v4563 = vsel %vm4300, %v4560, %v4562
      %v4564 = vrot.slane %v3918, 2
      %v4565 = vsel %vm4300, %v4562, %v4564
      %v4566 = vrot.slane %v3919, 2
      %v4567 = vsel %vm4300, %v4564, %v4566
      %v4568 = vrot.slane %v3920, 2
      %v4569 = vsel %vm4300, %v4566, %v4568
      %v4570 = vrot.slane %v3921, 2
      %v4571 = vsel %vm4300, %v4568, %v4570
      %v4572 = vrot.slane %v3922, 2
      %v4573 = vsel %vm4300, %v4570, %v4572
      %v4574 = vrot.slane %v3923, 2
      %v4575 = vsel %vm4300, %v4572, %v4574
      %v4576 = vrot.slane %v3924, 2
      %v4577 = vsel %vm4300, %v4574, %v4576
      %v4578 = vrot.slane %v3925, 2
      %v4579 = vsel %vm4300, %v4576, %v4578
      %v4580 = vrot.slane %v3926, 2
      %v4581 = vsel %vm4300, %v4578, %v4580
      %v4582 = vrot.slane %v3927, 2
      %v4583 = vsel %vm4300, %v4580, %v4582
      %v4584 = vrot.slane %v3928, 2
      %v4585 = vsel %vm4300, %v4582, %v4584
      %v4586 = vrot.slane %v3929, 2
      %v4587 = vsel %vm4300, %v4584, %v4586
      %v4588 = vrot.slane %v3930, 2
      %v4589 = vsel %vm4300, %v4586, %v4588
      %v4590 = vrot.slane %v3931, 2
      %v4591 = vsel %vm4300, %v4588, %v4590
      %v4592 = vrot.slane %v3932, 2
      %v4593 = vsel %vm4300, %v4590, %v4592
      %v4594 = vrot.slane %v3933, 2
      %v4595 = vsel %vm4300, %v4592, %v4594
      %v4596 = vrot.slane %v3934, 2
      %v4597 = vsel %vm4300, %v4594, %v4596
      %v4598 = vrot.slane %v3935, 2
      %v4599 = vsel %vm4300, %v4596, %v4598
      %v4600 = vrot.slane %v3936, 2
      %v4601 = vsel %vm4300, %v4598, %v4600
      %v4602 = vrot.slane %v3937, 2
      %v4603 = vsel %vm4300, %v4600, %v4602
      %v4604 = vrot.slane %v3938, 2
      %v4605 = vsel %vm4300, %v4602, %v4604
      %v4606 = vrot.slane %v3939, 2
      %v4607 = vsel %vm4300, %v4604, %v4606
      %v4608 = vrot.slane %v3940, 2
      %v4609 = vsel %vm4300, %v4606, %v4608
      %v4610 = vrot.slane %v3941, 2
      %v4611 = vsel %vm4300, %v4608, %v4610
      %v4612 = vrot.slane %v3942, 2
      %v4613 = vsel %vm4300, %v4610, %v4612
      %v4614 = vrot.slane %v3943, 2
      %v4615 = vsel %vm4300, %v4612, %v4614
      %v4616 = vrot.slane %v3944, 2
      %v4617 = vsel %vm4300, %v4614, %v4616
      %v4618 = vrot.slane %v3945, 2
      %v4619 = vsel %vm4300, %v4616, %v4618
      %v4620 = vrot.slane %v3946, 2
      %v4621 = vsel %vm4300, %v4618, %v4620
      %v4622 = vrot.slane %v3947, 2
      %v4623 = vsel %vm4300, %v4620, %v4622
      %v4624 = vrot.slane %v3948, 2
      %v4625 = vsel %vm4300, %v4622, %v4624
      %v4626 = vrot.slane %v3949, 2
      %v4627 = vsel %vm4300, %v4624, %v4626
      %v4628 = vrot.slane %v3950, 2
      %v4629 = vsel %vm4300, %v4626, %v4628
      %v4630 = vrot.slane %v3951, 2
      %v4631 = vsel %vm4300, %v4628, %v4630
      %v4632 = vrot.slane %v3952, 2
      %v4633 = vsel %vm4300, %v4630, %v4632
      %v4634 = vrot.slane %v3953, 2
      %v4635 = vsel %vm4300, %v4632, %v4634
      %v4636 = vrot.slane %v3954, 2
      %v4637 = vsel %vm4300, %v4634, %v4636
      %v4638 = vrot.slane %v3955, 2
      %v4639 = vsel %vm4300, %v4636, %v4638
      %v4640 = vrot.slane %v3956, 2
      %v4641 = vsel %vm4300, %v4638, %v4640
      %v4642 = vrot.slane %v3957, 2
      %v4643 = vsel %vm4300, %v4640, %v4642
      %v4644 = vrot.slane %v3958, 2
      %v4645 = vsel %vm4300, %v4642, %v4644
      %v4646 = vrot.slane %v3959, 2
      %v4647 = vsel %vm4300, %v4644, %v4646
      %v4648 = vrot.slane %v3960, 2
      %v4649 = vsel %vm4300, %v4646, %v4648
      %v4650 = vrot.slane %v3961, 2
      %v4651 = vsel %vm4300, %v4648, %v4650
      %v4652 = vrot.slane %v3962, 2
      %v4653 = vsel %vm4300, %v4650, %v4652
      %v4654 = vrot.slane %v3963, 2
      %v4655 = vsel %vm4300, %v4652, %v4654
      %v4656 = vrot.slane %v3964, 2
      %v4657 = vsel %vm4300, %v4654, %v4656
      %v4658 = vrot.slane %v3965, 2
      %v4659 = vsel %vm4300, %v4656, %v4658
      %v4660 = vrot.slane %v3966, 2
      %v4661 = vsel %vm4300, %v4658, %v4660
      %v4662 = vrot.slane %v3967, 2
      %v4663 = vsel %vm4300, %v4660, %v4662
      %v4664 = vrot.slane %v3968, 2
      %v4665 = vsel %vm4300, %v4662, %v4664
      %v4666 = vrot.slane %v3969, 2
      %v4667 = vsel %vm4300, %v4664, %v4666
      %v4668 = vrot.slane %v3970, 2
      %v4669 = vsel %vm4300, %v4666, %v4668
      %v4670 = vrot.slane %v3971, 2
      %v4671 = vsel %vm4300, %v4668, %v4670
      %v4672 = vrot.slane %v3972, 2
      %v4673 = vsel %vm4300, %v4670, %v4672
      %v4674 = vrot.slane %v3973, 2
      %v4675 = vsel %vm4300, %v4672, %v4674
      %v4676 = vrot.slane %v3974, 2
      %v4677 = vsel %vm4300, %v4674, %v4676
      %v4678 = vrot.slane %v3975, 2
      %v4679 = vsel %vm4300, %v4676, %v4678
      %v4680 = vrot.slane %v3976, 2
      %v4681 = vsel %vm4300, %v4678, %v4680
      %v4682 = vrot.slane %v3977, 2
      %v4683 = vsel %vm4300, %v4680, %v4682
      %v4684 = vrot.slane %v3978, 2
      %v4685 = vsel %vm4300, %v4682, %v4684
      %v4686 = vrot.slane %v3979, 2
      %v4687 = vsel %vm4300, %v4684, %v4686
      %v4688 = vrot.slane %v3980, 2
      %v4689 = vsel %vm4300, %v4686, %v4688
      %v4690 = vrot.slane %v3981, 2
      %v4691 = vsel %vm4300, %v4688, %v4690
      %v4692 = vrot.slane %v3982, 2
      %v4693 = vsel %vm4300, %v4690, %v4692
      %v4694 = vrot.slane %v3983, 2
      %v4695 = vsel %vm4300, %v4692, %v4694
      %v4696 = vrot.slane %v3984, 2
      %v4697 = vsel %vm4300, %v4694, %v4696
      %v4698 = vrot.slane %v3985, 2
      %v4699 = vsel %vm4300, %v4696, %v4698
      %v4700 = vrot.slane %v3986, 2
      %v4701 = vsel %vm4300, %v4698, %v4700
      %v4702 = vrot.slane %v3987, 2
      %v4703 = vsel %vm4300, %v4700, %v4702
      %v4704 = vrot.slane %v3988, 2
      %v4705 = vsel %vm4300, %v4702, %v4704
      %v4706 = vrot.slane %v3989, 2
      %v4707 = vsel %vm4300, %v4704, %v4706
      %v4708 = vrot.slane %v3990, 2
      %v4709 = vsel %vm4300, %v4706, %v4708
      %v4710 = vrot.slane %v3991, 2
      %v4711 = vsel %vm4300, %v4708, %v4710
      %v4712 = vrot.slane %v3992, 2
      %v4713 = vsel %vm4300, %v4710, %v4712
      %v4714 = vrot.slane %v3993, 2
      %v4715 = vsel %vm4300, %v4712, %v4714
      %v4716 = vrot.slane %v3994, 2
      %v4717 = vsel %vm4300, %v4714, %v4716
      %v4718 = vrot.slane %v3995, 2
      %v4719 = vsel %vm4300, %v4716, %v4718
      %v4720 = vrot.slane %v3996, 2
      %v4721 = vsel %vm4300, %v4718, %v4720
      %v4722 = vrot.slane %v3997, 2
      %v4723 = vsel %vm4300, %v4720, %v4722
      %v4724 = vrot.slane %v3998, 2
      %v4725 = vsel %vm4300, %v4722, %v4724
      %v4726 = vrot.slane %v3999, 2
      %v4727 = vsel %vm4300, %v4724, %v4726
      %v4728 = vrot.slane %v4000, 2
      %v4729 = vsel %vm4300, %v4726, %v4728
      %v4730 = vrot.slane %v4001, 2
      %v4731 = vsel %vm4300, %v4728, %v4730
      %v4732 = vrot.slane %v4002, 2
      %v4733 = vsel %vm4300, %v4730, %v4732
      %v4734 = vrot.slane %v4003, 2
      %v4735 = vsel %vm4300, %v4732, %v4734
      %v4736 = vrot.slane %v4004, 2
      %v4737 = vsel %vm4300, %v4734, %v4736
      %v4738 = vrot.slane %v4005, 2
      %v4739 = vsel %vm4300, %v4736, %v4738
      %v4740 = vrot.slane %v4006, 2
      %v4741 = vsel %vm4300, %v4738, %v4740
      %v4742 = vrot.slane %v4007, 2
      %v4743 = vsel %vm4300, %v4740, %v4742
      %v4744 = vrot.slane %v4008, 2
      %v4745 = vsel %vm4300, %v4742, %v4744
      %v4746 = vrot.slane %v4009, 2
      %v4747 = vsel %vm4300, %v4744, %v4746
      %v4748 = vrot.slane %v4010, 2
      %v4749 = vsel %vm4300, %v4746, %v4748
      %v4750 = vrot.slane %v4011, 2
      %v4751 = vsel %vm4300, %v4748, %v4750
      %v4752 = vrot.slane %v4012, 2
      %v4753 = vsel %vm4300, %v4750, %v4752
      %v4754 = vrot.slane %v4013, 2
      %v4755 = vsel %vm4300, %v4752, %v4754
      %v4756 = vrot.slane %v4014, 2
      %v4757 = vsel %vm4300, %v4754, %v4756
      %v4758 = vrot.slane %v4015, 2
      %v4759 = vsel %vm4300, %v4756, %v4758
      %v4760 = vrot.slane %v4016, 2
      %v4761 = vsel %vm4300, %v4758, %v4760
      %v4762 = vrot.slane %v4017, 2
      %v4763 = vsel %vm4300, %v4760, %v4762
      %v4764 = vrot.slane %v4018, 2
      %v4765 = vsel %vm4300, %v4762, %v4764
      %v4766 = vrot.slane %v4019, 2
      %v4767 = vsel %vm4300, %v4764, %v4766
      %v4768 = vrot.slane %v4020, 2
      %v4769 = vsel %vm4300, %v4766, %v4768
      %v4770 = vrot.slane %v4021, 2
      %v4771 = vsel %vm4300, %v4768, %v4770
      %v4772 = vrot.slane %v4022, 2
      %v4773 = vsel %vm4300, %v4770, %v4772
      %v4774 = vrot.slane %v4023, 2
      %v4775 = vsel %vm4300, %v4772, %v4774
      %v4776 = vrot.slane %v4024, 2
      %v4777 = vsel %vm4300, %v4774, %v4776
      %v4778 = vrot.slane %v4025, 2
      %v4779 = vsel %vm4300, %v4776, %v4778
      %v4780 = vrot.slane %v4026, 2
      %v4781 = vsel %vm4300, %v4778, %v4780
      %v4782 = vrot.slane %v4027, 2
      %v4783 = vsel %vm4300, %v4780, %v4782
      %v4784 = vrot.slane %v4028, 2
      %v4785 = vsel %vm4300, %v4782, %v4784
      %v4786 = vrot.slane %v4029, 2
      %v4787 = vsel %vm4300, %v4784, %v4786
      %v4788 = vrot.slane %v4030, 2
      %v4789 = vsel %vm4300, %v4786, %v4788
      %v4790 = vrot.slane %v4031, 2
      %v4791 = vsel %vm4300, %v4788, %v4790
      %v4792 = vrot.slane %v4032, 2
      %v4793 = vsel %vm4300, %v4790, %v4792
      %v4794 = vrot.slane %v4033, 2
      %v4795 = vsel %vm4300, %v4792, %v4794
      %v4796 = vrot.slane %v4034, 2
      %v4797 = vsel %vm4300, %v4794, %v4796
      %v4798 = vrot.slane %v4035, 2
      %v4799 = vsel %vm4300, %v4796, %v4798
      %v4800 = vrot.slane %v4036, 2
      %v4801 = vsel %vm4300, %v4798, %v4800
      %v4802 = vrot.slane %v4037, 2
      %v4803 = vsel %vm4300, %v4800, %v4802
      %v4804 = vrot.slane %v4038, 2
      %v4805 = vsel %vm4300, %v4802, %v4804
      %v4806 = vrot.slane %v4039, 2
      %v4807 = vsel %vm4300, %v4804, %v4806
      %v4808 = vrot.slane %v4040, 2
      %v4809 = vsel %vm4300, %v4806, %v4808
      %v4810 = vrot.slane %v4041, 2
      %v4811 = vsel %vm4300, %v4808, %v4810
      %v4812 = vrot.slane %v4042, 2
      %v4813 = vsel %vm4300, %v4810, %v4812
      %v5070 = vadd.f32 %v3526, %v4303
      %v5071 = vadd.f32 %v3527, %v4305
      %v5072 = vadd.f32 %v3528, %v4307
      %v5073 = vadd.f32 %v3529, %v4309
      %v5074 = vadd.f32 %v3530, %v4311
      %v5075 = vadd.f32 %v3531, %v4313
      %v5076 = vadd.f32 %v3532, %v4315
      %v5077 = vadd.f32 %v3533, %v4317
      %v5078 = vadd.f32 %v3534, %v4319
      %v5079 = vadd.f32 %v3535, %v4321
      %v5080 = vadd.f32 %v3536, %v4323
      %v5081 = vadd.f32 %v3537, %v4325
      %v5082 = vadd.f32 %v3538, %v4327
      %v5083 = vadd.f32 %v3539, %v4329
      %v5084 = vadd.f32 %v3540, %v4331
      %v5085 = vadd.f32 %v3541, %v4333
      %v5086 = vadd.f32 %v3542, %v4335
      %v5087 = vadd.f32 %v3543, %v4337
      %v5088 = vadd.f32 %v3544, %v4339
      %v5089 = vadd.f32 %v3545, %v4341
      %v5090 = vadd.f32 %v3546, %v4343
      %v5091 = vadd.f32 %v3547, %v4345
      %v5092 = vadd.f32 %v3548, %v4347
      %v5093 = vadd.f32 %v3549, %v4349
      %v5094 = vadd.f32 %v3550, %v4351
      %v5095 = vadd.f32 %v3551, %v4353
      %v5096 = vadd.f32 %v3552, %v4355
      %v5097 = vadd.f32 %v3553, %v4357
      %v5098 = vadd.f32 %v3554, %v4359
      %v5099 = vadd.f32 %v3555, %v4361
      %v5100 = vadd.f32 %v3556, %v4363
      %v5101 = vadd.f32 %v3557, %v4365
      %v5102 = vadd.f32 %v3558, %v4367
      %v5103 = vadd.f32 %v3559, %v4369
      %v5104 = vadd.f32 %v3560, %v4371
      %v5105 = vadd.f32 %v3561, %v4373
      %v5106 = vadd.f32 %v3562, %v4375
      %v5107 = vadd.f32 %v3563, %v4377
      %v5108 = vadd.f32 %v3564, %v4379
      %v5109 = vadd.f32 %v3565, %v4381
      %v5110 = vadd.f32 %v3566, %v4383
      %v5111 = vadd.f32 %v3567, %v4385
      %v5112 = vadd.f32 %v3568, %v4387
      %v5113 = vadd.f32 %v3569, %v4389
      %v5114 = vadd.f32 %v3570, %v4391
      %v5115 = vadd.f32 %v3571, %v4393
      %v5116 = vadd.f32 %v3572, %v4395
      %v5117 = vadd.f32 %v3573, %v4397
      %v5118 = vadd.f32 %v3574, %v4399
      %v5119 = vadd.f32 %v3575, %v4401
      %v5120 = vadd.f32 %v3576, %v4403
      %v5121 = vadd.f32 %v3577, %v4405
      %v5122 = vadd.f32 %v3578, %v4407
      %v5123 = vadd.f32 %v3579, %v4409
      %v5124 = vadd.f32 %v3580, %v4411
      %v5125 = vadd.f32 %v3581, %v4413
      %v5126 = vadd.f32 %v3582, %v4415
      %v5127 = vadd.f32 %v3583, %v4417
      %v5128 = vadd.f32 %v3584, %v4419
      %v5129 = vadd.f32 %v3585, %v4421
      %v5130 = vadd.f32 %v3586, %v4423
      %v5131 = vadd.f32 %v3587, %v4425
      %v5132 = vadd.f32 %v3588, %v4427
      %v5133 = vadd.f32 %v3589, %v4429
      %v5134 = vadd.f32 %v3590, %v4431
      %v5135 = vadd.f32 %v3591, %v4433
      %v5136 = vadd.f32 %v3592, %v4435
      %v5137 = vadd.f32 %v3593, %v4437
      %v5138 = vadd.f32 %v3594, %v4439
      %v5139 = vadd.f32 %v3595, %v4441
      %v5140 = vadd.f32 %v3596, %v4443
      %v5141 = vadd.f32 %v3597, %v4445
      %v5142 = vadd.f32 %v3598, %v4447
      %v5143 = vadd.f32 %v3599, %v4449
      %v5144 = vadd.f32 %v3600, %v4451
      %v5145 = vadd.f32 %v3601, %v4453
      %v5146 = vadd.f32 %v3602, %v4455
      %v5147 = vadd.f32 %v3603, %v4457
      %v5148 = vadd.f32 %v3604, %v4459
      %v5149 = vadd.f32 %v3605, %v4461
      %v5150 = vadd.f32 %v3606, %v4463
      %v5151 = vadd.f32 %v3607, %v4465
      %v5152 = vadd.f32 %v3608, %v4467
      %v5153 = vadd.f32 %v3609, %v4469
      %v5154 = vadd.f32 %v3610, %v4471
      %v5155 = vadd.f32 %v3611, %v4473
      %v5156 = vadd.f32 %v3612, %v4475
      %v5157 = vadd.f32 %v3613, %v4477
      %v5158 = vadd.f32 %v3614, %v4479
      %v5159 = vadd.f32 %v3615, %v4481
      %v5160 = vadd.f32 %v3616, %v4483
      %v5161 = vadd.f32 %v3617, %v4485
      %v5162 = vadd.f32 %v3618, %v4487
      %v5163 = vadd.f32 %v3619, %v4489
      %v5164 = vadd.f32 %v3620, %v4491
      %v5165 = vadd.f32 %v3621, %v4493
      %v5166 = vadd.f32 %v3622, %v4495
      %v5167 = vadd.f32 %v3623, %v4497
      %v5168 = vadd.f32 %v3624, %v4499
      %v5169 = vadd.f32 %v3625, %v4501
      %v5170 = vadd.f32 %v3626, %v4503
      %v5171 = vadd.f32 %v3627, %v4505
      %v5172 = vadd.f32 %v3628, %v4507
      %v5173 = vadd.f32 %v3629, %v4509
      %v5174 = vadd.f32 %v3630, %v4511
      %v5175 = vadd.f32 %v3631, %v4513
      %v5176 = vadd.f32 %v3632, %v4515
      %v5177 = vadd.f32 %v3633, %v4517
      %v5178 = vadd.f32 %v3634, %v4519
      %v5179 = vadd.f32 %v3635, %v4521
      %v5180 = vadd.f32 %v3636, %v4523
      %v5181 = vadd.f32 %v3637, %v4525
      %v5182 = vadd.f32 %v3638, %v4527
      %v5183 = vadd.f32 %v3639, %v4529
      %v5184 = vadd.f32 %v3640, %v4531
      %v5185 = vadd.f32 %v3641, %v4533
      %v5186 = vadd.f32 %v3642, %v4535
      %v5187 = vadd.f32 %v3643, %v4537
      %v5188 = vadd.f32 %v3644, %v4539
      %v5189 = vadd.f32 %v3645, %v4541
      %v5190 = vadd.f32 %v3646, %v4543
      %v5191 = vadd.f32 %v3647, %v4545
      %v5192 = vadd.f32 %v3648, %v4547
      %v5193 = vadd.f32 %v3649, %v4549
      %v5194 = vadd.f32 %v3650, %v4551
      %v5195 = vadd.f32 %v3651, %v4553
      %v5196 = vadd.f32 %v3652, %v4555
      %v5197 = vadd.f32 %v3653, %v4557
      %v5198 = vadd.f32 %v3654, %v4559
      %v5199 = vadd.f32 %v3655, %v4561
      %v5200 = vadd.f32 %v3656, %v4563
      %v5201 = vadd.f32 %v3657, %v4565
      %v5202 = vadd.f32 %v3658, %v4567
      %v5203 = vadd.f32 %v3659, %v4569
      %v5204 = vadd.f32 %v3660, %v4571
      %v5205 = vadd.f32 %v3661, %v4573
      %v5206 = vadd.f32 %v3662, %v4575
      %v5207 = vadd.f32 %v3663, %v4577
      %v5208 = vadd.f32 %v3664, %v4579
      %v5209 = vadd.f32 %v3665, %v4581
      %v5210 = vadd.f32 %v3666, %v4583
      %v5211 = vadd.f32 %v3667, %v4585
      %v5212 = vadd.f32 %v3668, %v4587
      %v5213 = vadd.f32 %v3669, %v4589
      %v5214 = vadd.f32 %v3670, %v4591
      %v5215 = vadd.f32 %v3671, %v4593
      %v5216 = vadd.f32 %v3672, %v4595
      %v5217 = vadd.f32 %v3673, %v4597
      %v5218 = vadd.f32 %v3674, %v4599
      %v5219 = vadd.f32 %v3675, %v4601
      %v5220 = vadd.f32 %v3676, %v4603
      %v5221 = vadd.f32 %v3677, %v4605
      %v5222 = vadd.f32 %v3678, %v4607
      %v5223 = vadd.f32 %v3679, %v4609
      %v5224 = vadd.f32 %v3680, %v4611
      %v5225 = vadd.f32 %v3681, %v4613
      %v5226 = vadd.f32 %v3682, %v4615
      %v5227 = vadd.f32 %v3683, %v4617
      %v5228 = vadd.f32 %v3684, %v4619
      %v5229 = vadd.f32 %v3685, %v4621
      %v5230 = vadd.f32 %v3686, %v4623
      %v5231 = vadd.f32 %v3687, %v4625
      %v5232 = vadd.f32 %v3688, %v4627
      %v5233 = vadd.f32 %v3689, %v4629
      %v5234 = vadd.f32 %v3690, %v4631
      %v5235 = vadd.f32 %v3691, %v4633
      %v5236 = vadd.f32 %v3692, %v4635
      %v5237 = vadd.f32 %v3693, %v4637
      %v5238 = vadd.f32 %v3694, %v4639
      %v5239 = vadd.f32 %v3695, %v4641
      %v5240 = vadd.f32 %v3696, %v4643
      %v5241 = vadd.f32 %v3697, %v4645
      %v5242 = vadd.f32 %v3698, %v4647
      %v5243 = vadd.f32 %v3699, %v4649
      %v5244 = vadd.f32 %v3700, %v4651
      %v5245 = vadd.f32 %v3701, %v4653
      %v5246 = vadd.f32 %v3702, %v4655
      %v5247 = vadd.f32 %v3703, %v4657
      %v5248 = vadd.f32 %v3704, %v4659
      %v5249 = vadd.f32 %v3705, %v4661
      %v5250 = vadd.f32 %v3706, %v4663
      %v5251 = vadd.f32 %v3707, %v4665
      %v5252 = vadd.f32 %v3708, %v4667
      %v5253 = vadd.f32 %v3709, %v4669
      %v5254 = vadd.f32 %v3710, %v4671
      %v5255 = vadd.f32 %v3711, %v4673
      %v5256 = vadd.f32 %v3712, %v4675
      %v5257 = vadd.f32 %v3713, %v4677
      %v5258 = vadd.f32 %v3714, %v4679
      %v5259 = vadd.f32 %v3715, %v4681
      %v5260 = vadd.f32 %v3716, %v4683
      %v5261 = vadd.f32 %v3717, %v4685
      %v5262 = vadd.f32 %v3718, %v4687
      %v5263 = vadd.f32 %v3719, %v4689
      %v5264 = vadd.f32 %v3720, %v4691
      %v5265 = vadd.f32 %v3721, %v4693
      %v5266 = vadd.f32 %v3722, %v4695
      %v5267 = vadd.f32 %v3723, %v4697
      %v5268 = vadd.f32 %v3724, %v4699
      %v5269 = vadd.f32 %v3725, %v4701
      %v5270 = vadd.f32 %v3726, %v4703
      %v5271 = vadd.f32 %v3727, %v4705
      %v5272 = vadd.f32 %v3728, %v4707
      %v5273 = vadd.f32 %v3729, %v4709
      %v5274 = vadd.f32 %v3730, %v4711
      %v5275 = vadd.f32 %v3731, %v4713
      %v5276 = vadd.f32 %v3732, %v4715
      %v5277 = vadd.f32 %v3733, %v4717
      %v5278 = vadd.f32 %v3734, %v4719
      %v5279 = vadd.f32 %v3735, %v4721
      %v5280 = vadd.f32 %v3736, %v4723
      %v5281 = vadd.f32 %v3737, %v4725
      %v5282 = vadd.f32 %v3738, %v4727
      %v5283 = vadd.f32 %v3739, %v4729
      %v5284 = vadd.f32 %v3740, %v4731
      %v5285 = vadd.f32 %v3741, %v4733
      %v5286 = vadd.f32 %v3742, %v4735
      %v5287 = vadd.f32 %v3743, %v4737
      %v5288 = vadd.f32 %v3744, %v4739
      %v5289 = vadd.f32 %v3745, %v4741
      %v5290 = vadd.f32 %v3746, %v4743
      %v5291 = vadd.f32 %v3747, %v4745
      %v5292 = vadd.f32 %v3748, %v4747
      %v5293 = vadd.f32 %v3749, %v4749
      %v5294 = vadd.f32 %v3750, %v4751
      %v5295 = vadd.f32 %v3751, %v4753
      %v5296 = vadd.f32 %v3752, %v4755
      %v5297 = vadd.f32 %v3753, %v4757
      %v5298 = vadd.f32 %v3754, %v4759
      %v5299 = vadd.f32 %v3755, %v4761
      %v5300 = vadd.f32 %v3756, %v4763
      %v5301 = vadd.f32 %v3757, %v4765
      %v5302 = vadd.f32 %v3758, %v4767
      %v5303 = vadd.f32 %v3759, %v4769
      %v5304 = vadd.f32 %v3760, %v4771
      %v5305 = vadd.f32 %v3761, %v4773
      %v5306 = vadd.f32 %v3762, %v4775
      %v5307 = vadd.f32 %v3763, %v4777
      %v5308 = vadd.f32 %v3764, %v4779
      %v5309 = vadd.f32 %v3765, %v4781
      %v5310 = vadd.f32 %v3766, %v4783
      %v5311 = vadd.f32 %v3767, %v4785
      %v5312 = vadd.f32 %v3768, %v4787
      %v5313 = vadd.f32 %v3769, %v4789
      %v5314 = vadd.f32 %v3770, %v4791
      %v5315 = vadd.f32 %v3771, %v4793
      %v5316 = vadd.f32 %v3772, %v4795
      %v5317 = vadd.f32 %v3773, %v4797
      %v5318 = vadd.f32 %v3774, %v4799
      %v5319 = vadd.f32 %v3775, %v4801
      %v5320 = vadd.f32 %v3776, %v4803
      %v5321 = vadd.f32 %v3777, %v4805
      %v5322 = vadd.f32 %v3778, %v4807
      %v5323 = vadd.f32 %v3779, %v4809
      %v5324 = vadd.f32 %v3780, %v4811
      %v5325 = vadd.f32 %v3781, %v4813
      %v5326 = vlaneseq
      %v5327 = vshrl.u32 %v5326, 7
      %v5328 = vsub.s32 3, %v5327
      %v5329 = vrot.slane %v430, %v5328
      %v5330 = vmul.f32 %v440, %v5329
      %v5331 = vmul.f32 %v445, %v5329
      %v5332 = vmul.f32 %v450, %v5329
      %v5333 = vmul.f32 %v455, %v5329
      %v5334 = vmul.f32 %v460, %v5329
      %v5335 = vmul.f32 %v465, %v5329
      %v5336 = vmul.f32 %v470, %v5329
      %v5337 = vmul.f32 %v475, %v5329
      %v5338 = vmul.f32 %v480, %v5329
      %v5339 = vmul.f32 %v485, %v5329
      %v5340 = vmul.f32 %v490, %v5329
      %v5341 = vmul.f32 %v495, %v5329
      %v5342 = vmul.f32 %v500, %v5329
      %v5343 = vmul.f32 %v505, %v5329
      %v5344 = vmul.f32 %v510, %v5329
      %v5345 = vmul.f32 %v515, %v5329
      %v5346 = vmul.f32 %v520, %v5329
      %v5347 = vmul.f32 %v525, %v5329
      %v5348 = vmul.f32 %v530, %v5329
      %v5349 = vmul.f32 %v535, %v5329
      %v5350 = vmul.f32 %v540, %v5329
      %v5351 = vmul.f32 %v545, %v5329
      %v5352 = vmul.f32 %v550, %v5329
      %v5353 = vmul.f32 %v555, %v5329
      %v5354 = vmul.f32 %v560, %v5329
      %v5355 = vmul.f32 %v565, %v5329
      %v5356 = vmul.f32 %v570, %v5329
      %v5357 = vmul.f32 %v575, %v5329
      %v5358 = vmul.f32 %v580, %v5329
      %v5359 = vmul.f32 %v585, %v5329
      %v5360 = vmul.f32 %v590, %v5329
      %v5361 = vmul.f32 %v595, %v5329
      %v5362 = vmul.f32 %v600, %v5329
      %v5363 = vmul.f32 %v605, %v5329
      %v5364 = vmul.f32 %v610, %v5329
      %v5365 = vmul.f32 %v615, %v5329
      %v5366 = vmul.f32 %v620, %v5329
      %v5367 = vmul.f32 %v625, %v5329
      %v5368 = vmul.f32 %v630, %v5329
      %v5369 = vmul.f32 %v635, %v5329
      %v5370 = vmul.f32 %v640, %v5329
      %v5371 = vmul.f32 %v645, %v5329
      %v5372 = vmul.f32 %v650, %v5329
      %v5373 = vmul.f32 %v655, %v5329
      %v5374 = vmul.f32 %v660, %v5329
      %v5375 = vmul.f32 %v665, %v5329
      %v5376 = vmul.f32 %v670, %v5329
      %v5377 = vmul.f32 %v675, %v5329
      %v5378 = vmul.f32 %v680, %v5329
      %v5379 = vmul.f32 %v685, %v5329
      %v5380 = vmul.f32 %v690, %v5329
      %v5381 = vmul.f32 %v695, %v5329
      %v5382 = vmul.f32 %v700, %v5329
      %v5383 = vmul.f32 %v705, %v5329
      %v5384 = vmul.f32 %v710, %v5329
      %v5385 = vmul.f32 %v715, %v5329
      %v5386 = vmul.f32 %v720, %v5329
      %v5387 = vmul.f32 %v725, %v5329
      %v5388 = vmul.f32 %v730, %v5329
      %v5389 = vmul.f32 %v735, %v5329
      %v5390 = vmul.f32 %v740, %v5329
      %v5391 = vmul.f32 %v745, %v5329
      %v5392 = vmul.f32 %v750, %v5329
      %v5393 = vmul.f32 %v755, %v5329
      %v5394 = vmul.f32 %v760, %v5329
      %v5395 = vmul.f32 %v765, %v5329
      %v5396 = vmul.f32 %v770, %v5329
      %v5397 = vmul.f32 %v775, %v5329
      %v5398 = vmul.f32 %v780, %v5329
      %v5399 = vmul.f32 %v785, %v5329
      %v5400 = vmul.f32 %v790, %v5329
      %v5401 = vmul.f32 %v795, %v5329
      %v5402 = vmul.f32 %v800, %v5329
      %v5403 = vmul.f32 %v805, %v5329
      %v5404 = vmul.f32 %v810, %v5329
      %v5405 = vmul.f32 %v815, %v5329
      %v5406 = vmul.f32 %v820, %v5329
      %v5407 = vmul.f32 %v825, %v5329
      %v5408 = vmul.f32 %v830, %v5329
      %v5409 = vmul.f32 %v835, %v5329
      %v5410 = vmul.f32 %v840, %v5329
      %v5411 = vmul.f32 %v845, %v5329
      %v5412 = vmul.f32 %v850, %v5329
      %v5413 = vmul.f32 %v855, %v5329
      %v5414 = vmul.f32 %v860, %v5329
      %v5415 = vmul.f32 %v865, %v5329
      %v5416 = vmul.f32 %v870, %v5329
      %v5417 = vmul.f32 %v875, %v5329
      %v5418 = vmul.f32 %v880, %v5329
      %v5419 = vmul.f32 %v885, %v5329
      %v5420 = vmul.f32 %v890, %v5329
      %v5421 = vmul.f32 %v895, %v5329
      %v5422 = vmul.f32 %v900, %v5329
      %v5423 = vmul.f32 %v905, %v5329
      %v5424 = vmul.f32 %v910, %v5329
      %v5425 = vmul.f32 %v915, %v5329
      %v5426 = vmul.f32 %v920, %v5329
      %v5427 = vmul.f32 %v925, %v5329
      %v5428 = vmul.f32 %v930, %v5329
      %v5429 = vmul.f32 %v935, %v5329
      %v5430 = vmul.f32 %v940, %v5329
      %v5431 = vmul.f32 %v945, %v5329
      %v5432 = vmul.f32 %v950, %v5329
      %v5433 = vmul.f32 %v955, %v5329
      %v5434 = vmul.f32 %v960, %v5329
      %v5435 = vmul.f32 %v965, %v5329
      %v5436 = vmul.f32 %v970, %v5329
      %v5437 = vmul.f32 %v975, %v5329
      %v5438 = vmul.f32 %v980, %v5329
      %v5439 = vmul.f32 %v985, %v5329
      %v5440 = vmul.f32 %v990, %v5329
      %v5441 = vmul.f32 %v995, %v5329
      %v5442 = vmul.f32 %v1000, %v5329
      %v5443 = vmul.f32 %v1005, %v5329
      %v5444 = vmul.f32 %v1010, %v5329
      %v5445 = vmul.f32 %v1015, %v5329
      %v5446 = vmul.f32 %v1020, %v5329
      %v5447 = vmul.f32 %v1025, %v5329
      %v5448 = vmul.f32 %v1030, %v5329
      %v5449 = vmul.f32 %v1035, %v5329
      %v5450 = vmul.f32 %v1040, %v5329
      %v5451 = vmul.f32 %v1045, %v5329
      %v5452 = vmul.f32 %v1050, %v5329
      %v5453 = vmul.f32 %v1055, %v5329
      %v5454 = vmul.f32 %v1060, %v5329
      %v5455 = vmul.f32 %v1065, %v5329
      %v5456 = vmul.f32 %v1070, %v5329
      %v5457 = vmul.f32 %v1075, %v5329
      %v5458 = vmul.f32 %v1080, %v5329
      %v5459 = vmul.f32 %v1085, %v5329
      %v5460 = vmul.f32 %v1090, %v5329
      %v5461 = vmul.f32 %v1095, %v5329
      %v5462 = vmul.f32 %v1100, %v5329
      %v5463 = vmul.f32 %v1105, %v5329
      %v5464 = vmul.f32 %v1110, %v5329
      %v5465 = vmul.f32 %v1115, %v5329
      %v5466 = vmul.f32 %v1120, %v5329
      %v5467 = vmul.f32 %v1125, %v5329
      %v5468 = vmul.f32 %v1130, %v5329
      %v5469 = vmul.f32 %v1135, %v5329
      %v5470 = vmul.f32 %v1140, %v5329
      %v5471 = vmul.f32 %v1145, %v5329
      %v5472 = vmul.f32 %v1150, %v5329
      %v5473 = vmul.f32 %v1155, %v5329
      %v5474 = vmul.f32 %v1160, %v5329
      %v5475 = vmul.f32 %v1165, %v5329
      %v5476 = vmul.f32 %v1170, %v5329
      %v5477 = vmul.f32 %v1175, %v5329
      %v5478 = vmul.f32 %v1180, %v5329
      %v5479 = vmul.f32 %v1185, %v5329
      %v5480 = vmul.f32 %v1190, %v5329
      %v5481 = vmul.f32 %v1195, %v5329
      %v5482 = vmul.f32 %v1200, %v5329
      %v5483 = vmul.f32 %v1205, %v5329
      %v5484 = vmul.f32 %v1210, %v5329
      %v5485 = vmul.f32 %v1215, %v5329
      %v5486 = vmul.f32 %v1220, %v5329
      %v5487 = vmul.f32 %v1225, %v5329
      %v5488 = vmul.f32 %v1230, %v5329
      %v5489 = vmul.f32 %v1235, %v5329
      %v5490 = vmul.f32 %v1240, %v5329
      %v5491 = vmul.f32 %v1245, %v5329
      %v5492 = vmul.f32 %v1250, %v5329
      %v5493 = vmul.f32 %v1255, %v5329
      %v5494 = vmul.f32 %v1260, %v5329
      %v5495 = vmul.f32 %v1265, %v5329
      %v5496 = vmul.f32 %v1270, %v5329
      %v5497 = vmul.f32 %v1275, %v5329
      %v5498 = vmul.f32 %v1280, %v5329
      %v5499 = vmul.f32 %v1285, %v5329
      %v5500 = vmul.f32 %v1290, %v5329
      %v5501 = vmul.f32 %v1295, %v5329
      %v5502 = vmul.f32 %v1300, %v5329
      %v5503 = vmul.f32 %v1305, %v5329
      %v5504 = vmul.f32 %v1310, %v5329
      %v5505 = vmul.f32 %v1315, %v5329
      %v5506 = vmul.f32 %v1320, %v5329
      %v5507 = vmul.f32 %v1325, %v5329
      %v5508 = vmul.f32 %v1330, %v5329
      %v5509 = vmul.f32 %v1335, %v5329
      %v5510 = vmul.f32 %v1340, %v5329
      %v5511 = vmul.f32 %v1345, %v5329
      %v5512 = vmul.f32 %v1350, %v5329
      %v5513 = vmul.f32 %v1355, %v5329
      %v5514 = vmul.f32 %v1360, %v5329
      %v5515 = vmul.f32 %v1365, %v5329
      %v5516 = vmul.f32 %v1370, %v5329
      %v5517 = vmul.f32 %v1375, %v5329
      %v5518 = vmul.f32 %v1380, %v5329
      %v5519 = vmul.f32 %v1385, %v5329
      %v5520 = vmul.f32 %v1390, %v5329
      %v5521 = vmul.f32 %v1395, %v5329
      %v5522 = vmul.f32 %v1400, %v5329
      %v5523 = vmul.f32 %v1405, %v5329
      %v5524 = vmul.f32 %v1410, %v5329
      %v5525 = vmul.f32 %v1415, %v5329
      %v5526 = vmul.f32 %v1420, %v5329
      %v5527 = vmul.f32 %v1425, %v5329
      %v5528 = vmul.f32 %v1430, %v5329
      %v5529 = vmul.f32 %v1435, %v5329
      %v5530 = vmul.f32 %v1440, %v5329
      %v5531 = vmul.f32 %v1445, %v5329
      %v5532 = vmul.f32 %v1450, %v5329
      %v5533 = vmul.f32 %v1455, %v5329
      %v5534 = vmul.f32 %v1460, %v5329
      %v5535 = vmul.f32 %v1465, %v5329
      %v5536 = vmul.f32 %v1470, %v5329
      %v5537 = vmul.f32 %v1475, %v5329
      %v5538 = vmul.f32 %v1480, %v5329
      %v5539 = vmul.f32 %v1485, %v5329
      %v5540 = vmul.f32 %v1490, %v5329
      %v5541 = vmul.f32 %v1495, %v5329
      %v5542 = vmul.f32 %v1500, %v5329
      %v5543 = vmul.f32 %v1505, %v5329
      %v5544 = vmul.f32 %v1510, %v5329
      %v5545 = vmul.f32 %v1515, %v5329
      %v5546 = vmul.f32 %v1520, %v5329
      %v5547 = vmul.f32 %v1525, %v5329
      %v5548 = vmul.f32 %v1530, %v5329
      %v5549 = vmul.f32 %v1535, %v5329
      %v5550 = vmul.f32 %v1540, %v5329
      %v5551 = vmul.f32 %v1545, %v5329
      %v5552 = vmul.f32 %v1550, %v5329
      %v5553 = vmul.f32 %v1555, %v5329
      %v5554 = vmul.f32 %v1560, %v5329
      %v5555 = vmul.f32 %v1565, %v5329
      %v5556 = vmul.f32 %v1570, %v5329
      %v5557 = vmul.f32 %v1575, %v5329
      %v5558 = vmul.f32 %v1580, %v5329
      %v5559 = vmul.f32 %v1585, %v5329
      %v5560 = vmul.f32 %v1590, %v5329
      %v5561 = vmul.f32 %v1595, %v5329
      %v5562 = vmul.f32 %v1600, %v5329
      %v5563 = vmul.f32 %v1605, %v5329
      %v5564 = vmul.f32 %v1610, %v5329
      %v5565 = vmul.f32 %v1615, %v5329
      %v5566 = vmul.f32 %v1620, %v5329
      %v5567 = vmul.f32 %v1625, %v5329
      %v5568 = vmul.f32 %v1630, %v5329
      %v5569 = vmul.f32 %v1635, %v5329
      %v5570 = vmul.f32 %v1640, %v5329
      %v5571 = vmul.f32 %v1645, %v5329
      %v5572 = vmul.f32 %v1650, %v5329
      %v5573 = vmul.f32 %v1655, %v5329
      %v5574 = vmul.f32 %v1660, %v5329
      %v5575 = vmul.f32 %v1665, %v5329
      %v5576 = vmul.f32 %v1670, %v5329
      %v5577 = vmul.f32 %v1675, %v5329
      %v5578 = vmul.f32 %v1680, %v5329
      %v5579 = vmul.f32 %v1685, %v5329
      %v5580 = vmul.f32 %v1690, %v5329
      %v5581 = vmul.f32 %v1695, %v5329
      %v5582 = vmul.f32 %v1700, %v5329
      %v5583 = vmul.f32 %v1705, %v5329
      %v5584 = vmul.f32 %v1710, %v5329
      %v5585 = vmul.f32 %v1715, %v5329
      %v5586 = vmul.f32 %v2236, %v5329
      %vm5844 = vcmask 1044480
      %v5845 = vrot.slane %v5330, 3
      %v5846 = vrot.slane %v5331, 3
      %v5847 = vsel %vm5844, %v5845, %v5846
      %v5848 = vrot.slane %v5332, 3
      %v5849 = vsel %vm5844, %v5846, %v5848
      %v5850 = vrot.slane %v5333, 3
      %v5851 = vsel %vm5844, %v5848, %v5850
      %v5852 = vrot.slane %v5334, 3
      %v5853 = vsel %vm5844, %v5850, %v5852
      %v5854 = vrot.slane %v5335, 3
      %v5855 = vsel %vm5844, %v5852, %v5854
      %v5856 = vrot.slane %v5336, 3
      %v5857 = vsel %vm5844, %v5854, %v5856
      %v5858 = vrot.slane %v5337, 3
      %v5859 = vsel %vm5844, %v5856, %v5858
      %v5860 = vrot.slane %v5338, 3
      %v5861 = vsel %vm5844, %v5858, %v5860
      %v5862 = vrot.slane %v5339, 3
      %v5863 = vsel %vm5844, %v5860, %v5862
      %v5864 = vrot.slane %v5340, 3
      %v5865 = vsel %vm5844, %v5862, %v5864
      %v5866 = vrot.slane %v5341, 3
      %v5867 = vsel %vm5844, %v5864, %v5866
      %v5868 = vrot.slane %v5342, 3
      %v5869 = vsel %vm5844, %v5866, %v5868
      %v5870 = vrot.slane %v5343, 3
      %v5871 = vsel %vm5844, %v5868, %v5870
      %v5872 = vrot.slane %v5344, 3
      %v5873 = vsel %vm5844, %v5870, %v5872
      %v5874 = vrot.slane %v5345, 3
      %v5875 = vsel %vm5844, %v5872, %v5874
      %v5876 = vrot.slane %v5346, 3
      %v5877 = vsel %vm5844, %v5874, %v5876
      %v5878 = vrot.slane %v5347, 3
      %v5879 = vsel %vm5844, %v5876, %v5878
      %v5880 = vrot.slane %v5348, 3
      %v5881 = vsel %vm5844, %v5878, %v5880
      %v5882 = vrot.slane %v5349, 3
      %v5883 = vsel %vm5844, %v5880, %v5882
      %v5884 = vrot.slane %v5350, 3
      %v5885 = vsel %vm5844, %v5882, %v5884
      %v5886 = vrot.slane %v5351, 3
      %v5887 = vsel %vm5844, %v5884, %v5886
      %v5888 = vrot.slane %v5352, 3
      %v5889 = vsel %vm5844, %v5886, %v5888
      %v5890 = vrot.slane %v5353, 3
      %v5891 = vsel %vm5844, %v5888, %v5890
      %v5892 = vrot.slane %v5354, 3
      %v5893 = vsel %vm5844, %v5890, %v5892
      %v5894 = vrot.slane %v5355, 3
      %v5895 = vsel %vm5844, %v5892, %v5894
      %v5896 = vrot.slane %v5356, 3
      %v5897 = vsel %vm5844, %v5894, %v5896
      %v5898 = vrot.slane %v5357, 3
      %v5899 = vsel %vm5844, %v5896, %v5898
      %v5900 = vrot.slane %v5358, 3
      %v5901 = vsel %vm5844, %v5898, %v5900
      %v5902 = vrot.slane %v5359, 3
      %v5903 = vsel %vm5844, %v5900, %v5902
      %v5904 = vrot.slane %v5360, 3
      %v5905 = vsel %vm5844, %v5902, %v5904
      %v5906 = vrot.slane %v5361, 3
      %v5907 = vsel %vm5844, %v5904, %v5906
      %v5908 = vrot.slane %v5362, 3
      %v5909 = vsel %vm5844, %v5906, %v5908
      %v5910 = vrot.slane %v5363, 3
      %v5911 = vsel %vm5844, %v5908, %v5910
      %v5912 = vrot.slane %v5364, 3
      %v5913 = vsel %vm5844, %v5910, %v5912
      %v5914 = vrot.slane %v5365, 3
      %v5915 = vsel %vm5844, %v5912, %v5914
      %v5916 = vrot.slane %v5366, 3
      %v5917 = vsel %vm5844, %v5914, %v5916
      %v5918 = vrot.slane %v5367, 3
      %v5919 = vsel %vm5844, %v5916, %v5918
      %v5920 = vrot.slane %v5368, 3
      %v5921 = vsel %vm5844, %v5918, %v5920
      %v5922 = vrot.slane %v5369, 3
      %v5923 = vsel %vm5844, %v5920, %v5922
      %v5924 = vrot.slane %v5370, 3
      %v5925 = vsel %vm5844, %v5922, %v5924
      %v5926 = vrot.slane %v5371, 3
      %v5927 = vsel %vm5844, %v5924, %v5926
      %v5928 = vrot.slane %v5372, 3
      %v5929 = vsel %vm5844, %v5926, %v5928
      %v5930 = vrot.slane %v5373, 3
      %v5931 = vsel %vm5844, %v5928, %v5930
      %v5932 = vrot.slane %v5374, 3
      %v5933 = vsel %vm5844, %v5930, %v5932
      %v5934 = vrot.slane %v5375, 3
      %v5935 = vsel %vm5844, %v5932, %v5934
      %v5936 = vrot.slane %v5376, 3
      %v5937 = vsel %vm5844, %v5934, %v5936
      %v5938 = vrot.slane %v5377, 3
      %v5939 = vsel %vm5844, %v5936, %v5938
      %v5940 = vrot.slane %v5378, 3
      %v5941 = vsel %vm5844, %v5938, %v5940
      %v5942 = vrot.slane %v5379, 3
      %v5943 = vsel %vm5844, %v5940, %v5942
      %v5944 = vrot.slane %v5380, 3
      %v5945 = vsel %vm5844, %v5942, %v5944
      %v5946 = vrot.slane %v5381, 3
      %v5947 = vsel %vm5844, %v5944, %v5946
      %v5948 = vrot.slane %v5382, 3
      %v5949 = vsel %vm5844, %v5946, %v5948
      %v5950 = vrot.slane %v5383, 3
      %v5951 = vsel %vm5844, %v5948, %v5950
      %v5952 = vrot.slane %v5384, 3
      %v5953 = vsel %vm5844, %v5950, %v5952
      %v5954 = vrot.slane %v5385, 3
      %v5955 = vsel %vm5844, %v5952, %v5954
      %v5956 = vrot.slane %v5386, 3
      %v5957 = vsel %vm5844, %v5954, %v5956
      %v5958 = vrot.slane %v5387, 3
      %v5959 = vsel %vm5844, %v5956, %v5958
      %v5960 = vrot.slane %v5388, 3
      %v5961 = vsel %vm5844, %v5958, %v5960
      %v5962 = vrot.slane %v5389, 3
      %v5963 = vsel %vm5844, %v5960, %v5962
      %v5964 = vrot.slane %v5390, 3
      %v5965 = vsel %vm5844, %v5962, %v5964
      %v5966 = vrot.slane %v5391, 3
      %v5967 = vsel %vm5844, %v5964, %v5966
      %v5968 = vrot.slane %v5392, 3
      %v5969 = vsel %vm5844, %v5966, %v5968
      %v5970 = vrot.slane %v5393, 3
      %v5971 = vsel %vm5844, %v5968, %v5970
      %v5972 = vrot.slane %v5394, 3
      %v5973 = vsel %vm5844, %v5970, %v5972
      %v5974 = vrot.slane %v5395, 3
      %v5975 = vsel %vm5844, %v5972, %v5974
      %v5976 = vrot.slane %v5396, 3
      %v5977 = vsel %vm5844, %v5974, %v5976
      %v5978 = vrot.slane %v5397, 3
      %v5979 = vsel %vm5844, %v5976, %v5978
      %v5980 = vrot.slane %v5398, 3
      %v5981 = vsel %vm5844, %v5978, %v5980
      %v5982 = vrot.slane %v5399, 3
      %v5983 = vsel %vm5844, %v5980, %v5982
      %v5984 = vrot.slane %v5400, 3
      %v5985 = vsel %vm5844, %v5982, %v5984
      %v5986 = vrot.slane %v5401, 3
      %v5987 = vsel %vm5844, %v5984, %v5986
      %v5988 = vrot.slane %v5402, 3
      %v5989 = vsel %vm5844, %v5986, %v5988
      %v5990 = vrot.slane %v5403, 3
      %v5991 = vsel %vm5844, %v5988, %v5990
      %v5992 = vrot.slane %v5404, 3
      %v5993 = vsel %vm5844, %v5990, %v5992
      %v5994 = vrot.slane %v5405, 3
      %v5995 = vsel %vm5844, %v5992, %v5994
      %v5996 = vrot.slane %v5406, 3
      %v5997 = vsel %vm5844, %v5994, %v5996
      %v5998 = vrot.slane %v5407, 3
      %v5999 = vsel %vm5844, %v5996, %v5998
      %v6000 = vrot.slane %v5408, 3
      %v6001 = vsel %vm5844, %v5998, %v6000
      %v6002 = vrot.slane %v5409, 3
      %v6003 = vsel %vm5844, %v6000, %v6002
      %v6004 = vrot.slane %v5410, 3
      %v6005 = vsel %vm5844, %v6002, %v6004
      %v6006 = vrot.slane %v5411, 3
      %v6007 = vsel %vm5844, %v6004, %v6006
      %v6008 = vrot.slane %v5412, 3
      %v6009 = vsel %vm5844, %v6006, %v6008
      %v6010 = vrot.slane %v5413, 3
      %v6011 = vsel %vm5844, %v6008, %v6010
      %v6012 = vrot.slane %v5414, 3
      %v6013 = vsel %vm5844, %v6010, %v6012
      %v6014 = vrot.slane %v5415, 3
      %v6015 = vsel %vm5844, %v6012, %v6014
      %v6016 = vrot.slane %v5416, 3
      %v6017 = vsel %vm5844, %v6014, %v6016
      %v6018 = vrot.slane %v5417, 3
      %v6019 = vsel %vm5844, %v6016, %v6018
      %v6020 = vrot.slane %v5418, 3
      %v6021 = vsel %vm5844, %v6018, %v6020
      %v6022 = vrot.slane %v5419, 3
      %v6023 = vsel %vm5844, %v6020, %v6022
      %v6024 = vrot.slane %v5420, 3
      %v6025 = vsel %vm5844, %v6022, %v6024
      %v6026 = vrot.slane %v5421, 3
      %v6027 = vsel %vm5844, %v6024, %v6026
      %v6028 = vrot.slane %v5422, 3
      %v6029 = vsel %vm5844, %v6026, %v6028
      %v6030 = vrot.slane %v5423, 3
      %v6031 = vsel %vm5844, %v6028, %v6030
      %v6032 = vrot.slane %v5424, 3
      %v6033 = vsel %vm5844, %v6030, %v6032
      %v6034 = vrot.slane %v5425, 3
      %v6035 = vsel %vm5844, %v6032, %v6034
      %v6036 = vrot.slane %v5426, 3
      %v6037 = vsel %vm5844, %v6034, %v6036
      %v6038 = vrot.slane %v5427, 3
      %v6039 = vsel %vm5844, %v6036, %v6038
      %v6040 = vrot.slane %v5428, 3
      %v6041 = vsel %vm5844, %v6038, %v6040
      %v6042 = vrot.slane %v5429, 3
      %v6043 = vsel %vm5844, %v6040, %v6042
      %v6044 = vrot.slane %v5430, 3
      %v6045 = vsel %vm5844, %v6042, %v6044
      %v6046 = vrot.slane %v5431, 3
      %v6047 = vsel %vm5844, %v6044, %v6046
      %v6048 = vrot.slane %v5432, 3
      %v6049 = vsel %vm5844, %v6046, %v6048
      %v6050 = vrot.slane %v5433, 3
      %v6051 = vsel %vm5844, %v6048, %v6050
      %v6052 = vrot.slane %v5434, 3
      %v6053 = vsel %vm5844, %v6050, %v6052
      %v6054 = vrot.slane %v5435, 3
      %v6055 = vsel %vm5844, %v6052, %v6054
      %v6056 = vrot.slane %v5436, 3
      %v6057 = vsel %vm5844, %v6054, %v6056
      %v6058 = vrot.slane %v5437, 3
      %v6059 = vsel %vm5844, %v6056, %v6058
      %v6060 = vrot.slane %v5438, 3
      %v6061 = vsel %vm5844, %v6058, %v6060
      %v6062 = vrot.slane %v5439, 3
      %v6063 = vsel %vm5844, %v6060, %v6062
      %v6064 = vrot.slane %v5440, 3
      %v6065 = vsel %vm5844, %v6062, %v6064
      %v6066 = vrot.slane %v5441, 3
      %v6067 = vsel %vm5844, %v6064, %v6066
      %v6068 = vrot.slane %v5442, 3
      %v6069 = vsel %vm5844, %v6066, %v6068
      %v6070 = vrot.slane %v5443, 3
      %v6071 = vsel %vm5844, %v6068, %v6070
      %v6072 = vrot.slane %v5444, 3
      %v6073 = vsel %vm5844, %v6070, %v6072
      %v6074 = vrot.slane %v5445, 3
      %v6075 = vsel %vm5844, %v6072, %v6074
      %v6076 = vrot.slane %v5446, 3
      %v6077 = vsel %vm5844, %v6074, %v6076
      %v6078 = vrot.slane %v5447, 3
      %v6079 = vsel %vm5844, %v6076, %v6078
      %v6080 = vrot.slane %v5448, 3
      %v6081 = vsel %vm5844, %v6078, %v6080
      %v6082 = vrot.slane %v5449, 3
      %v6083 = vsel %vm5844, %v6080, %v6082
      %v6084 = vrot.slane %v5450, 3
      %v6085 = vsel %vm5844, %v6082, %v6084
      %v6086 = vrot.slane %v5451, 3
      %v6087 = vsel %vm5844, %v6084, %v6086
      %v6088 = vrot.slane %v5452, 3
      %v6089 = vsel %vm5844, %v6086, %v6088
      %v6090 = vrot.slane %v5453, 3
      %v6091 = vsel %vm5844, %v6088, %v6090
      %v6092 = vrot.slane %v5454, 3
      %v6093 = vsel %vm5844, %v6090, %v6092
      %v6094 = vrot.slane %v5455, 3
      %v6095 = vsel %vm5844, %v6092, %v6094
      %v6096 = vrot.slane %v5456, 3
      %v6097 = vsel %vm5844, %v6094, %v6096
      %v6098 = vrot.slane %v5457, 3
      %v6099 = vsel %vm5844, %v6096, %v6098
      %v6100 = vrot.slane %v5458, 3
      %v6101 = vsel %vm5844, %v6098, %v6100
      %v6102 = vrot.slane %v5459, 3
      %v6103 = vsel %vm5844, %v6100, %v6102
      %v6104 = vrot.slane %v5460, 3
      %v6105 = vsel %vm5844, %v6102, %v6104
      %v6106 = vrot.slane %v5461, 3
      %v6107 = vsel %vm5844, %v6104, %v6106
      %v6108 = vrot.slane %v5462, 3
      %v6109 = vsel %vm5844, %v6106, %v6108
      %v6110 = vrot.slane %v5463, 3
      %v6111 = vsel %vm5844, %v6108, %v6110
      %v6112 = vrot.slane %v5464, 3
      %v6113 = vsel %vm5844, %v6110, %v6112
      %v6114 = vrot.slane %v5465, 3
      %v6115 = vsel %vm5844, %v6112, %v6114
      %v6116 = vrot.slane %v5466, 3
      %v6117 = vsel %vm5844, %v6114, %v6116
      %v6118 = vrot.slane %v5467, 3
      %v6119 = vsel %vm5844, %v6116, %v6118
      %v6120 = vrot.slane %v5468, 3
      %v6121 = vsel %vm5844, %v6118, %v6120
      %v6122 = vrot.slane %v5469, 3
      %v6123 = vsel %vm5844, %v6120, %v6122
      %v6124 = vrot.slane %v5470, 3
      %v6125 = vsel %vm5844, %v6122, %v6124
      %v6126 = vrot.slane %v5471, 3
      %v6127 = vsel %vm5844, %v6124, %v6126
      %v6128 = vrot.slane %v5472, 3
      %v6129 = vsel %vm5844, %v6126, %v6128
      %v6130 = vrot.slane %v5473, 3
      %v6131 = vsel %vm5844, %v6128, %v6130
      %v6132 = vrot.slane %v5474, 3
      %v6133 = vsel %vm5844, %v6130, %v6132
      %v6134 = vrot.slane %v5475, 3
      %v6135 = vsel %vm5844, %v6132, %v6134
      %v6136 = vrot.slane %v5476, 3
      %v6137 = vsel %vm5844, %v6134, %v6136
      %v6138 = vrot.slane %v5477, 3
      %v6139 = vsel %vm5844, %v6136, %v6138
      %v6140 = vrot.slane %v5478, 3
      %v6141 = vsel %vm5844, %v6138, %v6140
      %v6142 = vrot.slane %v5479, 3
      %v6143 = vsel %vm5844, %v6140, %v6142
      %v6144 = vrot.slane %v5480, 3
      %v6145 = vsel %vm5844, %v6142, %v6144
      %v6146 = vrot.slane %v5481, 3
      %v6147 = vsel %vm5844, %v6144, %v6146
      %v6148 = vrot.slane %v5482, 3
      %v6149 = vsel %vm5844, %v6146, %v6148
      %v6150 = vrot.slane %v5483, 3
      %v6151 = vsel %vm5844, %v6148, %v6150
      %v6152 = vrot.slane %v5484, 3
      %v6153 = vsel %vm5844, %v6150, %v6152
      %v6154 = vrot.slane %v5485, 3
      %v6155 = vsel %vm5844, %v6152, %v6154
      %v6156 = vrot.slane %v5486, 3
      %v6157 = vsel %vm5844, %v6154, %v6156
      %v6158 = vrot.slane %v5487, 3
      %v6159 = vsel %vm5844, %v6156, %v6158
      %v6160 = vrot.slane %v5488, 3
      %v6161 = vsel %vm5844, %v6158, %v6160
      %v6162 = vrot.slane %v5489, 3
      %v6163 = vsel %vm5844, %v6160, %v6162
      %v6164 = vrot.slane %v5490, 3
      %v6165 = vsel %vm5844, %v6162, %v6164
      %v6166 = vrot.slane %v5491, 3
      %v6167 = vsel %vm5844, %v6164, %v6166
      %v6168 = vrot.slane %v5492, 3
      %v6169 = vsel %vm5844, %v6166, %v6168
      %v6170 = vrot.slane %v5493, 3
      %v6171 = vsel %vm5844, %v6168, %v6170
      %v6172 = vrot.slane %v5494, 3
      %v6173 = vsel %vm5844, %v6170, %v6172
      %v6174 = vrot.slane %v5495, 3
      %v6175 = vsel %vm5844, %v6172, %v6174
      %v6176 = vrot.slane %v5496, 3
      %v6177 = vsel %vm5844, %v6174, %v6176
      %v6178 = vrot.slane %v5497, 3
      %v6179 = vsel %vm5844, %v6176, %v6178
      %v6180 = vrot.slane %v5498, 3
      %v6181 = vsel %vm5844, %v6178, %v6180
      %v6182 = vrot.slane %v5499, 3
      %v6183 = vsel %vm5844, %v6180, %v6182
      %v6184 = vrot.slane %v5500, 3
      %v6185 = vsel %vm5844, %v6182, %v6184
      %v6186 = vrot.slane %v5501, 3
      %v6187 = vsel %vm5844, %v6184, %v6186
      %v6188 = vrot.slane %v5502, 3
      %v6189 = vsel %vm5844, %v6186, %v6188
      %v6190 = vrot.slane %v5503, 3
      %v6191 = vsel %vm5844, %v6188, %v6190
      %v6192 = vrot.slane %v5504, 3
      %v6193 = vsel %vm5844, %v6190, %v6192
      %v6194 = vrot.slane %v5505, 3
      %v6195 = vsel %vm5844, %v6192, %v6194
      %v6196 = vrot.slane %v5506, 3
      %v6197 = vsel %vm5844, %v6194, %v6196
      %v6198 = vrot.slane %v5507, 3
      %v6199 = vsel %vm5844, %v6196, %v6198
      %v6200 = vrot.slane %v5508, 3
      %v6201 = vsel %vm5844, %v6198, %v6200
      %v6202 = vrot.slane %v5509, 3
      %v6203 = vsel %vm5844, %v6200, %v6202
      %v6204 = vrot.slane %v5510, 3
      %v6205 = vsel %vm5844, %v6202, %v6204
      %v6206 = vrot.slane %v5511, 3
      %v6207 = vsel %vm5844, %v6204, %v6206
      %v6208 = vrot.slane %v5512, 3
      %v6209 = vsel %vm5844, %v6206, %v6208
      %v6210 = vrot.slane %v5513, 3
      %v6211 = vsel %vm5844, %v6208, %v6210
      %v6212 = vrot.slane %v5514, 3
      %v6213 = vsel %vm5844, %v6210, %v6212
      %v6214 = vrot.slane %v5515, 3
      %v6215 = vsel %vm5844, %v6212, %v6214
      %v6216 = vrot.slane %v5516, 3
      %v6217 = vsel %vm5844, %v6214, %v6216
      %v6218 = vrot.slane %v5517, 3
      %v6219 = vsel %vm5844, %v6216, %v6218
      %v6220 = vrot.slane %v5518, 3
      %v6221 = vsel %vm5844, %v6218, %v6220
      %v6222 = vrot.slane %v5519, 3
      %v6223 = vsel %vm5844, %v6220, %v6222
      %v6224 = vrot.slane %v5520, 3
      %v6225 = vsel %vm5844, %v6222, %v6224
      %v6226 = vrot.slane %v5521, 3
      %v6227 = vsel %vm5844, %v6224, %v6226
      %v6228 = vrot.slane %v5522, 3
      %v6229 = vsel %vm5844, %v6226, %v6228
      %v6230 = vrot.slane %v5523, 3
      %v6231 = vsel %vm5844, %v6228, %v6230
      %v6232 = vrot.slane %v5524, 3
      %v6233 = vsel %vm5844, %v6230, %v6232
      %v6234 = vrot.slane %v5525, 3
      %v6235 = vsel %vm5844, %v6232, %v6234
      %v6236 = vrot.slane %v5526, 3
      %v6237 = vsel %vm5844, %v6234, %v6236
      %v6238 = vrot.slane %v5527, 3
      %v6239 = vsel %vm5844, %v6236, %v6238
      %v6240 = vrot.slane %v5528, 3
      %v6241 = vsel %vm5844, %v6238, %v6240
      %v6242 = vrot.slane %v5529, 3
      %v6243 = vsel %vm5844, %v6240, %v6242
      %v6244 = vrot.slane %v5530, 3
      %v6245 = vsel %vm5844, %v6242, %v6244
      %v6246 = vrot.slane %v5531, 3
      %v6247 = vsel %vm5844, %v6244, %v6246
      %v6248 = vrot.slane %v5532, 3
      %v6249 = vsel %vm5844, %v6246, %v6248
      %v6250 = vrot.slane %v5533, 3
      %v6251 = vsel %vm5844, %v6248, %v6250
      %v6252 = vrot.slane %v5534, 3
      %v6253 = vsel %vm5844, %v6250, %v6252
      %v6254 = vrot.slane %v5535, 3
      %v6255 = vsel %vm5844, %v6252, %v6254
      %v6256 = vrot.slane %v5536, 3
      %v6257 = vsel %vm5844, %v6254, %v6256
      %v6258 = vrot.slane %v5537, 3
      %v6259 = vsel %vm5844, %v6256, %v6258
      %v6260 = vrot.slane %v5538, 3
      %v6261 = vsel %vm5844, %v6258, %v6260
      %v6262 = vrot.slane %v5539, 3
      %v6263 = vsel %vm5844, %v6260, %v6262
      %v6264 = vrot.slane %v5540, 3
      %v6265 = vsel %vm5844, %v6262, %v6264
      %v6266 = vrot.slane %v5541, 3
      %v6267 = vsel %vm5844, %v6264, %v6266
      %v6268 = vrot.slane %v5542, 3
      %v6269 = vsel %vm5844, %v6266, %v6268
      %v6270 = vrot.slane %v5543, 3
      %v6271 = vsel %vm5844, %v6268, %v6270
      %v6272 = vrot.slane %v5544, 3
      %v6273 = vsel %vm5844, %v6270, %v6272
      %v6274 = vrot.slane %v5545, 3
      %v6275 = vsel %vm5844, %v6272, %v6274
      %v6276 = vrot.slane %v5546, 3
      %v6277 = vsel %vm5844, %v6274, %v6276
      %v6278 = vrot.slane %v5547, 3
      %v6279 = vsel %vm5844, %v6276, %v6278
      %v6280 = vrot.slane %v5548, 3
      %v6281 = vsel %vm5844, %v6278, %v6280
      %v6282 = vrot.slane %v5549, 3
      %v6283 = vsel %vm5844, %v6280, %v6282
      %v6284 = vrot.slane %v5550, 3
      %v6285 = vsel %vm5844, %v6282, %v6284
      %v6286 = vrot.slane %v5551, 3
      %v6287 = vsel %vm5844, %v6284, %v6286
      %v6288 = vrot.slane %v5552, 3
      %v6289 = vsel %vm5844, %v6286, %v6288
      %v6290 = vrot.slane %v5553, 3
      %v6291 = vsel %vm5844, %v6288, %v6290
      %v6292 = vrot.slane %v5554, 3
      %v6293 = vsel %vm5844, %v6290, %v6292
      %v6294 = vrot.slane %v5555, 3
      %v6295 = vsel %vm5844, %v6292, %v6294
      %v6296 = vrot.slane %v5556, 3
      %v6297 = vsel %vm5844, %v6294, %v6296
      %v6298 = vrot.slane %v5557, 3
      %v6299 = vsel %vm5844, %v6296, %v6298
      %v6300 = vrot.slane %v5558, 3
      %v6301 = vsel %vm5844, %v6298, %v6300
      %v6302 = vrot.slane %v5559, 3
      %v6303 = vsel %vm5844, %v6300, %v6302
      %v6304 = vrot.slane %v5560, 3
      %v6305 = vsel %vm5844, %v6302, %v6304
      %v6306 = vrot.slane %v5561, 3
      %v6307 = vsel %vm5844, %v6304, %v6306
      %v6308 = vrot.slane %v5562, 3
      %v6309 = vsel %vm5844, %v6306, %v6308
      %v6310 = vrot.slane %v5563, 3
      %v6311 = vsel %vm5844, %v6308, %v6310
      %v6312 = vrot.slane %v5564, 3
      %v6313 = vsel %vm5844, %v6310, %v6312
      %v6314 = vrot.slane %v5565, 3
      %v6315 = vsel %vm5844, %v6312, %v6314
      %v6316 = vrot.slane %v5566, 3
      %v6317 = vsel %vm5844, %v6314, %v6316
      %v6318 = vrot.slane %v5567, 3
      %v6319 = vsel %vm5844, %v6316, %v6318
      %v6320 = vrot.slane %v5568, 3
      %v6321 = vsel %vm5844, %v6318, %v6320
      %v6322 = vrot.slane %v5569, 3
      %v6323 = vsel %vm5844, %v6320, %v6322
      %v6324 = vrot.slane %v5570, 3
      %v6325 = vsel %vm5844, %v6322, %v6324
      %v6326 = vrot.slane %v5571, 3
      %v6327 = vsel %vm5844, %v6324, %v6326
      %v6328 = vrot.slane %v5572, 3
      %v6329 = vsel %vm5844, %v6326, %v6328
      %v6330 = vrot.slane %v5573, 3
      %v6331 = vsel %vm5844, %v6328, %v6330
      %v6332 = vrot.slane %v5574, 3
      %v6333 = vsel %vm5844, %v6330, %v6332
      %v6334 = vrot.slane %v5575, 3
      %v6335 = vsel %vm5844, %v6332, %v6334
      %v6336 = vrot.slane %v5576, 3
      %v6337 = vsel %vm5844, %v6334, %v6336
      %v6338 = vrot.slane %v5577, 3
      %v6339 = vsel %vm5844, %v6336, %v6338
      %v6340 = vrot.slane %v5578, 3
      %v6341 = vsel %vm5844, %v6338, %v6340
      %v6342 = vrot.slane %v5579, 3
      %v6343 = vsel %vm5844, %v6340, %v6342
      %v6344 = vrot.slane %v5580, 3
      %v6345 = vsel %vm5844, %v6342, %v6344
      %v6346 = vrot.slane %v5581, 3
      %v6347 = vsel %vm5844, %v6344, %v6346
      %v6348 = vrot.slane %v5582, 3
      %v6349 = vsel %vm5844, %v6346, %v6348
      %v6350 = vrot.slane %v5583, 3
      %v6351 = vsel %vm5844, %v6348, %v6350
      %v6352 = vrot.slane %v5584, 3
      %v6353 = vsel %vm5844, %v6350, %v6352
      %v6354 = vrot.slane %v5585, 3
      %v6355 = vsel %vm5844, %v6352, %v6354
      %v6356 = vrot.slane %v5586, 3
      %v6357 = vsel %vm5844, %v6354, %v6356
      %v6614 = vadd.f32 %v5070, %v5847
      %v6615 = vadd.f32 %v5071, %v5849
      %v6616 = vadd.f32 %v5072, %v5851
      %v6617 = vadd.f32 %v5073, %v5853
      %v6618 = vadd.f32 %v5074, %v5855
      %v6619 = vadd.f32 %v5075, %v5857
      %v6620 = vadd.f32 %v5076, %v5859
      %v6621 = vadd.f32 %v5077, %v5861
      %v6622 = vadd.f32 %v5078, %v5863
      %v6623 = vadd.f32 %v5079, %v5865
      %v6624 = vadd.f32 %v5080, %v5867
      %v6625 = vadd.f32 %v5081, %v5869
      %v6626 = vadd.f32 %v5082, %v5871
      %v6627 = vadd.f32 %v5083, %v5873
      %v6628 = vadd.f32 %v5084, %v5875
      %v6629 = vadd.f32 %v5085, %v5877
      %v6630 = vadd.f32 %v5086, %v5879
      %v6631 = vadd.f32 %v5087, %v5881
      %v6632 = vadd.f32 %v5088, %v5883
      %v6633 = vadd.f32 %v5089, %v5885
      %v6634 = vadd.f32 %v5090, %v5887
      %v6635 = vadd.f32 %v5091, %v5889
      %v6636 = vadd.f32 %v5092, %v5891
      %v6637 = vadd.f32 %v5093, %v5893
      %v6638 = vadd.f32 %v5094, %v5895
      %v6639 = vadd.f32 %v5095, %v5897
      %v6640 = vadd.f32 %v5096, %v5899
      %v6641 = vadd.f32 %v5097, %v5901
      %v6642 = vadd.f32 %v5098, %v5903
      %v6643 = vadd.f32 %v5099, %v5905
      %v6644 = vadd.f32 %v5100, %v5907
      %v6645 = vadd.f32 %v5101, %v5909
      %v6646 = vadd.f32 %v5102, %v5911
      %v6647 = vadd.f32 %v5103, %v5913
      %v6648 = vadd.f32 %v5104, %v5915
      %v6649 = vadd.f32 %v5105, %v5917
      %v6650 = vadd.f32 %v5106, %v5919
      %v6651 = vadd.f32 %v5107, %v5921
      %v6652 = vadd.f32 %v5108, %v5923
      %v6653 = vadd.f32 %v5109, %v5925
      %v6654 = vadd.f32 %v5110, %v5927
      %v6655 = vadd.f32 %v5111, %v5929
      %v6656 = vadd.f32 %v5112, %v5931
      %v6657 = vadd.f32 %v5113, %v5933
      %v6658 = vadd.f32 %v5114, %v5935
      %v6659 = vadd.f32 %v5115, %v5937
      %v6660 = vadd.f32 %v5116, %v5939
      %v6661 = vadd.f32 %v5117, %v5941
      %v6662 = vadd.f32 %v5118, %v5943
      %v6663 = vadd.f32 %v5119, %v5945
      %v6664 = vadd.f32 %v5120, %v5947
      %v6665 = vadd.f32 %v5121, %v5949
      %v6666 = vadd.f32 %v5122, %v5951
      %v6667 = vadd.f32 %v5123, %v5953
      %v6668 = vadd.f32 %v5124, %v5955
      %v6669 = vadd.f32 %v5125, %v5957
      %v6670 = vadd.f32 %v5126, %v5959
      %v6671 = vadd.f32 %v5127, %v5961
      %v6672 = vadd.f32 %v5128, %v5963
      %v6673 = vadd.f32 %v5129, %v5965
      %v6674 = vadd.f32 %v5130, %v5967
      %v6675 = vadd.f32 %v5131, %v5969
      %v6676 = vadd.f32 %v5132, %v5971
      %v6677 = vadd.f32 %v5133, %v5973
      %v6678 = vadd.f32 %v5134, %v5975
      %v6679 = vadd.f32 %v5135, %v5977
      %v6680 = vadd.f32 %v5136, %v5979
      %v6681 = vadd.f32 %v5137, %v5981
      %v6682 = vadd.f32 %v5138, %v5983
      %v6683 = vadd.f32 %v5139, %v5985
      %v6684 = vadd.f32 %v5140, %v5987
      %v6685 = vadd.f32 %v5141, %v5989
      %v6686 = vadd.f32 %v5142, %v5991
      %v6687 = vadd.f32 %v5143, %v5993
      %v6688 = vadd.f32 %v5144, %v5995
      %v6689 = vadd.f32 %v5145, %v5997
      %v6690 = vadd.f32 %v5146, %v5999
      %v6691 = vadd.f32 %v5147, %v6001
      %v6692 = vadd.f32 %v5148, %v6003
      %v6693 = vadd.f32 %v5149, %v6005
      %v6694 = vadd.f32 %v5150, %v6007
      %v6695 = vadd.f32 %v5151, %v6009
      %v6696 = vadd.f32 %v5152, %v6011
      %v6697 = vadd.f32 %v5153, %v6013
      %v6698 = vadd.f32 %v5154, %v6015
      %v6699 = vadd.f32 %v5155, %v6017
      %v6700 = vadd.f32 %v5156, %v6019
      %v6701 = vadd.f32 %v5157, %v6021
      %v6702 = vadd.f32 %v5158, %v6023
      %v6703 = vadd.f32 %v5159, %v6025
      %v6704 = vadd.f32 %v5160, %v6027
      %v6705 = vadd.f32 %v5161, %v6029
      %v6706 = vadd.f32 %v5162, %v6031
      %v6707 = vadd.f32 %v5163, %v6033
      %v6708 = vadd.f32 %v5164, %v6035
      %v6709 = vadd.f32 %v5165, %v6037
      %v6710 = vadd.f32 %v5166, %v6039
      %v6711 = vadd.f32 %v5167, %v6041
      %v6712 = vadd.f32 %v5168, %v6043
      %v6713 = vadd.f32 %v5169, %v6045
      %v6714 = vadd.f32 %v5170, %v6047
      %v6715 = vadd.f32 %v5171, %v6049
      %v6716 = vadd.f32 %v5172, %v6051
      %v6717 = vadd.f32 %v5173, %v6053
      %v6718 = vadd.f32 %v5174, %v6055
      %v6719 = vadd.f32 %v5175, %v6057
      %v6720 = vadd.f32 %v5176, %v6059
      %v6721 = vadd.f32 %v5177, %v6061
      %v6722 = vadd.f32 %v5178, %v6063
      %v6723 = vadd.f32 %v5179, %v6065
      %v6724 = vadd.f32 %v5180, %v6067
      %v6725 = vadd.f32 %v5181, %v6069
      %v6726 = vadd.f32 %v5182, %v6071
      %v6727 = vadd.f32 %v5183, %v6073
      %v6728 = vadd.f32 %v5184, %v6075
      %v6729 = vadd.f32 %v5185, %v6077
      %v6730 = vadd.f32 %v5186, %v6079
      %v6731 = vadd.f32 %v5187, %v6081
      %v6732 = vadd.f32 %v5188, %v6083
      %v6733 = vadd.f32 %v5189, %v6085
      %v6734 = vadd.f32 %v5190, %v6087
      %v6735 = vadd.f32 %v5191, %v6089
      %v6736 = vadd.f32 %v5192, %v6091
      %v6737 = vadd.f32 %v5193, %v6093
      %v6738 = vadd.f32 %v5194, %v6095
      %v6739 = vadd.f32 %v5195, %v6097
      %v6740 = vadd.f32 %v5196, %v6099
      %v6741 = vadd.f32 %v5197, %v6101
      %v6742 = vadd.f32 %v5198, %v6103
      %v6743 = vadd.f32 %v5199, %v6105
      %v6744 = vadd.f32 %v5200, %v6107
      %v6745 = vadd.f32 %v5201, %v6109
      %v6746 = vadd.f32 %v5202, %v6111
      %v6747 = vadd.f32 %v5203, %v6113
      %v6748 = vadd.f32 %v5204, %v6115
      %v6749 = vadd.f32 %v5205, %v6117
      %v6750 = vadd.f32 %v5206, %v6119
      %v6751 = vadd.f32 %v5207, %v6121
      %v6752 = vadd.f32 %v5208, %v6123
      %v6753 = vadd.f32 %v5209, %v6125
      %v6754 = vadd.f32 %v5210, %v6127
      %v6755 = vadd.f32 %v5211, %v6129
      %v6756 = vadd.f32 %v5212, %v6131
      %v6757 = vadd.f32 %v5213, %v6133
      %v6758 = vadd.f32 %v5214, %v6135
      %v6759 = vadd.f32 %v5215, %v6137
      %v6760 = vadd.f32 %v5216, %v6139
      %v6761 = vadd.f32 %v5217, %v6141
      %v6762 = vadd.f32 %v5218, %v6143
      %v6763 = vadd.f32 %v5219, %v6145
      %v6764 = vadd.f32 %v5220, %v6147
      %v6765 = vadd.f32 %v5221, %v6149
      %v6766 = vadd.f32 %v5222, %v6151
      %v6767 = vadd.f32 %v5223, %v6153
      %v6768 = vadd.f32 %v5224, %v6155
      %v6769 = vadd.f32 %v5225, %v6157
      %v6770 = vadd.f32 %v5226, %v6159
      %v6771 = vadd.f32 %v5227, %v6161
      %v6772 = vadd.f32 %v5228, %v6163
      %v6773 = vadd.f32 %v5229, %v6165
      %v6774 = vadd.f32 %v5230, %v6167
      %v6775 = vadd.f32 %v5231, %v6169
      %v6776 = vadd.f32 %v5232, %v6171
      %v6777 = vadd.f32 %v5233, %v6173
      %v6778 = vadd.f32 %v5234, %v6175
      %v6779 = vadd.f32 %v5235, %v6177
      %v6780 = vadd.f32 %v5236, %v6179
      %v6781 = vadd.f32 %v5237, %v6181
      %v6782 = vadd.f32 %v5238, %v6183
      %v6783 = vadd.f32 %v5239, %v6185
      %v6784 = vadd.f32 %v5240, %v6187
      %v6785 = vadd.f32 %v5241, %v6189
      %v6786 = vadd.f32 %v5242, %v6191
      %v6787 = vadd.f32 %v5243, %v6193
      %v6788 = vadd.f32 %v5244, %v6195
      %v6789 = vadd.f32 %v5245, %v6197
      %v6790 = vadd.f32 %v5246, %v6199
      %v6791 = vadd.f32 %v5247, %v6201
      %v6792 = vadd.f32 %v5248, %v6203
      %v6793 = vadd.f32 %v5249, %v6205
      %v6794 = vadd.f32 %v5250, %v6207
      %v6795 = vadd.f32 %v5251, %v6209
      %v6796 = vadd.f32 %v5252, %v6211
      %v6797 = vadd.f32 %v5253, %v6213
      %v6798 = vadd.f32 %v5254, %v6215
      %v6799 = vadd.f32 %v5255, %v6217
      %v6800 = vadd.f32 %v5256, %v6219
      %v6801 = vadd.f32 %v5257, %v6221
      %v6802 = vadd.f32 %v5258, %v6223
      %v6803 = vadd.f32 %v5259, %v6225
      %v6804 = vadd.f32 %v5260, %v6227
      %v6805 = vadd.f32 %v5261, %v6229
      %v6806 = vadd.f32 %v5262, %v6231
      %v6807 = vadd.f32 %v5263, %v6233
      %v6808 = vadd.f32 %v5264, %v6235
      %v6809 = vadd.f32 %v5265, %v6237
      %v6810 = vadd.f32 %v5266, %v6239
      %v6811 = vadd.f32 %v5267, %v6241
      %v6812 = vadd.f32 %v5268, %v6243
      %v6813 = vadd.f32 %v5269, %v6245
      %v6814 = vadd.f32 %v5270, %v6247
      %v6815 = vadd.f32 %v5271, %v6249
      %v6816 = vadd.f32 %v5272, %v6251
      %v6817 = vadd.f32 %v5273, %v6253
      %v6818 = vadd.f32 %v5274, %v6255
      %v6819 = vadd.f32 %v5275, %v6257
      %v6820 = vadd.f32 %v5276, %v6259
      %v6821 = vadd.f32 %v5277, %v6261
      %v6822 = vadd.f32 %v5278, %v6263
      %v6823 = vadd.f32 %v5279, %v6265
      %v6824 = vadd.f32 %v5280, %v6267
      %v6825 = vadd.f32 %v5281, %v6269
      %v6826 = vadd.f32 %v5282, %v6271
      %v6827 = vadd.f32 %v5283, %v6273
      %v6828 = vadd.f32 %v5284, %v6275
      %v6829 = vadd.f32 %v5285, %v6277
      %v6830 = vadd.f32 %v5286, %v6279
      %v6831 = vadd.f32 %v5287, %v6281
      %v6832 = vadd.f32 %v5288, %v6283
      %v6833 = vadd.f32 %v5289, %v6285
      %v6834 = vadd.f32 %v5290, %v6287
      %v6835 = vadd.f32 %v5291, %v6289
      %v6836 = vadd.f32 %v5292, %v6291
      %v6837 = vadd.f32 %v5293, %v6293
      %v6838 = vadd.f32 %v5294, %v6295
      %v6839 = vadd.f32 %v5295, %v6297
      %v6840 = vadd.f32 %v5296, %v6299
      %v6841 = vadd.f32 %v5297, %v6301
      %v6842 = vadd.f32 %v5298, %v6303
      %v6843 = vadd.f32 %v5299, %v6305
      %v6844 = vadd.f32 %v5300, %v6307
      %v6845 = vadd.f32 %v5301, %v6309
      %v6846 = vadd.f32 %v5302, %v6311
      %v6847 = vadd.f32 %v5303, %v6313
      %v6848 = vadd.f32 %v5304, %v6315
      %v6849 = vadd.f32 %v5305, %v6317
      %v6850 = vadd.f32 %v5306, %v6319
      %v6851 = vadd.f32 %v5307, %v6321
      %v6852 = vadd.f32 %v5308, %v6323
      %v6853 = vadd.f32 %v5309, %v6325
      %v6854 = vadd.f32 %v5310, %v6327
      %v6855 = vadd.f32 %v5311, %v6329
      %v6856 = vadd.f32 %v5312, %v6331
      %v6857 = vadd.f32 %v5313, %v6333
      %v6858 = vadd.f32 %v5314, %v6335
      %v6859 = vadd.f32 %v5315, %v6337
      %v6860 = vadd.f32 %v5316, %v6339
      %v6861 = vadd.f32 %v5317, %v6341
      %v6862 = vadd.f32 %v5318, %v6343
      %v6863 = vadd.f32 %v5319, %v6345
      %v6864 = vadd.f32 %v5320, %v6347
      %v6865 = vadd.f32 %v5321, %v6349
      %v6866 = vadd.f32 %v5322, %v6351
      %v6867 = vadd.f32 %v5323, %v6353
      %v6868 = vadd.f32 %v5324, %v6355
      %v6869 = vadd.f32 %v5325, %v6357
      %v6870 = vlaneseq
      %v6871 = vshrl.u32 %v6870, 7
      %v6872 = vsub.s32 4, %v6871
      %v6873 = vrot.slane %v430, %v6872
      %v6874 = vmul.f32 %v440, %v6873
      %v6875 = vmul.f32 %v445, %v6873
      %v6876 = vmul.f32 %v450, %v6873
      %v6877 = vmul.f32 %v455, %v6873
      %v6878 = vmul.f32 %v460, %v6873
      %v6879 = vmul.f32 %v465, %v6873
      %v6880 = vmul.f32 %v470, %v6873
      %v6881 = vmul.f32 %v475, %v6873
      %v6882 = vmul.f32 %v480, %v6873
      %v6883 = vmul.f32 %v485, %v6873
      %v6884 = vmul.f32 %v490, %v6873
      %v6885 = vmul.f32 %v495, %v6873
      %v6886 = vmul.f32 %v500, %v6873
      %v6887 = vmul.f32 %v505, %v6873
      %v6888 = vmul.f32 %v510, %v6873
      %v6889 = vmul.f32 %v515, %v6873
      %v6890 = vmul.f32 %v520, %v6873
      %v6891 = vmul.f32 %v525, %v6873
      %v6892 = vmul.f32 %v530, %v6873
      %v6893 = vmul.f32 %v535, %v6873
      %v6894 = vmul.f32 %v540, %v6873
      %v6895 = vmul.f32 %v545, %v6873
      %v6896 = vmul.f32 %v550, %v6873
      %v6897 = vmul.f32 %v555, %v6873
      %v6898 = vmul.f32 %v560, %v6873
      %v6899 = vmul.f32 %v565, %v6873
      %v6900 = vmul.f32 %v570, %v6873
      %v6901 = vmul.f32 %v575, %v6873
      %v6902 = vmul.f32 %v580, %v6873
      %v6903 = vmul.f32 %v585, %v6873
      %v6904 = vmul.f32 %v590, %v6873
      %v6905 = vmul.f32 %v595, %v6873
      %v6906 = vmul.f32 %v600, %v6873
      %v6907 = vmul.f32 %v605, %v6873
      %v6908 = vmul.f32 %v610, %v6873
      %v6909 = vmul.f32 %v615, %v6873
      %v6910 = vmul.f32 %v620, %v6873
      %v6911 = vmul.f32 %v625, %v6873
      %v6912 = vmul.f32 %v630, %v6873
      %v6913 = vmul.f32 %v635, %v6873
      %v6914 = vmul.f32 %v640, %v6873
      %v6915 = vmul.f32 %v645, %v6873
      %v6916 = vmul.f32 %v650, %v6873
      %v6917 = vmul.f32 %v655, %v6873
      %v6918 = vmul.f32 %v660, %v6873
      %v6919 = vmul.f32 %v665, %v6873
      %v6920 = vmul.f32 %v670, %v6873
      %v6921 = vmul.f32 %v675, %v6873
      %v6922 = vmul.f32 %v680, %v6873
      %v6923 = vmul.f32 %v685, %v6873
      %v6924 = vmul.f32 %v690, %v6873
      %v6925 = vmul.f32 %v695, %v6873
      %v6926 = vmul.f32 %v700, %v6873
      %v6927 = vmul.f32 %v705, %v6873
      %v6928 = vmul.f32 %v710, %v6873
      %v6929 = vmul.f32 %v715, %v6873
      %v6930 = vmul.f32 %v720, %v6873
      %v6931 = vmul.f32 %v725, %v6873
      %v6932 = vmul.f32 %v730, %v6873
      %v6933 = vmul.f32 %v735, %v6873
      %v6934 = vmul.f32 %v740, %v6873
      %v6935 = vmul.f32 %v745, %v6873
      %v6936 = vmul.f32 %v750, %v6873
      %v6937 = vmul.f32 %v755, %v6873
      %v6938 = vmul.f32 %v760, %v6873
      %v6939 = vmul.f32 %v765, %v6873
      %v6940 = vmul.f32 %v770, %v6873
      %v6941 = vmul.f32 %v775, %v6873
      %v6942 = vmul.f32 %v780, %v6873
      %v6943 = vmul.f32 %v785, %v6873
      %v6944 = vmul.f32 %v790, %v6873
      %v6945 = vmul.f32 %v795, %v6873
      %v6946 = vmul.f32 %v800, %v6873
      %v6947 = vmul.f32 %v805, %v6873
      %v6948 = vmul.f32 %v810, %v6873
      %v6949 = vmul.f32 %v815, %v6873
      %v6950 = vmul.f32 %v820, %v6873
      %v6951 = vmul.f32 %v825, %v6873
      %v6952 = vmul.f32 %v830, %v6873
      %v6953 = vmul.f32 %v835, %v6873
      %v6954 = vmul.f32 %v840, %v6873
      %v6955 = vmul.f32 %v845, %v6873
      %v6956 = vmul.f32 %v850, %v6873
      %v6957 = vmul.f32 %v855, %v6873
      %v6958 = vmul.f32 %v860, %v6873
      %v6959 = vmul.f32 %v865, %v6873
      %v6960 = vmul.f32 %v870, %v6873
      %v6961 = vmul.f32 %v875, %v6873
      %v6962 = vmul.f32 %v880, %v6873
      %v6963 = vmul.f32 %v885, %v6873
      %v6964 = vmul.f32 %v890, %v6873
      %v6965 = vmul.f32 %v895, %v6873
      %v6966 = vmul.f32 %v900, %v6873
      %v6967 = vmul.f32 %v905, %v6873
      %v6968 = vmul.f32 %v910, %v6873
      %v6969 = vmul.f32 %v915, %v6873
      %v6970 = vmul.f32 %v920, %v6873
      %v6971 = vmul.f32 %v925, %v6873
      %v6972 = vmul.f32 %v930, %v6873
      %v6973 = vmul.f32 %v935, %v6873
      %v6974 = vmul.f32 %v940, %v6873
      %v6975 = vmul.f32 %v945, %v6873
      %v6976 = vmul.f32 %v950, %v6873
      %v6977 = vmul.f32 %v955, %v6873
      %v6978 = vmul.f32 %v960, %v6873
      %v6979 = vmul.f32 %v965, %v6873
      %v6980 = vmul.f32 %v970, %v6873
      %v6981 = vmul.f32 %v975, %v6873
      %v6982 = vmul.f32 %v980, %v6873
      %v6983 = vmul.f32 %v985, %v6873
      %v6984 = vmul.f32 %v990, %v6873
      %v6985 = vmul.f32 %v995, %v6873
      %v6986 = vmul.f32 %v1000, %v6873
      %v6987 = vmul.f32 %v1005, %v6873
      %v6988 = vmul.f32 %v1010, %v6873
      %v6989 = vmul.f32 %v1015, %v6873
      %v6990 = vmul.f32 %v1020, %v6873
      %v6991 = vmul.f32 %v1025, %v6873
      %v6992 = vmul.f32 %v1030, %v6873
      %v6993 = vmul.f32 %v1035, %v6873
      %v6994 = vmul.f32 %v1040, %v6873
      %v6995 = vmul.f32 %v1045, %v6873
      %v6996 = vmul.f32 %v1050, %v6873
      %v6997 = vmul.f32 %v1055, %v6873
      %v6998 = vmul.f32 %v1060, %v6873
      %v6999 = vmul.f32 %v1065, %v6873
      %v7000 = vmul.f32 %v1070, %v6873
      %v7001 = vmul.f32 %v1075, %v6873
      %v7002 = vmul.f32 %v1080, %v6873
      %v7003 = vmul.f32 %v1085, %v6873
      %v7004 = vmul.f32 %v1090, %v6873
      %v7005 = vmul.f32 %v1095, %v6873
      %v7006 = vmul.f32 %v1100, %v6873
      %v7007 = vmul.f32 %v1105, %v6873
      %v7008 = vmul.f32 %v1110, %v6873
      %v7009 = vmul.f32 %v1115, %v6873
      %v7010 = vmul.f32 %v1120, %v6873
      %v7011 = vmul.f32 %v1125, %v6873
      %v7012 = vmul.f32 %v1130, %v6873
      %v7013 = vmul.f32 %v1135, %v6873
      %v7014 = vmul.f32 %v1140, %v6873
      %v7015 = vmul.f32 %v1145, %v6873
      %v7016 = vmul.f32 %v1150, %v6873
      %v7017 = vmul.f32 %v1155, %v6873
      %v7018 = vmul.f32 %v1160, %v6873
      %v7019 = vmul.f32 %v1165, %v6873
      %v7020 = vmul.f32 %v1170, %v6873
      %v7021 = vmul.f32 %v1175, %v6873
      %v7022 = vmul.f32 %v1180, %v6873
      %v7023 = vmul.f32 %v1185, %v6873
      %v7024 = vmul.f32 %v1190, %v6873
      %v7025 = vmul.f32 %v1195, %v6873
      %v7026 = vmul.f32 %v1200, %v6873
      %v7027 = vmul.f32 %v1205, %v6873
      %v7028 = vmul.f32 %v1210, %v6873
      %v7029 = vmul.f32 %v1215, %v6873
      %v7030 = vmul.f32 %v1220, %v6873
      %v7031 = vmul.f32 %v1225, %v6873
      %v7032 = vmul.f32 %v1230, %v6873
      %v7033 = vmul.f32 %v1235, %v6873
      %v7034 = vmul.f32 %v1240, %v6873
      %v7035 = vmul.f32 %v1245, %v6873
      %v7036 = vmul.f32 %v1250, %v6873
      %v7037 = vmul.f32 %v1255, %v6873
      %v7038 = vmul.f32 %v1260, %v6873
      %v7039 = vmul.f32 %v1265, %v6873
      %v7040 = vmul.f32 %v1270, %v6873
      %v7041 = vmul.f32 %v1275, %v6873
      %v7042 = vmul.f32 %v1280, %v6873
      %v7043 = vmul.f32 %v1285, %v6873
      %v7044 = vmul.f32 %v1290, %v6873
      %v7045 = vmul.f32 %v1295, %v6873
      %v7046 = vmul.f32 %v1300, %v6873
      %v7047 = vmul.f32 %v1305, %v6873
      %v7048 = vmul.f32 %v1310, %v6873
      %v7049 = vmul.f32 %v1315, %v6873
      %v7050 = vmul.f32 %v1320, %v6873
      %v7051 = vmul.f32 %v1325, %v6873
      %v7052 = vmul.f32 %v1330, %v6873
      %v7053 = vmul.f32 %v1335, %v6873
      %v7054 = vmul.f32 %v1340, %v6873
      %v7055 = vmul.f32 %v1345, %v6873
      %v7056 = vmul.f32 %v1350, %v6873
      %v7057 = vmul.f32 %v1355, %v6873
      %v7058 = vmul.f32 %v1360, %v6873
      %v7059 = vmul.f32 %v1365, %v6873
      %v7060 = vmul.f32 %v1370, %v6873
      %v7061 = vmul.f32 %v1375, %v6873
      %v7062 = vmul.f32 %v1380, %v6873
      %v7063 = vmul.f32 %v1385, %v6873
      %v7064 = vmul.f32 %v1390, %v6873
      %v7065 = vmul.f32 %v1395, %v6873
      %v7066 = vmul.f32 %v1400, %v6873
      %v7067 = vmul.f32 %v1405, %v6873
      %v7068 = vmul.f32 %v1410, %v6873
      %v7069 = vmul.f32 %v1415, %v6873
      %v7070 = vmul.f32 %v1420, %v6873
      %v7071 = vmul.f32 %v1425, %v6873
      %v7072 = vmul.f32 %v1430, %v6873
      %v7073 = vmul.f32 %v1435, %v6873
      %v7074 = vmul.f32 %v1440, %v6873
      %v7075 = vmul.f32 %v1445, %v6873
      %v7076 = vmul.f32 %v1450, %v6873
      %v7077 = vmul.f32 %v1455, %v6873
      %v7078 = vmul.f32 %v1460, %v6873
      %v7079 = vmul.f32 %v1465, %v6873
      %v7080 = vmul.f32 %v1470, %v6873
      %v7081 = vmul.f32 %v1475, %v6873
      %v7082 = vmul.f32 %v1480, %v6873
      %v7083 = vmul.f32 %v1485, %v6873
      %v7084 = vmul.f32 %v1490, %v6873
      %v7085 = vmul.f32 %v1495, %v6873
      %v7086 = vmul.f32 %v1500, %v6873
      %v7087 = vmul.f32 %v1505, %v6873
      %v7088 = vmul.f32 %v1510, %v6873
      %v7089 = vmul.f32 %v1515, %v6873
      %v7090 = vmul.f32 %v1520, %v6873
      %v7091 = vmul.f32 %v1525, %v6873
      %v7092 = vmul.f32 %v1530, %v6873
      %v7093 = vmul.f32 %v1535, %v6873
      %v7094 = vmul.f32 %v1540, %v6873
      %v7095 = vmul.f32 %v1545, %v6873
      %v7096 = vmul.f32 %v1550, %v6873
      %v7097 = vmul.f32 %v1555, %v6873
      %v7098 = vmul.f32 %v1560, %v6873
      %v7099 = vmul.f32 %v1565, %v6873
      %v7100 = vmul.f32 %v1570, %v6873
      %v7101 = vmul.f32 %v1575, %v6873
      %v7102 = vmul.f32 %v1580, %v6873
      %v7103 = vmul.f32 %v1585, %v6873
      %v7104 = vmul.f32 %v1590, %v6873
      %v7105 = vmul.f32 %v1595, %v6873
      %v7106 = vmul.f32 %v1600, %v6873
      %v7107 = vmul.f32 %v1605, %v6873
      %v7108 = vmul.f32 %v1610, %v6873
      %v7109 = vmul.f32 %v1615, %v6873
      %v7110 = vmul.f32 %v1620, %v6873
      %v7111 = vmul.f32 %v1625, %v6873
      %v7112 = vmul.f32 %v1630, %v6873
      %v7113 = vmul.f32 %v1635, %v6873
      %v7114 = vmul.f32 %v1640, %v6873
      %v7115 = vmul.f32 %v1645, %v6873
      %v7116 = vmul.f32 %v1650, %v6873
      %v7117 = vmul.f32 %v1655, %v6873
      %v7118 = vmul.f32 %v1660, %v6873
      %v7119 = vmul.f32 %v1665, %v6873
      %v7120 = vmul.f32 %v1670, %v6873
      %v7121 = vmul.f32 %v1675, %v6873
      %v7122 = vmul.f32 %v1680, %v6873
      %v7123 = vmul.f32 %v1685, %v6873
      %v7124 = vmul.f32 %v1690, %v6873
      %v7125 = vmul.f32 %v1695, %v6873
      %v7126 = vmul.f32 %v1700, %v6873
      %v7127 = vmul.f32 %v1705, %v6873
      %v7128 = vmul.f32 %v1710, %v6873
      %v7129 = vmul.f32 %v1715, %v6873
      %v7130 = vmul.f32 %v2236, %v6873
      %vm7388 = vcmask 1043456
      %v7389 = vrot.slane %v6874, 4
      %v7390 = vrot.slane %v6875, 4
      %v7391 = vsel %vm7388, %v7389, %v7390
      %v7392 = vrot.slane %v6876, 4
      %v7393 = vsel %vm7388, %v7390, %v7392
      %v7394 = vrot.slane %v6877, 4
      %v7395 = vsel %vm7388, %v7392, %v7394
      %v7396 = vrot.slane %v6878, 4
      %v7397 = vsel %vm7388, %v7394, %v7396
      %v7398 = vrot.slane %v6879, 4
      %v7399 = vsel %vm7388, %v7396, %v7398
      %v7400 = vrot.slane %v6880, 4
      %v7401 = vsel %vm7388, %v7398, %v7400
      %v7402 = vrot.slane %v6881, 4
      %v7403 = vsel %vm7388, %v7400, %v7402
      %v7404 = vrot.slane %v6882, 4
      %v7405 = vsel %vm7388, %v7402, %v7404
      %v7406 = vrot.slane %v6883, 4
      %v7407 = vsel %vm7388, %v7404, %v7406
      %v7408 = vrot.slane %v6884, 4
      %v7409 = vsel %vm7388, %v7406, %v7408
      %v7410 = vrot.slane %v6885, 4
      %v7411 = vsel %vm7388, %v7408, %v7410
      %v7412 = vrot.slane %v6886, 4
      %v7413 = vsel %vm7388, %v7410, %v7412
      %v7414 = vrot.slane %v6887, 4
      %v7415 = vsel %vm7388, %v7412, %v7414
      %v7416 = vrot.slane %v6888, 4
      %v7417 = vsel %vm7388, %v7414, %v7416
      %v7418 = vrot.slane %v6889, 4
      %v7419 = vsel %vm7388, %v7416, %v7418
      %v7420 = vrot.slane %v6890, 4
      %v7421 = vsel %vm7388, %v7418, %v7420
      %v7422 = vrot.slane %v6891, 4
      %v7423 = vsel %vm7388, %v7420, %v7422
      %v7424 = vrot.slane %v6892, 4
      %v7425 = vsel %vm7388, %v7422, %v7424
      %v7426 = vrot.slane %v6893, 4
      %v7427 = vsel %vm7388, %v7424, %v7426
      %v7428 = vrot.slane %v6894, 4
      %v7429 = vsel %vm7388, %v7426, %v7428
      %v7430 = vrot.slane %v6895, 4
      %v7431 = vsel %vm7388, %v7428, %v7430
      %v7432 = vrot.slane %v6896, 4
      %v7433 = vsel %vm7388, %v7430, %v7432
      %v7434 = vrot.slane %v6897, 4
      %v7435 = vsel %vm7388, %v7432, %v7434
      %v7436 = vrot.slane %v6898, 4
      %v7437 = vsel %vm7388, %v7434, %v7436
      %v7438 = vrot.slane %v6899, 4
      %v7439 = vsel %vm7388, %v7436, %v7438
      %v7440 = vrot.slane %v6900, 4
      %v7441 = vsel %vm7388, %v7438, %v7440
      %v7442 = vrot.slane %v6901, 4
      %v7443 = vsel %vm7388, %v7440, %v7442
      %v7444 = vrot.slane %v6902, 4
      %v7445 = vsel %vm7388, %v7442, %v7444
      %v7446 = vrot.slane %v6903, 4
      %v7447 = vsel %vm7388, %v7444, %v7446
      %v7448 = vrot.slane %v6904, 4
      %v7449 = vsel %vm7388, %v7446, %v7448
      %v7450 = vrot.slane %v6905, 4
      %v7451 = vsel %vm7388, %v7448, %v7450
      %v7452 = vrot.slane %v6906, 4
      %v7453 = vsel %vm7388, %v7450, %v7452
      %v7454 = vrot.slane %v6907, 4
      %v7455 = vsel %vm7388, %v7452, %v7454
      %v7456 = vrot.slane %v6908, 4
      %v7457 = vsel %vm7388, %v7454, %v7456
      %v7458 = vrot.slane %v6909, 4
      %v7459 = vsel %vm7388, %v7456, %v7458
      %v7460 = vrot.slane %v6910, 4
      %v7461 = vsel %vm7388, %v7458, %v7460
      %v7462 = vrot.slane %v6911, 4
      %v7463 = vsel %vm7388, %v7460, %v7462
      %v7464 = vrot.slane %v6912, 4
      %v7465 = vsel %vm7388, %v7462, %v7464
      %v7466 = vrot.slane %v6913, 4
      %v7467 = vsel %vm7388, %v7464, %v7466
      %v7468 = vrot.slane %v6914, 4
      %v7469 = vsel %vm7388, %v7466, %v7468
      %v7470 = vrot.slane %v6915, 4
      %v7471 = vsel %vm7388, %v7468, %v7470
      %v7472 = vrot.slane %v6916, 4
      %v7473 = vsel %vm7388, %v7470, %v7472
      %v7474 = vrot.slane %v6917, 4
      %v7475 = vsel %vm7388, %v7472, %v7474
      %v7476 = vrot.slane %v6918, 4
      %v7477 = vsel %vm7388, %v7474, %v7476
      %v7478 = vrot.slane %v6919, 4
      %v7479 = vsel %vm7388, %v7476, %v7478
      %v7480 = vrot.slane %v6920, 4
      %v7481 = vsel %vm7388, %v7478, %v7480
      %v7482 = vrot.slane %v6921, 4
      %v7483 = vsel %vm7388, %v7480, %v7482
      %v7484 = vrot.slane %v6922, 4
      %v7485 = vsel %vm7388, %v7482, %v7484
      %v7486 = vrot.slane %v6923, 4
      %v7487 = vsel %vm7388, %v7484, %v7486
      %v7488 = vrot.slane %v6924, 4
      %v7489 = vsel %vm7388, %v7486, %v7488
      %v7490 = vrot.slane %v6925, 4
      %v7491 = vsel %vm7388, %v7488, %v7490
      %v7492 = vrot.slane %v6926, 4
      %v7493 = vsel %vm7388, %v7490, %v7492
      %v7494 = vrot.slane %v6927, 4
      %v7495 = vsel %vm7388, %v7492, %v7494
      %v7496 = vrot.slane %v6928, 4
      %v7497 = vsel %vm7388, %v7494, %v7496
      %v7498 = vrot.slane %v6929, 4
      %v7499 = vsel %vm7388, %v7496, %v7498
      %v7500 = vrot.slane %v6930, 4
      %v7501 = vsel %vm7388, %v7498, %v7500
      %v7502 = vrot.slane %v6931, 4
      %v7503 = vsel %vm7388, %v7500, %v7502
      %v7504 = vrot.slane %v6932, 4
      %v7505 = vsel %vm7388, %v7502, %v7504
      %v7506 = vrot.slane %v6933, 4
      %v7507 = vsel %vm7388, %v7504, %v7506
      %v7508 = vrot.slane %v6934, 4
      %v7509 = vsel %vm7388, %v7506, %v7508
      %v7510 = vrot.slane %v6935, 4
      %v7511 = vsel %vm7388, %v7508, %v7510
      %v7512 = vrot.slane %v6936, 4
      %v7513 = vsel %vm7388, %v7510, %v7512
      %v7514 = vrot.slane %v6937, 4
      %v7515 = vsel %vm7388, %v7512, %v7514
      %v7516 = vrot.slane %v6938, 4
      %v7517 = vsel %vm7388, %v7514, %v7516
      %v7518 = vrot.slane %v6939, 4
      %v7519 = vsel %vm7388, %v7516, %v7518
      %v7520 = vrot.slane %v6940, 4
      %v7521 = vsel %vm7388, %v7518, %v7520
      %v7522 = vrot.slane %v6941, 4
      %v7523 = vsel %vm7388, %v7520, %v7522
      %v7524 = vrot.slane %v6942, 4
      %v7525 = vsel %vm7388, %v7522, %v7524
      %v7526 = vrot.slane %v6943, 4
      %v7527 = vsel %vm7388, %v7524, %v7526
      %v7528 = vrot.slane %v6944, 4
      %v7529 = vsel %vm7388, %v7526, %v7528
      %v7530 = vrot.slane %v6945, 4
      %v7531 = vsel %vm7388, %v7528, %v7530
      %v7532 = vrot.slane %v6946, 4
      %v7533 = vsel %vm7388, %v7530, %v7532
      %v7534 = vrot.slane %v6947, 4
      %v7535 = vsel %vm7388, %v7532, %v7534
      %v7536 = vrot.slane %v6948, 4
      %v7537 = vsel %vm7388, %v7534, %v7536
      %v7538 = vrot.slane %v6949, 4
      %v7539 = vsel %vm7388, %v7536, %v7538
      %v7540 = vrot.slane %v6950, 4
      %v7541 = vsel %vm7388, %v7538, %v7540
      %v7542 = vrot.slane %v6951, 4
      %v7543 = vsel %vm7388, %v7540, %v7542
      %v7544 = vrot.slane %v6952, 4
      %v7545 = vsel %vm7388, %v7542, %v7544
      %v7546 = vrot.slane %v6953, 4
      %v7547 = vsel %vm7388, %v7544, %v7546
      %v7548 = vrot.slane %v6954, 4
      %v7549 = vsel %vm7388, %v7546, %v7548
      %v7550 = vrot.slane %v6955, 4
      %v7551 = vsel %vm7388, %v7548, %v7550
      %v7552 = vrot.slane %v6956, 4
      %v7553 = vsel %vm7388, %v7550, %v7552
      %v7554 = vrot.slane %v6957, 4
      %v7555 = vsel %vm7388, %v7552, %v7554
      %v7556 = vrot.slane %v6958, 4
      %v7557 = vsel %vm7388, %v7554, %v7556
      %v7558 = vrot.slane %v6959, 4
      %v7559 = vsel %vm7388, %v7556, %v7558
      %v7560 = vrot.slane %v6960, 4
      %v7561 = vsel %vm7388, %v7558, %v7560
      %v7562 = vrot.slane %v6961, 4
      %v7563 = vsel %vm7388, %v7560, %v7562
      %v7564 = vrot.slane %v6962, 4
      %v7565 = vsel %vm7388, %v7562, %v7564
      %v7566 = vrot.slane %v6963, 4
      %v7567 = vsel %vm7388, %v7564, %v7566
      %v7568 = vrot.slane %v6964, 4
      %v7569 = vsel %vm7388, %v7566, %v7568
      %v7570 = vrot.slane %v6965, 4
      %v7571 = vsel %vm7388, %v7568, %v7570
      %v7572 = vrot.slane %v6966, 4
      %v7573 = vsel %vm7388, %v7570, %v7572
      %v7574 = vrot.slane %v6967, 4
      %v7575 = vsel %vm7388, %v7572, %v7574
      %v7576 = vrot.slane %v6968, 4
      %v7577 = vsel %vm7388, %v7574, %v7576
      %v7578 = vrot.slane %v6969, 4
      %v7579 = vsel %vm7388, %v7576, %v7578
      %v7580 = vrot.slane %v6970, 4
      %v7581 = vsel %vm7388, %v7578, %v7580
      %v7582 = vrot.slane %v6971, 4
      %v7583 = vsel %vm7388, %v7580, %v7582
      %v7584 = vrot.slane %v6972, 4
      %v7585 = vsel %vm7388, %v7582, %v7584
      %v7586 = vrot.slane %v6973, 4
      %v7587 = vsel %vm7388, %v7584, %v7586
      %v7588 = vrot.slane %v6974, 4
      %v7589 = vsel %vm7388, %v7586, %v7588
      %v7590 = vrot.slane %v6975, 4
      %v7591 = vsel %vm7388, %v7588, %v7590
      %v7592 = vrot.slane %v6976, 4
      %v7593 = vsel %vm7388, %v7590, %v7592
      %v7594 = vrot.slane %v6977, 4
      %v7595 = vsel %vm7388, %v7592, %v7594
      %v7596 = vrot.slane %v6978, 4
      %v7597 = vsel %vm7388, %v7594, %v7596
      %v7598 = vrot.slane %v6979, 4
      %v7599 = vsel %vm7388, %v7596, %v7598
      %v7600 = vrot.slane %v6980, 4
      %v7601 = vsel %vm7388, %v7598, %v7600
      %v7602 = vrot.slane %v6981, 4
      %v7603 = vsel %vm7388, %v7600, %v7602
      %v7604 = vrot.slane %v6982, 4
      %v7605 = vsel %vm7388, %v7602, %v7604
      %v7606 = vrot.slane %v6983, 4
      %v7607 = vsel %vm7388, %v7604, %v7606
      %v7608 = vrot.slane %v6984, 4
      %v7609 = vsel %vm7388, %v7606, %v7608
      %v7610 = vrot.slane %v6985, 4
      %v7611 = vsel %vm7388, %v7608, %v7610
      %v7612 = vrot.slane %v6986, 4
      %v7613 = vsel %vm7388, %v7610, %v7612
      %v7614 = vrot.slane %v6987, 4
      %v7615 = vsel %vm7388, %v7612, %v7614
      %v7616 = vrot.slane %v6988, 4
      %v7617 = vsel %vm7388, %v7614, %v7616
      %v7618 = vrot.slane %v6989, 4
      %v7619 = vsel %vm7388, %v7616, %v7618
      %v7620 = vrot.slane %v6990, 4
      %v7621 = vsel %vm7388, %v7618, %v7620
      %v7622 = vrot.slane %v6991, 4
      %v7623 = vsel %vm7388, %v7620, %v7622
      %v7624 = vrot.slane %v6992, 4
      %v7625 = vsel %vm7388, %v7622, %v7624
      %v7626 = vrot.slane %v6993, 4
      %v7627 = vsel %vm7388, %v7624, %v7626
      %v7628 = vrot.slane %v6994, 4
      %v7629 = vsel %vm7388, %v7626, %v7628
      %v7630 = vrot.slane %v6995, 4
      %v7631 = vsel %vm7388, %v7628, %v7630
      %v7632 = vrot.slane %v6996, 4
      %v7633 = vsel %vm7388, %v7630, %v7632
      %v7634 = vrot.slane %v6997, 4
      %v7635 = vsel %vm7388, %v7632, %v7634
      %v7636 = vrot.slane %v6998, 4
      %v7637 = vsel %vm7388, %v7634, %v7636
      %v7638 = vrot.slane %v6999, 4
      %v7639 = vsel %vm7388, %v7636, %v7638
      %v7640 = vrot.slane %v7000, 4
      %v7641 = vsel %vm7388, %v7638, %v7640
      %v7642 = vrot.slane %v7001, 4
      %v7643 = vsel %vm7388, %v7640, %v7642
      %v7644 = vrot.slane %v7002, 4
      %v7645 = vsel %vm7388, %v7642, %v7644
      %v7646 = vrot.slane %v7003, 4
      %v7647 = vsel %vm7388, %v7644, %v7646
      %v7648 = vrot.slane %v7004, 4
      %v7649 = vsel %vm7388, %v7646, %v7648
      %v7650 = vrot.slane %v7005, 4
      %v7651 = vsel %vm7388, %v7648, %v7650
      %v7652 = vrot.slane %v7006, 4
      %v7653 = vsel %vm7388, %v7650, %v7652
      %v7654 = vrot.slane %v7007, 4
      %v7655 = vsel %vm7388, %v7652, %v7654
      %v7656 = vrot.slane %v7008, 4
      %v7657 = vsel %vm7388, %v7654, %v7656
      %v7658 = vrot.slane %v7009, 4
      %v7659 = vsel %vm7388, %v7656, %v7658
      %v7660 = vrot.slane %v7010, 4
      %v7661 = vsel %vm7388, %v7658, %v7660
      %v7662 = vrot.slane %v7011, 4
      %v7663 = vsel %vm7388, %v7660, %v7662
      %v7664 = vrot.slane %v7012, 4
      %v7665 = vsel %vm7388, %v7662, %v7664
      %v7666 = vrot.slane %v7013, 4
      %v7667 = vsel %vm7388, %v7664, %v7666
      %v7668 = vrot.slane %v7014, 4
      %v7669 = vsel %vm7388, %v7666, %v7668
      %v7670 = vrot.slane %v7015, 4
      %v7671 = vsel %vm7388, %v7668, %v7670
      %v7672 = vrot.slane %v7016, 4
      %v7673 = vsel %vm7388, %v7670, %v7672
      %v7674 = vrot.slane %v7017, 4
      %v7675 = vsel %vm7388, %v7672, %v7674
      %v7676 = vrot.slane %v7018, 4
      %v7677 = vsel %vm7388, %v7674, %v7676
      %v7678 = vrot.slane %v7019, 4
      %v7679 = vsel %vm7388, %v7676, %v7678
      %v7680 = vrot.slane %v7020, 4
      %v7681 = vsel %vm7388, %v7678, %v7680
      %v7682 = vrot.slane %v7021, 4
      %v7683 = vsel %vm7388, %v7680, %v7682
      %v7684 = vrot.slane %v7022, 4
      %v7685 = vsel %vm7388, %v7682, %v7684
      %v7686 = vrot.slane %v7023, 4
      %v7687 = vsel %vm7388, %v7684, %v7686
      %v7688 = vrot.slane %v7024, 4
      %v7689 = vsel %vm7388, %v7686, %v7688
      %v7690 = vrot.slane %v7025, 4
      %v7691 = vsel %vm7388, %v7688, %v7690
      %v7692 = vrot.slane %v7026, 4
      %v7693 = vsel %vm7388, %v7690, %v7692
      %v7694 = vrot.slane %v7027, 4
      %v7695 = vsel %vm7388, %v7692, %v7694
      %v7696 = vrot.slane %v7028, 4
      %v7697 = vsel %vm7388, %v7694, %v7696
      %v7698 = vrot.slane %v7029, 4
      %v7699 = vsel %vm7388, %v7696, %v7698
      %v7700 = vrot.slane %v7030, 4
      %v7701 = vsel %vm7388, %v7698, %v7700
      %v7702 = vrot.slane %v7031, 4
      %v7703 = vsel %vm7388, %v7700, %v7702
      %v7704 = vrot.slane %v7032, 4
      %v7705 = vsel %vm7388, %v7702, %v7704
      %v7706 = vrot.slane %v7033, 4
      %v7707 = vsel %vm7388, %v7704, %v7706
      %v7708 = vrot.slane %v7034, 4
      %v7709 = vsel %vm7388, %v7706, %v7708
      %v7710 = vrot.slane %v7035, 4
      %v7711 = vsel %vm7388, %v7708, %v7710
      %v7712 = vrot.slane %v7036, 4
      %v7713 = vsel %vm7388, %v7710, %v7712
      %v7714 = vrot.slane %v7037, 4
      %v7715 = vsel %vm7388, %v7712, %v7714
      %v7716 = vrot.slane %v7038, 4
      %v7717 = vsel %vm7388, %v7714, %v7716
      %v7718 = vrot.slane %v7039, 4
      %v7719 = vsel %vm7388, %v7716, %v7718
      %v7720 = vrot.slane %v7040, 4
      %v7721 = vsel %vm7388, %v7718, %v7720
      %v7722 = vrot.slane %v7041, 4
      %v7723 = vsel %vm7388, %v7720, %v7722
      %v7724 = vrot.slane %v7042, 4
      %v7725 = vsel %vm7388, %v7722, %v7724
      %v7726 = vrot.slane %v7043, 4
      %v7727 = vsel %vm7388, %v7724, %v7726
      %v7728 = vrot.slane %v7044, 4
      %v7729 = vsel %vm7388, %v7726, %v7728
      %v7730 = vrot.slane %v7045, 4
      %v7731 = vsel %vm7388, %v7728, %v7730
      %v7732 = vrot.slane %v7046, 4
      %v7733 = vsel %vm7388, %v7730, %v7732
      %v7734 = vrot.slane %v7047, 4
      %v7735 = vsel %vm7388, %v7732, %v7734
      %v7736 = vrot.slane %v7048, 4
      %v7737 = vsel %vm7388, %v7734, %v7736
      %v7738 = vrot.slane %v7049, 4
      %v7739 = vsel %vm7388, %v7736, %v7738
      %v7740 = vrot.slane %v7050, 4
      %v7741 = vsel %vm7388, %v7738, %v7740
      %v7742 = vrot.slane %v7051, 4
      %v7743 = vsel %vm7388, %v7740, %v7742
      %v7744 = vrot.slane %v7052, 4
      %v7745 = vsel %vm7388, %v7742, %v7744
      %v7746 = vrot.slane %v7053, 4
      %v7747 = vsel %vm7388, %v7744, %v7746
      %v7748 = vrot.slane %v7054, 4
      %v7749 = vsel %vm7388, %v7746, %v7748
      %v7750 = vrot.slane %v7055, 4
      %v7751 = vsel %vm7388, %v7748, %v7750
      %v7752 = vrot.slane %v7056, 4
      %v7753 = vsel %vm7388, %v7750, %v7752
      %v7754 = vrot.slane %v7057, 4
      %v7755 = vsel %vm7388, %v7752, %v7754
      %v7756 = vrot.slane %v7058, 4
      %v7757 = vsel %vm7388, %v7754, %v7756
      %v7758 = vrot.slane %v7059, 4
      %v7759 = vsel %vm7388, %v7756, %v7758
      %v7760 = vrot.slane %v7060, 4
      %v7761 = vsel %vm7388, %v7758, %v7760
      %v7762 = vrot.slane %v7061, 4
      %v7763 = vsel %vm7388, %v7760, %v7762
      %v7764 = vrot.slane %v7062, 4
      %v7765 = vsel %vm7388, %v7762, %v7764
      %v7766 = vrot.slane %v7063, 4
      %v7767 = vsel %vm7388, %v7764, %v7766
      %v7768 = vrot.slane %v7064, 4
      %v7769 = vsel %vm7388, %v7766, %v7768
      %v7770 = vrot.slane %v7065, 4
      %v7771 = vsel %vm7388, %v7768, %v7770
      %v7772 = vrot.slane %v7066, 4
      %v7773 = vsel %vm7388, %v7770, %v7772
      %v7774 = vrot.slane %v7067, 4
      %v7775 = vsel %vm7388, %v7772, %v7774
      %v7776 = vrot.slane %v7068, 4
      %v7777 = vsel %vm7388, %v7774, %v7776
      %v7778 = vrot.slane %v7069, 4
      %v7779 = vsel %vm7388, %v7776, %v7778
      %v7780 = vrot.slane %v7070, 4
      %v7781 = vsel %vm7388, %v7778, %v7780
      %v7782 = vrot.slane %v7071, 4
      %v7783 = vsel %vm7388, %v7780, %v7782
      %v7784 = vrot.slane %v7072, 4
      %v7785 = vsel %vm7388, %v7782, %v7784
      %v7786 = vrot.slane %v7073, 4
      %v7787 = vsel %vm7388, %v7784, %v7786
      %v7788 = vrot.slane %v7074, 4
      %v7789 = vsel %vm7388, %v7786, %v7788
      %v7790 = vrot.slane %v7075, 4
      %v7791 = vsel %vm7388, %v7788, %v7790
      %v7792 = vrot.slane %v7076, 4
      %v7793 = vsel %vm7388, %v7790, %v7792
      %v7794 = vrot.slane %v7077, 4
      %v7795 = vsel %vm7388, %v7792, %v7794
      %v7796 = vrot.slane %v7078, 4
      %v7797 = vsel %vm7388, %v7794, %v7796
      %v7798 = vrot.slane %v7079, 4
      %v7799 = vsel %vm7388, %v7796, %v7798
      %v7800 = vrot.slane %v7080, 4
      %v7801 = vsel %vm7388, %v7798, %v7800
      %v7802 = vrot.slane %v7081, 4
      %v7803 = vsel %vm7388, %v7800, %v7802
      %v7804 = vrot.slane %v7082, 4
      %v7805 = vsel %vm7388, %v7802, %v7804
      %v7806 = vrot.slane %v7083, 4
      %v7807 = vsel %vm7388, %v7804, %v7806
      %v7808 = vrot.slane %v7084, 4
      %v7809 = vsel %vm7388, %v7806, %v7808
      %v7810 = vrot.slane %v7085, 4
      %v7811 = vsel %vm7388, %v7808, %v7810
      %v7812 = vrot.slane %v7086, 4
      %v7813 = vsel %vm7388, %v7810, %v7812
      %v7814 = vrot.slane %v7087, 4
      %v7815 = vsel %vm7388, %v7812, %v7814
      %v7816 = vrot.slane %v7088, 4
      %v7817 = vsel %vm7388, %v7814, %v7816
      %v7818 = vrot.slane %v7089, 4
      %v7819 = vsel %vm7388, %v7816, %v7818
      %v7820 = vrot.slane %v7090, 4
      %v7821 = vsel %vm7388, %v7818, %v7820
      %v7822 = vrot.slane %v7091, 4
      %v7823 = vsel %vm7388, %v7820, %v7822
      %v7824 = vrot.slane %v7092, 4
      %v7825 = vsel %vm7388, %v7822, %v7824
      %v7826 = vrot.slane %v7093, 4
      %v7827 = vsel %vm7388, %v7824, %v7826
      %v7828 = vrot.slane %v7094, 4
      %v7829 = vsel %vm7388, %v7826, %v7828
      %v7830 = vrot.slane %v7095, 4
      %v7831 = vsel %vm7388, %v7828, %v7830
      %v7832 = vrot.slane %v7096, 4
      %v7833 = vsel %vm7388, %v7830, %v7832
      %v7834 = vrot.slane %v7097, 4
      %v7835 = vsel %vm7388, %v7832, %v7834
      %v7836 = vrot.slane %v7098, 4
      %v7837 = vsel %vm7388, %v7834, %v7836
      %v7838 = vrot.slane %v7099, 4
      %v7839 = vsel %vm7388, %v7836, %v7838
      %v7840 = vrot.slane %v7100, 4
      %v7841 = vsel %vm7388, %v7838, %v7840
      %v7842 = vrot.slane %v7101, 4
      %v7843 = vsel %vm7388, %v7840, %v7842
      %v7844 = vrot.slane %v7102, 4
      %v7845 = vsel %vm7388, %v7842, %v7844
      %v7846 = vrot.slane %v7103, 4
      %v7847 = vsel %vm7388, %v7844, %v7846
      %v7848 = vrot.slane %v7104, 4
      %v7849 = vsel %vm7388, %v7846, %v7848
      %v7850 = vrot.slane %v7105, 4
      %v7851 = vsel %vm7388, %v7848, %v7850
      %v7852 = vrot.slane %v7106, 4
      %v7853 = vsel %vm7388, %v7850, %v7852
      %v7854 = vrot.slane %v7107, 4
      %v7855 = vsel %vm7388, %v7852, %v7854
      %v7856 = vrot.slane %v7108, 4
      %v7857 = vsel %vm7388, %v7854, %v7856
      %v7858 = vrot.slane %v7109, 4
      %v7859 = vsel %vm7388, %v7856, %v7858
      %v7860 = vrot.slane %v7110, 4
      %v7861 = vsel %vm7388, %v7858, %v7860
      %v7862 = vrot.slane %v7111, 4
      %v7863 = vsel %vm7388, %v7860, %v7862
      %v7864 = vrot.slane %v7112, 4
      %v7865 = vsel %vm7388, %v7862, %v7864
      %v7866 = vrot.slane %v7113, 4
      %v7867 = vsel %vm7388, %v7864, %v7866
      %v7868 = vrot.slane %v7114, 4
      %v7869 = vsel %vm7388, %v7866, %v7868
      %v7870 = vrot.slane %v7115, 4
      %v7871 = vsel %vm7388, %v7868, %v7870
      %v7872 = vrot.slane %v7116, 4
      %v7873 = vsel %vm7388, %v7870, %v7872
      %v7874 = vrot.slane %v7117, 4
      %v7875 = vsel %vm7388, %v7872, %v7874
      %v7876 = vrot.slane %v7118, 4
      %v7877 = vsel %vm7388, %v7874, %v7876
      %v7878 = vrot.slane %v7119, 4
      %v7879 = vsel %vm7388, %v7876, %v7878
      %v7880 = vrot.slane %v7120, 4
      %v7881 = vsel %vm7388, %v7878, %v7880
      %v7882 = vrot.slane %v7121, 4
      %v7883 = vsel %vm7388, %v7880, %v7882
      %v7884 = vrot.slane %v7122, 4
      %v7885 = vsel %vm7388, %v7882, %v7884
      %v7886 = vrot.slane %v7123, 4
      %v7887 = vsel %vm7388, %v7884, %v7886
      %v7888 = vrot.slane %v7124, 4
      %v7889 = vsel %vm7388, %v7886, %v7888
      %v7890 = vrot.slane %v7125, 4
      %v7891 = vsel %vm7388, %v7888, %v7890
      %v7892 = vrot.slane %v7126, 4
      %v7893 = vsel %vm7388, %v7890, %v7892
      %v7894 = vrot.slane %v7127, 4
      %v7895 = vsel %vm7388, %v7892, %v7894
      %v7896 = vrot.slane %v7128, 4
      %v7897 = vsel %vm7388, %v7894, %v7896
      %v7898 = vrot.slane %v7129, 4
      %v7899 = vsel %vm7388, %v7896, %v7898
      %v7900 = vrot.slane %v7130, 4
      %v7901 = vsel %vm7388, %v7898, %v7900
      %v8158 = vadd.f32 %v6614, %v7391
      %v8159 = vadd.f32 %v6615, %v7393
      %v8160 = vadd.f32 %v6616, %v7395
      %v8161 = vadd.f32 %v6617, %v7397
      %v8162 = vadd.f32 %v6618, %v7399
      %v8163 = vadd.f32 %v6619, %v7401
      %v8164 = vadd.f32 %v6620, %v7403
      %v8165 = vadd.f32 %v6621, %v7405
      %v8166 = vadd.f32 %v6622, %v7407
      %v8167 = vadd.f32 %v6623, %v7409
      %v8168 = vadd.f32 %v6624, %v7411
      %v8169 = vadd.f32 %v6625, %v7413
      %v8170 = vadd.f32 %v6626, %v7415
      %v8171 = vadd.f32 %v6627, %v7417
      %v8172 = vadd.f32 %v6628, %v7419
      %v8173 = vadd.f32 %v6629, %v7421
      %v8174 = vadd.f32 %v6630, %v7423
      %v8175 = vadd.f32 %v6631, %v7425
      %v8176 = vadd.f32 %v6632, %v7427
      %v8177 = vadd.f32 %v6633, %v7429
      %v8178 = vadd.f32 %v6634, %v7431
      %v8179 = vadd.f32 %v6635, %v7433
      %v8180 = vadd.f32 %v6636, %v7435
      %v8181 = vadd.f32 %v6637, %v7437
      %v8182 = vadd.f32 %v6638, %v7439
      %v8183 = vadd.f32 %v6639, %v7441
      %v8184 = vadd.f32 %v6640, %v7443
      %v8185 = vadd.f32 %v6641, %v7445
      %v8186 = vadd.f32 %v6642, %v7447
      %v8187 = vadd.f32 %v6643, %v7449
      %v8188 = vadd.f32 %v6644, %v7451
      %v8189 = vadd.f32 %v6645, %v7453
      %v8190 = vadd.f32 %v6646, %v7455
      %v8191 = vadd.f32 %v6647, %v7457
      %v8192 = vadd.f32 %v6648, %v7459
      %v8193 = vadd.f32 %v6649, %v7461
      %v8194 = vadd.f32 %v6650, %v7463
      %v8195 = vadd.f32 %v6651, %v7465
      %v8196 = vadd.f32 %v6652, %v7467
      %v8197 = vadd.f32 %v6653, %v7469
      %v8198 = vadd.f32 %v6654, %v7471
      %v8199 = vadd.f32 %v6655, %v7473
      %v8200 = vadd.f32 %v6656, %v7475
      %v8201 = vadd.f32 %v6657, %v7477
      %v8202 = vadd.f32 %v6658, %v7479
      %v8203 = vadd.f32 %v6659, %v7481
      %v8204 = vadd.f32 %v6660, %v7483
      %v8205 = vadd.f32 %v6661, %v7485
      %v8206 = vadd.f32 %v6662, %v7487
      %v8207 = vadd.f32 %v6663, %v7489
      %v8208 = vadd.f32 %v6664, %v7491
      %v8209 = vadd.f32 %v6665, %v7493
      %v8210 = vadd.f32 %v6666, %v7495
      %v8211 = vadd.f32 %v6667, %v7497
      %v8212 = vadd.f32 %v6668, %v7499
      %v8213 = vadd.f32 %v6669, %v7501
      %v8214 = vadd.f32 %v6670, %v7503
      %v8215 = vadd.f32 %v6671, %v7505
      %v8216 = vadd.f32 %v6672, %v7507
      %v8217 = vadd.f32 %v6673, %v7509
      %v8218 = vadd.f32 %v6674, %v7511
      %v8219 = vadd.f32 %v6675, %v7513
      %v8220 = vadd.f32 %v6676, %v7515
      %v8221 = vadd.f32 %v6677, %v7517
      %v8222 = vadd.f32 %v6678, %v7519
      %v8223 = vadd.f32 %v6679, %v7521
      %v8224 = vadd.f32 %v6680, %v7523
      %v8225 = vadd.f32 %v6681, %v7525
      %v8226 = vadd.f32 %v6682, %v7527
      %v8227 = vadd.f32 %v6683, %v7529
      %v8228 = vadd.f32 %v6684, %v7531
      %v8229 = vadd.f32 %v6685, %v7533
      %v8230 = vadd.f32 %v6686, %v7535
      %v8231 = vadd.f32 %v6687, %v7537
      %v8232 = vadd.f32 %v6688, %v7539
      %v8233 = vadd.f32 %v6689, %v7541
      %v8234 = vadd.f32 %v6690, %v7543
      %v8235 = vadd.f32 %v6691, %v7545
      %v8236 = vadd.f32 %v6692, %v7547
      %v8237 = vadd.f32 %v6693, %v7549
      %v8238 = vadd.f32 %v6694, %v7551
      %v8239 = vadd.f32 %v6695, %v7553
      %v8240 = vadd.f32 %v6696, %v7555
      %v8241 = vadd.f32 %v6697, %v7557
      %v8242 = vadd.f32 %v6698, %v7559
      %v8243 = vadd.f32 %v6699, %v7561
      %v8244 = vadd.f32 %v6700, %v7563
      %v8245 = vadd.f32 %v6701, %v7565
      %v8246 = vadd.f32 %v6702, %v7567
      %v8247 = vadd.f32 %v6703, %v7569
      %v8248 = vadd.f32 %v6704, %v7571
      %v8249 = vadd.f32 %v6705, %v7573
      %v8250 = vadd.f32 %v6706, %v7575
      %v8251 = vadd.f32 %v6707, %v7577
      %v8252 = vadd.f32 %v6708, %v7579
      %v8253 = vadd.f32 %v6709, %v7581
      %v8254 = vadd.f32 %v6710, %v7583
      %v8255 = vadd.f32 %v6711, %v7585
      %v8256 = vadd.f32 %v6712, %v7587
      %v8257 = vadd.f32 %v6713, %v7589
      %v8258 = vadd.f32 %v6714, %v7591
      %v8259 = vadd.f32 %v6715, %v7593
      %v8260 = vadd.f32 %v6716, %v7595
      %v8261 = vadd.f32 %v6717, %v7597
      %v8262 = vadd.f32 %v6718, %v7599
      %v8263 = vadd.f32 %v6719, %v7601
      %v8264 = vadd.f32 %v6720, %v7603
      %v8265 = vadd.f32 %v6721, %v7605
      %v8266 = vadd.f32 %v6722, %v7607
      %v8267 = vadd.f32 %v6723, %v7609
      %v8268 = vadd.f32 %v6724, %v7611
      %v8269 = vadd.f32 %v6725, %v7613
      %v8270 = vadd.f32 %v6726, %v7615
      %v8271 = vadd.f32 %v6727, %v7617
      %v8272 = vadd.f32 %v6728, %v7619
      %v8273 = vadd.f32 %v6729, %v7621
      %v8274 = vadd.f32 %v6730, %v7623
      %v8275 = vadd.f32 %v6731, %v7625
      %v8276 = vadd.f32 %v6732, %v7627
      %v8277 = vadd.f32 %v6733, %v7629
      %v8278 = vadd.f32 %v6734, %v7631
      %v8279 = vadd.f32 %v6735, %v7633
      %v8280 = vadd.f32 %v6736, %v7635
      %v8281 = vadd.f32 %v6737, %v7637
      %v8282 = vadd.f32 %v6738, %v7639
      %v8283 = vadd.f32 %v6739, %v7641
      %v8284 = vadd.f32 %v6740, %v7643
      %v8285 = vadd.f32 %v6741, %v7645
      %v8286 = vadd.f32 %v6742, %v7647
      %v8287 = vadd.f32 %v6743, %v7649
      %v8288 = vadd.f32 %v6744, %v7651
      %v8289 = vadd.f32 %v6745, %v7653
      %v8290 = vadd.f32 %v6746, %v7655
      %v8291 = vadd.f32 %v6747, %v7657
      %v8292 = vadd.f32 %v6748, %v7659
      %v8293 = vadd.f32 %v6749, %v7661
      %v8294 = vadd.f32 %v6750, %v7663
      %v8295 = vadd.f32 %v6751, %v7665
      %v8296 = vadd.f32 %v6752, %v7667
      %v8297 = vadd.f32 %v6753, %v7669
      %v8298 = vadd.f32 %v6754, %v7671
      %v8299 = vadd.f32 %v6755, %v7673
      %v8300 = vadd.f32 %v6756, %v7675
      %v8301 = vadd.f32 %v6757, %v7677
      %v8302 = vadd.f32 %v6758, %v7679
      %v8303 = vadd.f32 %v6759, %v7681
      %v8304 = vadd.f32 %v6760, %v7683
      %v8305 = vadd.f32 %v6761, %v7685
      %v8306 = vadd.f32 %v6762, %v7687
      %v8307 = vadd.f32 %v6763, %v7689
      %v8308 = vadd.f32 %v6764, %v7691
      %v8309 = vadd.f32 %v6765, %v7693
      %v8310 = vadd.f32 %v6766, %v7695
      %v8311 = vadd.f32 %v6767, %v7697
      %v8312 = vadd.f32 %v6768, %v7699
      %v8313 = vadd.f32 %v6769, %v7701
      %v8314 = vadd.f32 %v6770, %v7703
      %v8315 = vadd.f32 %v6771, %v7705
      %v8316 = vadd.f32 %v6772, %v7707
      %v8317 = vadd.f32 %v6773, %v7709
      %v8318 = vadd.f32 %v6774, %v7711
      %v8319 = vadd.f32 %v6775, %v7713
      %v8320 = vadd.f32 %v6776, %v7715
      %v8321 = vadd.f32 %v6777, %v7717
      %v8322 = vadd.f32 %v6778, %v7719
      %v8323 = vadd.f32 %v6779, %v7721
      %v8324 = vadd.f32 %v6780, %v7723
      %v8325 = vadd.f32 %v6781, %v7725
      %v8326 = vadd.f32 %v6782, %v7727
      %v8327 = vadd.f32 %v6783, %v7729
      %v8328 = vadd.f32 %v6784, %v7731
      %v8329 = vadd.f32 %v6785, %v7733
      %v8330 = vadd.f32 %v6786, %v7735
      %v8331 = vadd.f32 %v6787, %v7737
      %v8332 = vadd.f32 %v6788, %v7739
      %v8333 = vadd.f32 %v6789, %v7741
      %v8334 = vadd.f32 %v6790, %v7743
      %v8335 = vadd.f32 %v6791, %v7745
      %v8336 = vadd.f32 %v6792, %v7747
      %v8337 = vadd.f32 %v6793, %v7749
      %v8338 = vadd.f32 %v6794, %v7751
      %v8339 = vadd.f32 %v6795, %v7753
      %v8340 = vadd.f32 %v6796, %v7755
      %v8341 = vadd.f32 %v6797, %v7757
      %v8342 = vadd.f32 %v6798, %v7759
      %v8343 = vadd.f32 %v6799, %v7761
      %v8344 = vadd.f32 %v6800, %v7763
      %v8345 = vadd.f32 %v6801, %v7765
      %v8346 = vadd.f32 %v6802, %v7767
      %v8347 = vadd.f32 %v6803, %v7769
      %v8348 = vadd.f32 %v6804, %v7771
      %v8349 = vadd.f32 %v6805, %v7773
      %v8350 = vadd.f32 %v6806, %v7775
      %v8351 = vadd.f32 %v6807, %v7777
      %v8352 = vadd.f32 %v6808, %v7779
      %v8353 = vadd.f32 %v6809, %v7781
      %v8354 = vadd.f32 %v6810, %v7783
      %v8355 = vadd.f32 %v6811, %v7785
      %v8356 = vadd.f32 %v6812, %v7787
      %v8357 = vadd.f32 %v6813, %v7789
      %v8358 = vadd.f32 %v6814, %v7791
      %v8359 = vadd.f32 %v6815, %v7793
      %v8360 = vadd.f32 %v6816, %v7795
      %v8361 = vadd.f32 %v6817, %v7797
      %v8362 = vadd.f32 %v6818, %v7799
      %v8363 = vadd.f32 %v6819, %v7801
      %v8364 = vadd.f32 %v6820, %v7803
      %v8365 = vadd.f32 %v6821, %v7805
      %v8366 = vadd.f32 %v6822, %v7807
      %v8367 = vadd.f32 %v6823, %v7809
      %v8368 = vadd.f32 %v6824, %v7811
      %v8369 = vadd.f32 %v6825, %v7813
      %v8370 = vadd.f32 %v6826, %v7815
      %v8371 = vadd.f32 %v6827, %v7817
      %v8372 = vadd.f32 %v6828, %v7819
      %v8373 = vadd.f32 %v6829, %v7821
      %v8374 = vadd.f32 %v6830, %v7823
      %v8375 = vadd.f32 %v6831, %v7825
      %v8376 = vadd.f32 %v6832, %v7827
      %v8377 = vadd.f32 %v6833, %v7829
      %v8378 = vadd.f32 %v6834, %v7831
      %v8379 = vadd.f32 %v6835, %v7833
      %v8380 = vadd.f32 %v6836, %v7835
      %v8381 = vadd.f32 %v6837, %v7837
      %v8382 = vadd.f32 %v6838, %v7839
      %v8383 = vadd.f32 %v6839, %v7841
      %v8384 = vadd.f32 %v6840, %v7843
      %v8385 = vadd.f32 %v6841, %v7845
      %v8386 = vadd.f32 %v6842, %v7847
      %v8387 = vadd.f32 %v6843, %v7849
      %v8388 = vadd.f32 %v6844, %v7851
      %v8389 = vadd.f32 %v6845, %v7853
      %v8390 = vadd.f32 %v6846, %v7855
      %v8391 = vadd.f32 %v6847, %v7857
      %v8392 = vadd.f32 %v6848, %v7859
      %v8393 = vadd.f32 %v6849, %v7861
      %v8394 = vadd.f32 %v6850, %v7863
      %v8395 = vadd.f32 %v6851, %v7865
      %v8396 = vadd.f32 %v6852, %v7867
      %v8397 = vadd.f32 %v6853, %v7869
      %v8398 = vadd.f32 %v6854, %v7871
      %v8399 = vadd.f32 %v6855, %v7873
      %v8400 = vadd.f32 %v6856, %v7875
      %v8401 = vadd.f32 %v6857, %v7877
      %v8402 = vadd.f32 %v6858, %v7879
      %v8403 = vadd.f32 %v6859, %v7881
      %v8404 = vadd.f32 %v6860, %v7883
      %v8405 = vadd.f32 %v6861, %v7885
      %v8406 = vadd.f32 %v6862, %v7887
      %v8407 = vadd.f32 %v6863, %v7889
      %v8408 = vadd.f32 %v6864, %v7891
      %v8409 = vadd.f32 %v6865, %v7893
      %v8410 = vadd.f32 %v6866, %v7895
      %v8411 = vadd.f32 %v6867, %v7897
      %v8412 = vadd.f32 %v6868, %v7899
      %v8413 = vadd.f32 %v6869, %v7901
      %v8414 = vlaneseq
      %v8415 = vshrl.u32 %v8414, 7
      %v8416 = vsub.s32 5, %v8415
      %v8417 = vrot.slane %v430, %v8416
      %v8418 = vmul.f32 %v440, %v8417
      %v8419 = vmul.f32 %v445, %v8417
      %v8420 = vmul.f32 %v450, %v8417
      %v8421 = vmul.f32 %v455, %v8417
      %v8422 = vmul.f32 %v460, %v8417
      %v8423 = vmul.f32 %v465, %v8417
      %v8424 = vmul.f32 %v470, %v8417
      %v8425 = vmul.f32 %v475, %v8417
      %v8426 = vmul.f32 %v480, %v8417
      %v8427 = vmul.f32 %v485, %v8417
      %v8428 = vmul.f32 %v490, %v8417
      %v8429 = vmul.f32 %v495, %v8417
      %v8430 = vmul.f32 %v500, %v8417
      %v8431 = vmul.f32 %v505, %v8417
      %v8432 = vmul.f32 %v510, %v8417
      %v8433 = vmul.f32 %v515, %v8417
      %v8434 = vmul.f32 %v520, %v8417
      %v8435 = vmul.f32 %v525, %v8417
      %v8436 = vmul.f32 %v530, %v8417
      %v8437 = vmul.f32 %v535, %v8417
      %v8438 = vmul.f32 %v540, %v8417
      %v8439 = vmul.f32 %v545, %v8417
      %v8440 = vmul.f32 %v550, %v8417
      %v8441 = vmul.f32 %v555, %v8417
      %v8442 = vmul.f32 %v560, %v8417
      %v8443 = vmul.f32 %v565, %v8417
      %v8444 = vmul.f32 %v570, %v8417
      %v8445 = vmul.f32 %v575, %v8417
      %v8446 = vmul.f32 %v580, %v8417
      %v8447 = vmul.f32 %v585, %v8417
      %v8448 = vmul.f32 %v590, %v8417
      %v8449 = vmul.f32 %v595, %v8417
      %v8450 = vmul.f32 %v600, %v8417
      %v8451 = vmul.f32 %v605, %v8417
      %v8452 = vmul.f32 %v610, %v8417
      %v8453 = vmul.f32 %v615, %v8417
      %v8454 = vmul.f32 %v620, %v8417
      %v8455 = vmul.f32 %v625, %v8417
      %v8456 = vmul.f32 %v630, %v8417
      %v8457 = vmul.f32 %v635, %v8417
      %v8458 = vmul.f32 %v640, %v8417
      %v8459 = vmul.f32 %v645, %v8417
      %v8460 = vmul.f32 %v650, %v8417
      %v8461 = vmul.f32 %v655, %v8417
      %v8462 = vmul.f32 %v660, %v8417
      %v8463 = vmul.f32 %v665, %v8417
      %v8464 = vmul.f32 %v670, %v8417
      %v8465 = vmul.f32 %v675, %v8417
      %v8466 = vmul.f32 %v680, %v8417
      %v8467 = vmul.f32 %v685, %v8417
      %v8468 = vmul.f32 %v690, %v8417
      %v8469 = vmul.f32 %v695, %v8417
      %v8470 = vmul.f32 %v700, %v8417
      %v8471 = vmul.f32 %v705, %v8417
      %v8472 = vmul.f32 %v710, %v8417
      %v8473 = vmul.f32 %v715, %v8417
      %v8474 = vmul.f32 %v720, %v8417
      %v8475 = vmul.f32 %v725, %v8417
      %v8476 = vmul.f32 %v730, %v8417
      %v8477 = vmul.f32 %v735, %v8417
      %v8478 = vmul.f32 %v740, %v8417
      %v8479 = vmul.f32 %v745, %v8417
      %v8480 = vmul.f32 %v750, %v8417
      %v8481 = vmul.f32 %v755, %v8417
      %v8482 = vmul.f32 %v760, %v8417
      %v8483 = vmul.f32 %v765, %v8417
      %v8484 = vmul.f32 %v770, %v8417
      %v8485 = vmul.f32 %v775, %v8417
      %v8486 = vmul.f32 %v780, %v8417
      %v8487 = vmul.f32 %v785, %v8417
      %v8488 = vmul.f32 %v790, %v8417
      %v8489 = vmul.f32 %v795, %v8417
      %v8490 = vmul.f32 %v800, %v8417
      %v8491 = vmul.f32 %v805, %v8417
      %v8492 = vmul.f32 %v810, %v8417
      %v8493 = vmul.f32 %v815, %v8417
      %v8494 = vmul.f32 %v820, %v8417
      %v8495 = vmul.f32 %v825, %v8417
      %v8496 = vmul.f32 %v830, %v8417
      %v8497 = vmul.f32 %v835, %v8417
      %v8498 = vmul.f32 %v840, %v8417
      %v8499 = vmul.f32 %v845, %v8417
      %v8500 = vmul.f32 %v850, %v8417
      %v8501 = vmul.f32 %v855, %v8417
      %v8502 = vmul.f32 %v860, %v8417
      %v8503 = vmul.f32 %v865, %v8417
      %v8504 = vmul.f32 %v870, %v8417
      %v8505 = vmul.f32 %v875, %v8417
      %v8506 = vmul.f32 %v880, %v8417
      %v8507 = vmul.f32 %v885, %v8417
      %v8508 = vmul.f32 %v890, %v8417
      %v8509 = vmul.f32 %v895, %v8417
      %v8510 = vmul.f32 %v900, %v8417
      %v8511 = vmul.f32 %v905, %v8417
      %v8512 = vmul.f32 %v910, %v8417
      %v8513 = vmul.f32 %v915, %v8417
      %v8514 = vmul.f32 %v920, %v8417
      %v8515 = vmul.f32 %v925, %v8417
      %v8516 = vmul.f32 %v930, %v8417
      %v8517 = vmul.f32 %v935, %v8417
      %v8518 = vmul.f32 %v940, %v8417
      %v8519 = vmul.f32 %v945, %v8417
      %v8520 = vmul.f32 %v950, %v8417
      %v8521 = vmul.f32 %v955, %v8417
      %v8522 = vmul.f32 %v960, %v8417
      %v8523 = vmul.f32 %v965, %v8417
      %v8524 = vmul.f32 %v970, %v8417
      %v8525 = vmul.f32 %v975, %v8417
      %v8526 = vmul.f32 %v980, %v8417
      %v8527 = vmul.f32 %v985, %v8417
      %v8528 = vmul.f32 %v990, %v8417
      %v8529 = vmul.f32 %v995, %v8417
      %v8530 = vmul.f32 %v1000, %v8417
      %v8531 = vmul.f32 %v1005, %v8417
      %v8532 = vmul.f32 %v1010, %v8417
      %v8533 = vmul.f32 %v1015, %v8417
      %v8534 = vmul.f32 %v1020, %v8417
      %v8535 = vmul.f32 %v1025, %v8417
      %v8536 = vmul.f32 %v1030, %v8417
      %v8537 = vmul.f32 %v1035, %v8417
      %v8538 = vmul.f32 %v1040, %v8417
      %v8539 = vmul.f32 %v1045, %v8417
      %v8540 = vmul.f32 %v1050, %v8417
      %v8541 = vmul.f32 %v1055, %v8417
      %v8542 = vmul.f32 %v1060, %v8417
      %v8543 = vmul.f32 %v1065, %v8417
      %v8544 = vmul.f32 %v1070, %v8417
      %v8545 = vmul.f32 %v1075, %v8417
      %v8546 = vmul.f32 %v1080, %v8417
      %v8547 = vmul.f32 %v1085, %v8417
      %v8548 = vmul.f32 %v1090, %v8417
      %v8549 = vmul.f32 %v1095, %v8417
      %v8550 = vmul.f32 %v1100, %v8417
      %v8551 = vmul.f32 %v1105, %v8417
      %v8552 = vmul.f32 %v1110, %v8417
      %v8553 = vmul.f32 %v1115, %v8417
      %v8554 = vmul.f32 %v1120, %v8417
      %v8555 = vmul.f32 %v1125, %v8417
      %v8556 = vmul.f32 %v1130, %v8417
      %v8557 = vmul.f32 %v1135, %v8417
      %v8558 = vmul.f32 %v1140, %v8417
      %v8559 = vmul.f32 %v1145, %v8417
      %v8560 = vmul.f32 %v1150, %v8417
      %v8561 = vmul.f32 %v1155, %v8417
      %v8562 = vmul.f32 %v1160, %v8417
      %v8563 = vmul.f32 %v1165, %v8417
      %v8564 = vmul.f32 %v1170, %v8417
      %v8565 = vmul.f32 %v1175, %v8417
      %v8566 = vmul.f32 %v1180, %v8417
      %v8567 = vmul.f32 %v1185, %v8417
      %v8568 = vmul.f32 %v1190, %v8417
      %v8569 = vmul.f32 %v1195, %v8417
      %v8570 = vmul.f32 %v1200, %v8417
      %v8571 = vmul.f32 %v1205, %v8417
      %v8572 = vmul.f32 %v1210, %v8417
      %v8573 = vmul.f32 %v1215, %v8417
      %v8574 = vmul.f32 %v1220, %v8417
      %v8575 = vmul.f32 %v1225, %v8417
      %v8576 = vmul.f32 %v1230, %v8417
      %v8577 = vmul.f32 %v1235, %v8417
      %v8578 = vmul.f32 %v1240, %v8417
      %v8579 = vmul.f32 %v1245, %v8417
      %v8580 = vmul.f32 %v1250, %v8417
      %v8581 = vmul.f32 %v1255, %v8417
      %v8582 = vmul.f32 %v1260, %v8417
      %v8583 = vmul.f32 %v1265, %v8417
      %v8584 = vmul.f32 %v1270, %v8417
      %v8585 = vmul.f32 %v1275, %v8417
      %v8586 = vmul.f32 %v1280, %v8417
      %v8587 = vmul.f32 %v1285, %v8417
      %v8588 = vmul.f32 %v1290, %v8417
      %v8589 = vmul.f32 %v1295, %v8417
      %v8590 = vmul.f32 %v1300, %v8417
      %v8591 = vmul.f32 %v1305, %v8417
      %v8592 = vmul.f32 %v1310, %v8417
      %v8593 = vmul.f32 %v1315, %v8417
      %v8594 = vmul.f32 %v1320, %v8417
      %v8595 = vmul.f32 %v1325, %v8417
      %v8596 = vmul.f32 %v1330, %v8417
      %v8597 = vmul.f32 %v1335, %v8417
      %v8598 = vmul.f32 %v1340, %v8417
      %v8599 = vmul.f32 %v1345, %v8417
      %v8600 = vmul.f32 %v1350, %v8417
      %v8601 = vmul.f32 %v1355, %v8417
      %v8602 = vmul.f32 %v1360, %v8417
      %v8603 = vmul.f32 %v1365, %v8417
      %v8604 = vmul.f32 %v1370, %v8417
      %v8605 = vmul.f32 %v1375, %v8417
      %v8606 = vmul.f32 %v1380, %v8417
      %v8607 = vmul.f32 %v1385, %v8417
      %v8608 = vmul.f32 %v1390, %v8417
      %v8609 = vmul.f32 %v1395, %v8417
      %v8610 = vmul.f32 %v1400, %v8417
      %v8611 = vmul.f32 %v1405, %v8417
      %v8612 = vmul.f32 %v1410, %v8417
      %v8613 = vmul.f32 %v1415, %v8417
      %v8614 = vmul.f32 %v1420, %v8417
      %v8615 = vmul.f32 %v1425, %v8417
      %v8616 = vmul.f32 %v1430, %v8417
      %v8617 = vmul.f32 %v1435, %v8417
      %v8618 = vmul.f32 %v1440, %v8417
      %v8619 = vmul.f32 %v1445, %v8417
      %v8620 = vmul.f32 %v1450, %v8417
      %v8621 = vmul.f32 %v1455, %v8417
      %v8622 = vmul.f32 %v1460, %v8417
      %v8623 = vmul.f32 %v1465, %v8417
      %v8624 = vmul.f32 %v1470, %v8417
      %v8625 = vmul.f32 %v1475, %v8417
      %v8626 = vmul.f32 %v1480, %v8417
      %v8627 = vmul.f32 %v1485, %v8417
      %v8628 = vmul.f32 %v1490, %v8417
      %v8629 = vmul.f32 %v1495, %v8417
      %v8630 = vmul.f32 %v1500, %v8417
      %v8631 = vmul.f32 %v1505, %v8417
      %v8632 = vmul.f32 %v1510, %v8417
      %v8633 = vmul.f32 %v1515, %v8417
      %v8634 = vmul.f32 %v1520, %v8417
      %v8635 = vmul.f32 %v1525, %v8417
      %v8636 = vmul.f32 %v1530, %v8417
      %v8637 = vmul.f32 %v1535, %v8417
      %v8638 = vmul.f32 %v1540, %v8417
      %v8639 = vmul.f32 %v1545, %v8417
      %v8640 = vmul.f32 %v1550, %v8417
      %v8641 = vmul.f32 %v1555, %v8417
      %v8642 = vmul.f32 %v1560, %v8417
      %v8643 = vmul.f32 %v1565, %v8417
      %v8644 = vmul.f32 %v1570, %v8417
      %v8645 = vmul.f32 %v1575, %v8417
      %v8646 = vmul.f32 %v1580, %v8417
      %v8647 = vmul.f32 %v1585, %v8417
      %v8648 = vmul.f32 %v1590, %v8417
      %v8649 = vmul.f32 %v1595, %v8417
      %v8650 = vmul.f32 %v1600, %v8417
      %v8651 = vmul.f32 %v1605, %v8417
      %v8652 = vmul.f32 %v1610, %v8417
      %v8653 = vmul.f32 %v1615, %v8417
      %v8654 = vmul.f32 %v1620, %v8417
      %v8655 = vmul.f32 %v1625, %v8417
      %v8656 = vmul.f32 %v1630, %v8417
      %v8657 = vmul.f32 %v1635, %v8417
      %v8658 = vmul.f32 %v1640, %v8417
      %v8659 = vmul.f32 %v1645, %v8417
      %v8660 = vmul.f32 %v1650, %v8417
      %v8661 = vmul.f32 %v1655, %v8417
      %v8662 = vmul.f32 %v1660, %v8417
      %v8663 = vmul.f32 %v1665, %v8417
      %v8664 = vmul.f32 %v1670, %v8417
      %v8665 = vmul.f32 %v1675, %v8417
      %v8666 = vmul.f32 %v1680, %v8417
      %v8667 = vmul.f32 %v1685, %v8417
      %v8668 = vmul.f32 %v1690, %v8417
      %v8669 = vmul.f32 %v1695, %v8417
      %v8670 = vmul.f32 %v1700, %v8417
      %v8671 = vmul.f32 %v1705, %v8417
      %v8672 = vmul.f32 %v1710, %v8417
      %v8673 = vmul.f32 %v1715, %v8417
      %v8674 = vmul.f32 %v2236, %v8417
      %vm8932 = vcmask 1042432
      %v8933 = vrot.slane %v8418, 5
      %v8934 = vrot.slane %v8419, 5
      %v8935 = vsel %vm8932, %v8933, %v8934
      %v8936 = vrot.slane %v8420, 5
      %v8937 = vsel %vm8932, %v8934, %v8936
      %v8938 = vrot.slane %v8421, 5
      %v8939 = vsel %vm8932, %v8936, %v8938
      %v8940 = vrot.slane %v8422, 5
      %v8941 = vsel %vm8932, %v8938, %v8940
      %v8942 = vrot.slane %v8423, 5
      %v8943 = vsel %vm8932, %v8940, %v8942
      %v8944 = vrot.slane %v8424, 5
      %v8945 = vsel %vm8932, %v8942, %v8944
      %v8946 = vrot.slane %v8425, 5
      %v8947 = vsel %vm8932, %v8944, %v8946
      %v8948 = vrot.slane %v8426, 5
      %v8949 = vsel %vm8932, %v8946, %v8948
      %v8950 = vrot.slane %v8427, 5
      %v8951 = vsel %vm8932, %v8948, %v8950
      %v8952 = vrot.slane %v8428, 5
      %v8953 = vsel %vm8932, %v8950, %v8952
      %v8954 = vrot.slane %v8429, 5
      %v8955 = vsel %vm8932, %v8952, %v8954
      %v8956 = vrot.slane %v8430, 5
      %v8957 = vsel %vm8932, %v8954, %v8956
      %v8958 = vrot.slane %v8431, 5
      %v8959 = vsel %vm8932, %v8956, %v8958
      %v8960 = vrot.slane %v8432, 5
      %v8961 = vsel %vm8932, %v8958, %v8960
      %v8962 = vrot.slane %v8433, 5
      %v8963 = vsel %vm8932, %v8960, %v8962
      %v8964 = vrot.slane %v8434, 5
      %v8965 = vsel %vm8932, %v8962, %v8964
      %v8966 = vrot.slane %v8435, 5
      %v8967 = vsel %vm8932, %v8964, %v8966
      %v8968 = vrot.slane %v8436, 5
      %v8969 = vsel %vm8932, %v8966, %v8968
      %v8970 = vrot.slane %v8437, 5
      %v8971 = vsel %vm8932, %v8968, %v8970
      %v8972 = vrot.slane %v8438, 5
      %v8973 = vsel %vm8932, %v8970, %v8972
      %v8974 = vrot.slane %v8439, 5
      %v8975 = vsel %vm8932, %v8972, %v8974
      %v8976 = vrot.slane %v8440, 5
      %v8977 = vsel %vm8932, %v8974, %v8976
      %v8978 = vrot.slane %v8441, 5
      %v8979 = vsel %vm8932, %v8976, %v8978
      %v8980 = vrot.slane %v8442, 5
      %v8981 = vsel %vm8932, %v8978, %v8980
      %v8982 = vrot.slane %v8443, 5
      %v8983 = vsel %vm8932, %v8980, %v8982
      %v8984 = vrot.slane %v8444, 5
      %v8985 = vsel %vm8932, %v8982, %v8984
      %v8986 = vrot.slane %v8445, 5
      %v8987 = vsel %vm8932, %v8984, %v8986
      %v8988 = vrot.slane %v8446, 5
      %v8989 = vsel %vm8932, %v8986, %v8988
      %v8990 = vrot.slane %v8447, 5
      %v8991 = vsel %vm8932, %v8988, %v8990
      %v8992 = vrot.slane %v8448, 5
      %v8993 = vsel %vm8932, %v8990, %v8992
      %v8994 = vrot.slane %v8449, 5
      %v8995 = vsel %vm8932, %v8992, %v8994
      %v8996 = vrot.slane %v8450, 5
      %v8997 = vsel %vm8932, %v8994, %v8996
      %v8998 = vrot.slane %v8451, 5
      %v8999 = vsel %vm8932, %v8996, %v8998
      %v9000 = vrot.slane %v8452, 5
      %v9001 = vsel %vm8932, %v8998, %v9000
      %v9002 = vrot.slane %v8453, 5
      %v9003 = vsel %vm8932, %v9000, %v9002
      %v9004 = vrot.slane %v8454, 5
      %v9005 = vsel %vm8932, %v9002, %v9004
      %v9006 = vrot.slane %v8455, 5
      %v9007 = vsel %vm8932, %v9004, %v9006
      %v9008 = vrot.slane %v8456, 5
      %v9009 = vsel %vm8932, %v9006, %v9008
      %v9010 = vrot.slane %v8457, 5
      %v9011 = vsel %vm8932, %v9008, %v9010
      %v9012 = vrot.slane %v8458, 5
      %v9013 = vsel %vm8932, %v9010, %v9012
      %v9014 = vrot.slane %v8459, 5
      %v9015 = vsel %vm8932, %v9012, %v9014
      %v9016 = vrot.slane %v8460, 5
      %v9017 = vsel %vm8932, %v9014, %v9016
      %v9018 = vrot.slane %v8461, 5
      %v9019 = vsel %vm8932, %v9016, %v9018
      %v9020 = vrot.slane %v8462, 5
      %v9021 = vsel %vm8932, %v9018, %v9020
      %v9022 = vrot.slane %v8463, 5
      %v9023 = vsel %vm8932, %v9020, %v9022
      %v9024 = vrot.slane %v8464, 5
      %v9025 = vsel %vm8932, %v9022, %v9024
      %v9026 = vrot.slane %v8465, 5
      %v9027 = vsel %vm8932, %v9024, %v9026
      %v9028 = vrot.slane %v8466, 5
      %v9029 = vsel %vm8932, %v9026, %v9028
      %v9030 = vrot.slane %v8467, 5
      %v9031 = vsel %vm8932, %v9028, %v9030
      %v9032 = vrot.slane %v8468, 5
      %v9033 = vsel %vm8932, %v9030, %v9032
      %v9034 = vrot.slane %v8469, 5
      %v9035 = vsel %vm8932, %v9032, %v9034
      %v9036 = vrot.slane %v8470, 5
      %v9037 = vsel %vm8932, %v9034, %v9036
      %v9038 = vrot.slane %v8471, 5
      %v9039 = vsel %vm8932, %v9036, %v9038
      %v9040 = vrot.slane %v8472, 5
      %v9041 = vsel %vm8932, %v9038, %v9040
      %v9042 = vrot.slane %v8473, 5
      %v9043 = vsel %vm8932, %v9040, %v9042
      %v9044 = vrot.slane %v8474, 5
      %v9045 = vsel %vm8932, %v9042, %v9044
      %v9046 = vrot.slane %v8475, 5
      %v9047 = vsel %vm8932, %v9044, %v9046
      %v9048 = vrot.slane %v8476, 5
      %v9049 = vsel %vm8932, %v9046, %v9048
      %v9050 = vrot.slane %v8477, 5
      %v9051 = vsel %vm8932, %v9048, %v9050
      %v9052 = vrot.slane %v8478, 5
      %v9053 = vsel %vm8932, %v9050, %v9052
      %v9054 = vrot.slane %v8479, 5
      %v9055 = vsel %vm8932, %v9052, %v9054
      %v9056 = vrot.slane %v8480, 5
      %v9057 = vsel %vm8932, %v9054, %v9056
      %v9058 = vrot.slane %v8481, 5
      %v9059 = vsel %vm8932, %v9056, %v9058
      %v9060 = vrot.slane %v8482, 5
      %v9061 = vsel %vm8932, %v9058, %v9060
      %v9062 = vrot.slane %v8483, 5
      %v9063 = vsel %vm8932, %v9060, %v9062
      %v9064 = vrot.slane %v8484, 5
      %v9065 = vsel %vm8932, %v9062, %v9064
      %v9066 = vrot.slane %v8485, 5
      %v9067 = vsel %vm8932, %v9064, %v9066
      %v9068 = vrot.slane %v8486, 5
      %v9069 = vsel %vm8932, %v9066, %v9068
      %v9070 = vrot.slane %v8487, 5
      %v9071 = vsel %vm8932, %v9068, %v9070
      %v9072 = vrot.slane %v8488, 5
      %v9073 = vsel %vm8932, %v9070, %v9072
      %v9074 = vrot.slane %v8489, 5
      %v9075 = vsel %vm8932, %v9072, %v9074
      %v9076 = vrot.slane %v8490, 5
      %v9077 = vsel %vm8932, %v9074, %v9076
      %v9078 = vrot.slane %v8491, 5
      %v9079 = vsel %vm8932, %v9076, %v9078
      %v9080 = vrot.slane %v8492, 5
      %v9081 = vsel %vm8932, %v9078, %v9080
      %v9082 = vrot.slane %v8493, 5
      %v9083 = vsel %vm8932, %v9080, %v9082
      %v9084 = vrot.slane %v8494, 5
      %v9085 = vsel %vm8932, %v9082, %v9084
      %v9086 = vrot.slane %v8495, 5
      %v9087 = vsel %vm8932, %v9084, %v9086
      %v9088 = vrot.slane %v8496, 5
      %v9089 = vsel %vm8932, %v9086, %v9088
      %v9090 = vrot.slane %v8497, 5
      %v9091 = vsel %vm8932, %v9088, %v9090
      %v9092 = vrot.slane %v8498, 5
      %v9093 = vsel %vm8932, %v9090, %v9092
      %v9094 = vrot.slane %v8499, 5
      %v9095 = vsel %vm8932, %v9092, %v9094
      %v9096 = vrot.slane %v8500, 5
      %v9097 = vsel %vm8932, %v9094, %v9096
      %v9098 = vrot.slane %v8501, 5
      %v9099 = vsel %vm8932, %v9096, %v9098
      %v9100 = vrot.slane %v8502, 5
      %v9101 = vsel %vm8932, %v9098, %v9100
      %v9102 = vrot.slane %v8503, 5
      %v9103 = vsel %vm8932, %v9100, %v9102
      %v9104 = vrot.slane %v8504, 5
      %v9105 = vsel %vm8932, %v9102, %v9104
      %v9106 = vrot.slane %v8505, 5
      %v9107 = vsel %vm8932, %v9104, %v9106
      %v9108 = vrot.slane %v8506, 5
      %v9109 = vsel %vm8932, %v9106, %v9108
      %v9110 = vrot.slane %v8507, 5
      %v9111 = vsel %vm8932, %v9108, %v9110
      %v9112 = vrot.slane %v8508, 5
      %v9113 = vsel %vm8932, %v9110, %v9112
      %v9114 = vrot.slane %v8509, 5
      %v9115 = vsel %vm8932, %v9112, %v9114
      %v9116 = vrot.slane %v8510, 5
      %v9117 = vsel %vm8932, %v9114, %v9116
      %v9118 = vrot.slane %v8511, 5
      %v9119 = vsel %vm8932, %v9116, %v9118
      %v9120 = vrot.slane %v8512, 5
      %v9121 = vsel %vm8932, %v9118, %v9120
      %v9122 = vrot.slane %v8513, 5
      %v9123 = vsel %vm8932, %v9120, %v9122
      %v9124 = vrot.slane %v8514, 5
      %v9125 = vsel %vm8932, %v9122, %v9124
      %v9126 = vrot.slane %v8515, 5
      %v9127 = vsel %vm8932, %v9124, %v9126
      %v9128 = vrot.slane %v8516, 5
      %v9129 = vsel %vm8932, %v9126, %v9128
      %v9130 = vrot.slane %v8517, 5
      %v9131 = vsel %vm8932, %v9128, %v9130
      %v9132 = vrot.slane %v8518, 5
      %v9133 = vsel %vm8932, %v9130, %v9132
      %v9134 = vrot.slane %v8519, 5
      %v9135 = vsel %vm8932, %v9132, %v9134
      %v9136 = vrot.slane %v8520, 5
      %v9137 = vsel %vm8932, %v9134, %v9136
      %v9138 = vrot.slane %v8521, 5
      %v9139 = vsel %vm8932, %v9136, %v9138
      %v9140 = vrot.slane %v8522, 5
      %v9141 = vsel %vm8932, %v9138, %v9140
      %v9142 = vrot.slane %v8523, 5
      %v9143 = vsel %vm8932, %v9140, %v9142
      %v9144 = vrot.slane %v8524, 5
      %v9145 = vsel %vm8932, %v9142, %v9144
      %v9146 = vrot.slane %v8525, 5
      %v9147 = vsel %vm8932, %v9144, %v9146
      %v9148 = vrot.slane %v8526, 5
      %v9149 = vsel %vm8932, %v9146, %v9148
      %v9150 = vrot.slane %v8527, 5
      %v9151 = vsel %vm8932, %v9148, %v9150
      %v9152 = vrot.slane %v8528, 5
      %v9153 = vsel %vm8932, %v9150, %v9152
      %v9154 = vrot.slane %v8529, 5
      %v9155 = vsel %vm8932, %v9152, %v9154
      %v9156 = vrot.slane %v8530, 5
      %v9157 = vsel %vm8932, %v9154, %v9156
      %v9158 = vrot.slane %v8531, 5
      %v9159 = vsel %vm8932, %v9156, %v9158
      %v9160 = vrot.slane %v8532, 5
      %v9161 = vsel %vm8932, %v9158, %v9160
      %v9162 = vrot.slane %v8533, 5
      %v9163 = vsel %vm8932, %v9160, %v9162
      %v9164 = vrot.slane %v8534, 5
      %v9165 = vsel %vm8932, %v9162, %v9164
      %v9166 = vrot.slane %v8535, 5
      %v9167 = vsel %vm8932, %v9164, %v9166
      %v9168 = vrot.slane %v8536, 5
      %v9169 = vsel %vm8932, %v9166, %v9168
      %v9170 = vrot.slane %v8537, 5
      %v9171 = vsel %vm8932, %v9168, %v9170
      %v9172 = vrot.slane %v8538, 5
      %v9173 = vsel %vm8932, %v9170, %v9172
      %v9174 = vrot.slane %v8539, 5
      %v9175 = vsel %vm8932, %v9172, %v9174
      %v9176 = vrot.slane %v8540, 5
      %v9177 = vsel %vm8932, %v9174, %v9176
      %v9178 = vrot.slane %v8541, 5
      %v9179 = vsel %vm8932, %v9176, %v9178
      %v9180 = vrot.slane %v8542, 5
      %v9181 = vsel %vm8932, %v9178, %v9180
      %v9182 = vrot.slane %v8543, 5
      %v9183 = vsel %vm8932, %v9180, %v9182
      %v9184 = vrot.slane %v8544, 5
      %v9185 = vsel %vm8932, %v9182, %v9184
      %v9186 = vrot.slane %v8545, 5
      %v9187 = vsel %vm8932, %v9184, %v9186
      %v9188 = vrot.slane %v8546, 5
      %v9189 = vsel %vm8932, %v9186, %v9188
      %v9190 = vrot.slane %v8547, 5
      %v9191 = vsel %vm8932, %v9188, %v9190
      %v9192 = vrot.slane %v8548, 5
      %v9193 = vsel %vm8932, %v9190, %v9192
      %v9194 = vrot.slane %v8549, 5
      %v9195 = vsel %vm8932, %v9192, %v9194
      %v9196 = vrot.slane %v8550, 5
      %v9197 = vsel %vm8932, %v9194, %v9196
      %v9198 = vrot.slane %v8551, 5
      %v9199 = vsel %vm8932, %v9196, %v9198
      %v9200 = vrot.slane %v8552, 5
      %v9201 = vsel %vm8932, %v9198, %v9200
      %v9202 = vrot.slane %v8553, 5
      %v9203 = vsel %vm8932, %v9200, %v9202
      %v9204 = vrot.slane %v8554, 5
      %v9205 = vsel %vm8932, %v9202, %v9204
      %v9206 = vrot.slane %v8555, 5
      %v9207 = vsel %vm8932, %v9204, %v9206
      %v9208 = vrot.slane %v8556, 5
      %v9209 = vsel %vm8932, %v9206, %v9208
      %v9210 = vrot.slane %v8557, 5
      %v9211 = vsel %vm8932, %v9208, %v9210
      %v9212 = vrot.slane %v8558, 5
      %v9213 = vsel %vm8932, %v9210, %v9212
      %v9214 = vrot.slane %v8559, 5
      %v9215 = vsel %vm8932, %v9212, %v9214
      %v9216 = vrot.slane %v8560, 5
      %v9217 = vsel %vm8932, %v9214, %v9216
      %v9218 = vrot.slane %v8561, 5
      %v9219 = vsel %vm8932, %v9216, %v9218
      %v9220 = vrot.slane %v8562, 5
      %v9221 = vsel %vm8932, %v9218, %v9220
      %v9222 = vrot.slane %v8563, 5
      %v9223 = vsel %vm8932, %v9220, %v9222
      %v9224 = vrot.slane %v8564, 5
      %v9225 = vsel %vm8932, %v9222, %v9224
      %v9226 = vrot.slane %v8565, 5
      %v9227 = vsel %vm8932, %v9224, %v9226
      %v9228 = vrot.slane %v8566, 5
      %v9229 = vsel %vm8932, %v9226, %v9228
      %v9230 = vrot.slane %v8567, 5
      %v9231 = vsel %vm8932, %v9228, %v9230
      %v9232 = vrot.slane %v8568, 5
      %v9233 = vsel %vm8932, %v9230, %v9232
      %v9234 = vrot.slane %v8569, 5
      %v9235 = vsel %vm8932, %v9232, %v9234
      %v9236 = vrot.slane %v8570, 5
      %v9237 = vsel %vm8932, %v9234, %v9236
      %v9238 = vrot.slane %v8571, 5
      %v9239 = vsel %vm8932, %v9236, %v9238
      %v9240 = vrot.slane %v8572, 5
      %v9241 = vsel %vm8932, %v9238, %v9240
      %v9242 = vrot.slane %v8573, 5
      %v9243 = vsel %vm8932, %v9240, %v9242
      %v9244 = vrot.slane %v8574, 5
      %v9245 = vsel %vm8932, %v9242, %v9244
      %v9246 = vrot.slane %v8575, 5
      %v9247 = vsel %vm8932, %v9244, %v9246
      %v9248 = vrot.slane %v8576, 5
      %v9249 = vsel %vm8932, %v9246, %v9248
      %v9250 = vrot.slane %v8577, 5
      %v9251 = vsel %vm8932, %v9248, %v9250
      %v9252 = vrot.slane %v8578, 5
      %v9253 = vsel %vm8932, %v9250, %v9252
      %v9254 = vrot.slane %v8579, 5
      %v9255 = vsel %vm8932, %v9252, %v9254
      %v9256 = vrot.slane %v8580, 5
      %v9257 = vsel %vm8932, %v9254, %v9256
      %v9258 = vrot.slane %v8581, 5
      %v9259 = vsel %vm8932, %v9256, %v9258
      %v9260 = vrot.slane %v8582, 5
      %v9261 = vsel %vm8932, %v9258, %v9260
      %v9262 = vrot.slane %v8583, 5
      %v9263 = vsel %vm8932, %v9260, %v9262
      %v9264 = vrot.slane %v8584, 5
      %v9265 = vsel %vm8932, %v9262, %v9264
      %v9266 = vrot.slane %v8585, 5
      %v9267 = vsel %vm8932, %v9264, %v9266
      %v9268 = vrot.slane %v8586, 5
      %v9269 = vsel %vm8932, %v9266, %v9268
      %v9270 = vrot.slane %v8587, 5
      %v9271 = vsel %vm8932, %v9268, %v9270
      %v9272 = vrot.slane %v8588, 5
      %v9273 = vsel %vm8932, %v9270, %v9272
      %v9274 = vrot.slane %v8589, 5
      %v9275 = vsel %vm8932, %v9272, %v9274
      %v9276 = vrot.slane %v8590, 5
      %v9277 = vsel %vm8932, %v9274, %v9276
      %v9278 = vrot.slane %v8591, 5
      %v9279 = vsel %vm8932, %v9276, %v9278
      %v9280 = vrot.slane %v8592, 5
      %v9281 = vsel %vm8932, %v9278, %v9280
      %v9282 = vrot.slane %v8593, 5
      %v9283 = vsel %vm8932, %v9280, %v9282
      %v9284 = vrot.slane %v8594, 5
      %v9285 = vsel %vm8932, %v9282, %v9284
      %v9286 = vrot.slane %v8595, 5
      %v9287 = vsel %vm8932, %v9284, %v9286
      %v9288 = vrot.slane %v8596, 5
      %v9289 = vsel %vm8932, %v9286, %v9288
      %v9290 = vrot.slane %v8597, 5
      %v9291 = vsel %vm8932, %v9288, %v9290
      %v9292 = vrot.slane %v8598, 5
      %v9293 = vsel %vm8932, %v9290, %v9292
      %v9294 = vrot.slane %v8599, 5
      %v9295 = vsel %vm8932, %v9292, %v9294
      %v9296 = vrot.slane %v8600, 5
      %v9297 = vsel %vm8932, %v9294, %v9296
      %v9298 = vrot.slane %v8601, 5
      %v9299 = vsel %vm8932, %v9296, %v9298
      %v9300 = vrot.slane %v8602, 5
      %v9301 = vsel %vm8932, %v9298, %v9300
      %v9302 = vrot.slane %v8603, 5
      %v9303 = vsel %vm8932, %v9300, %v9302
      %v9304 = vrot.slane %v8604, 5
      %v9305 = vsel %vm8932, %v9302, %v9304
      %v9306 = vrot.slane %v8605, 5
      %v9307 = vsel %vm8932, %v9304, %v9306
      %v9308 = vrot.slane %v8606, 5
      %v9309 = vsel %vm8932, %v9306, %v9308
      %v9310 = vrot.slane %v8607, 5
      %v9311 = vsel %vm8932, %v9308, %v9310
      %v9312 = vrot.slane %v8608, 5
      %v9313 = vsel %vm8932, %v9310, %v9312
      %v9314 = vrot.slane %v8609, 5
      %v9315 = vsel %vm8932, %v9312, %v9314
      %v9316 = vrot.slane %v8610, 5
      %v9317 = vsel %vm8932, %v9314, %v9316
      %v9318 = vrot.slane %v8611, 5
      %v9319 = vsel %vm8932, %v9316, %v9318
      %v9320 = vrot.slane %v8612, 5
      %v9321 = vsel %vm8932, %v9318, %v9320
      %v9322 = vrot.slane %v8613, 5
      %v9323 = vsel %vm8932, %v9320, %v9322
      %v9324 = vrot.slane %v8614, 5
      %v9325 = vsel %vm8932, %v9322, %v9324
      %v9326 = vrot.slane %v8615, 5
      %v9327 = vsel %vm8932, %v9324, %v9326
      %v9328 = vrot.slane %v8616, 5
      %v9329 = vsel %vm8932, %v9326, %v9328
      %v9330 = vrot.slane %v8617, 5
      %v9331 = vsel %vm8932, %v9328, %v9330
      %v9332 = vrot.slane %v8618, 5
      %v9333 = vsel %vm8932, %v9330, %v9332
      %v9334 = vrot.slane %v8619, 5
      %v9335 = vsel %vm8932, %v9332, %v9334
      %v9336 = vrot.slane %v8620, 5
      %v9337 = vsel %vm8932, %v9334, %v9336
      %v9338 = vrot.slane %v8621, 5
      %v9339 = vsel %vm8932, %v9336, %v9338
      %v9340 = vrot.slane %v8622, 5
      %v9341 = vsel %vm8932, %v9338, %v9340
      %v9342 = vrot.slane %v8623, 5
      %v9343 = vsel %vm8932, %v9340, %v9342
      %v9344 = vrot.slane %v8624, 5
      %v9345 = vsel %vm8932, %v9342, %v9344
      %v9346 = vrot.slane %v8625, 5
      %v9347 = vsel %vm8932, %v9344, %v9346
      %v9348 = vrot.slane %v8626, 5
      %v9349 = vsel %vm8932, %v9346, %v9348
      %v9350 = vrot.slane %v8627, 5
      %v9351 = vsel %vm8932, %v9348, %v9350
      %v9352 = vrot.slane %v8628, 5
      %v9353 = vsel %vm8932, %v9350, %v9352
      %v9354 = vrot.slane %v8629, 5
      %v9355 = vsel %vm8932, %v9352, %v9354
      %v9356 = vrot.slane %v8630, 5
      %v9357 = vsel %vm8932, %v9354, %v9356
      %v9358 = vrot.slane %v8631, 5
      %v9359 = vsel %vm8932, %v9356, %v9358
      %v9360 = vrot.slane %v8632, 5
      %v9361 = vsel %vm8932, %v9358, %v9360
      %v9362 = vrot.slane %v8633, 5
      %v9363 = vsel %vm8932, %v9360, %v9362
      %v9364 = vrot.slane %v8634, 5
      %v9365 = vsel %vm8932, %v9362, %v9364
      %v9366 = vrot.slane %v8635, 5
      %v9367 = vsel %vm8932, %v9364, %v9366
      %v9368 = vrot.slane %v8636, 5
      %v9369 = vsel %vm8932, %v9366, %v9368
      %v9370 = vrot.slane %v8637, 5
      %v9371 = vsel %vm8932, %v9368, %v9370
      %v9372 = vrot.slane %v8638, 5
      %v9373 = vsel %vm8932, %v9370, %v9372
      %v9374 = vrot.slane %v8639, 5
      %v9375 = vsel %vm8932, %v9372, %v9374
      %v9376 = vrot.slane %v8640, 5
      %v9377 = vsel %vm8932, %v9374, %v9376
      %v9378 = vrot.slane %v8641, 5
      %v9379 = vsel %vm8932, %v9376, %v9378
      %v9380 = vrot.slane %v8642, 5
      %v9381 = vsel %vm8932, %v9378, %v9380
      %v9382 = vrot.slane %v8643, 5
      %v9383 = vsel %vm8932, %v9380, %v9382
      %v9384 = vrot.slane %v8644, 5
      %v9385 = vsel %vm8932, %v9382, %v9384
      %v9386 = vrot.slane %v8645, 5
      %v9387 = vsel %vm8932, %v9384, %v9386
      %v9388 = vrot.slane %v8646, 5
      %v9389 = vsel %vm8932, %v9386, %v9388
      %v9390 = vrot.slane %v8647, 5
      %v9391 = vsel %vm8932, %v9388, %v9390
      %v9392 = vrot.slane %v8648, 5
      %v9393 = vsel %vm8932, %v9390, %v9392
      %v9394 = vrot.slane %v8649, 5
      %v9395 = vsel %vm8932, %v9392, %v9394
      %v9396 = vrot.slane %v8650, 5
      %v9397 = vsel %vm8932, %v9394, %v9396
      %v9398 = vrot.slane %v8651, 5
      %v9399 = vsel %vm8932, %v9396, %v9398
      %v9400 = vrot.slane %v8652, 5
      %v9401 = vsel %vm8932, %v9398, %v9400
      %v9402 = vrot.slane %v8653, 5
      %v9403 = vsel %vm8932, %v9400, %v9402
      %v9404 = vrot.slane %v8654, 5
      %v9405 = vsel %vm8932, %v9402, %v9404
      %v9406 = vrot.slane %v8655, 5
      %v9407 = vsel %vm8932, %v9404, %v9406
      %v9408 = vrot.slane %v8656, 5
      %v9409 = vsel %vm8932, %v9406, %v9408
      %v9410 = vrot.slane %v8657, 5
      %v9411 = vsel %vm8932, %v9408, %v9410
      %v9412 = vrot.slane %v8658, 5
      %v9413 = vsel %vm8932, %v9410, %v9412
      %v9414 = vrot.slane %v8659, 5
      %v9415 = vsel %vm8932, %v9412, %v9414
      %v9416 = vrot.slane %v8660, 5
      %v9417 = vsel %vm8932, %v9414, %v9416
      %v9418 = vrot.slane %v8661, 5
      %v9419 = vsel %vm8932, %v9416, %v9418
      %v9420 = vrot.slane %v8662, 5
      %v9421 = vsel %vm8932, %v9418, %v9420
      %v9422 = vrot.slane %v8663, 5
      %v9423 = vsel %vm8932, %v9420, %v9422
      %v9424 = vrot.slane %v8664, 5
      %v9425 = vsel %vm8932, %v9422, %v9424
      %v9426 = vrot.slane %v8665, 5
      %v9427 = vsel %vm8932, %v9424, %v9426
      %v9428 = vrot.slane %v8666, 5
      %v9429 = vsel %vm8932, %v9426, %v9428
      %v9430 = vrot.slane %v8667, 5
      %v9431 = vsel %vm8932, %v9428, %v9430
      %v9432 = vrot.slane %v8668, 5
      %v9433 = vsel %vm8932, %v9430, %v9432
      %v9434 = vrot.slane %v8669, 5
      %v9435 = vsel %vm8932, %v9432, %v9434
      %v9436 = vrot.slane %v8670, 5
      %v9437 = vsel %vm8932, %v9434, %v9436
      %v9438 = vrot.slane %v8671, 5
      %v9439 = vsel %vm8932, %v9436, %v9438
      %v9440 = vrot.slane %v8672, 5
      %v9441 = vsel %vm8932, %v9438, %v9440
      %v9442 = vrot.slane %v8673, 5
      %v9443 = vsel %vm8932, %v9440, %v9442
      %v9444 = vrot.slane %v8674, 5
      %v9445 = vsel %vm8932, %v9442, %v9444
      %v9702 = vadd.f32 %v8158, %v8935
      %v9703 = vadd.f32 %v8159, %v8937
      %v9704 = vadd.f32 %v8160, %v8939
      %v9705 = vadd.f32 %v8161, %v8941
      %v9706 = vadd.f32 %v8162, %v8943
      %v9707 = vadd.f32 %v8163, %v8945
      %v9708 = vadd.f32 %v8164, %v8947
      %v9709 = vadd.f32 %v8165, %v8949
      %v9710 = vadd.f32 %v8166, %v8951
      %v9711 = vadd.f32 %v8167, %v8953
      %v9712 = vadd.f32 %v8168, %v8955
      %v9713 = vadd.f32 %v8169, %v8957
      %v9714 = vadd.f32 %v8170, %v8959
      %v9715 = vadd.f32 %v8171, %v8961
      %v9716 = vadd.f32 %v8172, %v8963
      %v9717 = vadd.f32 %v8173, %v8965
      %v9718 = vadd.f32 %v8174, %v8967
      %v9719 = vadd.f32 %v8175, %v8969
      %v9720 = vadd.f32 %v8176, %v8971
      %v9721 = vadd.f32 %v8177, %v8973
      %v9722 = vadd.f32 %v8178, %v8975
      %v9723 = vadd.f32 %v8179, %v8977
      %v9724 = vadd.f32 %v8180, %v8979
      %v9725 = vadd.f32 %v8181, %v8981
      %v9726 = vadd.f32 %v8182, %v8983
      %v9727 = vadd.f32 %v8183, %v8985
      %v9728 = vadd.f32 %v8184, %v8987
      %v9729 = vadd.f32 %v8185, %v8989
      %v9730 = vadd.f32 %v8186, %v8991
      %v9731 = vadd.f32 %v8187, %v8993
      %v9732 = vadd.f32 %v8188, %v8995
      %v9733 = vadd.f32 %v8189, %v8997
      %v9734 = vadd.f32 %v8190, %v8999
      %v9735 = vadd.f32 %v8191, %v9001
      %v9736 = vadd.f32 %v8192, %v9003
      %v9737 = vadd.f32 %v8193, %v9005
      %v9738 = vadd.f32 %v8194, %v9007
      %v9739 = vadd.f32 %v8195, %v9009
      %v9740 = vadd.f32 %v8196, %v9011
      %v9741 = vadd.f32 %v8197, %v9013
      %v9742 = vadd.f32 %v8198, %v9015
      %v9743 = vadd.f32 %v8199, %v9017
      %v9744 = vadd.f32 %v8200, %v9019
      %v9745 = vadd.f32 %v8201, %v9021
      %v9746 = vadd.f32 %v8202, %v9023
      %v9747 = vadd.f32 %v8203, %v9025
      %v9748 = vadd.f32 %v8204, %v9027
      %v9749 = vadd.f32 %v8205, %v9029
      %v9750 = vadd.f32 %v8206, %v9031
      %v9751 = vadd.f32 %v8207, %v9033
      %v9752 = vadd.f32 %v8208, %v9035
      %v9753 = vadd.f32 %v8209, %v9037
      %v9754 = vadd.f32 %v8210, %v9039
      %v9755 = vadd.f32 %v8211, %v9041
      %v9756 = vadd.f32 %v8212, %v9043
      %v9757 = vadd.f32 %v8213, %v9045
      %v9758 = vadd.f32 %v8214, %v9047
      %v9759 = vadd.f32 %v8215, %v9049
      %v9760 = vadd.f32 %v8216, %v9051
      %v9761 = vadd.f32 %v8217, %v9053
      %v9762 = vadd.f32 %v8218, %v9055
      %v9763 = vadd.f32 %v8219, %v9057
      %v9764 = vadd.f32 %v8220, %v9059
      %v9765 = vadd.f32 %v8221, %v9061
      %v9766 = vadd.f32 %v8222, %v9063
      %v9767 = vadd.f32 %v8223, %v9065
      %v9768 = vadd.f32 %v8224, %v9067
      %v9769 = vadd.f32 %v8225, %v9069
      %v9770 = vadd.f32 %v8226, %v9071
      %v9771 = vadd.f32 %v8227, %v9073
      %v9772 = vadd.f32 %v8228, %v9075
      %v9773 = vadd.f32 %v8229, %v9077
      %v9774 = vadd.f32 %v8230, %v9079
      %v9775 = vadd.f32 %v8231, %v9081
      %v9776 = vadd.f32 %v8232, %v9083
      %v9777 = vadd.f32 %v8233, %v9085
      %v9778 = vadd.f32 %v8234, %v9087
      %v9779 = vadd.f32 %v8235, %v9089
      %v9780 = vadd.f32 %v8236, %v9091
      %v9781 = vadd.f32 %v8237, %v9093
      %v9782 = vadd.f32 %v8238, %v9095
      %v9783 = vadd.f32 %v8239, %v9097
      %v9784 = vadd.f32 %v8240, %v9099
      %v9785 = vadd.f32 %v8241, %v9101
      %v9786 = vadd.f32 %v8242, %v9103
      %v9787 = vadd.f32 %v8243, %v9105
      %v9788 = vadd.f32 %v8244, %v9107
      %v9789 = vadd.f32 %v8245, %v9109
      %v9790 = vadd.f32 %v8246, %v9111
      %v9791 = vadd.f32 %v8247, %v9113
      %v9792 = vadd.f32 %v8248, %v9115
      %v9793 = vadd.f32 %v8249, %v9117
      %v9794 = vadd.f32 %v8250, %v9119
      %v9795 = vadd.f32 %v8251, %v9121
      %v9796 = vadd.f32 %v8252, %v9123
      %v9797 = vadd.f32 %v8253, %v9125
      %v9798 = vadd.f32 %v8254, %v9127
      %v9799 = vadd.f32 %v8255, %v9129
      %v9800 = vadd.f32 %v8256, %v9131
      %v9801 = vadd.f32 %v8257, %v9133
      %v9802 = vadd.f32 %v8258, %v9135
      %v9803 = vadd.f32 %v8259, %v9137
      %v9804 = vadd.f32 %v8260, %v9139
      %v9805 = vadd.f32 %v8261, %v9141
      %v9806 = vadd.f32 %v8262, %v9143
      %v9807 = vadd.f32 %v8263, %v9145
      %v9808 = vadd.f32 %v8264, %v9147
      %v9809 = vadd.f32 %v8265, %v9149
      %v9810 = vadd.f32 %v8266, %v9151
      %v9811 = vadd.f32 %v8267, %v9153
      %v9812 = vadd.f32 %v8268, %v9155
      %v9813 = vadd.f32 %v8269, %v9157
      %v9814 = vadd.f32 %v8270, %v9159
      %v9815 = vadd.f32 %v8271, %v9161
      %v9816 = vadd.f32 %v8272, %v9163
      %v9817 = vadd.f32 %v8273, %v9165
      %v9818 = vadd.f32 %v8274, %v9167
      %v9819 = vadd.f32 %v8275, %v9169
      %v9820 = vadd.f32 %v8276, %v9171
      %v9821 = vadd.f32 %v8277, %v9173
      %v9822 = vadd.f32 %v8278, %v9175
      %v9823 = vadd.f32 %v8279, %v9177
      %v9824 = vadd.f32 %v8280, %v9179
      %v9825 = vadd.f32 %v8281, %v9181
      %v9826 = vadd.f32 %v8282, %v9183
      %v9827 = vadd.f32 %v8283, %v9185
      %v9828 = vadd.f32 %v8284, %v9187
      %v9829 = vadd.f32 %v8285, %v9189
      %v9830 = vadd.f32 %v8286, %v9191
      %v9831 = vadd.f32 %v8287, %v9193
      %v9832 = vadd.f32 %v8288, %v9195
      %v9833 = vadd.f32 %v8289, %v9197
      %v9834 = vadd.f32 %v8290, %v9199
      %v9835 = vadd.f32 %v8291, %v9201
      %v9836 = vadd.f32 %v8292, %v9203
      %v9837 = vadd.f32 %v8293, %v9205
      %v9838 = vadd.f32 %v8294, %v9207
      %v9839 = vadd.f32 %v8295, %v9209
      %v9840 = vadd.f32 %v8296, %v9211
      %v9841 = vadd.f32 %v8297, %v9213
      %v9842 = vadd.f32 %v8298, %v9215
      %v9843 = vadd.f32 %v8299, %v9217
      %v9844 = vadd.f32 %v8300, %v9219
      %v9845 = vadd.f32 %v8301, %v9221
      %v9846 = vadd.f32 %v8302, %v9223
      %v9847 = vadd.f32 %v8303, %v9225
      %v9848 = vadd.f32 %v8304, %v9227
      %v9849 = vadd.f32 %v8305, %v9229
      %v9850 = vadd.f32 %v8306, %v9231
      %v9851 = vadd.f32 %v8307, %v9233
      %v9852 = vadd.f32 %v8308, %v9235
      %v9853 = vadd.f32 %v8309, %v9237
      %v9854 = vadd.f32 %v8310, %v9239
      %v9855 = vadd.f32 %v8311, %v9241
      %v9856 = vadd.f32 %v8312, %v9243
      %v9857 = vadd.f32 %v8313, %v9245
      %v9858 = vadd.f32 %v8314, %v9247
      %v9859 = vadd.f32 %v8315, %v9249
      %v9860 = vadd.f32 %v8316, %v9251
      %v9861 = vadd.f32 %v8317, %v9253
      %v9862 = vadd.f32 %v8318, %v9255
      %v9863 = vadd.f32 %v8319, %v9257
      %v9864 = vadd.f32 %v8320, %v9259
      %v9865 = vadd.f32 %v8321, %v9261
      %v9866 = vadd.f32 %v8322, %v9263
      %v9867 = vadd.f32 %v8323, %v9265
      %v9868 = vadd.f32 %v8324, %v9267
      %v9869 = vadd.f32 %v8325, %v9269
      %v9870 = vadd.f32 %v8326, %v9271
      %v9871 = vadd.f32 %v8327, %v9273
      %v9872 = vadd.f32 %v8328, %v9275
      %v9873 = vadd.f32 %v8329, %v9277
      %v9874 = vadd.f32 %v8330, %v9279
      %v9875 = vadd.f32 %v8331, %v9281
      %v9876 = vadd.f32 %v8332, %v9283
      %v9877 = vadd.f32 %v8333, %v9285
      %v9878 = vadd.f32 %v8334, %v9287
      %v9879 = vadd.f32 %v8335, %v9289
      %v9880 = vadd.f32 %v8336, %v9291
      %v9881 = vadd.f32 %v8337, %v9293
      %v9882 = vadd.f32 %v8338, %v9295
      %v9883 = vadd.f32 %v8339, %v9297
      %v9884 = vadd.f32 %v8340, %v9299
      %v9885 = vadd.f32 %v8341, %v9301
      %v9886 = vadd.f32 %v8342, %v9303
      %v9887 = vadd.f32 %v8343, %v9305
      %v9888 = vadd.f32 %v8344, %v9307
      %v9889 = vadd.f32 %v8345, %v9309
      %v9890 = vadd.f32 %v8346, %v9311
      %v9891 = vadd.f32 %v8347, %v9313
      %v9892 = vadd.f32 %v8348, %v9315
      %v9893 = vadd.f32 %v8349, %v9317
      %v9894 = vadd.f32 %v8350, %v9319
      %v9895 = vadd.f32 %v8351, %v9321
      %v9896 = vadd.f32 %v8352, %v9323
      %v9897 = vadd.f32 %v8353, %v9325
      %v9898 = vadd.f32 %v8354, %v9327
      %v9899 = vadd.f32 %v8355, %v9329
      %v9900 = vadd.f32 %v8356, %v9331
      %v9901 = vadd.f32 %v8357, %v9333
      %v9902 = vadd.f32 %v8358, %v9335
      %v9903 = vadd.f32 %v8359, %v9337
      %v9904 = vadd.f32 %v8360, %v9339
      %v9905 = vadd.f32 %v8361, %v9341
      %v9906 = vadd.f32 %v8362, %v9343
      %v9907 = vadd.f32 %v8363, %v9345
      %v9908 = vadd.f32 %v8364, %v9347
      %v9909 = vadd.f32 %v8365, %v9349
      %v9910 = vadd.f32 %v8366, %v9351
      %v9911 = vadd.f32 %v8367, %v9353
      %v9912 = vadd.f32 %v8368, %v9355
      %v9913 = vadd.f32 %v8369, %v9357
      %v9914 = vadd.f32 %v8370, %v9359
      %v9915 = vadd.f32 %v8371, %v9361
      %v9916 = vadd.f32 %v8372, %v9363
      %v9917 = vadd.f32 %v8373, %v9365
      %v9918 = vadd.f32 %v8374, %v9367
      %v9919 = vadd.f32 %v8375, %v9369
      %v9920 = vadd.f32 %v8376, %v9371
      %v9921 = vadd.f32 %v8377, %v9373
      %v9922 = vadd.f32 %v8378, %v9375
      %v9923 = vadd.f32 %v8379, %v9377
      %v9924 = vadd.f32 %v8380, %v9379
      %v9925 = vadd.f32 %v8381, %v9381
      %v9926 = vadd.f32 %v8382, %v9383
      %v9927 = vadd.f32 %v8383, %v9385
      %v9928 = vadd.f32 %v8384, %v9387
      %v9929 = vadd.f32 %v8385, %v9389
      %v9930 = vadd.f32 %v8386, %v9391
      %v9931 = vadd.f32 %v8387, %v9393
      %v9932 = vadd.f32 %v8388, %v9395
      %v9933 = vadd.f32 %v8389, %v9397
      %v9934 = vadd.f32 %v8390, %v9399
      %v9935 = vadd.f32 %v8391, %v9401
      %v9936 = vadd.f32 %v8392, %v9403
      %v9937 = vadd.f32 %v8393, %v9405
      %v9938 = vadd.f32 %v8394, %v9407
      %v9939 = vadd.f32 %v8395, %v9409
      %v9940 = vadd.f32 %v8396, %v9411
      %v9941 = vadd.f32 %v8397, %v9413
      %v9942 = vadd.f32 %v8398, %v9415
      %v9943 = vadd.f32 %v8399, %v9417
      %v9944 = vadd.f32 %v8400, %v9419
      %v9945 = vadd.f32 %v8401, %v9421
      %v9946 = vadd.f32 %v8402, %v9423
      %v9947 = vadd.f32 %v8403, %v9425
      %v9948 = vadd.f32 %v8404, %v9427
      %v9949 = vadd.f32 %v8405, %v9429
      %v9950 = vadd.f32 %v8406, %v9431
      %v9951 = vadd.f32 %v8407, %v9433
      %v9952 = vadd.f32 %v8408, %v9435
      %v9953 = vadd.f32 %v8409, %v9437
      %v9954 = vadd.f32 %v8410, %v9439
      %v9955 = vadd.f32 %v8411, %v9441
      %v9956 = vadd.f32 %v8412, %v9443
      %v9957 = vadd.f32 %v8413, %v9445
      %v9958 = vlaneseq
      %v9959 = vshrl.u32 %v9958, 7
      %v9960 = vsub.s32 6, %v9959
      %v9961 = vrot.slane %v430, %v9960
      %v9962 = vmul.f32 %v440, %v9961
      %v9963 = vmul.f32 %v445, %v9961
      %v9964 = vmul.f32 %v450, %v9961
      %v9965 = vmul.f32 %v455, %v9961
      %v9966 = vmul.f32 %v460, %v9961
      %v9967 = vmul.f32 %v465, %v9961
      %v9968 = vmul.f32 %v470, %v9961
      %v9969 = vmul.f32 %v475, %v9961
      %v9970 = vmul.f32 %v480, %v9961
      %v9971 = vmul.f32 %v485, %v9961
      %v9972 = vmul.f32 %v490, %v9961
      %v9973 = vmul.f32 %v495, %v9961
      %v9974 = vmul.f32 %v500, %v9961
      %v9975 = vmul.f32 %v505, %v9961
      %v9976 = vmul.f32 %v510, %v9961
      %v9977 = vmul.f32 %v515, %v9961
      %v9978 = vmul.f32 %v520, %v9961
      %v9979 = vmul.f32 %v525, %v9961
      %v9980 = vmul.f32 %v530, %v9961
      %v9981 = vmul.f32 %v535, %v9961
      %v9982 = vmul.f32 %v540, %v9961
      %v9983 = vmul.f32 %v545, %v9961
      %v9984 = vmul.f32 %v550, %v9961
      %v9985 = vmul.f32 %v555, %v9961
      %v9986 = vmul.f32 %v560, %v9961
      %v9987 = vmul.f32 %v565, %v9961
      %v9988 = vmul.f32 %v570, %v9961
      %v9989 = vmul.f32 %v575, %v9961
      %v9990 = vmul.f32 %v580, %v9961
      %v9991 = vmul.f32 %v585, %v9961
      %v9992 = vmul.f32 %v590, %v9961
      %v9993 = vmul.f32 %v595, %v9961
      %v9994 = vmul.f32 %v600, %v9961
      %v9995 = vmul.f32 %v605, %v9961
      %v9996 = vmul.f32 %v610, %v9961
      %v9997 = vmul.f32 %v615, %v9961
      %v9998 = vmul.f32 %v620, %v9961
      %v9999 = vmul.f32 %v625, %v9961
      %v10000 = vmul.f32 %v630, %v9961
      %v10001 = vmul.f32 %v635, %v9961
      %v10002 = vmul.f32 %v640, %v9961
      %v10003 = vmul.f32 %v645, %v9961
      %v10004 = vmul.f32 %v650, %v9961
      %v10005 = vmul.f32 %v655, %v9961
      %v10006 = vmul.f32 %v660, %v9961
      %v10007 = vmul.f32 %v665, %v9961
      %v10008 = vmul.f32 %v670, %v9961
      %v10009 = vmul.f32 %v675, %v9961
      %v10010 = vmul.f32 %v680, %v9961
      %v10011 = vmul.f32 %v685, %v9961
      %v10012 = vmul.f32 %v690, %v9961
      %v10013 = vmul.f32 %v695, %v9961
      %v10014 = vmul.f32 %v700, %v9961
      %v10015 = vmul.f32 %v705, %v9961
      %v10016 = vmul.f32 %v710, %v9961
      %v10017 = vmul.f32 %v715, %v9961
      %v10018 = vmul.f32 %v720, %v9961
      %v10019 = vmul.f32 %v725, %v9961
      %v10020 = vmul.f32 %v730, %v9961
      %v10021 = vmul.f32 %v735, %v9961
      %v10022 = vmul.f32 %v740, %v9961
      %v10023 = vmul.f32 %v745, %v9961
      %v10024 = vmul.f32 %v750, %v9961
      %v10025 = vmul.f32 %v755, %v9961
      %v10026 = vmul.f32 %v760, %v9961
      %v10027 = vmul.f32 %v765, %v9961
      %v10028 = vmul.f32 %v770, %v9961
      %v10029 = vmul.f32 %v775, %v9961
      %v10030 = vmul.f32 %v780, %v9961
      %v10031 = vmul.f32 %v785, %v9961
      %v10032 = vmul.f32 %v790, %v9961
      %v10033 = vmul.f32 %v795, %v9961
      %v10034 = vmul.f32 %v800, %v9961
      %v10035 = vmul.f32 %v805, %v9961
      %v10036 = vmul.f32 %v810, %v9961
      %v10037 = vmul.f32 %v815, %v9961
      %v10038 = vmul.f32 %v820, %v9961
      %v10039 = vmul.f32 %v825, %v9961
      %v10040 = vmul.f32 %v830, %v9961
      %v10041 = vmul.f32 %v835, %v9961
      %v10042 = vmul.f32 %v840, %v9961
      %v10043 = vmul.f32 %v845, %v9961
      %v10044 = vmul.f32 %v850, %v9961
      %v10045 = vmul.f32 %v855, %v9961
      %v10046 = vmul.f32 %v860, %v9961
      %v10047 = vmul.f32 %v865, %v9961
      %v10048 = vmul.f32 %v870, %v9961
      %v10049 = vmul.f32 %v875, %v9961
      %v10050 = vmul.f32 %v880, %v9961
      %v10051 = vmul.f32 %v885, %v9961
      %v10052 = vmul.f32 %v890, %v9961
      %v10053 = vmul.f32 %v895, %v9961
      %v10054 = vmul.f32 %v900, %v9961
      %v10055 = vmul.f32 %v905, %v9961
      %v10056 = vmul.f32 %v910, %v9961
      %v10057 = vmul.f32 %v915, %v9961
      %v10058 = vmul.f32 %v920, %v9961
      %v10059 = vmul.f32 %v925, %v9961
      %v10060 = vmul.f32 %v930, %v9961
      %v10061 = vmul.f32 %v935, %v9961
      %v10062 = vmul.f32 %v940, %v9961
      %v10063 = vmul.f32 %v945, %v9961
      %v10064 = vmul.f32 %v950, %v9961
      %v10065 = vmul.f32 %v955, %v9961
      %v10066 = vmul.f32 %v960, %v9961
      %v10067 = vmul.f32 %v965, %v9961
      %v10068 = vmul.f32 %v970, %v9961
      %v10069 = vmul.f32 %v975, %v9961
      %v10070 = vmul.f32 %v980, %v9961
      %v10071 = vmul.f32 %v985, %v9961
      %v10072 = vmul.f32 %v990, %v9961
      %v10073 = vmul.f32 %v995, %v9961
      %v10074 = vmul.f32 %v1000, %v9961
      %v10075 = vmul.f32 %v1005, %v9961
      %v10076 = vmul.f32 %v1010, %v9961
      %v10077 = vmul.f32 %v1015, %v9961
      %v10078 = vmul.f32 %v1020, %v9961
      %v10079 = vmul.f32 %v1025, %v9961
      %v10080 = vmul.f32 %v1030, %v9961
      %v10081 = vmul.f32 %v1035, %v9961
      %v10082 = vmul.f32 %v1040, %v9961
      %v10083 = vmul.f32 %v1045, %v9961
      %v10084 = vmul.f32 %v1050, %v9961
      %v10085 = vmul.f32 %v1055, %v9961
      %v10086 = vmul.f32 %v1060, %v9961
      %v10087 = vmul.f32 %v1065, %v9961
      %v10088 = vmul.f32 %v1070, %v9961
      %v10089 = vmul.f32 %v1075, %v9961
      %v10090 = vmul.f32 %v1080, %v9961
      %v10091 = vmul.f32 %v1085, %v9961
      %v10092 = vmul.f32 %v1090, %v9961
      %v10093 = vmul.f32 %v1095, %v9961
      %v10094 = vmul.f32 %v1100, %v9961
      %v10095 = vmul.f32 %v1105, %v9961
      %v10096 = vmul.f32 %v1110, %v9961
      %v10097 = vmul.f32 %v1115, %v9961
      %v10098 = vmul.f32 %v1120, %v9961
      %v10099 = vmul.f32 %v1125, %v9961
      %v10100 = vmul.f32 %v1130, %v9961
      %v10101 = vmul.f32 %v1135, %v9961
      %v10102 = vmul.f32 %v1140, %v9961
      %v10103 = vmul.f32 %v1145, %v9961
      %v10104 = vmul.f32 %v1150, %v9961
      %v10105 = vmul.f32 %v1155, %v9961
      %v10106 = vmul.f32 %v1160, %v9961
      %v10107 = vmul.f32 %v1165, %v9961
      %v10108 = vmul.f32 %v1170, %v9961
      %v10109 = vmul.f32 %v1175, %v9961
      %v10110 = vmul.f32 %v1180, %v9961
      %v10111 = vmul.f32 %v1185, %v9961
      %v10112 = vmul.f32 %v1190, %v9961
      %v10113 = vmul.f32 %v1195, %v9961
      %v10114 = vmul.f32 %v1200, %v9961
      %v10115 = vmul.f32 %v1205, %v9961
      %v10116 = vmul.f32 %v1210, %v9961
      %v10117 = vmul.f32 %v1215, %v9961
      %v10118 = vmul.f32 %v1220, %v9961
      %v10119 = vmul.f32 %v1225, %v9961
      %v10120 = vmul.f32 %v1230, %v9961
      %v10121 = vmul.f32 %v1235, %v9961
      %v10122 = vmul.f32 %v1240, %v9961
      %v10123 = vmul.f32 %v1245, %v9961
      %v10124 = vmul.f32 %v1250, %v9961
      %v10125 = vmul.f32 %v1255, %v9961
      %v10126 = vmul.f32 %v1260, %v9961
      %v10127 = vmul.f32 %v1265, %v9961
      %v10128 = vmul.f32 %v1270, %v9961
      %v10129 = vmul.f32 %v1275, %v9961
      %v10130 = vmul.f32 %v1280, %v9961
      %v10131 = vmul.f32 %v1285, %v9961
      %v10132 = vmul.f32 %v1290, %v9961
      %v10133 = vmul.f32 %v1295, %v9961
      %v10134 = vmul.f32 %v1300, %v9961
      %v10135 = vmul.f32 %v1305, %v9961
      %v10136 = vmul.f32 %v1310, %v9961
      %v10137 = vmul.f32 %v1315, %v9961
      %v10138 = vmul.f32 %v1320, %v9961
      %v10139 = vmul.f32 %v1325, %v9961
      %v10140 = vmul.f32 %v1330, %v9961
      %v10141 = vmul.f32 %v1335, %v9961
      %v10142 = vmul.f32 %v1340, %v9961
      %v10143 = vmul.f32 %v1345, %v9961
      %v10144 = vmul.f32 %v1350, %v9961
      %v10145 = vmul.f32 %v1355, %v9961
      %v10146 = vmul.f32 %v1360, %v9961
      %v10147 = vmul.f32 %v1365, %v9961
      %v10148 = vmul.f32 %v1370, %v9961
      %v10149 = vmul.f32 %v1375, %v9961
      %v10150 = vmul.f32 %v1380, %v9961
      %v10151 = vmul.f32 %v1385, %v9961
      %v10152 = vmul.f32 %v1390, %v9961
      %v10153 = vmul.f32 %v1395, %v9961
      %v10154 = vmul.f32 %v1400, %v9961
      %v10155 = vmul.f32 %v1405, %v9961
      %v10156 = vmul.f32 %v1410, %v9961
      %v10157 = vmul.f32 %v1415, %v9961
      %v10158 = vmul.f32 %v1420, %v9961
      %v10159 = vmul.f32 %v1425, %v9961
      %v10160 = vmul.f32 %v1430, %v9961
      %v10161 = vmul.f32 %v1435, %v9961
      %v10162 = vmul.f32 %v1440, %v9961
      %v10163 = vmul.f32 %v1445, %v9961
      %v10164 = vmul.f32 %v1450, %v9961
      %v10165 = vmul.f32 %v1455, %v9961
      %v10166 = vmul.f32 %v1460, %v9961
      %v10167 = vmul.f32 %v1465, %v9961
      %v10168 = vmul.f32 %v1470, %v9961
      %v10169 = vmul.f32 %v1475, %v9961
      %v10170 = vmul.f32 %v1480, %v9961
      %v10171 = vmul.f32 %v1485, %v9961
      %v10172 = vmul.f32 %v1490, %v9961
      %v10173 = vmul.f32 %v1495, %v9961
      %v10174 = vmul.f32 %v1500, %v9961
      %v10175 = vmul.f32 %v1505, %v9961
      %v10176 = vmul.f32 %v1510, %v9961
      %v10177 = vmul.f32 %v1515, %v9961
      %v10178 = vmul.f32 %v1520, %v9961
      %v10179 = vmul.f32 %v1525, %v9961
      %v10180 = vmul.f32 %v1530, %v9961
      %v10181 = vmul.f32 %v1535, %v9961
      %v10182 = vmul.f32 %v1540, %v9961
      %v10183 = vmul.f32 %v1545, %v9961
      %v10184 = vmul.f32 %v1550, %v9961
      %v10185 = vmul.f32 %v1555, %v9961
      %v10186 = vmul.f32 %v1560, %v9961
      %v10187 = vmul.f32 %v1565, %v9961
      %v10188 = vmul.f32 %v1570, %v9961
      %v10189 = vmul.f32 %v1575, %v9961
      %v10190 = vmul.f32 %v1580, %v9961
      %v10191 = vmul.f32 %v1585, %v9961
      %v10192 = vmul.f32 %v1590, %v9961
      %v10193 = vmul.f32 %v1595, %v9961
      %v10194 = vmul.f32 %v1600, %v9961
      %v10195 = vmul.f32 %v1605, %v9961
      %v10196 = vmul.f32 %v1610, %v9961
      %v10197 = vmul.f32 %v1615, %v9961
      %v10198 = vmul.f32 %v1620, %v9961
      %v10199 = vmul.f32 %v1625, %v9961
      %v10200 = vmul.f32 %v1630, %v9961
      %v10201 = vmul.f32 %v1635, %v9961
      %v10202 = vmul.f32 %v1640, %v9961
      %v10203 = vmul.f32 %v1645, %v9961
      %v10204 = vmul.f32 %v1650, %v9961
      %v10205 = vmul.f32 %v1655, %v9961
      %v10206 = vmul.f32 %v1660, %v9961
      %v10207 = vmul.f32 %v1665, %v9961
      %v10208 = vmul.f32 %v1670, %v9961
      %v10209 = vmul.f32 %v1675, %v9961
      %v10210 = vmul.f32 %v1680, %v9961
      %v10211 = vmul.f32 %v1685, %v9961
      %v10212 = vmul.f32 %v1690, %v9961
      %v10213 = vmul.f32 %v1695, %v9961
      %v10214 = vmul.f32 %v1700, %v9961
      %v10215 = vmul.f32 %v1705, %v9961
      %v10216 = vmul.f32 %v1710, %v9961
      %v10217 = vmul.f32 %v1715, %v9961
      %v10218 = vmul.f32 %v2236, %v9961
      %vm10476 = vcmask 1041408
      %v10477 = vrot.slane %v9962, 6
      %v10478 = vrot.slane %v9963, 6
      %v10479 = vsel %vm10476, %v10477, %v10478
      %v10480 = vrot.slane %v9964, 6
      %v10481 = vsel %vm10476, %v10478, %v10480
      %v10482 = vrot.slane %v9965, 6
      %v10483 = vsel %vm10476, %v10480, %v10482
      %v10484 = vrot.slane %v9966, 6
      %v10485 = vsel %vm10476, %v10482, %v10484
      %v10486 = vrot.slane %v9967, 6
      %v10487 = vsel %vm10476, %v10484, %v10486
      %v10488 = vrot.slane %v9968, 6
      %v10489 = vsel %vm10476, %v10486, %v10488
      %v10490 = vrot.slane %v9969, 6
      %v10491 = vsel %vm10476, %v10488, %v10490
      %v10492 = vrot.slane %v9970, 6
      %v10493 = vsel %vm10476, %v10490, %v10492
      %v10494 = vrot.slane %v9971, 6
      %v10495 = vsel %vm10476, %v10492, %v10494
      %v10496 = vrot.slane %v9972, 6
      %v10497 = vsel %vm10476, %v10494, %v10496
      %v10498 = vrot.slane %v9973, 6
      %v10499 = vsel %vm10476, %v10496, %v10498
      %v10500 = vrot.slane %v9974, 6
      %v10501 = vsel %vm10476, %v10498, %v10500
      %v10502 = vrot.slane %v9975, 6
      %v10503 = vsel %vm10476, %v10500, %v10502
      %v10504 = vrot.slane %v9976, 6
      %v10505 = vsel %vm10476, %v10502, %v10504
      %v10506 = vrot.slane %v9977, 6
      %v10507 = vsel %vm10476, %v10504, %v10506
      %v10508 = vrot.slane %v9978, 6
      %v10509 = vsel %vm10476, %v10506, %v10508
      %v10510 = vrot.slane %v9979, 6
      %v10511 = vsel %vm10476, %v10508, %v10510
      %v10512 = vrot.slane %v9980, 6
      %v10513 = vsel %vm10476, %v10510, %v10512
      %v10514 = vrot.slane %v9981, 6
      %v10515 = vsel %vm10476, %v10512, %v10514
      %v10516 = vrot.slane %v9982, 6
      %v10517 = vsel %vm10476, %v10514, %v10516
      %v10518 = vrot.slane %v9983, 6
      %v10519 = vsel %vm10476, %v10516, %v10518
      %v10520 = vrot.slane %v9984, 6
      %v10521 = vsel %vm10476, %v10518, %v10520
      %v10522 = vrot.slane %v9985, 6
      %v10523 = vsel %vm10476, %v10520, %v10522
      %v10524 = vrot.slane %v9986, 6
      %v10525 = vsel %vm10476, %v10522, %v10524
      %v10526 = vrot.slane %v9987, 6
      %v10527 = vsel %vm10476, %v10524, %v10526
      %v10528 = vrot.slane %v9988, 6
      %v10529 = vsel %vm10476, %v10526, %v10528
      %v10530 = vrot.slane %v9989, 6
      %v10531 = vsel %vm10476, %v10528, %v10530
      %v10532 = vrot.slane %v9990, 6
      %v10533 = vsel %vm10476, %v10530, %v10532
      %v10534 = vrot.slane %v9991, 6
      %v10535 = vsel %vm10476, %v10532, %v10534
      %v10536 = vrot.slane %v9992, 6
      %v10537 = vsel %vm10476, %v10534, %v10536
      %v10538 = vrot.slane %v9993, 6
      %v10539 = vsel %vm10476, %v10536, %v10538
      %v10540 = vrot.slane %v9994, 6
      %v10541 = vsel %vm10476, %v10538, %v10540
      %v10542 = vrot.slane %v9995, 6
      %v10543 = vsel %vm10476, %v10540, %v10542
      %v10544 = vrot.slane %v9996, 6
      %v10545 = vsel %vm10476, %v10542, %v10544
      %v10546 = vrot.slane %v9997, 6
      %v10547 = vsel %vm10476, %v10544, %v10546
      %v10548 = vrot.slane %v9998, 6
      %v10549 = vsel %vm10476, %v10546, %v10548
      %v10550 = vrot.slane %v9999, 6
      %v10551 = vsel %vm10476, %v10548, %v10550
      %v10552 = vrot.slane %v10000, 6
      %v10553 = vsel %vm10476, %v10550, %v10552
      %v10554 = vrot.slane %v10001, 6
      %v10555 = vsel %vm10476, %v10552, %v10554
      %v10556 = vrot.slane %v10002, 6
      %v10557 = vsel %vm10476, %v10554, %v10556
      %v10558 = vrot.slane %v10003, 6
      %v10559 = vsel %vm10476, %v10556, %v10558
      %v10560 = vrot.slane %v10004, 6
      %v10561 = vsel %vm10476, %v10558, %v10560
      %v10562 = vrot.slane %v10005, 6
      %v10563 = vsel %vm10476, %v10560, %v10562
      %v10564 = vrot.slane %v10006, 6
      %v10565 = vsel %vm10476, %v10562, %v10564
      %v10566 = vrot.slane %v10007, 6
      %v10567 = vsel %vm10476, %v10564, %v10566
      %v10568 = vrot.slane %v10008, 6
      %v10569 = vsel %vm10476, %v10566, %v10568
      %v10570 = vrot.slane %v10009, 6
      %v10571 = vsel %vm10476, %v10568, %v10570
      %v10572 = vrot.slane %v10010, 6
      %v10573 = vsel %vm10476, %v10570, %v10572
      %v10574 = vrot.slane %v10011, 6
      %v10575 = vsel %vm10476, %v10572, %v10574
      %v10576 = vrot.slane %v10012, 6
      %v10577 = vsel %vm10476, %v10574, %v10576
      %v10578 = vrot.slane %v10013, 6
      %v10579 = vsel %vm10476, %v10576, %v10578
      %v10580 = vrot.slane %v10014, 6
      %v10581 = vsel %vm10476, %v10578, %v10580
      %v10582 = vrot.slane %v10015, 6
      %v10583 = vsel %vm10476, %v10580, %v10582
      %v10584 = vrot.slane %v10016, 6
      %v10585 = vsel %vm10476, %v10582, %v10584
      %v10586 = vrot.slane %v10017, 6
      %v10587 = vsel %vm10476, %v10584, %v10586
      %v10588 = vrot.slane %v10018, 6
      %v10589 = vsel %vm10476, %v10586, %v10588
      %v10590 = vrot.slane %v10019, 6
      %v10591 = vsel %vm10476, %v10588, %v10590
      %v10592 = vrot.slane %v10020, 6
      %v10593 = vsel %vm10476, %v10590, %v10592
      %v10594 = vrot.slane %v10021, 6
      %v10595 = vsel %vm10476, %v10592, %v10594
      %v10596 = vrot.slane %v10022, 6
      %v10597 = vsel %vm10476, %v10594, %v10596
      %v10598 = vrot.slane %v10023, 6
      %v10599 = vsel %vm10476, %v10596, %v10598
      %v10600 = vrot.slane %v10024, 6
      %v10601 = vsel %vm10476, %v10598, %v10600
      %v10602 = vrot.slane %v10025, 6
      %v10603 = vsel %vm10476, %v10600, %v10602
      %v10604 = vrot.slane %v10026, 6
      %v10605 = vsel %vm10476, %v10602, %v10604
      %v10606 = vrot.slane %v10027, 6
      %v10607 = vsel %vm10476, %v10604, %v10606
      %v10608 = vrot.slane %v10028, 6
      %v10609 = vsel %vm10476, %v10606, %v10608
      %v10610 = vrot.slane %v10029, 6
      %v10611 = vsel %vm10476, %v10608, %v10610
      %v10612 = vrot.slane %v10030, 6
      %v10613 = vsel %vm10476, %v10610, %v10612
      %v10614 = vrot.slane %v10031, 6
      %v10615 = vsel %vm10476, %v10612, %v10614
      %v10616 = vrot.slane %v10032, 6
      %v10617 = vsel %vm10476, %v10614, %v10616
      %v10618 = vrot.slane %v10033, 6
      %v10619 = vsel %vm10476, %v10616, %v10618
      %v10620 = vrot.slane %v10034, 6
      %v10621 = vsel %vm10476, %v10618, %v10620
      %v10622 = vrot.slane %v10035, 6
      %v10623 = vsel %vm10476, %v10620, %v10622
      %v10624 = vrot.slane %v10036, 6
      %v10625 = vsel %vm10476, %v10622, %v10624
      %v10626 = vrot.slane %v10037, 6
      %v10627 = vsel %vm10476, %v10624, %v10626
      %v10628 = vrot.slane %v10038, 6
      %v10629 = vsel %vm10476, %v10626, %v10628
      %v10630 = vrot.slane %v10039, 6
      %v10631 = vsel %vm10476, %v10628, %v10630
      %v10632 = vrot.slane %v10040, 6
      %v10633 = vsel %vm10476, %v10630, %v10632
      %v10634 = vrot.slane %v10041, 6
      %v10635 = vsel %vm10476, %v10632, %v10634
      %v10636 = vrot.slane %v10042, 6
      %v10637 = vsel %vm10476, %v10634, %v10636
      %v10638 = vrot.slane %v10043, 6
      %v10639 = vsel %vm10476, %v10636, %v10638
      %v10640 = vrot.slane %v10044, 6
      %v10641 = vsel %vm10476, %v10638, %v10640
      %v10642 = vrot.slane %v10045, 6
      %v10643 = vsel %vm10476, %v10640, %v10642
      %v10644 = vrot.slane %v10046, 6
      %v10645 = vsel %vm10476, %v10642, %v10644
      %v10646 = vrot.slane %v10047, 6
      %v10647 = vsel %vm10476, %v10644, %v10646
      %v10648 = vrot.slane %v10048, 6
      %v10649 = vsel %vm10476, %v10646, %v10648
      %v10650 = vrot.slane %v10049, 6
      %v10651 = vsel %vm10476, %v10648, %v10650
      %v10652 = vrot.slane %v10050, 6
      %v10653 = vsel %vm10476, %v10650, %v10652
      %v10654 = vrot.slane %v10051, 6
      %v10655 = vsel %vm10476, %v10652, %v10654
      %v10656 = vrot.slane %v10052, 6
      %v10657 = vsel %vm10476, %v10654, %v10656
      %v10658 = vrot.slane %v10053, 6
      %v10659 = vsel %vm10476, %v10656, %v10658
      %v10660 = vrot.slane %v10054, 6
      %v10661 = vsel %vm10476, %v10658, %v10660
      %v10662 = vrot.slane %v10055, 6
      %v10663 = vsel %vm10476, %v10660, %v10662
      %v10664 = vrot.slane %v10056, 6
      %v10665 = vsel %vm10476, %v10662, %v10664
      %v10666 = vrot.slane %v10057, 6
      %v10667 = vsel %vm10476, %v10664, %v10666
      %v10668 = vrot.slane %v10058, 6
      %v10669 = vsel %vm10476, %v10666, %v10668
      %v10670 = vrot.slane %v10059, 6
      %v10671 = vsel %vm10476, %v10668, %v10670
      %v10672 = vrot.slane %v10060, 6
      %v10673 = vsel %vm10476, %v10670, %v10672
      %v10674 = vrot.slane %v10061, 6
      %v10675 = vsel %vm10476, %v10672, %v10674
      %v10676 = vrot.slane %v10062, 6
      %v10677 = vsel %vm10476, %v10674, %v10676
      %v10678 = vrot.slane %v10063, 6
      %v10679 = vsel %vm10476, %v10676, %v10678
      %v10680 = vrot.slane %v10064, 6
      %v10681 = vsel %vm10476, %v10678, %v10680
      %v10682 = vrot.slane %v10065, 6
      %v10683 = vsel %vm10476, %v10680, %v10682
      %v10684 = vrot.slane %v10066, 6
      %v10685 = vsel %vm10476, %v10682, %v10684
      %v10686 = vrot.slane %v10067, 6
      %v10687 = vsel %vm10476, %v10684, %v10686
      %v10688 = vrot.slane %v10068, 6
      %v10689 = vsel %vm10476, %v10686, %v10688
      %v10690 = vrot.slane %v10069, 6
      %v10691 = vsel %vm10476, %v10688, %v10690
      %v10692 = vrot.slane %v10070, 6
      %v10693 = vsel %vm10476, %v10690, %v10692
      %v10694 = vrot.slane %v10071, 6
      %v10695 = vsel %vm10476, %v10692, %v10694
      %v10696 = vrot.slane %v10072, 6
      %v10697 = vsel %vm10476, %v10694, %v10696
      %v10698 = vrot.slane %v10073, 6
      %v10699 = vsel %vm10476, %v10696, %v10698
      %v10700 = vrot.slane %v10074, 6
      %v10701 = vsel %vm10476, %v10698, %v10700
      %v10702 = vrot.slane %v10075, 6
      %v10703 = vsel %vm10476, %v10700, %v10702
      %v10704 = vrot.slane %v10076, 6
      %v10705 = vsel %vm10476, %v10702, %v10704
      %v10706 = vrot.slane %v10077, 6
      %v10707 = vsel %vm10476, %v10704, %v10706
      %v10708 = vrot.slane %v10078, 6
      %v10709 = vsel %vm10476, %v10706, %v10708
      %v10710 = vrot.slane %v10079, 6
      %v10711 = vsel %vm10476, %v10708, %v10710
      %v10712 = vrot.slane %v10080, 6
      %v10713 = vsel %vm10476, %v10710, %v10712
      %v10714 = vrot.slane %v10081, 6
      %v10715 = vsel %vm10476, %v10712, %v10714
      %v10716 = vrot.slane %v10082, 6
      %v10717 = vsel %vm10476, %v10714, %v10716
      %v10718 = vrot.slane %v10083, 6
      %v10719 = vsel %vm10476, %v10716, %v10718
      %v10720 = vrot.slane %v10084, 6
      %v10721 = vsel %vm10476, %v10718, %v10720
      %v10722 = vrot.slane %v10085, 6
      %v10723 = vsel %vm10476, %v10720, %v10722
      %v10724 = vrot.slane %v10086, 6
      %v10725 = vsel %vm10476, %v10722, %v10724
      %v10726 = vrot.slane %v10087, 6
      %v10727 = vsel %vm10476, %v10724, %v10726
      %v10728 = vrot.slane %v10088, 6
      %v10729 = vsel %vm10476, %v10726, %v10728
      %v10730 = vrot.slane %v10089, 6
      %v10731 = vsel %vm10476, %v10728, %v10730
      %v10732 = vrot.slane %v10090, 6
      %v10733 = vsel %vm10476, %v10730, %v10732
      %v10734 = vrot.slane %v10091, 6
      %v10735 = vsel %vm10476, %v10732, %v10734
      %v10736 = vrot.slane %v10092, 6
      %v10737 = vsel %vm10476, %v10734, %v10736
      %v10738 = vrot.slane %v10093, 6
      %v10739 = vsel %vm10476, %v10736, %v10738
      %v10740 = vrot.slane %v10094, 6
      %v10741 = vsel %vm10476, %v10738, %v10740
      %v10742 = vrot.slane %v10095, 6
      %v10743 = vsel %vm10476, %v10740, %v10742
      %v10744 = vrot.slane %v10096, 6
      %v10745 = vsel %vm10476, %v10742, %v10744
      %v10746 = vrot.slane %v10097, 6
      %v10747 = vsel %vm10476, %v10744, %v10746
      %v10748 = vrot.slane %v10098, 6
      %v10749 = vsel %vm10476, %v10746, %v10748
      %v10750 = vrot.slane %v10099, 6
      %v10751 = vsel %vm10476, %v10748, %v10750
      %v10752 = vrot.slane %v10100, 6
      %v10753 = vsel %vm10476, %v10750, %v10752
      %v10754 = vrot.slane %v10101, 6
      %v10755 = vsel %vm10476, %v10752, %v10754
      %v10756 = vrot.slane %v10102, 6
      %v10757 = vsel %vm10476, %v10754, %v10756
      %v10758 = vrot.slane %v10103, 6
      %v10759 = vsel %vm10476, %v10756, %v10758
      %v10760 = vrot.slane %v10104, 6
      %v10761 = vsel %vm10476, %v10758, %v10760
      %v10762 = vrot.slane %v10105, 6
      %v10763 = vsel %vm10476, %v10760, %v10762
      %v10764 = vrot.slane %v10106, 6
      %v10765 = vsel %vm10476, %v10762, %v10764
      %v10766 = vrot.slane %v10107, 6
      %v10767 = vsel %vm10476, %v10764, %v10766
      %v10768 = vrot.slane %v10108, 6
      %v10769 = vsel %vm10476, %v10766, %v10768
      %v10770 = vrot.slane %v10109, 6
      %v10771 = vsel %vm10476, %v10768, %v10770
      %v10772 = vrot.slane %v10110, 6
      %v10773 = vsel %vm10476, %v10770, %v10772
      %v10774 = vrot.slane %v10111, 6
      %v10775 = vsel %vm10476, %v10772, %v10774
      %v10776 = vrot.slane %v10112, 6
      %v10777 = vsel %vm10476, %v10774, %v10776
      %v10778 = vrot.slane %v10113, 6
      %v10779 = vsel %vm10476, %v10776, %v10778
      %v10780 = vrot.slane %v10114, 6
      %v10781 = vsel %vm10476, %v10778, %v10780
      %v10782 = vrot.slane %v10115, 6
      %v10783 = vsel %vm10476, %v10780, %v10782
      %v10784 = vrot.slane %v10116, 6
      %v10785 = vsel %vm10476, %v10782, %v10784
      %v10786 = vrot.slane %v10117, 6
      %v10787 = vsel %vm10476, %v10784, %v10786
      %v10788 = vrot.slane %v10118, 6
      %v10789 = vsel %vm10476, %v10786, %v10788
      %v10790 = vrot.slane %v10119, 6
      %v10791 = vsel %vm10476, %v10788, %v10790
      %v10792 = vrot.slane %v10120, 6
      %v10793 = vsel %vm10476, %v10790, %v10792
      %v10794 = vrot.slane %v10121, 6
      %v10795 = vsel %vm10476, %v10792, %v10794
      %v10796 = vrot.slane %v10122, 6
      %v10797 = vsel %vm10476, %v10794, %v10796
      %v10798 = vrot.slane %v10123, 6
      %v10799 = vsel %vm10476, %v10796, %v10798
      %v10800 = vrot.slane %v10124, 6
      %v10801 = vsel %vm10476, %v10798, %v10800
      %v10802 = vrot.slane %v10125, 6
      %v10803 = vsel %vm10476, %v10800, %v10802
      %v10804 = vrot.slane %v10126, 6
      %v10805 = vsel %vm10476, %v10802, %v10804
      %v10806 = vrot.slane %v10127, 6
      %v10807 = vsel %vm10476, %v10804, %v10806
      %v10808 = vrot.slane %v10128, 6
      %v10809 = vsel %vm10476, %v10806, %v10808
      %v10810 = vrot.slane %v10129, 6
      %v10811 = vsel %vm10476, %v10808, %v10810
      %v10812 = vrot.slane %v10130, 6
      %v10813 = vsel %vm10476, %v10810, %v10812
      %v10814 = vrot.slane %v10131, 6
      %v10815 = vsel %vm10476, %v10812, %v10814
      %v10816 = vrot.slane %v10132, 6
      %v10817 = vsel %vm10476, %v10814, %v10816
      %v10818 = vrot.slane %v10133, 6
      %v10819 = vsel %vm10476, %v10816, %v10818
      %v10820 = vrot.slane %v10134, 6
      %v10821 = vsel %vm10476, %v10818, %v10820
      %v10822 = vrot.slane %v10135, 6
      %v10823 = vsel %vm10476, %v10820, %v10822
      %v10824 = vrot.slane %v10136, 6
      %v10825 = vsel %vm10476, %v10822, %v10824
      %v10826 = vrot.slane %v10137, 6
      %v10827 = vsel %vm10476, %v10824, %v10826
      %v10828 = vrot.slane %v10138, 6
      %v10829 = vsel %vm10476, %v10826, %v10828
      %v10830 = vrot.slane %v10139, 6
      %v10831 = vsel %vm10476, %v10828, %v10830
      %v10832 = vrot.slane %v10140, 6
      %v10833 = vsel %vm10476, %v10830, %v10832
      %v10834 = vrot.slane %v10141, 6
      %v10835 = vsel %vm10476, %v10832, %v10834
      %v10836 = vrot.slane %v10142, 6
      %v10837 = vsel %vm10476, %v10834, %v10836
      %v10838 = vrot.slane %v10143, 6
      %v10839 = vsel %vm10476, %v10836, %v10838
      %v10840 = vrot.slane %v10144, 6
      %v10841 = vsel %vm10476, %v10838, %v10840
      %v10842 = vrot.slane %v10145, 6
      %v10843 = vsel %vm10476, %v10840, %v10842
      %v10844 = vrot.slane %v10146, 6
      %v10845 = vsel %vm10476, %v10842, %v10844
      %v10846 = vrot.slane %v10147, 6
      %v10847 = vsel %vm10476, %v10844, %v10846
      %v10848 = vrot.slane %v10148, 6
      %v10849 = vsel %vm10476, %v10846, %v10848
      %v10850 = vrot.slane %v10149, 6
      %v10851 = vsel %vm10476, %v10848, %v10850
      %v10852 = vrot.slane %v10150, 6
      %v10853 = vsel %vm10476, %v10850, %v10852
      %v10854 = vrot.slane %v10151, 6
      %v10855 = vsel %vm10476, %v10852, %v10854
      %v10856 = vrot.slane %v10152, 6
      %v10857 = vsel %vm10476, %v10854, %v10856
      %v10858 = vrot.slane %v10153, 6
      %v10859 = vsel %vm10476, %v10856, %v10858
      %v10860 = vrot.slane %v10154, 6
      %v10861 = vsel %vm10476, %v10858, %v10860
      %v10862 = vrot.slane %v10155, 6
      %v10863 = vsel %vm10476, %v10860, %v10862
      %v10864 = vrot.slane %v10156, 6
      %v10865 = vsel %vm10476, %v10862, %v10864
      %v10866 = vrot.slane %v10157, 6
      %v10867 = vsel %vm10476, %v10864, %v10866
      %v10868 = vrot.slane %v10158, 6
      %v10869 = vsel %vm10476, %v10866, %v10868
      %v10870 = vrot.slane %v10159, 6
      %v10871 = vsel %vm10476, %v10868, %v10870
      %v10872 = vrot.slane %v10160, 6
      %v10873 = vsel %vm10476, %v10870, %v10872
      %v10874 = vrot.slane %v10161, 6
      %v10875 = vsel %vm10476, %v10872, %v10874
      %v10876 = vrot.slane %v10162, 6
      %v10877 = vsel %vm10476, %v10874, %v10876
      %v10878 = vrot.slane %v10163, 6
      %v10879 = vsel %vm10476, %v10876, %v10878
      %v10880 = vrot.slane %v10164, 6
      %v10881 = vsel %vm10476, %v10878, %v10880
      %v10882 = vrot.slane %v10165, 6
      %v10883 = vsel %vm10476, %v10880, %v10882
      %v10884 = vrot.slane %v10166, 6
      %v10885 = vsel %vm10476, %v10882, %v10884
      %v10886 = vrot.slane %v10167, 6
      %v10887 = vsel %vm10476, %v10884, %v10886
      %v10888 = vrot.slane %v10168, 6
      %v10889 = vsel %vm10476, %v10886, %v10888
      %v10890 = vrot.slane %v10169, 6
      %v10891 = vsel %vm10476, %v10888, %v10890
      %v10892 = vrot.slane %v10170, 6
      %v10893 = vsel %vm10476, %v10890, %v10892
      %v10894 = vrot.slane %v10171, 6
      %v10895 = vsel %vm10476, %v10892, %v10894
      %v10896 = vrot.slane %v10172, 6
      %v10897 = vsel %vm10476, %v10894, %v10896
      %v10898 = vrot.slane %v10173, 6
      %v10899 = vsel %vm10476, %v10896, %v10898
      %v10900 = vrot.slane %v10174, 6
      %v10901 = vsel %vm10476, %v10898, %v10900
      %v10902 = vrot.slane %v10175, 6
      %v10903 = vsel %vm10476, %v10900, %v10902
      %v10904 = vrot.slane %v10176, 6
      %v10905 = vsel %vm10476, %v10902, %v10904
      %v10906 = vrot.slane %v10177, 6
      %v10907 = vsel %vm10476, %v10904, %v10906
      %v10908 = vrot.slane %v10178, 6
      %v10909 = vsel %vm10476, %v10906, %v10908
      %v10910 = vrot.slane %v10179, 6
      %v10911 = vsel %vm10476, %v10908, %v10910
      %v10912 = vrot.slane %v10180, 6
      %v10913 = vsel %vm10476, %v10910, %v10912
      %v10914 = vrot.slane %v10181, 6
      %v10915 = vsel %vm10476, %v10912, %v10914
      %v10916 = vrot.slane %v10182, 6
      %v10917 = vsel %vm10476, %v10914, %v10916
      %v10918 = vrot.slane %v10183, 6
      %v10919 = vsel %vm10476, %v10916, %v10918
      %v10920 = vrot.slane %v10184, 6
      %v10921 = vsel %vm10476, %v10918, %v10920
      %v10922 = vrot.slane %v10185, 6
      %v10923 = vsel %vm10476, %v10920, %v10922
      %v10924 = vrot.slane %v10186, 6
      %v10925 = vsel %vm10476, %v10922, %v10924
      %v10926 = vrot.slane %v10187, 6
      %v10927 = vsel %vm10476, %v10924, %v10926
      %v10928 = vrot.slane %v10188, 6
      %v10929 = vsel %vm10476, %v10926, %v10928
      %v10930 = vrot.slane %v10189, 6
      %v10931 = vsel %vm10476, %v10928, %v10930
      %v10932 = vrot.slane %v10190, 6
      %v10933 = vsel %vm10476, %v10930, %v10932
      %v10934 = vrot.slane %v10191, 6
      %v10935 = vsel %vm10476, %v10932, %v10934
      %v10936 = vrot.slane %v10192, 6
      %v10937 = vsel %vm10476, %v10934, %v10936
      %v10938 = vrot.slane %v10193, 6
      %v10939 = vsel %vm10476, %v10936, %v10938
      %v10940 = vrot.slane %v10194, 6
      %v10941 = vsel %vm10476, %v10938, %v10940
      %v10942 = vrot.slane %v10195, 6
      %v10943 = vsel %vm10476, %v10940, %v10942
      %v10944 = vrot.slane %v10196, 6
      %v10945 = vsel %vm10476, %v10942, %v10944
      %v10946 = vrot.slane %v10197, 6
      %v10947 = vsel %vm10476, %v10944, %v10946
      %v10948 = vrot.slane %v10198, 6
      %v10949 = vsel %vm10476, %v10946, %v10948
      %v10950 = vrot.slane %v10199, 6
      %v10951 = vsel %vm10476, %v10948, %v10950
      %v10952 = vrot.slane %v10200, 6
      %v10953 = vsel %vm10476, %v10950, %v10952
      %v10954 = vrot.slane %v10201, 6
      %v10955 = vsel %vm10476, %v10952, %v10954
      %v10956 = vrot.slane %v10202, 6
      %v10957 = vsel %vm10476, %v10954, %v10956
      %v10958 = vrot.slane %v10203, 6
      %v10959 = vsel %vm10476, %v10956, %v10958
      %v10960 = vrot.slane %v10204, 6
      %v10961 = vsel %vm10476, %v10958, %v10960
      %v10962 = vrot.slane %v10205, 6
      %v10963 = vsel %vm10476, %v10960, %v10962
      %v10964 = vrot.slane %v10206, 6
      %v10965 = vsel %vm10476, %v10962, %v10964
      %v10966 = vrot.slane %v10207, 6
      %v10967 = vsel %vm10476, %v10964, %v10966
      %v10968 = vrot.slane %v10208, 6
      %v10969 = vsel %vm10476, %v10966, %v10968
      %v10970 = vrot.slane %v10209, 6
      %v10971 = vsel %vm10476, %v10968, %v10970
      %v10972 = vrot.slane %v10210, 6
      %v10973 = vsel %vm10476, %v10970, %v10972
      %v10974 = vrot.slane %v10211, 6
      %v10975 = vsel %vm10476, %v10972, %v10974
      %v10976 = vrot.slane %v10212, 6
      %v10977 = vsel %vm10476, %v10974, %v10976
      %v10978 = vrot.slane %v10213, 6
      %v10979 = vsel %vm10476, %v10976, %v10978
      %v10980 = vrot.slane %v10214, 6
      %v10981 = vsel %vm10476, %v10978, %v10980
      %v10982 = vrot.slane %v10215, 6
      %v10983 = vsel %vm10476, %v10980, %v10982
      %v10984 = vrot.slane %v10216, 6
      %v10985 = vsel %vm10476, %v10982, %v10984
      %v10986 = vrot.slane %v10217, 6
      %v10987 = vsel %vm10476, %v10984, %v10986
      %v10988 = vrot.slane %v10218, 6
      %v10989 = vsel %vm10476, %v10986, %v10988
      %v11246 = vadd.f32 %v9702, %v10479
      %v11247 = vadd.f32 %v9703, %v10481
      %v11248 = vadd.f32 %v9704, %v10483
      %v11249 = vadd.f32 %v9705, %v10485
      %v11250 = vadd.f32 %v9706, %v10487
      %v11251 = vadd.f32 %v9707, %v10489
      %v11252 = vadd.f32 %v9708, %v10491
      %v11253 = vadd.f32 %v9709, %v10493
      %v11254 = vadd.f32 %v9710, %v10495
      %v11255 = vadd.f32 %v9711, %v10497
      %v11256 = vadd.f32 %v9712, %v10499
      %v11257 = vadd.f32 %v9713, %v10501
      %v11258 = vadd.f32 %v9714, %v10503
      %v11259 = vadd.f32 %v9715, %v10505
      %v11260 = vadd.f32 %v9716, %v10507
      %v11261 = vadd.f32 %v9717, %v10509
      %v11262 = vadd.f32 %v9718, %v10511
      %v11263 = vadd.f32 %v9719, %v10513
      %v11264 = vadd.f32 %v9720, %v10515
      %v11265 = vadd.f32 %v9721, %v10517
      %v11266 = vadd.f32 %v9722, %v10519
      %v11267 = vadd.f32 %v9723, %v10521
      %v11268 = vadd.f32 %v9724, %v10523
      %v11269 = vadd.f32 %v9725, %v10525
      %v11270 = vadd.f32 %v9726, %v10527
      %v11271 = vadd.f32 %v9727, %v10529
      %v11272 = vadd.f32 %v9728, %v10531
      %v11273 = vadd.f32 %v9729, %v10533
      %v11274 = vadd.f32 %v9730, %v10535
      %v11275 = vadd.f32 %v9731, %v10537
      %v11276 = vadd.f32 %v9732, %v10539
      %v11277 = vadd.f32 %v9733, %v10541
      %v11278 = vadd.f32 %v9734, %v10543
      %v11279 = vadd.f32 %v9735, %v10545
      %v11280 = vadd.f32 %v9736, %v10547
      %v11281 = vadd.f32 %v9737, %v10549
      %v11282 = vadd.f32 %v9738, %v10551
      %v11283 = vadd.f32 %v9739, %v10553
      %v11284 = vadd.f32 %v9740, %v10555
      %v11285 = vadd.f32 %v9741, %v10557
      %v11286 = vadd.f32 %v9742, %v10559
      %v11287 = vadd.f32 %v9743, %v10561
      %v11288 = vadd.f32 %v9744, %v10563
      %v11289 = vadd.f32 %v9745, %v10565
      %v11290 = vadd.f32 %v9746, %v10567
      %v11291 = vadd.f32 %v9747, %v10569
      %v11292 = vadd.f32 %v9748, %v10571
      %v11293 = vadd.f32 %v9749, %v10573
      %v11294 = vadd.f32 %v9750, %v10575
      %v11295 = vadd.f32 %v9751, %v10577
      %v11296 = vadd.f32 %v9752, %v10579
      %v11297 = vadd.f32 %v9753, %v10581
      %v11298 = vadd.f32 %v9754, %v10583
      %v11299 = vadd.f32 %v9755, %v10585
      %v11300 = vadd.f32 %v9756, %v10587
      %v11301 = vadd.f32 %v9757, %v10589
      %v11302 = vadd.f32 %v9758, %v10591
      %v11303 = vadd.f32 %v9759, %v10593
      %v11304 = vadd.f32 %v9760, %v10595
      %v11305 = vadd.f32 %v9761, %v10597
      %v11306 = vadd.f32 %v9762, %v10599
      %v11307 = vadd.f32 %v9763, %v10601
      %v11308 = vadd.f32 %v9764, %v10603
      %v11309 = vadd.f32 %v9765, %v10605
      %v11310 = vadd.f32 %v9766, %v10607
      %v11311 = vadd.f32 %v9767, %v10609
      %v11312 = vadd.f32 %v9768, %v10611
      %v11313 = vadd.f32 %v9769, %v10613
      %v11314 = vadd.f32 %v9770, %v10615
      %v11315 = vadd.f32 %v9771, %v10617
      %v11316 = vadd.f32 %v9772, %v10619
      %v11317 = vadd.f32 %v9773, %v10621
      %v11318 = vadd.f32 %v9774, %v10623
      %v11319 = vadd.f32 %v9775, %v10625
      %v11320 = vadd.f32 %v9776, %v10627
      %v11321 = vadd.f32 %v9777, %v10629
      %v11322 = vadd.f32 %v9778, %v10631
      %v11323 = vadd.f32 %v9779, %v10633
      %v11324 = vadd.f32 %v9780, %v10635
      %v11325 = vadd.f32 %v9781, %v10637
      %v11326 = vadd.f32 %v9782, %v10639
      %v11327 = vadd.f32 %v9783, %v10641
      %v11328 = vadd.f32 %v9784, %v10643
      %v11329 = vadd.f32 %v9785, %v10645
      %v11330 = vadd.f32 %v9786, %v10647
      %v11331 = vadd.f32 %v9787, %v10649
      %v11332 = vadd.f32 %v9788, %v10651
      %v11333 = vadd.f32 %v9789, %v10653
      %v11334 = vadd.f32 %v9790, %v10655
      %v11335 = vadd.f32 %v9791, %v10657
      %v11336 = vadd.f32 %v9792, %v10659
      %v11337 = vadd.f32 %v9793, %v10661
      %v11338 = vadd.f32 %v9794, %v10663
      %v11339 = vadd.f32 %v9795, %v10665
      %v11340 = vadd.f32 %v9796, %v10667
      %v11341 = vadd.f32 %v9797, %v10669
      %v11342 = vadd.f32 %v9798, %v10671
      %v11343 = vadd.f32 %v9799, %v10673
      %v11344 = vadd.f32 %v9800, %v10675
      %v11345 = vadd.f32 %v9801, %v10677
      %v11346 = vadd.f32 %v9802, %v10679
      %v11347 = vadd.f32 %v9803, %v10681
      %v11348 = vadd.f32 %v9804, %v10683
      %v11349 = vadd.f32 %v9805, %v10685
      %v11350 = vadd.f32 %v9806, %v10687
      %v11351 = vadd.f32 %v9807, %v10689
      %v11352 = vadd.f32 %v9808, %v10691
      %v11353 = vadd.f32 %v9809, %v10693
      %v11354 = vadd.f32 %v9810, %v10695
      %v11355 = vadd.f32 %v9811, %v10697
      %v11356 = vadd.f32 %v9812, %v10699
      %v11357 = vadd.f32 %v9813, %v10701
      %v11358 = vadd.f32 %v9814, %v10703
      %v11359 = vadd.f32 %v9815, %v10705
      %v11360 = vadd.f32 %v9816, %v10707
      %v11361 = vadd.f32 %v9817, %v10709
      %v11362 = vadd.f32 %v9818, %v10711
      %v11363 = vadd.f32 %v9819, %v10713
      %v11364 = vadd.f32 %v9820, %v10715
      %v11365 = vadd.f32 %v9821, %v10717
      %v11366 = vadd.f32 %v9822, %v10719
      %v11367 = vadd.f32 %v9823, %v10721
      %v11368 = vadd.f32 %v9824, %v10723
      %v11369 = vadd.f32 %v9825, %v10725
      %v11370 = vadd.f32 %v9826, %v10727
      %v11371 = vadd.f32 %v9827, %v10729
      %v11372 = vadd.f32 %v9828, %v10731
      %v11373 = vadd.f32 %v9829, %v10733
      %v11374 = vadd.f32 %v9830, %v10735
      %v11375 = vadd.f32 %v9831, %v10737
      %v11376 = vadd.f32 %v9832, %v10739
      %v11377 = vadd.f32 %v9833, %v10741
      %v11378 = vadd.f32 %v9834, %v10743
      %v11379 = vadd.f32 %v9835, %v10745
      %v11380 = vadd.f32 %v9836, %v10747
      %v11381 = vadd.f32 %v9837, %v10749
      %v11382 = vadd.f32 %v9838, %v10751
      %v11383 = vadd.f32 %v9839, %v10753
      %v11384 = vadd.f32 %v9840, %v10755
      %v11385 = vadd.f32 %v9841, %v10757
      %v11386 = vadd.f32 %v9842, %v10759
      %v11387 = vadd.f32 %v9843, %v10761
      %v11388 = vadd.f32 %v9844, %v10763
      %v11389 = vadd.f32 %v9845, %v10765
      %v11390 = vadd.f32 %v9846, %v10767
      %v11391 = vadd.f32 %v9847, %v10769
      %v11392 = vadd.f32 %v9848, %v10771
      %v11393 = vadd.f32 %v9849, %v10773
      %v11394 = vadd.f32 %v9850, %v10775
      %v11395 = vadd.f32 %v9851, %v10777
      %v11396 = vadd.f32 %v9852, %v10779
      %v11397 = vadd.f32 %v9853, %v10781
      %v11398 = vadd.f32 %v9854, %v10783
      %v11399 = vadd.f32 %v9855, %v10785
      %v11400 = vadd.f32 %v9856, %v10787
      %v11401 = vadd.f32 %v9857, %v10789
      %v11402 = vadd.f32 %v9858, %v10791
      %v11403 = vadd.f32 %v9859, %v10793
      %v11404 = vadd.f32 %v9860, %v10795
      %v11405 = vadd.f32 %v9861, %v10797
      %v11406 = vadd.f32 %v9862, %v10799
      %v11407 = vadd.f32 %v9863, %v10801
      %v11408 = vadd.f32 %v9864, %v10803
      %v11409 = vadd.f32 %v9865, %v10805
      %v11410 = vadd.f32 %v9866, %v10807
      %v11411 = vadd.f32 %v9867, %v10809
      %v11412 = vadd.f32 %v9868, %v10811
      %v11413 = vadd.f32 %v9869, %v10813
      %v11414 = vadd.f32 %v9870, %v10815
      %v11415 = vadd.f32 %v9871, %v10817
      %v11416 = vadd.f32 %v9872, %v10819
      %v11417 = vadd.f32 %v9873, %v10821
      %v11418 = vadd.f32 %v9874, %v10823
      %v11419 = vadd.f32 %v9875, %v10825
      %v11420 = vadd.f32 %v9876, %v10827
      %v11421 = vadd.f32 %v9877, %v10829
      %v11422 = vadd.f32 %v9878, %v10831
      %v11423 = vadd.f32 %v9879, %v10833
      %v11424 = vadd.f32 %v9880, %v10835
      %v11425 = vadd.f32 %v9881, %v10837
      %v11426 = vadd.f32 %v9882, %v10839
      %v11427 = vadd.f32 %v9883, %v10841
      %v11428 = vadd.f32 %v9884, %v10843
      %v11429 = vadd.f32 %v9885, %v10845
      %v11430 = vadd.f32 %v9886, %v10847
      %v11431 = vadd.f32 %v9887, %v10849
      %v11432 = vadd.f32 %v9888, %v10851
      %v11433 = vadd.f32 %v9889, %v10853
      %v11434 = vadd.f32 %v9890, %v10855
      %v11435 = vadd.f32 %v9891, %v10857
      %v11436 = vadd.f32 %v9892, %v10859
      %v11437 = vadd.f32 %v9893, %v10861
      %v11438 = vadd.f32 %v9894, %v10863
      %v11439 = vadd.f32 %v9895, %v10865
      %v11440 = vadd.f32 %v9896, %v10867
      %v11441 = vadd.f32 %v9897, %v10869
      %v11442 = vadd.f32 %v9898, %v10871
      %v11443 = vadd.f32 %v9899, %v10873
      %v11444 = vadd.f32 %v9900, %v10875
      %v11445 = vadd.f32 %v9901, %v10877
      %v11446 = vadd.f32 %v9902, %v10879
      %v11447 = vadd.f32 %v9903, %v10881
      %v11448 = vadd.f32 %v9904, %v10883
      %v11449 = vadd.f32 %v9905, %v10885
      %v11450 = vadd.f32 %v9906, %v10887
      %v11451 = vadd.f32 %v9907, %v10889
      %v11452 = vadd.f32 %v9908, %v10891
      %v11453 = vadd.f32 %v9909, %v10893
      %v11454 = vadd.f32 %v9910, %v10895
      %v11455 = vadd.f32 %v9911, %v10897
      %v11456 = vadd.f32 %v9912, %v10899
      %v11457 = vadd.f32 %v9913, %v10901
      %v11458 = vadd.f32 %v9914, %v10903
      %v11459 = vadd.f32 %v9915, %v10905
      %v11460 = vadd.f32 %v9916, %v10907
      %v11461 = vadd.f32 %v9917, %v10909
      %v11462 = vadd.f32 %v9918, %v10911
      %v11463 = vadd.f32 %v9919, %v10913
      %v11464 = vadd.f32 %v9920, %v10915
      %v11465 = vadd.f32 %v9921, %v10917
      %v11466 = vadd.f32 %v9922, %v10919
      %v11467 = vadd.f32 %v9923, %v10921
      %v11468 = vadd.f32 %v9924, %v10923
      %v11469 = vadd.f32 %v9925, %v10925
      %v11470 = vadd.f32 %v9926, %v10927
      %v11471 = vadd.f32 %v9927, %v10929
      %v11472 = vadd.f32 %v9928, %v10931
      %v11473 = vadd.f32 %v9929, %v10933
      %v11474 = vadd.f32 %v9930, %v10935
      %v11475 = vadd.f32 %v9931, %v10937
      %v11476 = vadd.f32 %v9932, %v10939
      %v11477 = vadd.f32 %v9933, %v10941
      %v11478 = vadd.f32 %v9934, %v10943
      %v11479 = vadd.f32 %v9935, %v10945
      %v11480 = vadd.f32 %v9936, %v10947
      %v11481 = vadd.f32 %v9937, %v10949
      %v11482 = vadd.f32 %v9938, %v10951
      %v11483 = vadd.f32 %v9939, %v10953
      %v11484 = vadd.f32 %v9940, %v10955
      %v11485 = vadd.f32 %v9941, %v10957
      %v11486 = vadd.f32 %v9942, %v10959
      %v11487 = vadd.f32 %v9943, %v10961
      %v11488 = vadd.f32 %v9944, %v10963
      %v11489 = vadd.f32 %v9945, %v10965
      %v11490 = vadd.f32 %v9946, %v10967
      %v11491 = vadd.f32 %v9947, %v10969
      %v11492 = vadd.f32 %v9948, %v10971
      %v11493 = vadd.f32 %v9949, %v10973
      %v11494 = vadd.f32 %v9950, %v10975
      %v11495 = vadd.f32 %v9951, %v10977
      %v11496 = vadd.f32 %v9952, %v10979
      %v11497 = vadd.f32 %v9953, %v10981
      %v11498 = vadd.f32 %v9954, %v10983
      %v11499 = vadd.f32 %v9955, %v10985
      %v11500 = vadd.f32 %v9956, %v10987
      %v11501 = vadd.f32 %v9957, %v10989
      %v11502 = vpack.c.bf16 %v11247, %v11246
      %v11503 = vpack.c.bf16 %v11249, %v11248
      %v11504 = vpack.c.bf16 %v11251, %v11250
      %v11505 = vpack.c.bf16 %v11253, %v11252
      %v11506 = vpack.c.bf16 %v11255, %v11254
      %v11507 = vpack.c.bf16 %v11257, %v11256
      %v11508 = vpack.c.bf16 %v11259, %v11258
      %v11509 = vpack.c.bf16 %v11261, %v11260
      %v11510 = vpack.c.bf16 %v11263, %v11262
      %v11511 = vpack.c.bf16 %v11265, %v11264
      %v11512 = vpack.c.bf16 %v11267, %v11266
      %v11513 = vpack.c.bf16 %v11269, %v11268
      %v11514 = vpack.c.bf16 %v11271, %v11270
      %v11515 = vpack.c.bf16 %v11273, %v11272
      %v11516 = vpack.c.bf16 %v11275, %v11274
      %v11517 = vpack.c.bf16 %v11277, %v11276
      %v11518 = vpack.c.bf16 %v11279, %v11278
      %v11519 = vpack.c.bf16 %v11281, %v11280
      %v11520 = vpack.c.bf16 %v11283, %v11282
      %v11521 = vpack.c.bf16 %v11285, %v11284
      %v11522 = vpack.c.bf16 %v11287, %v11286
      %v11523 = vpack.c.bf16 %v11289, %v11288
      %v11524 = vpack.c.bf16 %v11291, %v11290
      %v11525 = vpack.c.bf16 %v11293, %v11292
      %v11526 = vpack.c.bf16 %v11295, %v11294
      %v11527 = vpack.c.bf16 %v11297, %v11296
      %v11528 = vpack.c.bf16 %v11299, %v11298
      %v11529 = vpack.c.bf16 %v11301, %v11300
      %v11530 = vpack.c.bf16 %v11303, %v11302
      %v11531 = vpack.c.bf16 %v11305, %v11304
      %v11532 = vpack.c.bf16 %v11307, %v11306
      %v11533 = vpack.c.bf16 %v11309, %v11308
      %v11534 = vpack.c.bf16 %v11311, %v11310
      %v11535 = vpack.c.bf16 %v11313, %v11312
      %v11536 = vpack.c.bf16 %v11315, %v11314
      %v11537 = vpack.c.bf16 %v11317, %v11316
      %v11538 = vpack.c.bf16 %v11319, %v11318
      %v11539 = vpack.c.bf16 %v11321, %v11320
      %v11540 = vpack.c.bf16 %v11323, %v11322
      %v11541 = vpack.c.bf16 %v11325, %v11324
      %v11542 = vpack.c.bf16 %v11327, %v11326
      %v11543 = vpack.c.bf16 %v11329, %v11328
      %v11544 = vpack.c.bf16 %v11331, %v11330
      %v11545 = vpack.c.bf16 %v11333, %v11332
      %v11546 = vpack.c.bf16 %v11335, %v11334
      %v11547 = vpack.c.bf16 %v11337, %v11336
      %v11548 = vpack.c.bf16 %v11339, %v11338
      %v11549 = vpack.c.bf16 %v11341, %v11340
      %v11550 = vpack.c.bf16 %v11343, %v11342
      %v11551 = vpack.c.bf16 %v11345, %v11344
      %v11552 = vpack.c.bf16 %v11347, %v11346
      %v11553 = vpack.c.bf16 %v11349, %v11348
      %v11554 = vpack.c.bf16 %v11351, %v11350
      %v11555 = vpack.c.bf16 %v11353, %v11352
      %v11556 = vpack.c.bf16 %v11355, %v11354
      %v11557 = vpack.c.bf16 %v11357, %v11356
      %v11558 = vpack.c.bf16 %v11359, %v11358
      %v11559 = vpack.c.bf16 %v11361, %v11360
      %v11560 = vpack.c.bf16 %v11363, %v11362
      %v11561 = vpack.c.bf16 %v11365, %v11364
      %v11562 = vpack.c.bf16 %v11367, %v11366
      %v11563 = vpack.c.bf16 %v11369, %v11368
      %v11564 = vpack.c.bf16 %v11371, %v11370
      %v11565 = vpack.c.bf16 %v11373, %v11372
      %v11566 = vpack.c.bf16 %v11375, %v11374
      %v11567 = vpack.c.bf16 %v11377, %v11376
      %v11568 = vpack.c.bf16 %v11379, %v11378
      %v11569 = vpack.c.bf16 %v11381, %v11380
      %v11570 = vpack.c.bf16 %v11383, %v11382
      %v11571 = vpack.c.bf16 %v11385, %v11384
      %v11572 = vpack.c.bf16 %v11387, %v11386
      %v11573 = vpack.c.bf16 %v11389, %v11388
      %v11574 = vpack.c.bf16 %v11391, %v11390
      %v11575 = vpack.c.bf16 %v11393, %v11392
      %v11576 = vpack.c.bf16 %v11395, %v11394
      %v11577 = vpack.c.bf16 %v11397, %v11396
      %v11578 = vpack.c.bf16 %v11399, %v11398
      %v11579 = vpack.c.bf16 %v11401, %v11400
      %v11580 = vpack.c.bf16 %v11403, %v11402
      %v11581 = vpack.c.bf16 %v11405, %v11404
      %v11582 = vpack.c.bf16 %v11407, %v11406
      %v11583 = vpack.c.bf16 %v11409, %v11408
      %v11584 = vpack.c.bf16 %v11411, %v11410
      %v11585 = vpack.c.bf16 %v11413, %v11412
      %v11586 = vpack.c.bf16 %v11415, %v11414
      %v11587 = vpack.c.bf16 %v11417, %v11416
      %v11588 = vpack.c.bf16 %v11419, %v11418
      %v11589 = vpack.c.bf16 %v11421, %v11420
      %v11590 = vpack.c.bf16 %v11423, %v11422
      %v11591 = vpack.c.bf16 %v11425, %v11424
      %v11592 = vpack.c.bf16 %v11427, %v11426
      %v11593 = vpack.c.bf16 %v11429, %v11428
      %v11594 = vpack.c.bf16 %v11431, %v11430
      %v11595 = vpack.c.bf16 %v11433, %v11432
      %v11596 = vpack.c.bf16 %v11435, %v11434
      %v11597 = vpack.c.bf16 %v11437, %v11436
      %v11598 = vpack.c.bf16 %v11439, %v11438
      %v11599 = vpack.c.bf16 %v11441, %v11440
      %v11600 = vpack.c.bf16 %v11443, %v11442
      %v11601 = vpack.c.bf16 %v11445, %v11444
      %v11602 = vpack.c.bf16 %v11447, %v11446
      %v11603 = vpack.c.bf16 %v11449, %v11448
      %v11604 = vpack.c.bf16 %v11451, %v11450
      %v11605 = vpack.c.bf16 %v11453, %v11452
      %v11606 = vpack.c.bf16 %v11455, %v11454
      %v11607 = vpack.c.bf16 %v11457, %v11456
      %v11608 = vpack.c.bf16 %v11459, %v11458
      %v11609 = vpack.c.bf16 %v11461, %v11460
      %v11610 = vpack.c.bf16 %v11463, %v11462
      %v11611 = vpack.c.bf16 %v11465, %v11464
      %v11612 = vpack.c.bf16 %v11467, %v11466
      %v11613 = vpack.c.bf16 %v11469, %v11468
      %v11614 = vpack.c.bf16 %v11471, %v11470
      %v11615 = vpack.c.bf16 %v11473, %v11472
      %v11616 = vpack.c.bf16 %v11475, %v11474
      %v11617 = vpack.c.bf16 %v11477, %v11476
      %v11618 = vpack.c.bf16 %v11479, %v11478
      %v11619 = vpack.c.bf16 %v11481, %v11480
      %v11620 = vpack.c.bf16 %v11483, %v11482
      %v11621 = vpack.c.bf16 %v11485, %v11484
      %v11622 = vpack.c.bf16 %v11487, %v11486
      %v11623 = vpack.c.bf16 %v11489, %v11488
      %v11624 = vpack.c.bf16 %v11491, %v11490
      %v11625 = vpack.c.bf16 %v11493, %v11492
      %v11626 = vpack.c.bf16 %v11495, %v11494
      %v11627 = vpack.c.bf16 %v11497, %v11496
      %v11628 = vpack.c.bf16 %v11499, %v11498
      %v11629 = vpack.c.bf16 %v11501, %v11500
      %v11758 = vunpack.c.l.b16 %v11502
      %v11759 = vunpack.c.h.b16 %v11502
      %v11760 = vunpack.c.l.b16 %v11503
      %v11761 = vunpack.c.h.b16 %v11503
      %v11762 = vunpack.c.l.b16 %v11504
      %v11763 = vunpack.c.h.b16 %v11504
      %v11764 = vunpack.c.l.b16 %v11505
      %v11765 = vunpack.c.h.b16 %v11505
      %v11766 = vunpack.c.l.b16 %v11506
      %v11767 = vunpack.c.h.b16 %v11506
      %v11768 = vunpack.c.l.b16 %v11507
      %v11769 = vunpack.c.h.b16 %v11507
      %v11770 = vunpack.c.l.b16 %v11508
      %v11771 = vunpack.c.h.b16 %v11508
      %v11772 = vunpack.c.l.b16 %v11509
      %v11773 = vunpack.c.h.b16 %v11509
      %v11774 = vunpack.c.l.b16 %v11510
      %v11775 = vunpack.c.h.b16 %v11510
      %v11776 = vunpack.c.l.b16 %v11511
      %v11777 = vunpack.c.h.b16 %v11511
      %v11778 = vunpack.c.l.b16 %v11512
      %v11779 = vunpack.c.h.b16 %v11512
      %v11780 = vunpack.c.l.b16 %v11513
      %v11781 = vunpack.c.h.b16 %v11513
      %v11782 = vunpack.c.l.b16 %v11514
      %v11783 = vunpack.c.h.b16 %v11514
      %v11784 = vunpack.c.l.b16 %v11515
      %v11785 = vunpack.c.h.b16 %v11515
      %v11786 = vunpack.c.l.b16 %v11516
      %v11787 = vunpack.c.h.b16 %v11516
      %v11788 = vunpack.c.l.b16 %v11517
      %v11789 = vunpack.c.h.b16 %v11517
      %v11790 = vunpack.c.l.b16 %v11518
      %v11791 = vunpack.c.h.b16 %v11518
      %v11792 = vunpack.c.l.b16 %v11519
      %v11793 = vunpack.c.h.b16 %v11519
      %v11794 = vunpack.c.l.b16 %v11520
      %v11795 = vunpack.c.h.b16 %v11520
      %v11796 = vunpack.c.l.b16 %v11521
      %v11797 = vunpack.c.h.b16 %v11521
      %v11798 = vunpack.c.l.b16 %v11522
      %v11799 = vunpack.c.h.b16 %v11522
      %v11800 = vunpack.c.l.b16 %v11523
      %v11801 = vunpack.c.h.b16 %v11523
      %v11802 = vunpack.c.l.b16 %v11524
      %v11803 = vunpack.c.h.b16 %v11524
      %v11804 = vunpack.c.l.b16 %v11525
      %v11805 = vunpack.c.h.b16 %v11525
      %v11806 = vunpack.c.l.b16 %v11526
      %v11807 = vunpack.c.h.b16 %v11526
      %v11808 = vunpack.c.l.b16 %v11527
      %v11809 = vunpack.c.h.b16 %v11527
      %v11810 = vunpack.c.l.b16 %v11528
      %v11811 = vunpack.c.h.b16 %v11528
      %v11812 = vunpack.c.l.b16 %v11529
      %v11813 = vunpack.c.h.b16 %v11529
      %v11814 = vunpack.c.l.b16 %v11530
      %v11815 = vunpack.c.h.b16 %v11530
      %v11816 = vunpack.c.l.b16 %v11531
      %v11817 = vunpack.c.h.b16 %v11531
      %v11818 = vunpack.c.l.b16 %v11532
      %v11819 = vunpack.c.h.b16 %v11532
      %v11820 = vunpack.c.l.b16 %v11533
      %v11821 = vunpack.c.h.b16 %v11533
      %v11822 = vunpack.c.l.b16 %v11534
      %v11823 = vunpack.c.h.b16 %v11534
      %v11824 = vunpack.c.l.b16 %v11535
      %v11825 = vunpack.c.h.b16 %v11535
      %v11826 = vunpack.c.l.b16 %v11536
      %v11827 = vunpack.c.h.b16 %v11536
      %v11828 = vunpack.c.l.b16 %v11537
      %v11829 = vunpack.c.h.b16 %v11537
      %v11830 = vunpack.c.l.b16 %v11538
      %v11831 = vunpack.c.h.b16 %v11538
      %v11832 = vunpack.c.l.b16 %v11539
      %v11833 = vunpack.c.h.b16 %v11539
      %v11834 = vunpack.c.l.b16 %v11540
      %v11835 = vunpack.c.h.b16 %v11540
      %v11836 = vunpack.c.l.b16 %v11541
      %v11837 = vunpack.c.h.b16 %v11541
      %v11838 = vunpack.c.l.b16 %v11542
      %v11839 = vunpack.c.h.b16 %v11542
      %v11840 = vunpack.c.l.b16 %v11543
      %v11841 = vunpack.c.h.b16 %v11543
      %v11842 = vunpack.c.l.b16 %v11544
      %v11843 = vunpack.c.h.b16 %v11544
      %v11844 = vunpack.c.l.b16 %v11545
      %v11845 = vunpack.c.h.b16 %v11545
      %v11846 = vunpack.c.l.b16 %v11546
      %v11847 = vunpack.c.h.b16 %v11546
      %v11848 = vunpack.c.l.b16 %v11547
      %v11849 = vunpack.c.h.b16 %v11547
      %v11850 = vunpack.c.l.b16 %v11548
      %v11851 = vunpack.c.h.b16 %v11548
      %v11852 = vunpack.c.l.b16 %v11549
      %v11853 = vunpack.c.h.b16 %v11549
      %v11854 = vunpack.c.l.b16 %v11550
      %v11855 = vunpack.c.h.b16 %v11550
      %v11856 = vunpack.c.l.b16 %v11551
      %v11857 = vunpack.c.h.b16 %v11551
      %v11858 = vunpack.c.l.b16 %v11552
      %v11859 = vunpack.c.h.b16 %v11552
      %v11860 = vunpack.c.l.b16 %v11553
      %v11861 = vunpack.c.h.b16 %v11553
      %v11862 = vunpack.c.l.b16 %v11554
      %v11863 = vunpack.c.h.b16 %v11554
      %v11864 = vunpack.c.l.b16 %v11555
      %v11865 = vunpack.c.h.b16 %v11555
      %v11866 = vunpack.c.l.b16 %v11556
      %v11867 = vunpack.c.h.b16 %v11556
      %v11868 = vunpack.c.l.b16 %v11557
      %v11869 = vunpack.c.h.b16 %v11557
      %v11870 = vunpack.c.l.b16 %v11558
      %v11871 = vunpack.c.h.b16 %v11558
      %v11872 = vunpack.c.l.b16 %v11559
      %v11873 = vunpack.c.h.b16 %v11559
      %v11874 = vunpack.c.l.b16 %v11560
      %v11875 = vunpack.c.h.b16 %v11560
      %v11876 = vunpack.c.l.b16 %v11561
      %v11877 = vunpack.c.h.b16 %v11561
      %v11878 = vunpack.c.l.b16 %v11562
      %v11879 = vunpack.c.h.b16 %v11562
      %v11880 = vunpack.c.l.b16 %v11563
      %v11881 = vunpack.c.h.b16 %v11563
      %v11882 = vunpack.c.l.b16 %v11564
      %v11883 = vunpack.c.h.b16 %v11564
      %v11884 = vunpack.c.l.b16 %v11565
      %v11885 = vunpack.c.h.b16 %v11565
      %v11886 = vunpack.c.l.b16 %v11566
      %v11887 = vunpack.c.h.b16 %v11566
      %v11888 = vunpack.c.l.b16 %v11567
      %v11889 = vunpack.c.h.b16 %v11567
      %v11890 = vunpack.c.l.b16 %v11568
      %v11891 = vunpack.c.h.b16 %v11568
      %v11892 = vunpack.c.l.b16 %v11569
      %v11893 = vunpack.c.h.b16 %v11569
      %v11894 = vunpack.c.l.b16 %v11570
      %v11895 = vunpack.c.h.b16 %v11570
      %v11896 = vunpack.c.l.b16 %v11571
      %v11897 = vunpack.c.h.b16 %v11571
      %v11898 = vunpack.c.l.b16 %v11572
      %v11899 = vunpack.c.h.b16 %v11572
      %v11900 = vunpack.c.l.b16 %v11573
      %v11901 = vunpack.c.h.b16 %v11573
      %v11902 = vunpack.c.l.b16 %v11574
      %v11903 = vunpack.c.h.b16 %v11574
      %v11904 = vunpack.c.l.b16 %v11575
      %v11905 = vunpack.c.h.b16 %v11575
      %v11906 = vunpack.c.l.b16 %v11576
      %v11907 = vunpack.c.h.b16 %v11576
      %v11908 = vunpack.c.l.b16 %v11577
      %v11909 = vunpack.c.h.b16 %v11577
      %v11910 = vunpack.c.l.b16 %v11578
      %v11911 = vunpack.c.h.b16 %v11578
      %v11912 = vunpack.c.l.b16 %v11579
      %v11913 = vunpack.c.h.b16 %v11579
      %v11914 = vunpack.c.l.b16 %v11580
      %v11915 = vunpack.c.h.b16 %v11580
      %v11916 = vunpack.c.l.b16 %v11581
      %v11917 = vunpack.c.h.b16 %v11581
      %v11918 = vunpack.c.l.b16 %v11582
      %v11919 = vunpack.c.h.b16 %v11582
      %v11920 = vunpack.c.l.b16 %v11583
      %v11921 = vunpack.c.h.b16 %v11583
      %v11922 = vunpack.c.l.b16 %v11584
      %v11923 = vunpack.c.h.b16 %v11584
      %v11924 = vunpack.c.l.b16 %v11585
      %v11925 = vunpack.c.h.b16 %v11585
      %v11926 = vunpack.c.l.b16 %v11586
      %v11927 = vunpack.c.h.b16 %v11586
      %v11928 = vunpack.c.l.b16 %v11587
      %v11929 = vunpack.c.h.b16 %v11587
      %v11930 = vunpack.c.l.b16 %v11588
      %v11931 = vunpack.c.h.b16 %v11588
      %v11932 = vunpack.c.l.b16 %v11589
      %v11933 = vunpack.c.h.b16 %v11589
      %v11934 = vunpack.c.l.b16 %v11590
      %v11935 = vunpack.c.h.b16 %v11590
      %v11936 = vunpack.c.l.b16 %v11591
      %v11937 = vunpack.c.h.b16 %v11591
      %v11938 = vunpack.c.l.b16 %v11592
      %v11939 = vunpack.c.h.b16 %v11592
      %v11940 = vunpack.c.l.b16 %v11593
      %v11941 = vunpack.c.h.b16 %v11593
      %v11942 = vunpack.c.l.b16 %v11594
      %v11943 = vunpack.c.h.b16 %v11594
      %v11944 = vunpack.c.l.b16 %v11595
      %v11945 = vunpack.c.h.b16 %v11595
      %v11946 = vunpack.c.l.b16 %v11596
      %v11947 = vunpack.c.h.b16 %v11596
      %v11948 = vunpack.c.l.b16 %v11597
      %v11949 = vunpack.c.h.b16 %v11597
      %v11950 = vunpack.c.l.b16 %v11598
      %v11951 = vunpack.c.h.b16 %v11598
      %v11952 = vunpack.c.l.b16 %v11599
      %v11953 = vunpack.c.h.b16 %v11599
      %v11954 = vunpack.c.l.b16 %v11600
      %v11955 = vunpack.c.h.b16 %v11600
      %v11956 = vunpack.c.l.b16 %v11601
      %v11957 = vunpack.c.h.b16 %v11601
      %v11958 = vunpack.c.l.b16 %v11602
      %v11959 = vunpack.c.h.b16 %v11602
      %v11960 = vunpack.c.l.b16 %v11603
      %v11961 = vunpack.c.h.b16 %v11603
      %v11962 = vunpack.c.l.b16 %v11604
      %v11963 = vunpack.c.h.b16 %v11604
      %v11964 = vunpack.c.l.b16 %v11605
      %v11965 = vunpack.c.h.b16 %v11605
      %v11966 = vunpack.c.l.b16 %v11606
      %v11967 = vunpack.c.h.b16 %v11606
      %v11968 = vunpack.c.l.b16 %v11607
      %v11969 = vunpack.c.h.b16 %v11607
      %v11970 = vunpack.c.l.b16 %v11608
      %v11971 = vunpack.c.h.b16 %v11608
      %v11972 = vunpack.c.l.b16 %v11609
      %v11973 = vunpack.c.h.b16 %v11609
      %v11974 = vunpack.c.l.b16 %v11610
      %v11975 = vunpack.c.h.b16 %v11610
      %v11976 = vunpack.c.l.b16 %v11611
      %v11977 = vunpack.c.h.b16 %v11611
      %v11978 = vunpack.c.l.b16 %v11612
      %v11979 = vunpack.c.h.b16 %v11612
      %v11980 = vunpack.c.l.b16 %v11613
      %v11981 = vunpack.c.h.b16 %v11613
      %v11982 = vunpack.c.l.b16 %v11614
      %v11983 = vunpack.c.h.b16 %v11614
      %v11984 = vunpack.c.l.b16 %v11615
      %v11985 = vunpack.c.h.b16 %v11615
      %v11986 = vunpack.c.l.b16 %v11616
      %v11987 = vunpack.c.h.b16 %v11616
      %v11988 = vunpack.c.l.b16 %v11617
      %v11989 = vunpack.c.h.b16 %v11617
      %v11990 = vunpack.c.l.b16 %v11618
      %v11991 = vunpack.c.h.b16 %v11618
      %v11992 = vunpack.c.l.b16 %v11619
      %v11993 = vunpack.c.h.b16 %v11619
      %v11994 = vunpack.c.l.b16 %v11620
      %v11995 = vunpack.c.h.b16 %v11620
      %v11996 = vunpack.c.l.b16 %v11621
      %v11997 = vunpack.c.h.b16 %v11621
      %v11998 = vunpack.c.l.b16 %v11622
      %v11999 = vunpack.c.h.b16 %v11622
      %v12000 = vunpack.c.l.b16 %v11623
      %v12001 = vunpack.c.h.b16 %v11623
      %v12002 = vunpack.c.l.b16 %v11624
      %v12003 = vunpack.c.h.b16 %v11624
      %v12004 = vunpack.c.l.b16 %v11625
      %v12005 = vunpack.c.h.b16 %v11625
      %v12006 = vunpack.c.l.b16 %v11626
      %v12007 = vunpack.c.h.b16 %v11626
      %v12008 = vunpack.c.l.b16 %v11627
      %v12009 = vunpack.c.h.b16 %v11627
      %v12010 = vunpack.c.l.b16 %v11628
      %v12011 = vunpack.c.h.b16 %v11628
      %v12012 = vunpack.c.l.b16 %v11629
      %v12013 = vunpack.c.h.b16 %v11629
      %v12014 = vpack.c.b16 %v11758, %v11758
      %v12015 = vpack.c.b16 %v11759, %v11759
      %v12016 = vpack.c.b16 %v11760, %v11760
      %v12017 = vpack.c.b16 %v11761, %v11761
      %v12018 = vpack.c.b16 %v11762, %v11762
      %v12019 = vpack.c.b16 %v11763, %v11763
      %v12020 = vpack.c.b16 %v11764, %v11764
      %v12021 = vpack.c.b16 %v11765, %v11765
      %v12022 = vpack.c.b16 %v11766, %v11766
      %v12023 = vpack.c.b16 %v11767, %v11767
      %v12024 = vpack.c.b16 %v11768, %v11768
      %v12025 = vpack.c.b16 %v11769, %v11769
      %v12026 = vpack.c.b16 %v11770, %v11770
      %v12027 = vpack.c.b16 %v11771, %v11771
      %v12028 = vpack.c.b16 %v11772, %v11772
      %v12029 = vpack.c.b16 %v11773, %v11773
      %v12030 = vpack.c.b16 %v11774, %v11774
      %v12031 = vpack.c.b16 %v11775, %v11775
      %v12032 = vpack.c.b16 %v11776, %v11776
      %v12033 = vpack.c.b16 %v11777, %v11777
      %v12034 = vpack.c.b16 %v11778, %v11778
      %v12035 = vpack.c.b16 %v11779, %v11779
      %v12036 = vpack.c.b16 %v11780, %v11780
      %v12037 = vpack.c.b16 %v11781, %v11781
      %v12038 = vpack.c.b16 %v11782, %v11782
      %v12039 = vpack.c.b16 %v11783, %v11783
      %v12040 = vpack.c.b16 %v11784, %v11784
      %v12041 = vpack.c.b16 %v11785, %v11785
      %v12042 = vpack.c.b16 %v11786, %v11786
      %v12043 = vpack.c.b16 %v11787, %v11787
      %v12044 = vpack.c.b16 %v11788, %v11788
      %v12045 = vpack.c.b16 %v11789, %v11789
      %v12046 = vpack.c.b16 %v11790, %v11790
      %v12047 = vpack.c.b16 %v11791, %v11791
      %v12048 = vpack.c.b16 %v11792, %v11792
      %v12049 = vpack.c.b16 %v11793, %v11793
      %v12050 = vpack.c.b16 %v11794, %v11794
      %v12051 = vpack.c.b16 %v11795, %v11795
      %v12052 = vpack.c.b16 %v11796, %v11796
      %v12053 = vpack.c.b16 %v11797, %v11797
      %v12054 = vpack.c.b16 %v11798, %v11798
      %v12055 = vpack.c.b16 %v11799, %v11799
      %v12056 = vpack.c.b16 %v11800, %v11800
      %v12057 = vpack.c.b16 %v11801, %v11801
      %v12058 = vpack.c.b16 %v11802, %v11802
      %v12059 = vpack.c.b16 %v11803, %v11803
      %v12060 = vpack.c.b16 %v11804, %v11804
      %v12061 = vpack.c.b16 %v11805, %v11805
      %v12062 = vpack.c.b16 %v11806, %v11806
      %v12063 = vpack.c.b16 %v11807, %v11807
      %v12064 = vpack.c.b16 %v11808, %v11808
      %v12065 = vpack.c.b16 %v11809, %v11809
      %v12066 = vpack.c.b16 %v11810, %v11810
      %v12067 = vpack.c.b16 %v11811, %v11811
      %v12068 = vpack.c.b16 %v11812, %v11812
      %v12069 = vpack.c.b16 %v11813, %v11813
      %v12070 = vpack.c.b16 %v11814, %v11814
      %v12071 = vpack.c.b16 %v11815, %v11815
      %v12072 = vpack.c.b16 %v11816, %v11816
      %v12073 = vpack.c.b16 %v11817, %v11817
      %v12074 = vpack.c.b16 %v11818, %v11818
      %v12075 = vpack.c.b16 %v11819, %v11819
      %v12076 = vpack.c.b16 %v11820, %v11820
      %v12077 = vpack.c.b16 %v11821, %v11821
      %v12078 = vpack.c.b16 %v11822, %v11822
      %v12079 = vpack.c.b16 %v11823, %v11823
      %v12080 = vpack.c.b16 %v11824, %v11824
      %v12081 = vpack.c.b16 %v11825, %v11825
      %v12082 = vpack.c.b16 %v11826, %v11826
      %v12083 = vpack.c.b16 %v11827, %v11827
      %v12084 = vpack.c.b16 %v11828, %v11828
      %v12085 = vpack.c.b16 %v11829, %v11829
      %v12086 = vpack.c.b16 %v11830, %v11830
      %v12087 = vpack.c.b16 %v11831, %v11831
      %v12088 = vpack.c.b16 %v11832, %v11832
      %v12089 = vpack.c.b16 %v11833, %v11833
      %v12090 = vpack.c.b16 %v11834, %v11834
      %v12091 = vpack.c.b16 %v11835, %v11835
      %v12092 = vpack.c.b16 %v11836, %v11836
      %v12093 = vpack.c.b16 %v11837, %v11837
      %v12094 = vpack.c.b16 %v11838, %v11838
      %v12095 = vpack.c.b16 %v11839, %v11839
      %v12096 = vpack.c.b16 %v11840, %v11840
      %v12097 = vpack.c.b16 %v11841, %v11841
      %v12098 = vpack.c.b16 %v11842, %v11842
      %v12099 = vpack.c.b16 %v11843, %v11843
      %v12100 = vpack.c.b16 %v11844, %v11844
      %v12101 = vpack.c.b16 %v11845, %v11845
      %v12102 = vpack.c.b16 %v11846, %v11846
      %v12103 = vpack.c.b16 %v11847, %v11847
      %v12104 = vpack.c.b16 %v11848, %v11848
      %v12105 = vpack.c.b16 %v11849, %v11849
      %v12106 = vpack.c.b16 %v11850, %v11850
      %v12107 = vpack.c.b16 %v11851, %v11851
      %v12108 = vpack.c.b16 %v11852, %v11852
      %v12109 = vpack.c.b16 %v11853, %v11853
      %v12110 = vpack.c.b16 %v11854, %v11854
      %v12111 = vpack.c.b16 %v11855, %v11855
      %v12112 = vpack.c.b16 %v11856, %v11856
      %v12113 = vpack.c.b16 %v11857, %v11857
      %v12114 = vpack.c.b16 %v11858, %v11858
      %v12115 = vpack.c.b16 %v11859, %v11859
      %v12116 = vpack.c.b16 %v11860, %v11860
      %v12117 = vpack.c.b16 %v11861, %v11861
      %v12118 = vpack.c.b16 %v11862, %v11862
      %v12119 = vpack.c.b16 %v11863, %v11863
      %v12120 = vpack.c.b16 %v11864, %v11864
      %v12121 = vpack.c.b16 %v11865, %v11865
      %v12122 = vpack.c.b16 %v11866, %v11866
      %v12123 = vpack.c.b16 %v11867, %v11867
      %v12124 = vpack.c.b16 %v11868, %v11868
      %v12125 = vpack.c.b16 %v11869, %v11869
      %v12126 = vpack.c.b16 %v11870, %v11870
      %v12127 = vpack.c.b16 %v11871, %v11871
      %v12128 = vpack.c.b16 %v11872, %v11872
      %v12129 = vpack.c.b16 %v11873, %v11873
      %v12130 = vpack.c.b16 %v11874, %v11874
      %v12131 = vpack.c.b16 %v11875, %v11875
      %v12132 = vpack.c.b16 %v11876, %v11876
      %v12133 = vpack.c.b16 %v11877, %v11877
      %v12134 = vpack.c.b16 %v11878, %v11878
      %v12135 = vpack.c.b16 %v11879, %v11879
      %v12136 = vpack.c.b16 %v11880, %v11880
      %v12137 = vpack.c.b16 %v11881, %v11881
      %v12138 = vpack.c.b16 %v11882, %v11882
      %v12139 = vpack.c.b16 %v11883, %v11883
      %v12140 = vpack.c.b16 %v11884, %v11884
      %v12141 = vpack.c.b16 %v11885, %v11885
      %v12142 = vpack.c.b16 %v11886, %v11886
      %v12143 = vpack.c.b16 %v11887, %v11887
      %v12144 = vpack.c.b16 %v11888, %v11888
      %v12145 = vpack.c.b16 %v11889, %v11889
      %v12146 = vpack.c.b16 %v11890, %v11890
      %v12147 = vpack.c.b16 %v11891, %v11891
      %v12148 = vpack.c.b16 %v11892, %v11892
      %v12149 = vpack.c.b16 %v11893, %v11893
      %v12150 = vpack.c.b16 %v11894, %v11894
      %v12151 = vpack.c.b16 %v11895, %v11895
      %v12152 = vpack.c.b16 %v11896, %v11896
      %v12153 = vpack.c.b16 %v11897, %v11897
      %v12154 = vpack.c.b16 %v11898, %v11898
      %v12155 = vpack.c.b16 %v11899, %v11899
      %v12156 = vpack.c.b16 %v11900, %v11900
      %v12157 = vpack.c.b16 %v11901, %v11901
      %v12158 = vpack.c.b16 %v11902, %v11902
      %v12159 = vpack.c.b16 %v11903, %v11903
      %v12160 = vpack.c.b16 %v11904, %v11904
      %v12161 = vpack.c.b16 %v11905, %v11905
      %v12162 = vpack.c.b16 %v11906, %v11906
      %v12163 = vpack.c.b16 %v11907, %v11907
      %v12164 = vpack.c.b16 %v11908, %v11908
      %v12165 = vpack.c.b16 %v11909, %v11909
      %v12166 = vpack.c.b16 %v11910, %v11910
      %v12167 = vpack.c.b16 %v11911, %v11911
      %v12168 = vpack.c.b16 %v11912, %v11912
      %v12169 = vpack.c.b16 %v11913, %v11913
      %v12170 = vpack.c.b16 %v11914, %v11914
      %v12171 = vpack.c.b16 %v11915, %v11915
      %v12172 = vpack.c.b16 %v11916, %v11916
      %v12173 = vpack.c.b16 %v11917, %v11917
      %v12174 = vpack.c.b16 %v11918, %v11918
      %v12175 = vpack.c.b16 %v11919, %v11919
      %v12176 = vpack.c.b16 %v11920, %v11920
      %v12177 = vpack.c.b16 %v11921, %v11921
      %v12178 = vpack.c.b16 %v11922, %v11922
      %v12179 = vpack.c.b16 %v11923, %v11923
      %v12180 = vpack.c.b16 %v11924, %v11924
      %v12181 = vpack.c.b16 %v11925, %v11925
      %v12182 = vpack.c.b16 %v11926, %v11926
      %v12183 = vpack.c.b16 %v11927, %v11927
      %v12184 = vpack.c.b16 %v11928, %v11928
      %v12185 = vpack.c.b16 %v11929, %v11929
      %v12186 = vpack.c.b16 %v11930, %v11930
      %v12187 = vpack.c.b16 %v11931, %v11931
      %v12188 = vpack.c.b16 %v11932, %v11932
      %v12189 = vpack.c.b16 %v11933, %v11933
      %v12190 = vpack.c.b16 %v11934, %v11934
      %v12191 = vpack.c.b16 %v11935, %v11935
      %v12192 = vpack.c.b16 %v11936, %v11936
      %v12193 = vpack.c.b16 %v11937, %v11937
      %v12194 = vpack.c.b16 %v11938, %v11938
      %v12195 = vpack.c.b16 %v11939, %v11939
      %v12196 = vpack.c.b16 %v11940, %v11940
      %v12197 = vpack.c.b16 %v11941, %v11941
      %v12198 = vpack.c.b16 %v11942, %v11942
      %v12199 = vpack.c.b16 %v11943, %v11943
      %v12200 = vpack.c.b16 %v11944, %v11944
      %v12201 = vpack.c.b16 %v11945, %v11945
      %v12202 = vpack.c.b16 %v11946, %v11946
      %v12203 = vpack.c.b16 %v11947, %v11947
      %v12204 = vpack.c.b16 %v11948, %v11948
      %v12205 = vpack.c.b16 %v11949, %v11949
      %v12206 = vpack.c.b16 %v11950, %v11950
      %v12207 = vpack.c.b16 %v11951, %v11951
      %v12208 = vpack.c.b16 %v11952, %v11952
      %v12209 = vpack.c.b16 %v11953, %v11953
      %v12210 = vpack.c.b16 %v11954, %v11954
      %v12211 = vpack.c.b16 %v11955, %v11955
      %v12212 = vpack.c.b16 %v11956, %v11956
      %v12213 = vpack.c.b16 %v11957, %v11957
      %v12214 = vpack.c.b16 %v11958, %v11958
      %v12215 = vpack.c.b16 %v11959, %v11959
      %v12216 = vpack.c.b16 %v11960, %v11960
      %v12217 = vpack.c.b16 %v11961, %v11961
      %v12218 = vpack.c.b16 %v11962, %v11962
      %v12219 = vpack.c.b16 %v11963, %v11963
      %v12220 = vpack.c.b16 %v11964, %v11964
      %v12221 = vpack.c.b16 %v11965, %v11965
      %v12222 = vpack.c.b16 %v11966, %v11966
      %v12223 = vpack.c.b16 %v11967, %v11967
      %v12224 = vpack.c.b16 %v11968, %v11968
      %v12225 = vpack.c.b16 %v11969, %v11969
      %v12226 = vpack.c.b16 %v11970, %v11970
      %v12227 = vpack.c.b16 %v11971, %v11971
      %v12228 = vpack.c.b16 %v11972, %v11972
      %v12229 = vpack.c.b16 %v11973, %v11973
      %v12230 = vpack.c.b16 %v11974, %v11974
      %v12231 = vpack.c.b16 %v11975, %v11975
      %v12232 = vpack.c.b16 %v11976, %v11976
      %v12233 = vpack.c.b16 %v11977, %v11977
      %v12234 = vpack.c.b16 %v11978, %v11978
      %v12235 = vpack.c.b16 %v11979, %v11979
      %v12236 = vpack.c.b16 %v11980, %v11980
      %v12237 = vpack.c.b16 %v11981, %v11981
      %v12238 = vpack.c.b16 %v11982, %v11982
      %v12239 = vpack.c.b16 %v11983, %v11983
      %v12240 = vpack.c.b16 %v11984, %v11984
      %v12241 = vpack.c.b16 %v11985, %v11985
      %v12242 = vpack.c.b16 %v11986, %v11986
      %v12243 = vpack.c.b16 %v11987, %v11987
      %v12244 = vpack.c.b16 %v11988, %v11988
      %v12245 = vpack.c.b16 %v11989, %v11989
      %v12246 = vpack.c.b16 %v11990, %v11990
      %v12247 = vpack.c.b16 %v11991, %v11991
      %v12248 = vpack.c.b16 %v11992, %v11992
      %v12249 = vpack.c.b16 %v11993, %v11993
      %v12250 = vpack.c.b16 %v11994, %v11994
      %v12251 = vpack.c.b16 %v11995, %v11995
      %v12252 = vpack.c.b16 %v11996, %v11996
      %v12253 = vpack.c.b16 %v11997, %v11997
      %v12254 = vpack.c.b16 %v11998, %v11998
      %v12255 = vpack.c.b16 %v11999, %v11999
      %v12256 = vpack.c.b16 %v12000, %v12000
      %v12257 = vpack.c.b16 %v12001, %v12001
      %v12258 = vpack.c.b16 %v12002, %v12002
      %v12259 = vpack.c.b16 %v12003, %v12003
      %v12260 = vpack.c.b16 %v12004, %v12004
      %v12261 = vpack.c.b16 %v12005, %v12005
      %v12262 = vpack.c.b16 %v12006, %v12006
      %v12263 = vpack.c.b16 %v12007, %v12007
      %v12264 = vpack.c.b16 %v12008, %v12008
      %v12265 = vpack.c.b16 %v12009, %v12009
      %v12266 = vpack.c.b16 %v12010, %v12010
      %v12267 = vpack.c.b16 %v12011, %v12011
      %v12268 = vpack.c.b16 %v12012, %v12012
      %v12269 = vpack.c.b16 %v12013, %v12013
      %vm12526 = vcmask 60416
      %12527 = vst.msk [vmem:[%s170] sm:$0xf] %vm12526, %v12014
      %12528 = vst.msk [vmem:[%s170 + $0x4] sm:$0xf] %vm12526, %v12015
      %12529 = vst.msk [vmem:[%s170 + $0x8] sm:$0xf] %vm12526, %v12016
      %12530 = vst.msk [vmem:[%s170 + $0xc] sm:$0xf] %vm12526, %v12017
      %12531 = vst.msk [vmem:[%s170 + $0x10] sm:$0xf] %vm12526, %v12018
      %12532 = vst.msk [vmem:[%s170 + $0x14] sm:$0xf] %vm12526, %v12019
      %12533 = vst.msk [vmem:[%s170 + $0x18] sm:$0xf] %vm12526, %v12020
      %12534 = vst.msk [vmem:[%s170 + $0x1c] sm:$0xf] %vm12526, %v12021
      %12535 = vst.msk [vmem:[%s170 + $0x20] sm:$0xf] %vm12526, %v12022
      %12536 = vst.msk [vmem:[%s170 + $0x24] sm:$0xf] %vm12526, %v12023
      %12537 = vst.msk [vmem:[%s170 + $0x28] sm:$0xf] %vm12526, %v12024
      %12538 = vst.msk [vmem:[%s170 + $0x2c] sm:$0xf] %vm12526, %v12025
      %12539 = vst.msk [vmem:[%s170 + $0x30] sm:$0xf] %vm12526, %v12026
      %12540 = vst.msk [vmem:[%s170 + $0x34] sm:$0xf] %vm12526, %v12027
      %12541 = vst.msk [vmem:[%s170 + $0x38] sm:$0xf] %vm12526, %v12028
      %12542 = vst.msk [vmem:[%s170 + $0x3c] sm:$0xf] %vm12526, %v12029
      %12543 = vst.msk [vmem:[%s170 + $0x40] sm:$0xf] %vm12526, %v12030
      %12544 = vst.msk [vmem:[%s170 + $0x44] sm:$0xf] %vm12526, %v12031
      %12545 = vst.msk [vmem:[%s170 + $0x48] sm:$0xf] %vm12526, %v12032
      %12546 = vst.msk [vmem:[%s170 + $0x4c] sm:$0xf] %vm12526, %v12033
      %12547 = vst.msk [vmem:[%s170 + $0x50] sm:$0xf] %vm12526, %v12034
      %12548 = vst.msk [vmem:[%s170 + $0x54] sm:$0xf] %vm12526, %v12035
      %12549 = vst.msk [vmem:[%s170 + $0x58] sm:$0xf] %vm12526, %v12036
      %12550 = vst.msk [vmem:[%s170 + $0x5c] sm:$0xf] %vm12526, %v12037
      %12551 = vst.msk [vmem:[%s170 + $0x60] sm:$0xf] %vm12526, %v12038
      %12552 = vst.msk [vmem:[%s170 + $0x64] sm:$0xf] %vm12526, %v12039
      %12553 = vst.msk [vmem:[%s170 + $0x68] sm:$0xf] %vm12526, %v12040
      %12554 = vst.msk [vmem:[%s170 + $0x6c] sm:$0xf] %vm12526, %v12041
      %12555 = vst.msk [vmem:[%s170 + $0x70] sm:$0xf] %vm12526, %v12042
      %12556 = vst.msk [vmem:[%s170 + $0x74] sm:$0xf] %vm12526, %v12043
      %12557 = vst.msk [vmem:[%s170 + $0x78] sm:$0xf] %vm12526, %v12044
      %12558 = vst.msk [vmem:[%s170 + $0x7c] sm:$0xf] %vm12526, %v12045
      %12559 = vst.msk [vmem:[%s170 + $0x80] sm:$0xf] %vm12526, %v12046
      %12560 = vst.msk [vmem:[%s170 + $0x84] sm:$0xf] %vm12526, %v12047
      %12561 = vst.msk [vmem:[%s170 + $0x88] sm:$0xf] %vm12526, %v12048
      %12562 = vst.msk [vmem:[%s170 + $0x8c] sm:$0xf] %vm12526, %v12049
      %12563 = vst.msk [vmem:[%s170 + $0x90] sm:$0xf] %vm12526, %v12050
      %12564 = vst.msk [vmem:[%s170 + $0x94] sm:$0xf] %vm12526, %v12051
      %12565 = vst.msk [vmem:[%s170 + $0x98] sm:$0xf] %vm12526, %v12052
      %12566 = vst.msk [vmem:[%s170 + $0x9c] sm:$0xf] %vm12526, %v12053
      %12567 = vst.msk [vmem:[%s170 + $0xa0] sm:$0xf] %vm12526, %v12054
      %12568 = vst.msk [vmem:[%s170 + $0xa4] sm:$0xf] %vm12526, %v12055
      %12569 = vst.msk [vmem:[%s170 + $0xa8] sm:$0xf] %vm12526, %v12056
      %12570 = vst.msk [vmem:[%s170 + $0xac] sm:$0xf] %vm12526, %v12057
      %12571 = vst.msk [vmem:[%s170 + $0xb0] sm:$0xf] %vm12526, %v12058
      %12572 = vst.msk [vmem:[%s170 + $0xb4] sm:$0xf] %vm12526, %v12059
      %12573 = vst.msk [vmem:[%s170 + $0xb8] sm:$0xf] %vm12526, %v12060
      %12574 = vst.msk [vmem:[%s170 + $0xbc] sm:$0xf] %vm12526, %v12061
      %12575 = vst.msk [vmem:[%s170 + $0xc0] sm:$0xf] %vm12526, %v12062
      %12576 = vst.msk [vmem:[%s170 + $0xc4] sm:$0xf] %vm12526, %v12063
      %12577 = vst.msk [vmem:[%s170 + $0xc8] sm:$0xf] %vm12526, %v12064
      %12578 = vst.msk [vmem:[%s170 + $0xcc] sm:$0xf] %vm12526, %v12065
      %12579 = vst.msk [vmem:[%s170 + $0xd0] sm:$0xf] %vm12526, %v12066
      %12580 = vst.msk [vmem:[%s170 + $0xd4] sm:$0xf] %vm12526, %v12067
      %12581 = vst.msk [vmem:[%s170 + $0xd8] sm:$0xf] %vm12526, %v12068
      %12582 = vst.msk [vmem:[%s170 + $0xdc] sm:$0xf] %vm12526, %v12069
      %12583 = vst.msk [vmem:[%s170 + $0xe0] sm:$0xf] %vm12526, %v12070
      %12584 = vst.msk [vmem:[%s170 + $0xe4] sm:$0xf] %vm12526, %v12071
      %12585 = vst.msk [vmem:[%s170 + $0xe8] sm:$0xf] %vm12526, %v12072
      %12586 = vst.msk [vmem:[%s170 + $0xec] sm:$0xf] %vm12526, %v12073
      %12587 = vst.msk [vmem:[%s170 + $0xf0] sm:$0xf] %vm12526, %v12074
      %12588 = vst.msk [vmem:[%s170 + $0xf4] sm:$0xf] %vm12526, %v12075
      %12589 = vst.msk [vmem:[%s170 + $0xf8] sm:$0xf] %vm12526, %v12076
      %12590 = vst.msk [vmem:[%s170 + $0xfc] sm:$0xf] %vm12526, %v12077
      %12591 = vst.msk [vmem:[%s170 + $0x100] sm:$0xf] %vm12526, %v12078
      %12592 = vst.msk [vmem:[%s170 + $0x104] sm:$0xf] %vm12526, %v12079
      %12593 = vst.msk [vmem:[%s170 + $0x108] sm:$0xf] %vm12526, %v12080
      %12594 = vst.msk [vmem:[%s170 + $0x10c] sm:$0xf] %vm12526, %v12081
      %12595 = vst.msk [vmem:[%s170 + $0x110] sm:$0xf] %vm12526, %v12082
      %12596 = vst.msk [vmem:[%s170 + $0x114] sm:$0xf] %vm12526, %v12083
      %12597 = vst.msk [vmem:[%s170 + $0x118] sm:$0xf] %vm12526, %v12084
      %12598 = vst.msk [vmem:[%s170 + $0x11c] sm:$0xf] %vm12526, %v12085
      %12599 = vst.msk [vmem:[%s170 + $0x120] sm:$0xf] %vm12526, %v12086
      %12600 = vst.msk [vmem:[%s170 + $0x124] sm:$0xf] %vm12526, %v12087
      %12601 = vst.msk [vmem:[%s170 + $0x128] sm:$0xf] %vm12526, %v12088
      %12602 = vst.msk [vmem:[%s170 + $0x12c] sm:$0xf] %vm12526, %v12089
      %12603 = vst.msk [vmem:[%s170 + $0x130] sm:$0xf] %vm12526, %v12090
      %12604 = vst.msk [vmem:[%s170 + $0x134] sm:$0xf] %vm12526, %v12091
      %12605 = vst.msk [vmem:[%s170 + $0x138] sm:$0xf] %vm12526, %v12092
      %12606 = vst.msk [vmem:[%s170 + $0x13c] sm:$0xf] %vm12526, %v12093
      %12607 = vst.msk [vmem:[%s170 + $0x140] sm:$0xf] %vm12526, %v12094
      %12608 = vst.msk [vmem:[%s170 + $0x144] sm:$0xf] %vm12526, %v12095
      %12609 = vst.msk [vmem:[%s170 + $0x148] sm:$0xf] %vm12526, %v12096
      %12610 = vst.msk [vmem:[%s170 + $0x14c] sm:$0xf] %vm12526, %v12097
      %12611 = vst.msk [vmem:[%s170 + $0x150] sm:$0xf] %vm12526, %v12098
      %12612 = vst.msk [vmem:[%s170 + $0x154] sm:$0xf] %vm12526, %v12099
      %12613 = vst.msk [vmem:[%s170 + $0x158] sm:$0xf] %vm12526, %v12100
      %12614 = vst.msk [vmem:[%s170 + $0x15c] sm:$0xf] %vm12526, %v12101
      %12615 = vst.msk [vmem:[%s170 + $0x160] sm:$0xf] %vm12526, %v12102
      %12616 = vst.msk [vmem:[%s170 + $0x164] sm:$0xf] %vm12526, %v12103
      %12617 = vst.msk [vmem:[%s170 + $0x168] sm:$0xf] %vm12526, %v12104
      %12618 = vst.msk [vmem:[%s170 + $0x16c] sm:$0xf] %vm12526, %v12105
      %12619 = vst.msk [vmem:[%s170 + $0x170] sm:$0xf] %vm12526, %v12106
      %12620 = vst.msk [vmem:[%s170 + $0x174] sm:$0xf] %vm12526, %v12107
      %12621 = vst.msk [vmem:[%s170 + $0x178] sm:$0xf] %vm12526, %v12108
      %12622 = vst.msk [vmem:[%s170 + $0x17c] sm:$0xf] %vm12526, %v12109
      %12623 = vst.msk [vmem:[%s170 + $0x180] sm:$0xf] %vm12526, %v12110
      %12624 = vst.msk [vmem:[%s170 + $0x184] sm:$0xf] %vm12526, %v12111
      %12625 = vst.msk [vmem:[%s170 + $0x188] sm:$0xf] %vm12526, %v12112
      %12626 = vst.msk [vmem:[%s170 + $0x18c] sm:$0xf] %vm12526, %v12113
      %12627 = vst.msk [vmem:[%s170 + $0x190] sm:$0xf] %vm12526, %v12114
      %12628 = vst.msk [vmem:[%s170 + $0x194] sm:$0xf] %vm12526, %v12115
      %12629 = vst.msk [vmem:[%s170 + $0x198] sm:$0xf] %vm12526, %v12116
      %12630 = vst.msk [vmem:[%s170 + $0x19c] sm:$0xf] %vm12526, %v12117
      %12631 = vst.msk [vmem:[%s170 + $0x1a0] sm:$0xf] %vm12526, %v12118
      %12632 = vst.msk [vmem:[%s170 + $0x1a4] sm:$0xf] %vm12526, %v12119
      %12633 = vst.msk [vmem:[%s170 + $0x1a8] sm:$0xf] %vm12526, %v12120
      %12634 = vst.msk [vmem:[%s170 + $0x1ac] sm:$0xf] %vm12526, %v12121
      %12635 = vst.msk [vmem:[%s170 + $0x1b0] sm:$0xf] %vm12526, %v12122
      %12636 = vst.msk [vmem:[%s170 + $0x1b4] sm:$0xf] %vm12526, %v12123
      %12637 = vst.msk [vmem:[%s170 + $0x1b8] sm:$0xf] %vm12526, %v12124
      %12638 = vst.msk [vmem:[%s170 + $0x1bc] sm:$0xf] %vm12526, %v12125
      %12639 = vst.msk [vmem:[%s170 + $0x1c0] sm:$0xf] %vm12526, %v12126
      %12640 = vst.msk [vmem:[%s170 + $0x1c4] sm:$0xf] %vm12526, %v12127
      %12641 = vst.msk [vmem:[%s170 + $0x1c8] sm:$0xf] %vm12526, %v12128
      %12642 = vst.msk [vmem:[%s170 + $0x1cc] sm:$0xf] %vm12526, %v12129
      %12643 = vst.msk [vmem:[%s170 + $0x1d0] sm:$0xf] %vm12526, %v12130
      %12644 = vst.msk [vmem:[%s170 + $0x1d4] sm:$0xf] %vm12526, %v12131
      %12645 = vst.msk [vmem:[%s170 + $0x1d8] sm:$0xf] %vm12526, %v12132
      %12646 = vst.msk [vmem:[%s170 + $0x1dc] sm:$0xf] %vm12526, %v12133
      %12647 = vst.msk [vmem:[%s170 + $0x1e0] sm:$0xf] %vm12526, %v12134
      %12648 = vst.msk [vmem:[%s170 + $0x1e4] sm:$0xf] %vm12526, %v12135
      %12649 = vst.msk [vmem:[%s170 + $0x1e8] sm:$0xf] %vm12526, %v12136
      %12650 = vst.msk [vmem:[%s170 + $0x1ec] sm:$0xf] %vm12526, %v12137
      %12651 = vst.msk [vmem:[%s170 + $0x1f0] sm:$0xf] %vm12526, %v12138
      %12652 = vst.msk [vmem:[%s170 + $0x1f4] sm:$0xf] %vm12526, %v12139
      %12653 = vst.msk [vmem:[%s170 + $0x1f8] sm:$0xf] %vm12526, %v12140
      %12654 = vst.msk [vmem:[%s170 + $0x1fc] sm:$0xf] %vm12526, %v12141
      %12655 = vst.msk [vmem:[%s170 + $0x200] sm:$0xf] %vm12526, %v12142
      %12656 = vst.msk [vmem:[%s170 + $0x204] sm:$0xf] %vm12526, %v12143
      %12657 = vst.msk [vmem:[%s170 + $0x208] sm:$0xf] %vm12526, %v12144
      %12658 = vst.msk [vmem:[%s170 + $0x20c] sm:$0xf] %vm12526, %v12145
      %12659 = vst.msk [vmem:[%s170 + $0x210] sm:$0xf] %vm12526, %v12146
      %12660 = vst.msk [vmem:[%s170 + $0x214] sm:$0xf] %vm12526, %v12147
      %12661 = vst.msk [vmem:[%s170 + $0x218] sm:$0xf] %vm12526, %v12148
      %12662 = vst.msk [vmem:[%s170 + $0x21c] sm:$0xf] %vm12526, %v12149
      %12663 = vst.msk [vmem:[%s170 + $0x220] sm:$0xf] %vm12526, %v12150
      %12664 = vst.msk [vmem:[%s170 + $0x224] sm:$0xf] %vm12526, %v12151
      %12665 = vst.msk [vmem:[%s170 + $0x228] sm:$0xf] %vm12526, %v12152
      %12666 = vst.msk [vmem:[%s170 + $0x22c] sm:$0xf] %vm12526, %v12153
      %12667 = vst.msk [vmem:[%s170 + $0x230] sm:$0xf] %vm12526, %v12154
      %12668 = vst.msk [vmem:[%s170 + $0x234] sm:$0xf] %vm12526, %v12155
      %12669 = vst.msk [vmem:[%s170 + $0x238] sm:$0xf] %vm12526, %v12156
      %12670 = vst.msk [vmem:[%s170 + $0x23c] sm:$0xf] %vm12526, %v12157
      %12671 = vst.msk [vmem:[%s170 + $0x240] sm:$0xf] %vm12526, %v12158
      %12672 = vst.msk [vmem:[%s170 + $0x244] sm:$0xf] %vm12526, %v12159
      %12673 = vst.msk [vmem:[%s170 + $0x248] sm:$0xf] %vm12526, %v12160
      %12674 = vst.msk [vmem:[%s170 + $0x24c] sm:$0xf] %vm12526, %v12161
      %12675 = vst.msk [vmem:[%s170 + $0x250] sm:$0xf] %vm12526, %v12162
      %12676 = vst.msk [vmem:[%s170 + $0x254] sm:$0xf] %vm12526, %v12163
      %12677 = vst.msk [vmem:[%s170 + $0x258] sm:$0xf] %vm12526, %v12164
      %12678 = vst.msk [vmem:[%s170 + $0x25c] sm:$0xf] %vm12526, %v12165
      %12679 = vst.msk [vmem:[%s170 + $0x260] sm:$0xf] %vm12526, %v12166
      %12680 = vst.msk [vmem:[%s170 + $0x264] sm:$0xf] %vm12526, %v12167
      %12681 = vst.msk [vmem:[%s170 + $0x268] sm:$0xf] %vm12526, %v12168
      %12682 = vst.msk [vmem:[%s170 + $0x26c] sm:$0xf] %vm12526, %v12169
      %12683 = vst.msk [vmem:[%s170 + $0x270] sm:$0xf] %vm12526, %v12170
      %12684 = vst.msk [vmem:[%s170 + $0x274] sm:$0xf] %vm12526, %v12171
      %12685 = vst.msk [vmem:[%s170 + $0x278] sm:$0xf] %vm12526, %v12172
      %12686 = vst.msk [vmem:[%s170 + $0x27c] sm:$0xf] %vm12526, %v12173
      %12687 = vst.msk [vmem:[%s170 + $0x280] sm:$0xf] %vm12526, %v12174
      %12688 = vst.msk [vmem:[%s170 + $0x284] sm:$0xf] %vm12526, %v12175
      %12689 = vst.msk [vmem:[%s170 + $0x288] sm:$0xf] %vm12526, %v12176
      %12690 = vst.msk [vmem:[%s170 + $0x28c] sm:$0xf] %vm12526, %v12177
      %12691 = vst.msk [vmem:[%s170 + $0x290] sm:$0xf] %vm12526, %v12178
      %12692 = vst.msk [vmem:[%s170 + $0x294] sm:$0xf] %vm12526, %v12179
      %12693 = vst.msk [vmem:[%s170 + $0x298] sm:$0xf] %vm12526, %v12180
      %12694 = vst.msk [vmem:[%s170 + $0x29c] sm:$0xf] %vm12526, %v12181
      %12695 = vst.msk [vmem:[%s170 + $0x2a0] sm:$0xf] %vm12526, %v12182
      %12696 = vst.msk [vmem:[%s170 + $0x2a4] sm:$0xf] %vm12526, %v12183
      %12697 = vst.msk [vmem:[%s170 + $0x2a8] sm:$0xf] %vm12526, %v12184
      %12698 = vst.msk [vmem:[%s170 + $0x2ac] sm:$0xf] %vm12526, %v12185
      %12699 = vst.msk [vmem:[%s170 + $0x2b0] sm:$0xf] %vm12526, %v12186
      %12700 = vst.msk [vmem:[%s170 + $0x2b4] sm:$0xf] %vm12526, %v12187
      %12701 = vst.msk [vmem:[%s170 + $0x2b8] sm:$0xf] %vm12526, %v12188
      %12702 = vst.msk [vmem:[%s170 + $0x2bc] sm:$0xf] %vm12526, %v12189
      %12703 = vst.msk [vmem:[%s170 + $0x2c0] sm:$0xf] %vm12526, %v12190
      %12704 = vst.msk [vmem:[%s170 + $0x2c4] sm:$0xf] %vm12526, %v12191
      %12705 = vst.msk [vmem:[%s170 + $0x2c8] sm:$0xf] %vm12526, %v12192
      %12706 = vst.msk [vmem:[%s170 + $0x2cc] sm:$0xf] %vm12526, %v12193
      %12707 = vst.msk [vmem:[%s170 + $0x2d0] sm:$0xf] %vm12526, %v12194
      %12708 = vst.msk [vmem:[%s170 + $0x2d4] sm:$0xf] %vm12526, %v12195
      %12709 = vst.msk [vmem:[%s170 + $0x2d8] sm:$0xf] %vm12526, %v12196
      %12710 = vst.msk [vmem:[%s170 + $0x2dc] sm:$0xf] %vm12526, %v12197
      %12711 = vst.msk [vmem:[%s170 + $0x2e0] sm:$0xf] %vm12526, %v12198
      %12712 = vst.msk [vmem:[%s170 + $0x2e4] sm:$0xf] %vm12526, %v12199
      %12713 = vst.msk [vmem:[%s170 + $0x2e8] sm:$0xf] %vm12526, %v12200
      %12714 = vst.msk [vmem:[%s170 + $0x2ec] sm:$0xf] %vm12526, %v12201
      %12715 = vst.msk [vmem:[%s170 + $0x2f0] sm:$0xf] %vm12526, %v12202
      %12716 = vst.msk [vmem:[%s170 + $0x2f4] sm:$0xf] %vm12526, %v12203
      %12717 = vst.msk [vmem:[%s170 + $0x2f8] sm:$0xf] %vm12526, %v12204
      %12718 = vst.msk [vmem:[%s170 + $0x2fc] sm:$0xf] %vm12526, %v12205
      %12719 = vst.msk [vmem:[%s170 + $0x300] sm:$0xf] %vm12526, %v12206
      %12720 = vst.msk [vmem:[%s170 + $0x304] sm:$0xf] %vm12526, %v12207
      %12721 = vst.msk [vmem:[%s170 + $0x308] sm:$0xf] %vm12526, %v12208
      %12722 = vst.msk [vmem:[%s170 + $0x30c] sm:$0xf] %vm12526, %v12209
      %12723 = vst.msk [vmem:[%s170 + $0x310] sm:$0xf] %vm12526, %v12210
      %12724 = vst.msk [vmem:[%s170 + $0x314] sm:$0xf] %vm12526, %v12211
      %12725 = vst.msk [vmem:[%s170 + $0x318] sm:$0xf] %vm12526, %v12212
      %12726 = vst.msk [vmem:[%s170 + $0x31c] sm:$0xf] %vm12526, %v12213
      %12727 = vst.msk [vmem:[%s170 + $0x320] sm:$0xf] %vm12526, %v12214
      %12728 = vst.msk [vmem:[%s170 + $0x324] sm:$0xf] %vm12526, %v12215
      %12729 = vst.msk [vmem:[%s170 + $0x328] sm:$0xf] %vm12526, %v12216
      %12730 = vst.msk [vmem:[%s170 + $0x32c] sm:$0xf] %vm12526, %v12217
      %12731 = vst.msk [vmem:[%s170 + $0x330] sm:$0xf] %vm12526, %v12218
      %12732 = vst.msk [vmem:[%s170 + $0x334] sm:$0xf] %vm12526, %v12219
      %12733 = vst.msk [vmem:[%s170 + $0x338] sm:$0xf] %vm12526, %v12220
      %12734 = vst.msk [vmem:[%s170 + $0x33c] sm:$0xf] %vm12526, %v12221
      %12735 = vst.msk [vmem:[%s170 + $0x340] sm:$0xf] %vm12526, %v12222
      %12736 = vst.msk [vmem:[%s170 + $0x344] sm:$0xf] %vm12526, %v12223
      %12737 = vst.msk [vmem:[%s170 + $0x348] sm:$0xf] %vm12526, %v12224
      %12738 = vst.msk [vmem:[%s170 + $0x34c] sm:$0xf] %vm12526, %v12225
      %12739 = vst.msk [vmem:[%s170 + $0x350] sm:$0xf] %vm12526, %v12226
      %12740 = vst.msk [vmem:[%s170 + $0x354] sm:$0xf] %vm12526, %v12227
      %12741 = vst.msk [vmem:[%s170 + $0x358] sm:$0xf] %vm12526, %v12228
      %12742 = vst.msk [vmem:[%s170 + $0x35c] sm:$0xf] %vm12526, %v12229
      %12743 = vst.msk [vmem:[%s170 + $0x360] sm:$0xf] %vm12526, %v12230
      %12744 = vst.msk [vmem:[%s170 + $0x364] sm:$0xf] %vm12526, %v12231
      %12745 = vst.msk [vmem:[%s170 + $0x368] sm:$0xf] %vm12526, %v12232
      %12746 = vst.msk [vmem:[%s170 + $0x36c] sm:$0xf] %vm12526, %v12233
      %12747 = vst.msk [vmem:[%s170 + $0x370] sm:$0xf] %vm12526, %v12234
      %12748 = vst.msk [vmem:[%s170 + $0x374] sm:$0xf] %vm12526, %v12235
      %12749 = vst.msk [vmem:[%s170 + $0x378] sm:$0xf] %vm12526, %v12236
      %12750 = vst.msk [vmem:[%s170 + $0x37c] sm:$0xf] %vm12526, %v12237
      %12751 = vst.msk [vmem:[%s170 + $0x380] sm:$0xf] %vm12526, %v12238
      %12752 = vst.msk [vmem:[%s170 + $0x384] sm:$0xf] %vm12526, %v12239
      %12753 = vst.msk [vmem:[%s170 + $0x388] sm:$0xf] %vm12526, %v12240
      %12754 = vst.msk [vmem:[%s170 + $0x38c] sm:$0xf] %vm12526, %v12241
      %12755 = vst.msk [vmem:[%s170 + $0x390] sm:$0xf] %vm12526, %v12242
      %12756 = vst.msk [vmem:[%s170 + $0x394] sm:$0xf] %vm12526, %v12243
      %12757 = vst.msk [vmem:[%s170 + $0x398] sm:$0xf] %vm12526, %v12244
      %12758 = vst.msk [vmem:[%s170 + $0x39c] sm:$0xf] %vm12526, %v12245
      %12759 = vst.msk [vmem:[%s170 + $0x3a0] sm:$0xf] %vm12526, %v12246
      %12760 = vst.msk [vmem:[%s170 + $0x3a4] sm:$0xf] %vm12526, %v12247
      %12761 = vst.msk [vmem:[%s170 + $0x3a8] sm:$0xf] %vm12526, %v12248
      %12762 = vst.msk [vmem:[%s170 + $0x3ac] sm:$0xf] %vm12526, %v12249
      %12763 = vst.msk [vmem:[%s170 + $0x3b0] sm:$0xf] %vm12526, %v12250
      %12764 = vst.msk [vmem:[%s170 + $0x3b4] sm:$0xf] %vm12526, %v12251
      %12765 = vst.msk [vmem:[%s170 + $0x3b8] sm:$0xf] %vm12526, %v12252
      %12766 = vst.msk [vmem:[%s170 + $0x3bc] sm:$0xf] %vm12526, %v12253
      %12767 = vst.msk [vmem:[%s170 + $0x3c0] sm:$0xf] %vm12526, %v12254
      %12768 = vst.msk [vmem:[%s170 + $0x3c4] sm:$0xf] %vm12526, %v12255
      %12769 = vst.msk [vmem:[%s170 + $0x3c8] sm:$0xf] %vm12526, %v12256
      %12770 = vst.msk [vmem:[%s170 + $0x3cc] sm:$0xf] %vm12526, %v12257
      %12771 = vst.msk [vmem:[%s170 + $0x3d0] sm:$0xf] %vm12526, %v12258
      %12772 = vst.msk [vmem:[%s170 + $0x3d4] sm:$0xf] %vm12526, %v12259
      %12773 = vst.msk [vmem:[%s170 + $0x3d8] sm:$0xf] %vm12526, %v12260
      %12774 = vst.msk [vmem:[%s170 + $0x3dc] sm:$0xf] %vm12526, %v12261
      %12775 = vst.msk [vmem:[%s170 + $0x3e0] sm:$0xf] %vm12526, %v12262
      %12776 = vst.msk [vmem:[%s170 + $0x3e4] sm:$0xf] %vm12526, %v12263
      %12777 = vst.msk [vmem:[%s170 + $0x3e8] sm:$0xf] %vm12526, %v12264
      %12778 = vst.msk [vmem:[%s170 + $0x3ec] sm:$0xf] %vm12526, %v12265
      %12779 = vst.msk [vmem:[%s170 + $0x3f0] sm:$0xf] %vm12526, %v12266
      %12780 = vst.msk [vmem:[%s170 + $0x3f4] sm:$0xf] %vm12526, %v12267
      %12781 = vst.msk [vmem:[%s170 + $0x3f8] sm:$0xf] %vm12526, %v12268
      %12782 = vst.msk [vmem:[%s170 + $0x3fc] sm:$0xf] %vm12526, %v12269
      %p12783 = scmp.lt.s32.totalorder %s14, 1
      %s12784 = scalar_select %p12783, %s14, 1
      %s12785 = smul.addr %s12784, 256
      %s12786 = smul.addr %s12785, 4
      %s12787 = scalar_lea.vmem %s3, %s12786
      // Predicated region
      $region33: #{tpu_custom_call.1} parent=31 // pred_check
        %p12788 = pneg %p100
      $region34: #{tpu_custom_call.1} parent=31 // pred_check_branch
        %12790 = sbr.rel (%p12788) target = $region36
      $region35: #{tpu_custom_call.1} parent=31 // pred_region
        _
      $region36: #{tpu_custom_call.1} parent=31 // pred_fallthru
        _
    $region32: #{tpu_custom_call.1} parent=5 // pred_fallthru
      _
    %p12791 = scmp.le.s32.totalorder 2, %s9
    // Predicated region
    $region37: #{tpu_custom_call.1} parent=5 // pred_check
      %p12792 = pneg %p12791
    $region38: #{tpu_custom_call.1} parent=5 // pred_check_branch
      %12794 = sbr.rel (%p12792) target = $region40
    $region39: #{tpu_custom_call.1} parent=5 // pred_region
      %s12795 = ssub.s32 %s9, 2
      // Predicated region
      $region41: #{tpu_custom_call.1} parent=39 // pred_check
        %p12796 = pneg %p106
      $region42: #{tpu_custom_call.1} parent=39 // pred_check_branch
        %12798 = sbr.rel (%p12796) target = $region44
      $region43: #{tpu_custom_call.1} parent=39 // pred_region
        %p12799 = scmp.lt.s32.totalorder %s15, 1
        %s12800 = scalar_select %p12799, %s15, 1
        %s12801 = smul.addr %s12800, 256
        %s12802 = smul.addr %s12801, 4
        %s12803 = scalar_lea.vmem %s3, %s12802
      $region44: #{tpu_custom_call.1} parent=39 // pred_fallthru
        _
    $region40: #{tpu_custom_call.1} parent=5 // pred_fallthru
      _
  $region6: #{tpu_custom_call.1} parent=0 // loop_footer
    %s13 = sadd.s32 1, %s9
  $region7: #{tpu_custom_call.1} parent=0 // loop_footer_branch
    %8 = sbr.rel target = $region3
  $region8: #{tpu_custom_call.1} parent=0 // loop_exit
    _

</llo_original>
